<compile_context>
chip_gen: v6e
topology: v6e:2x2x1
jax: 0.10.0
libtpu: 0.0.40
codegen_flags: <defaults>
</compile_context>

<pallas_src>
import functools

import jax
import jax.numpy as jnp
from jax import lax
from jax.experimental import pallas as pl
from jax.experimental.pallas import tpu as pltpu

# Fixed by the module: Conv2d(256 * 8, 256, kernel_size=1), Linear(256, C).
FEAT_C = 256
CIN = 256 * 8
COUT = 256
NCLS_PAD = 128            # pad cls-head lane dim to a full vreg lane width
PROPOSALS_PER_TILE = 16   # rows/tile = 16 * 49 = 784 (multiple of 16 for bf16)


# ----------------------------------------------------------------------------
# Pallas kernel: conv1x1 + ReLU + avgpool + cls head + masked CE partial sums
# ----------------------------------------------------------------------------
def _ctx_head_kernel(x_ref, tgt_ref, wconv_ref, bconv_ref, wcls_ref, bcls_ref,
                     vec_ref, parts_ref, *, tp, hw):
    tm = tp * hw
    # 1x1 conv over channels: [TM, 2048] @ [2048, 256], bf16 in, f32 accumulate.
    h = jnp.dot(x_ref[...], wconv_ref[...], preferred_element_type=jnp.float32)
    h = jnp.maximum(h + bconv_ref[...], 0.0)                       # bias + ReLU

    # AdaptiveAvgPool2d((1,1)): per-proposal mean over its 49 spatial rows,
    # as a tiny in-kernel block-averaging matmul (no O(N^2) pool_mat input).
    r_ids = lax.broadcasted_iota(jnp.int32, (tp, tm), 1)
    p_ids = lax.broadcasted_iota(jnp.int32, (tp, tm), 0)
    pool = jnp.where((r_ids >= p_ids * hw) & (r_ids < (p_ids + 1) * hw),
                     jnp.float32(1.0 / hw), jnp.float32(0.0))
    vec = jnp.dot(pool, h, preferred_element_type=jnp.float32)     # [TP, 256]
    vec_ref[...] = vec

    # cls_head + masked cross-entropy partial sums. Padded logit columns carry
    # bias -1e30 so they vanish from the log-sum-exp. tgt = one_hot * valid.
    logits = jnp.dot(vec, wcls_ref[...],
                     preferred_element_type=jnp.float32) + bcls_ref[...]  # [TP,128]
    m = jnp.max(logits, axis=-1, keepdims=True)
    lse = m + jnp.log(jnp.sum(jnp.exp(logits - m), axis=-1, keepdims=True))
    tgt = tgt_ref[...]
    picked = jnp.sum(tgt * logits, axis=-1, keepdims=True)          # valid*logit[y]
    valid = jnp.sum(tgt, axis=-1, keepdims=True)
    num = jnp.sum(valid * lse - picked)
    den = jnp.sum(valid)

    # Per-tile partials in a lane-dense (8, 128) slab: row 0 = num, row 1 = den.
    rows = lax.broadcasted_iota(jnp.int32, (8, NCLS_PAD), 0)
    parts_ref[...] = jnp.where(rows == 0, num, jnp.where(rows == 1, den, 0.0))


def ctx_head_pallas(x_rows, tgt, w_conv_t, b_conv, w_cls_t, b_cls, *, hw):
    tp = PROPOSALS_PER_TILE
    tm = tp * hw
    n_pad = tgt.shape[0]
    num_tiles = n_pad // tp

    kernel = functools.partial(_ctx_head_kernel, tp=tp, hw=hw)
    out_shape = (
        jax.ShapeDtypeStruct((n_pad, COUT), jnp.float32),             # vec
        jax.ShapeDtypeStruct((num_tiles * 8, NCLS_PAD), jnp.float32),  # partials
    )
    grid_spec = pltpu.PrefetchScalarGridSpec(
        num_scalar_prefetch=0,
        grid=(num_tiles,),
        in_specs=[
            pl.BlockSpec((tm, CIN), lambda i: (i, 0)),          # x rows (bf16)
            pl.BlockSpec((tp, NCLS_PAD), lambda i: (i, 0)),     # one-hot * valid
            pl.BlockSpec((CIN, COUT), lambda i: (0, 0)),        # conv weight (bf16)
            pl.BlockSpec((1, COUT), lambda i: (0, 0)),          # conv bias
            pl.BlockSpec((COUT, NCLS_PAD), lambda i: (0, 0)),   # cls weight
            pl.BlockSpec((1, NCLS_PAD), lambda i: (0, 0)),      # cls bias (padded)
        ],
        out_specs=(
            pl.BlockSpec((tp, COUT), lambda i: (i, 0)),
            pl.BlockSpec((8, NCLS_PAD), lambda i: (i, 0)),
        ),
    )
    return pl.pallas_call(
        kernel,
        out_shape=out_shape,
        grid_spec=grid_spec,
        compiler_params=pltpu.CompilerParams(
            dimension_semantics=("parallel",),
            vmem_limit_bytes=32 * 1024 * 1024),
    )(x_rows, tgt, w_conv_t, b_conv, w_cls_t, b_cls)


# ----------------------------------------------------------------------------
# Plain-JAX glue: context box crops + ROIAlignV2 (aligned bilinear pooling)
# ----------------------------------------------------------------------------
# TODO(synk): ROIAlignV2 uses a data-dependent bilinear gather; kept in plain
# JAX (no clean static Pallas tiling for the gather). Semantics match detectron2.
def make_context_boxes(boxes):
    """boxes: [N,4] xyxy -> [8N,4] (3x3 grid crops minus center, crop-major)."""
    w = (boxes[:, 2] - boxes[:, 0]) / 3.0
    h = (boxes[:, 3] - boxes[:, 1]) / 3.0
    crops = []
    for i in range(3):
        for j in range(3):
            if i == 1 and j == 1:
                continue
            crops.append(jnp.stack(
                [boxes[:, 0] + j * w, boxes[:, 1] + i * h,
                 boxes[:, 0] + j * w + w, boxes[:, 1] + i * h + h], axis=1))
    return jnp.concatenate(crops, axis=0)


def _bilinear_batch(feat, y, x):
    """feat: [C,H,W]; y,x: [R,P] float coords -> [R,P,C]."""
    c, h, w = feat.shape
    valid = (y >= -1.0) & (y <= h) & (x >= -1.0) & (x <= w)
    y = jnp.maximum(y, 0.0)
    x = jnp.maximum(x, 0.0)
    y_low = jnp.floor(y).astype(jnp.int32)
    x_low = jnp.floor(x).astype(jnp.int32)
    y_adj = y_low >= h - 1
    x_adj = x_low >= w - 1
    y_low = jnp.where(y_adj, h - 1, y_low)
    x_low = jnp.where(x_adj, w - 1, x_low)
    y = jnp.where(y_adj, jnp.float32(h - 1), y)
    x = jnp.where(x_adj, jnp.float32(w - 1), x)
    y_high = jnp.where(y_adj, h - 1, y_low + 1)
    x_high = jnp.where(x_adj, w - 1, x_low + 1)
    ly = y - y_low.astype(jnp.float32)
    lx = x - x_low.astype(jnp.float32)
    hy, hx = 1.0 - ly, 1.0 - lx
    fhwc = jnp.transpose(feat, (1, 2, 0))            # [H,W,C]
    v1 = fhwc[y_low, x_low]
    v2 = fhwc[y_low, x_high]
    v3 = fhwc[y_high, x_low]
    v4 = fhwc[y_high, x_high]
    val = ((hy * hx)[..., None] * v1 + (hy * lx)[..., None] * v2 +
           (ly * hx)[..., None] * v3 + (ly * lx)[..., None] * v4)
    return jnp.where(valid[..., None], val, 0.0)


def roi_align_v2_nhwc(feat, boxes, out_size, spatial_scale, sampling_ratio):
    """feat: [C,Hf,Wf]; boxes: [R,4] -> [R,out,out,C] (aligned=True, NHWC)."""
    c, hf, wf = feat.shape
    r = boxes.shape[0]
    oh = ow = out_size
    sr = sampling_ratio
    x1 = boxes[:, 0] * spatial_scale - 0.5
    y1 = boxes[:, 1] * spatial_scale - 0.5
    x2 = boxes[:, 2] * spatial_scale - 0.5
    y2 = boxes[:, 3] * spatial_scale - 0.5
    bin_w = (x2 - x1) / ow
    bin_h = (y2 - y1) / oh
    frac = (jnp.arange(sr, dtype=jnp.float32) + 0.5) / sr          # [sr]
    idx = jnp.arange(oh, dtype=jnp.float32)                        # [oh]
    ys = y1[:, None, None] + (idx[None, :, None] + frac[None, None, :]) * bin_h[:, None, None]
    xs = x1[:, None, None] + (idx[None, :, None] + frac[None, None, :]) * bin_w[:, None, None]
    yy = jnp.broadcast_to(ys[:, :, :, None, None], (r, oh, sr, ow, sr))
    xx = jnp.broadcast_to(xs[:, None, None, :, :], (r, oh, sr, ow, sr))
    vals = _bilinear_batch(feat, yy.reshape(r, -1), xx.reshape(r, -1))   # [R,P,C]
    return vals.reshape(r, oh, sr, ow, sr, c).mean(axis=(2, 4))          # [R,oh,ow,C]


# ----------------------------------------------------------------------------
# Per-image head (jitted) + full forward, mirroring ContextBranchWithLoss
# ----------------------------------------------------------------------------
@functools.partial(jax.jit,
                   static_argnames=("output_size", "num_classes", "sampling_ratio"))
def _per_image(packed, feat, boxes, labels, *, output_size, num_classes,
               spatial_scale, sampling_ratio):
    w_conv_t, b_conv, w_cls_t, b_cls = packed
    n = boxes.shape[0]
    hw = output_size * output_size
    tp = PROPOSALS_PER_TILE
    n_pad = ((n + tp - 1) // tp) * tp

    crop_boxes = make_context_boxes(boxes)                       # [8N,4] crop-major
    roi = roi_align_v2_nhwc(feat, crop_boxes, output_size,
                            spatial_scale, sampling_ratio)       # [8N,7,7,256]
    roi = roi.astype(jnp.bfloat16)                               # halve layout BW

    # Match torch chunk.view(N, -1, 7, 7): row r = 8n + k supplies channel group
    # k of proposal n. Single layout transpose (k <-> hw) to channels-last rows.
    x = roi.reshape(n, 8, hw, FEAT_C)                            # free reshape
    x = jnp.transpose(x, (0, 2, 1, 3)).reshape(n * hw, CIN)      # [N*49, 2048]
    x = jnp.pad(x, ((0, (n_pad - n) * hw), (0, 0)))              # pad proposals

    valid = ((labels >= 0) & (labels < num_classes)).astype(jnp.float32)
    tgt = jax.nn.one_hot(labels, NCLS_PAD, dtype=jnp.float32) * valid[:, None]
    tgt = jnp.pad(tgt, ((0, n_pad - n), (0, 0)))

    vec, parts = ctx_head_pallas(x, tgt, w_conv_t, b_conv, w_cls_t, b_cls, hw=hw)
    num = jnp.sum(parts[0::8, 0])
    den = jnp.sum(parts[1::8, 0])
    # torch: 0.0 loss when no valid labels (valid.any() is False).
    loss = jnp.where(den > 0, num / jnp.maximum(den, 1.0), 0.0)
    return vec[:n], loss


def context_branch_forward(params, features, proposals_boxes, gt_classes,
                           feature_strides=(4,), output_size=7,
                           num_classes=16, sampling_ratio=2):
    w_conv, b_conv, w_cls, b_cls = params
    ncls = w_cls.shape[0]
    assert ncls <= NCLS_PAD
    # bf16 conv weight (MXU native); cls head padded to 128 lanes with zero
    # weights and -1e30 bias so padded logits never perturb the log-sum-exp.
    w_conv_t = w_conv.T.astype(jnp.bfloat16)                        # [2048, 256]
    b_conv_r = b_conv.reshape(1, COUT).astype(jnp.float32)
    w_cls_t = jnp.zeros((COUT, NCLS_PAD), jnp.float32).at[:, :ncls].set(
        w_cls.T.astype(jnp.float32))
    b_cls_p = jnp.full((1, NCLS_PAD), -1e30, jnp.float32).at[0, :ncls].set(
        b_cls.astype(jnp.float32))
    packed = (w_conv_t, b_conv_r, w_cls_t, b_cls_p)

    spatial_scale = 1.0 / feature_strides[0]
    feat0 = features[0]                                             # [B,256,Hf,Wf]
    outputs, aux_losses = [], {}
    for idx, boxes in enumerate(proposals_boxes):
        vec, loss = _per_image(
            packed, feat0[idx], boxes, gt_classes[idx],
            output_size=output_size, num_classes=num_classes,
            spatial_scale=spatial_scale, sampling_ratio=sampling_ratio)
        outputs.append(vec)
        aux_losses[f"ctx_loss_{idx}"] = loss
    return outputs, aux_losses


# ----------------------------------------------------------------------------
if __name__ == "__main__":
    num_classes = 16
    cin, cout = CIN, COUT             # fixed by the module: Conv2d(256*8, 256, 1)
    feat_c, feat_hw = FEAT_C, 32
    batch = 2

    key = jax.random.PRNGKey(0)
    kf, kb0, kb1, kw1, kw2, kw3 = jax.random.split(key, 6)

    # Deterministic parameters (module __init__ shapes).
    w_conv = 0.02 * jax.random.normal(kw1, (cout, cin), jnp.float32)   # conv 1x1
    b_conv = 0.01 * jax.random.normal(kw2, (cout,), jnp.float32)
    w_cls = 0.02 * jax.random.normal(kw3, (num_classes, cout), jnp.float32)
    b_cls = jnp.zeros((num_classes,), jnp.float32)
    params = (w_conv, b_conv, w_cls, b_cls)

    # Features: single FPN level, stride 4 -> image size 128x128.
    features = [0.5 * jax.random.normal(kf, (batch, feat_c, feat_hw, feat_hw),
                                        jnp.float32)]

    def rand_boxes(k, n):
        kx, ky, kw, kh = jax.random.split(k, 4)
        x1 = jax.random.uniform(kx, (n,), minval=0.0, maxval=80.0)
        y1 = jax.random.uniform(ky, (n,), minval=0.0, maxval=80.0)
        w = jax.random.uniform(kw, (n,), minval=12.0, maxval=40.0)
        h = jax.random.uniform(kh, (n,), minval=12.0, maxval=40.0)
        return jnp.stack([x1, y1, x1 + w, y1 + h], axis=1)

    proposals_boxes = [rand_boxes(kb0, 3), rand_boxes(kb1, 2)]
    gt_classes = [jnp.array([2, -1, 5], jnp.int32),          # one ignored label
                  jnp.array([num_classes, 3], jnp.int32)]    # one background label

    outputs, aux_losses = context_branch_forward(
        params, features, proposals_boxes, gt_classes,
        feature_strides=(4,), output_size=7, num_classes=num_classes,
        sampling_ratio=2)

    jax.block_until_ready((outputs, aux_losses))
    assert outputs[0].shape == (3, cout) and outputs[1].shape == (2, cout)
    assert set(aux_losses) == {"ctx_loss_0", "ctx_loss_1"}
    assert all(bool(jnp.isfinite(v)) for v in aux_losses.values())
    print("KERNEL_OK")
</pallas_src>

<mosaic_0001>
module attributes {stable_mosaic.version = 11 : i64} {
  func.func @_ctx_head_kernel(%arg0: i32, %arg1: memref<784x2048xbf16, #tpu.memory_space<vmem>>, %arg2: memref<16x128xf32, #tpu.memory_space<vmem>>, %arg3: memref<2048x256xbf16, #tpu.memory_space<vmem>>, %arg4: memref<1x256xf32, #tpu.memory_space<vmem>>, %arg5: memref<256x128xf32, #tpu.memory_space<vmem>>, %arg6: memref<1x128xf32, #tpu.memory_space<vmem>>, %arg7: memref<16x256xf32, #tpu.memory_space<vmem>>, %arg8: memref<8x128xf32, #tpu.memory_space<vmem>>) attributes {dimension_semantics = [#tpu.dimension_semantics<parallel>], iteration_bounds = array<i64: 1>, scalar_prefetch = 0 : i64, scratch_operands = 0 : i64, tpu.core_type = #tpu.core_type<tc>, window_params = [{transform_indices = @transform_0, window_bounds = array<i64: 784, 2048>}, {transform_indices = @transform_1, window_bounds = array<i64: 16, 128>}, {pipeline_mode = #tpu.pipeline_mode<synchronous>, transform_indices = @transform_2, window_bounds = array<i64: 2048, 256>}, {pipeline_mode = #tpu.pipeline_mode<synchronous>, transform_indices = @transform_3, window_bounds = array<i64: 1, 256>}, {pipeline_mode = #tpu.pipeline_mode<synchronous>, transform_indices = @transform_4, window_bounds = array<i64: 256, 128>}, {pipeline_mode = #tpu.pipeline_mode<synchronous>, transform_indices = @transform_5, window_bounds = array<i64: 1, 128>}, {transform_indices = @transform_6, window_bounds = array<i64: 16, 256>}, {transform_indices = @transform_7, window_bounds = array<i64: 8, 128>}]} {
    %c0 = arith.constant 0 : index
    %c0_0 = arith.constant 0 : index
    %0 = vector.load %arg1[%c0, %c0_0] : memref<784x2048xbf16, #tpu.memory_space<vmem>>, vector<784x2048xbf16>
    %c0_1 = arith.constant 0 : index
    %c0_2 = arith.constant 0 : index
    %1 = vector.load %arg3[%c0_1, %c0_2] : memref<2048x256xbf16, #tpu.memory_space<vmem>>, vector<2048x256xbf16>
    %cst = arith.constant dense<0.000000e+00> : vector<784x256xf32>
    %2 = tpu.matmul %0, %1, %cst {dimension_numbers = #tpu.dot_dimension_numbers<[1], [0], [0], [1], [0, 0, 1, 1], [], []>} : vector<784x2048xbf16>, vector<2048x256xbf16>, vector<784x256xf32> -> vector<784x256xf32>
    %c0_3 = arith.constant 0 : index
    %c0_4 = arith.constant 0 : index
    %3 = vector.load %arg4[%c0_3, %c0_4] : memref<1x256xf32, #tpu.memory_space<vmem>>, vector<1x256xf32>
    %4 = vector.broadcast %3 : vector<1x256xf32> to vector<784x256xf32>
    %5 = arith.addf %2, %4 : vector<784x256xf32>
    %cst_5 = arith.constant 0.000000e+00 : f32
    %6 = vector.broadcast %cst_5 : f32 to vector<784x256xf32>
    %7 = arith.maximumf %5, %6 : vector<784x256xf32>
    %8 = tpu.iota {dimensions = array<i32: 1>} : vector<16x784xi32>
    %9 = tpu.iota {dimensions = array<i32: 0>} : vector<16x784xi32>
    %c49_i32 = arith.constant 49 : i32
    %10 = vector.broadcast %c49_i32 : i32 to vector<16x784xi32>
    %11 = arith.muli %9, %10 : vector<16x784xi32>
    %12 = arith.cmpi sge, %8, %11 : vector<16x784xi32>
    %c1_i32 = arith.constant 1 : i32
    %13 = vector.broadcast %c1_i32 : i32 to vector<16x784xi32>
    %14 = arith.addi %9, %13 : vector<16x784xi32>
    %c49_i32_6 = arith.constant 49 : i32
    %15 = vector.broadcast %c49_i32_6 : i32 to vector<16x784xi32>
    %16 = arith.muli %14, %15 : vector<16x784xi32>
    %17 = arith.cmpi slt, %8, %16 : vector<16x784xi32>
    %18 = arith.andi %12, %17 : vector<16x784xi1>
    %cst_7 = arith.constant 0.0204081628 : f32
    %cst_8 = arith.constant 0.000000e+00 : f32
    %19 = vector.broadcast %cst_7 : f32 to vector<16x784xf32>
    %20 = vector.broadcast %cst_8 : f32 to vector<16x784xf32>
    %21 = arith.select %18, %19, %20 : vector<16x784xi1>, vector<16x784xf32>
    %cst_9 = arith.constant dense<0.000000e+00> : vector<16x256xf32>
    %22 = tpu.matmul %21, %7, %cst_9 {dimension_numbers = #tpu.dot_dimension_numbers<[1], [0], [0], [1], [0, 0, 1, 1], [], []>} : vector<16x784xf32>, vector<784x256xf32>, vector<16x256xf32> -> vector<16x256xf32>
    %c0_10 = arith.constant 0 : index
    %c0_11 = arith.constant 0 : index
    %23 = vector.load %arg7[%c0_10, %c0_11] : memref<16x256xf32, #tpu.memory_space<vmem>>, vector<16x256xf32>
    tpu.vector_store %arg7[%c0_10, %c0_11], %22 {strides = array<i32>} : memref<16x256xf32, #tpu.memory_space<vmem>>, vector<16x256xf32>,
    %c0_12 = arith.constant 0 : index
    %c0_13 = arith.constant 0 : index
    %24 = vector.load %arg5[%c0_12, %c0_13] : memref<256x128xf32, #tpu.memory_space<vmem>>, vector<256x128xf32>
    %cst_14 = arith.constant dense<0.000000e+00> : vector<16x128xf32>
    %25 = tpu.matmul %22, %24, %cst_14 {dimension_numbers = #tpu.dot_dimension_numbers<[1], [0], [0], [1], [0, 0, 1, 1], [], []>} : vector<16x256xf32>, vector<256x128xf32>, vector<16x128xf32> -> vector<16x128xf32>
    %c0_15 = arith.constant 0 : index
    %c0_16 = arith.constant 0 : index
    %26 = vector.load %arg6[%c0_15, %c0_16] : memref<1x128xf32, #tpu.memory_space<vmem>>, vector<1x128xf32>
    %27 = vector.broadcast %26 : vector<1x128xf32> to vector<16x128xf32>
    %28 = arith.addf %25, %27 : vector<16x128xf32>
    %cst_17 = arith.constant dense<0xFF800000> : vector<16xf32>
    %29 = vector.multi_reduction <maximumf>, %28, %cst_17 [1] : vector<16x128xf32> to vector<16xf32>
    %30 = vector.shape_cast %29 : vector<16xf32> to vector<16x1xf32>
    %31 = vector.broadcast %30 : vector<16x1xf32> to vector<16x128xf32>
    %32 = arith.subf %28, %31 : vector<16x128xf32>
    %33 = math.exp %32 : vector<16x128xf32>
    %cst_18 = arith.constant dense<0.000000e+00> : vector<16xf32>
    %34 = vector.multi_reduction <add>, %33, %cst_18 [1] : vector<16x128xf32> to vector<16xf32>
    %35 = vector.shape_cast %34 : vector<16xf32> to vector<16x1xf32>
    %36 = math.log %35 : vector<16x1xf32>
    %37 = arith.addf %30, %36 : vector<16x1xf32>
    %c0_19 = arith.constant 0 : index
    %c0_20 = arith.constant 0 : index
    %38 = vector.load %arg2[%c0_19, %c0_20] : memref<16x128xf32, #tpu.memory_space<vmem>>, vector<16x128xf32>
    %39 = arith.mulf %38, %28 : vector<16x128xf32>
    %cst_21 = arith.constant dense<0.000000e+00> : vector<16xf32>
    %40 = vector.multi_reduction <add>, %39, %cst_21 [1] : vector<16x128xf32> to vector<16xf32>
    %41 = vector.shape_cast %40 : vector<16xf32> to vector<16x1xf32>
    %cst_22 = arith.constant dense<0.000000e+00> : vector<16xf32>
    %42 = vector.multi_reduction <add>, %38, %cst_22 [1] : vector<16x128xf32> to vector<16xf32>
    %43 = vector.shape_cast %42 : vector<16xf32> to vector<16x1xf32>
    %44 = arith.mulf %43, %37 : vector<16x1xf32>
    %45 = arith.subf %44, %41 : vector<16x1xf32>
    %46 = vector.shape_cast %45 : vector<16x1xf32> to vector<1x16x1xf32>
    %cst_23 = arith.constant dense<0.000000e+00> : vector<1xf32>
    %47 = vector.multi_reduction <add>, %46, %cst_23 [1, 2] : vector<1x16x1xf32> to vector<1xf32>
    %48 = vector.shape_cast %47 : vector<1xf32> to vector<1x1x1xf32>
    %49 = vector.extract %48[0, 0, 0] : f32 from vector<1x1x1xf32>
    %50 = vector.shape_cast %43 : vector<16x1xf32> to vector<1x16x1xf32>
    %cst_24 = arith.constant dense<0.000000e+00> : vector<1xf32>
    %51 = vector.multi_reduction <add>, %50, %cst_24 [1, 2] : vector<1x16x1xf32> to vector<1xf32>
    %52 = vector.shape_cast %51 : vector<1xf32> to vector<1x1x1xf32>
    %53 = vector.extract %52[0, 0, 0] : f32 from vector<1x1x1xf32>
    %54 = tpu.iota {dimensions = array<i32: 0>} : vector<8x128xi32>
    %c0_i32 = arith.constant 0 : i32
    %55 = vector.broadcast %c0_i32 : i32 to vector<8x128xi32>
    %56 = arith.cmpi eq, %54, %55 : vector<8x128xi32>
    %c1_i32_25 = arith.constant 1 : i32
    %57 = vector.broadcast %c1_i32_25 : i32 to vector<8x128xi32>
    %58 = arith.cmpi eq, %54, %57 : vector<8x128xi32>
    %cst_26 = arith.constant 0.000000e+00 : f32
    %59 = vector.broadcast %53 : f32 to vector<8x128xf32>
    %60 = vector.broadcast %cst_26 : f32 to vector<8x128xf32>
    %61 = arith.select %58, %59, %60 : vector<8x128xi1>, vector<8x128xf32>
    %62 = vector.broadcast %49 : f32 to vector<8x128xf32>
    %63 = arith.select %56, %62, %61 : vector<8x128xi1>, vector<8x128xf32>
    %c0_27 = arith.constant 0 : index
    %c0_28 = arith.constant 0 : index
    %64 = vector.load %arg8[%c0_27, %c0_28] : memref<8x128xf32, #tpu.memory_space<vmem>>, vector<8x128xf32>
    tpu.vector_store %arg8[%c0_27, %c0_28], %63 {strides = array<i32>} : memref<8x128xf32, #tpu.memory_space<vmem>>, vector<8x128xf32>,
    return
  }
  func.func @transform_0(%arg0: i32) -> (i32, i32) {
    %c0_i32 = arith.constant 0 : i32
    %c0_i32_0 = arith.constant 0 : i32
    return %arg0, %c0_i32 : i32, i32
  }
  func.func @transform_1(%arg0: i32) -> (i32, i32) {
    %c0_i32 = arith.constant 0 : i32
    %c0_i32_0 = arith.constant 0 : i32
    return %arg0, %c0_i32 : i32, i32
  }
  func.func @transform_2(%arg0: i32) -> (i32, i32) {
    %c0_i32 = arith.constant 0 : i32
    %c0_i32_0 = arith.constant 0 : i32
    %c0_i32_1 = arith.constant 0 : i32
    return %c0_i32, %c0_i32_0 : i32, i32
  }
  func.func @transform_3(%arg0: i32) -> (i32, i32) {
    %c0_i32 = arith.constant 0 : i32
    %c0_i32_0 = arith.constant 0 : i32
    %c0_i32_1 = arith.constant 0 : i32
    return %c0_i32, %c0_i32_0 : i32, i32
  }
  func.func @transform_4(%arg0: i32) -> (i32, i32) {
    %c0_i32 = arith.constant 0 : i32
    %c0_i32_0 = arith.constant 0 : i32
    %c0_i32_1 = arith.constant 0 : i32
    return %c0_i32, %c0_i32_0 : i32, i32
  }
  func.func @transform_5(%arg0: i32) -> (i32, i32) {
    %c0_i32 = arith.constant 0 : i32
    %c0_i32_0 = arith.constant 0 : i32
    %c0_i32_1 = arith.constant 0 : i32
    return %c0_i32, %c0_i32_0 : i32, i32
  }
  func.func @transform_6(%arg0: i32) -> (i32, i32) {
    %c0_i32 = arith.constant 0 : i32
    %c0_i32_0 = arith.constant 0 : i32
    return %arg0, %c0_i32 : i32, i32
  }
  func.func @transform_7(%arg0: i32) -> (i32, i32) {
    %c0_i32 = arith.constant 0 : i32
    %c0_i32_0 = arith.constant 0 : i32
    return %arg0, %c0_i32 : i32, i32
  }
}

</mosaic_0001>

<llo_original>
// kernel: _per_image.1
$region0: #{_per_image.1}
  #allocation0 [shape = 'u32[]', space=smem, size = 0x4, offset = 0x4, fixed_abs, tag = 'smem constant byte address 0x4 - core index']
  #allocation1 [shape = 'u32[144,128]{1,0:T(1,128)}', space=vmem, size = 0x12000, scoped, tag = 'internal scratch']
  %s0 = inlined_call_operand.vmem [shape: bf16[784,2048], index: 0, kind: input, shape index: {}]
  %s1 = inlined_call_operand.vmem [shape: f32[16,128], index: 1, kind: input, shape index: {}]
  %s2 = inlined_call_operand.vmem [shape: bf16[2048,256], index: 2, kind: input, shape index: {}]
  %s3 = inlined_call_operand.vmem [shape: f32[1,256], index: 3, kind: input, shape index: {}]
  %s4 = inlined_call_operand.vmem [shape: f32[256,128], index: 4, kind: input, shape index: {}]
  %s5 = inlined_call_operand.vmem [shape: f32[1,128], index: 5, kind: input, shape index: {}]
  %s6 = inlined_call_operand.vmem [shape: f32[16,256], index: 6, kind: output, shape index: {0}]
  %s7 = inlined_call_operand.vmem [shape: f32[8,128], index: 7, kind: output, shape index: {1}]
  %8 = xla_tuple %s6, %s7
  %s9 = sld [smem:[#allocation0]]
  $region42: #{_per_image.1} parent=0
    _
  %s11 = ssub.s32 1, %s9
  %s12 = scalar_select 0, %s11, %s9
  // Predicated region
  $region2: #{_per_image.1} parent=0 // pred_check
    _
  $region3: #{_per_image.1} parent=0 // pred_check_branch
    %14 = sbr.rel (0) target = $region5
  $region4: #{_per_image.1} parent=0 // pred_region
    _
  $region5: #{_per_image.1} parent=0 // pred_fallthru
    _
  // Predicated region
  $region6: #{_per_image.1} parent=0 // pred_check
    _
  $region7: #{_per_image.1} parent=0 // pred_check_branch
    %16 = sbr.rel (0) target = $region9
  $region8: #{_per_image.1} parent=0 // pred_region
    _
  $region9: #{_per_image.1} parent=0 // pred_fallthru
    _
  // Predicated region
  $region10: #{_per_image.1} parent=0 // pred_check
    _
  $region11: #{_per_image.1} parent=0 // pred_check_branch
    %18 = sbr.rel (0) target = $region13
  $region12: #{_per_image.1} parent=0 // pred_region
    _
  $region13: #{_per_image.1} parent=0 // pred_fallthru
    _
  // Predicated region
  $region14: #{_per_image.1} parent=0 // pred_check
    _
  $region15: #{_per_image.1} parent=0 // pred_check_branch
    %20 = sbr.rel (0) target = $region17
  $region16: #{_per_image.1} parent=0 // pred_region
    _
  $region17: #{_per_image.1} parent=0 // pred_fallthru
    _
  // Predicated region
  $region18: #{_per_image.1} parent=0 // pred_check
    _
  $region19: #{_per_image.1} parent=0 // pred_check_branch
    %22 = sbr.rel (0) target = $region21
  $region20: #{_per_image.1} parent=0 // pred_region
    _
  $region21: #{_per_image.1} parent=0 // pred_fallthru
    _
  // Predicated region
  $region22: #{_per_image.1} parent=0 // pred_check
    _
  $region23: #{_per_image.1} parent=0 // pred_check_branch
    %24 = sbr.rel (0) target = $region25
  $region24: #{_per_image.1} parent=0 // pred_region
    _
  $region25: #{_per_image.1} parent=0 // pred_fallthru
    _
  %v25 = vld [vmem:[%s0] sm:$0xff]
  %v26 = vld [vmem:[%s0 + $0x8] sm:$0xff]
  %v27 = vld [vmem:[%s0 + $0x10] sm:$0xff]
  %v28 = vld [vmem:[%s0 + $0x18] sm:$0xff]
  %v29 = vld [vmem:[%s0 + $0x20] sm:$0xff]
  %v30 = vld [vmem:[%s0 + $0x28] sm:$0xff]
  %v31 = vld [vmem:[%s0 + $0x30] sm:$0xff]
  %v32 = vld [vmem:[%s0 + $0x38] sm:$0xff]
  %v33 = vld [vmem:[%s0 + $0x40] sm:$0xff]
  %v34 = vld [vmem:[%s0 + $0x48] sm:$0xff]
  %v35 = vld [vmem:[%s0 + $0x50] sm:$0xff]
  %v36 = vld [vmem:[%s0 + $0x58] sm:$0xff]
  %v37 = vld [vmem:[%s0 + $0x60] sm:$0xff]
  %v38 = vld [vmem:[%s0 + $0x68] sm:$0xff]
  %v39 = vld [vmem:[%s0 + $0x70] sm:$0xff]
  %v40 = vld [vmem:[%s0 + $0x78] sm:$0xff]
  %v41 = vld [vmem:[%s0 + $0x80] sm:$0xff]
  %v42 = vld [vmem:[%s0 + $0x88] sm:$0xff]
  %v43 = vld [vmem:[%s0 + $0x90] sm:$0xff]
  %v44 = vld [vmem:[%s0 + $0x98] sm:$0xff]
  %v45 = vld [vmem:[%s0 + $0xa0] sm:$0xff]
  %v46 = vld [vmem:[%s0 + $0xa8] sm:$0xff]
  %v47 = vld [vmem:[%s0 + $0xb0] sm:$0xff]
  %v48 = vld [vmem:[%s0 + $0xb8] sm:$0xff]
  %v49 = vld [vmem:[%s0 + $0xc0] sm:$0xff]
  %v50 = vld [vmem:[%s0 + $0xc8] sm:$0xff]
  %v51 = vld [vmem:[%s0 + $0xd0] sm:$0xff]
  %v52 = vld [vmem:[%s0 + $0xd8] sm:$0xff]
  %v53 = vld [vmem:[%s0 + $0xe0] sm:$0xff]
  %v54 = vld [vmem:[%s0 + $0xe8] sm:$0xff]
  %v55 = vld [vmem:[%s0 + $0xf0] sm:$0xff]
  %v56 = vld [vmem:[%s0 + $0xf8] sm:$0xff]
  %v57 = vld [vmem:[%s0 + $0x100] sm:$0xff]
  %v58 = vld [vmem:[%s0 + $0x108] sm:$0xff]
  %v59 = vld [vmem:[%s0 + $0x110] sm:$0xff]
  %v60 = vld [vmem:[%s0 + $0x118] sm:$0xff]
  %v61 = vld [vmem:[%s0 + $0x120] sm:$0xff]
  %v62 = vld [vmem:[%s0 + $0x128] sm:$0xff]
  %v63 = vld [vmem:[%s0 + $0x130] sm:$0xff]
  %v64 = vld [vmem:[%s0 + $0x138] sm:$0xff]
  %v65 = vld [vmem:[%s0 + $0x140] sm:$0xff]
  %v66 = vld [vmem:[%s0 + $0x148] sm:$0xff]
  %v67 = vld [vmem:[%s0 + $0x150] sm:$0xff]
  %v68 = vld [vmem:[%s0 + $0x158] sm:$0xff]
  %v69 = vld [vmem:[%s0 + $0x160] sm:$0xff]
  %v70 = vld [vmem:[%s0 + $0x168] sm:$0xff]
  %v71 = vld [vmem:[%s0 + $0x170] sm:$0xff]
  %v72 = vld [vmem:[%s0 + $0x178] sm:$0xff]
  %v73 = vld [vmem:[%s0 + $0x180] sm:$0xff]
  %v74 = vld [vmem:[%s0 + $0x188] sm:$0xff]
  %v75 = vld [vmem:[%s0 + $0x190] sm:$0xff]
  %v76 = vld [vmem:[%s0 + $0x198] sm:$0xff]
  %v77 = vld [vmem:[%s0 + $0x1a0] sm:$0xff]
  %v78 = vld [vmem:[%s0 + $0x1a8] sm:$0xff]
  %v79 = vld [vmem:[%s0 + $0x1b0] sm:$0xff]
  %v80 = vld [vmem:[%s0 + $0x1b8] sm:$0xff]
  %v81 = vld [vmem:[%s0 + $0x1c0] sm:$0xff]
  %v82 = vld [vmem:[%s0 + $0x1c8] sm:$0xff]
  %v83 = vld [vmem:[%s0 + $0x1d0] sm:$0xff]
  %v84 = vld [vmem:[%s0 + $0x1d8] sm:$0xff]
  %v85 = vld [vmem:[%s0 + $0x1e0] sm:$0xff]
  %v86 = vld [vmem:[%s0 + $0x1e8] sm:$0xff]
  %v87 = vld [vmem:[%s0 + $0x1f0] sm:$0xff]
  %v88 = vld [vmem:[%s0 + $0x1f8] sm:$0xff]
  %v89 = vld [vmem:[%s0 + $0x200] sm:$0xff]
  %v90 = vld [vmem:[%s0 + $0x208] sm:$0xff]
  %v91 = vld [vmem:[%s0 + $0x210] sm:$0xff]
  %v92 = vld [vmem:[%s0 + $0x218] sm:$0xff]
  %v93 = vld [vmem:[%s0 + $0x220] sm:$0xff]
  %v94 = vld [vmem:[%s0 + $0x228] sm:$0xff]
  %v95 = vld [vmem:[%s0 + $0x230] sm:$0xff]
  %v96 = vld [vmem:[%s0 + $0x238] sm:$0xff]
  %v97 = vld [vmem:[%s0 + $0x240] sm:$0xff]
  %v98 = vld [vmem:[%s0 + $0x248] sm:$0xff]
  %v99 = vld [vmem:[%s0 + $0x250] sm:$0xff]
  %v100 = vld [vmem:[%s0 + $0x258] sm:$0xff]
  %v101 = vld [vmem:[%s0 + $0x260] sm:$0xff]
  %v102 = vld [vmem:[%s0 + $0x268] sm:$0xff]
  %v103 = vld [vmem:[%s0 + $0x270] sm:$0xff]
  %v104 = vld [vmem:[%s0 + $0x278] sm:$0xff]
  %v105 = vld [vmem:[%s0 + $0x280] sm:$0xff]
  %v106 = vld [vmem:[%s0 + $0x288] sm:$0xff]
  %v107 = vld [vmem:[%s0 + $0x290] sm:$0xff]
  %v108 = vld [vmem:[%s0 + $0x298] sm:$0xff]
  %v109 = vld [vmem:[%s0 + $0x2a0] sm:$0xff]
  %v110 = vld [vmem:[%s0 + $0x2a8] sm:$0xff]
  %v111 = vld [vmem:[%s0 + $0x2b0] sm:$0xff]
  %v112 = vld [vmem:[%s0 + $0x2b8] sm:$0xff]
  %v113 = vld [vmem:[%s0 + $0x2c0] sm:$0xff]
  %v114 = vld [vmem:[%s0 + $0x2c8] sm:$0xff]
  %v115 = vld [vmem:[%s0 + $0x2d0] sm:$0xff]
  %v116 = vld [vmem:[%s0 + $0x2d8] sm:$0xff]
  %v117 = vld [vmem:[%s0 + $0x2e0] sm:$0xff]
  %v118 = vld [vmem:[%s0 + $0x2e8] sm:$0xff]
  %v119 = vld [vmem:[%s0 + $0x2f0] sm:$0xff]
  %v120 = vld [vmem:[%s0 + $0x2f8] sm:$0xff]
  %v121 = vld [vmem:[%s0 + $0x300] sm:$0xff]
  %v122 = vld [vmem:[%s0 + $0x308] sm:$0xff]
  %v123 = vld [vmem:[%s0 + $0x310] sm:$0xff]
  %v124 = vld [vmem:[%s0 + $0x318] sm:$0xff]
  %v125 = vld [vmem:[%s0 + $0x320] sm:$0xff]
  %v126 = vld [vmem:[%s0 + $0x328] sm:$0xff]
  %v127 = vld [vmem:[%s0 + $0x330] sm:$0xff]
  %v128 = vld [vmem:[%s0 + $0x338] sm:$0xff]
  %v129 = vld [vmem:[%s0 + $0x340] sm:$0xff]
  %v130 = vld [vmem:[%s0 + $0x348] sm:$0xff]
  %v131 = vld [vmem:[%s0 + $0x350] sm:$0xff]
  %v132 = vld [vmem:[%s0 + $0x358] sm:$0xff]
  %v133 = vld [vmem:[%s0 + $0x360] sm:$0xff]
  %v134 = vld [vmem:[%s0 + $0x368] sm:$0xff]
  %v135 = vld [vmem:[%s0 + $0x370] sm:$0xff]
  %v136 = vld [vmem:[%s0 + $0x378] sm:$0xff]
  %v137 = vld [vmem:[%s0 + $0x380] sm:$0xff]
  %v138 = vld [vmem:[%s0 + $0x388] sm:$0xff]
  %v139 = vld [vmem:[%s0 + $0x390] sm:$0xff]
  %v140 = vld [vmem:[%s0 + $0x398] sm:$0xff]
  %v141 = vld [vmem:[%s0 + $0x3a0] sm:$0xff]
  %v142 = vld [vmem:[%s0 + $0x3a8] sm:$0xff]
  %v143 = vld [vmem:[%s0 + $0x3b0] sm:$0xff]
  %v144 = vld [vmem:[%s0 + $0x3b8] sm:$0xff]
  %v145 = vld [vmem:[%s0 + $0x3c0] sm:$0xff]
  %v146 = vld [vmem:[%s0 + $0x3c8] sm:$0xff]
  %v147 = vld [vmem:[%s0 + $0x3d0] sm:$0xff]
  %v148 = vld [vmem:[%s0 + $0x3d8] sm:$0xff]
  %v149 = vld [vmem:[%s0 + $0x3e0] sm:$0xff]
  %v150 = vld [vmem:[%s0 + $0x3e8] sm:$0xff]
  %v151 = vld [vmem:[%s0 + $0x3f0] sm:$0xff]
  %v152 = vld [vmem:[%s0 + $0x3f8] sm:$0xff]
  %v153 = vld [vmem:[%s0 + $0x400] sm:$0xff]
  %v154 = vld [vmem:[%s0 + $0x408] sm:$0xff]
  %v155 = vld [vmem:[%s0 + $0x410] sm:$0xff]
  %v156 = vld [vmem:[%s0 + $0x418] sm:$0xff]
  %v157 = vld [vmem:[%s0 + $0x420] sm:$0xff]
  %v158 = vld [vmem:[%s0 + $0x428] sm:$0xff]
  %v159 = vld [vmem:[%s0 + $0x430] sm:$0xff]
  %v160 = vld [vmem:[%s0 + $0x438] sm:$0xff]
  %v161 = vld [vmem:[%s0 + $0x440] sm:$0xff]
  %v162 = vld [vmem:[%s0 + $0x448] sm:$0xff]
  %v163 = vld [vmem:[%s0 + $0x450] sm:$0xff]
  %v164 = vld [vmem:[%s0 + $0x458] sm:$0xff]
  %v165 = vld [vmem:[%s0 + $0x460] sm:$0xff]
  %v166 = vld [vmem:[%s0 + $0x468] sm:$0xff]
  %v167 = vld [vmem:[%s0 + $0x470] sm:$0xff]
  %v168 = vld [vmem:[%s0 + $0x478] sm:$0xff]
  %v169 = vld [vmem:[%s0 + $0x480] sm:$0xff]
  %v170 = vld [vmem:[%s0 + $0x488] sm:$0xff]
  %v171 = vld [vmem:[%s0 + $0x490] sm:$0xff]
  %v172 = vld [vmem:[%s0 + $0x498] sm:$0xff]
  %v173 = vld [vmem:[%s0 + $0x4a0] sm:$0xff]
  %v174 = vld [vmem:[%s0 + $0x4a8] sm:$0xff]
  %v175 = vld [vmem:[%s0 + $0x4b0] sm:$0xff]
  %v176 = vld [vmem:[%s0 + $0x4b8] sm:$0xff]
  %v177 = vld [vmem:[%s0 + $0x4c0] sm:$0xff]
  %v178 = vld [vmem:[%s0 + $0x4c8] sm:$0xff]
  %v179 = vld [vmem:[%s0 + $0x4d0] sm:$0xff]
  %v180 = vld [vmem:[%s0 + $0x4d8] sm:$0xff]
  %v181 = vld [vmem:[%s0 + $0x4e0] sm:$0xff]
  %v182 = vld [vmem:[%s0 + $0x4e8] sm:$0xff]
  %v183 = vld [vmem:[%s0 + $0x4f0] sm:$0xff]
  %v184 = vld [vmem:[%s0 + $0x4f8] sm:$0xff]
  %v185 = vld [vmem:[%s0 + $0x500] sm:$0xff]
  %v186 = vld [vmem:[%s0 + $0x508] sm:$0xff]
  %v187 = vld [vmem:[%s0 + $0x510] sm:$0xff]
  %v188 = vld [vmem:[%s0 + $0x518] sm:$0xff]
  %v189 = vld [vmem:[%s0 + $0x520] sm:$0xff]
  %v190 = vld [vmem:[%s0 + $0x528] sm:$0xff]
  %v191 = vld [vmem:[%s0 + $0x530] sm:$0xff]
  %v192 = vld [vmem:[%s0 + $0x538] sm:$0xff]
  %v193 = vld [vmem:[%s0 + $0x540] sm:$0xff]
  %v194 = vld [vmem:[%s0 + $0x548] sm:$0xff]
  %v195 = vld [vmem:[%s0 + $0x550] sm:$0xff]
  %v196 = vld [vmem:[%s0 + $0x558] sm:$0xff]
  %v197 = vld [vmem:[%s0 + $0x560] sm:$0xff]
  %v198 = vld [vmem:[%s0 + $0x568] sm:$0xff]
  %v199 = vld [vmem:[%s0 + $0x570] sm:$0xff]
  %v200 = vld [vmem:[%s0 + $0x578] sm:$0xff]
  %v201 = vld [vmem:[%s0 + $0x580] sm:$0xff]
  %v202 = vld [vmem:[%s0 + $0x588] sm:$0xff]
  %v203 = vld [vmem:[%s0 + $0x590] sm:$0xff]
  %v204 = vld [vmem:[%s0 + $0x598] sm:$0xff]
  %v205 = vld [vmem:[%s0 + $0x5a0] sm:$0xff]
  %v206 = vld [vmem:[%s0 + $0x5a8] sm:$0xff]
  %v207 = vld [vmem:[%s0 + $0x5b0] sm:$0xff]
  %v208 = vld [vmem:[%s0 + $0x5b8] sm:$0xff]
  %v209 = vld [vmem:[%s0 + $0x5c0] sm:$0xff]
  %v210 = vld [vmem:[%s0 + $0x5c8] sm:$0xff]
  %v211 = vld [vmem:[%s0 + $0x5d0] sm:$0xff]
  %v212 = vld [vmem:[%s0 + $0x5d8] sm:$0xff]
  %v213 = vld [vmem:[%s0 + $0x5e0] sm:$0xff]
  %v214 = vld [vmem:[%s0 + $0x5e8] sm:$0xff]
  %v215 = vld [vmem:[%s0 + $0x5f0] sm:$0xff]
  %v216 = vld [vmem:[%s0 + $0x5f8] sm:$0xff]
  %v217 = vld [vmem:[%s0 + $0x600] sm:$0xff]
  %v218 = vld [vmem:[%s0 + $0x608] sm:$0xff]
  %v219 = vld [vmem:[%s0 + $0x610] sm:$0xff]
  %v220 = vld [vmem:[%s0 + $0x618] sm:$0xff]
  %v221 = vld [vmem:[%s0 + $0x620] sm:$0xff]
  %v222 = vld [vmem:[%s0 + $0x628] sm:$0xff]
  %v223 = vld [vmem:[%s0 + $0x630] sm:$0xff]
  %v224 = vld [vmem:[%s0 + $0x638] sm:$0xff]
  %v225 = vld [vmem:[%s0 + $0x640] sm:$0xff]
  %v226 = vld [vmem:[%s0 + $0x648] sm:$0xff]
  %v227 = vld [vmem:[%s0 + $0x650] sm:$0xff]
  %v228 = vld [vmem:[%s0 + $0x658] sm:$0xff]
  %v229 = vld [vmem:[%s0 + $0x660] sm:$0xff]
  %v230 = vld [vmem:[%s0 + $0x668] sm:$0xff]
  %v231 = vld [vmem:[%s0 + $0x670] sm:$0xff]
  %v232 = vld [vmem:[%s0 + $0x678] sm:$0xff]
  %v233 = vld [vmem:[%s0 + $0x680] sm:$0xff]
  %v234 = vld [vmem:[%s0 + $0x688] sm:$0xff]
  %v235 = vld [vmem:[%s0 + $0x690] sm:$0xff]
  %v236 = vld [vmem:[%s0 + $0x698] sm:$0xff]
  %v237 = vld [vmem:[%s0 + $0x6a0] sm:$0xff]
  %v238 = vld [vmem:[%s0 + $0x6a8] sm:$0xff]
  %v239 = vld [vmem:[%s0 + $0x6b0] sm:$0xff]
  %v240 = vld [vmem:[%s0 + $0x6b8] sm:$0xff]
  %v241 = vld [vmem:[%s0 + $0x6c0] sm:$0xff]
  %v242 = vld [vmem:[%s0 + $0x6c8] sm:$0xff]
  %v243 = vld [vmem:[%s0 + $0x6d0] sm:$0xff]
  %v244 = vld [vmem:[%s0 + $0x6d8] sm:$0xff]
  %v245 = vld [vmem:[%s0 + $0x6e0] sm:$0xff]
  %v246 = vld [vmem:[%s0 + $0x6e8] sm:$0xff]
  %v247 = vld [vmem:[%s0 + $0x6f0] sm:$0xff]
  %v248 = vld [vmem:[%s0 + $0x6f8] sm:$0xff]
  %v249 = vld [vmem:[%s0 + $0x700] sm:$0xff]
  %v250 = vld [vmem:[%s0 + $0x708] sm:$0xff]
  %v251 = vld [vmem:[%s0 + $0x710] sm:$0xff]
  %v252 = vld [vmem:[%s0 + $0x718] sm:$0xff]
  %v253 = vld [vmem:[%s0 + $0x720] sm:$0xff]
  %v254 = vld [vmem:[%s0 + $0x728] sm:$0xff]
  %v255 = vld [vmem:[%s0 + $0x730] sm:$0xff]
  %v256 = vld [vmem:[%s0 + $0x738] sm:$0xff]
  %v257 = vld [vmem:[%s0 + $0x740] sm:$0xff]
  %v258 = vld [vmem:[%s0 + $0x748] sm:$0xff]
  %v259 = vld [vmem:[%s0 + $0x750] sm:$0xff]
  %v260 = vld [vmem:[%s0 + $0x758] sm:$0xff]
  %v261 = vld [vmem:[%s0 + $0x760] sm:$0xff]
  %v262 = vld [vmem:[%s0 + $0x768] sm:$0xff]
  %v263 = vld [vmem:[%s0 + $0x770] sm:$0xff]
  %v264 = vld [vmem:[%s0 + $0x778] sm:$0xff]
  %v265 = vld [vmem:[%s0 + $0x780] sm:$0xff]
  %v266 = vld [vmem:[%s0 + $0x788] sm:$0xff]
  %v267 = vld [vmem:[%s0 + $0x790] sm:$0xff]
  %v268 = vld [vmem:[%s0 + $0x798] sm:$0xff]
  %v269 = vld [vmem:[%s0 + $0x7a0] sm:$0xff]
  %v270 = vld [vmem:[%s0 + $0x7a8] sm:$0xff]
  %v271 = vld [vmem:[%s0 + $0x7b0] sm:$0xff]
  %v272 = vld [vmem:[%s0 + $0x7b8] sm:$0xff]
  %v273 = vld [vmem:[%s0 + $0x7c0] sm:$0xff]
  %v274 = vld [vmem:[%s0 + $0x7c8] sm:$0xff]
  %v275 = vld [vmem:[%s0 + $0x7d0] sm:$0xff]
  %v276 = vld [vmem:[%s0 + $0x7d8] sm:$0xff]
  %v277 = vld [vmem:[%s0 + $0x7e0] sm:$0xff]
  %v278 = vld [vmem:[%s0 + $0x7e8] sm:$0xff]
  %v279 = vld [vmem:[%s0 + $0x7f0] sm:$0xff]
  %v280 = vld [vmem:[%s0 + $0x7f8] sm:$0xff]
  %v281 = vld [vmem:[%s0 + $0x800] sm:$0xff]
  %v282 = vld [vmem:[%s0 + $0x808] sm:$0xff]
  %v283 = vld [vmem:[%s0 + $0x810] sm:$0xff]
  %v284 = vld [vmem:[%s0 + $0x818] sm:$0xff]
  %v285 = vld [vmem:[%s0 + $0x820] sm:$0xff]
  %v286 = vld [vmem:[%s0 + $0x828] sm:$0xff]
  %v287 = vld [vmem:[%s0 + $0x830] sm:$0xff]
  %v288 = vld [vmem:[%s0 + $0x838] sm:$0xff]
  %v289 = vld [vmem:[%s0 + $0x840] sm:$0xff]
  %v290 = vld [vmem:[%s0 + $0x848] sm:$0xff]
  %v291 = vld [vmem:[%s0 + $0x850] sm:$0xff]
  %v292 = vld [vmem:[%s0 + $0x858] sm:$0xff]
  %v293 = vld [vmem:[%s0 + $0x860] sm:$0xff]
  %v294 = vld [vmem:[%s0 + $0x868] sm:$0xff]
  %v295 = vld [vmem:[%s0 + $0x870] sm:$0xff]
  %v296 = vld [vmem:[%s0 + $0x878] sm:$0xff]
  %v297 = vld [vmem:[%s0 + $0x880] sm:$0xff]
  %v298 = vld [vmem:[%s0 + $0x888] sm:$0xff]
  %v299 = vld [vmem:[%s0 + $0x890] sm:$0xff]
  %v300 = vld [vmem:[%s0 + $0x898] sm:$0xff]
  %v301 = vld [vmem:[%s0 + $0x8a0] sm:$0xff]
  %v302 = vld [vmem:[%s0 + $0x8a8] sm:$0xff]
  %v303 = vld [vmem:[%s0 + $0x8b0] sm:$0xff]
  %v304 = vld [vmem:[%s0 + $0x8b8] sm:$0xff]
  %v305 = vld [vmem:[%s0 + $0x8c0] sm:$0xff]
  %v306 = vld [vmem:[%s0 + $0x8c8] sm:$0xff]
  %v307 = vld [vmem:[%s0 + $0x8d0] sm:$0xff]
  %v308 = vld [vmem:[%s0 + $0x8d8] sm:$0xff]
  %v309 = vld [vmem:[%s0 + $0x8e0] sm:$0xff]
  %v310 = vld [vmem:[%s0 + $0x8e8] sm:$0xff]
  %v311 = vld [vmem:[%s0 + $0x8f0] sm:$0xff]
  %v312 = vld [vmem:[%s0 + $0x8f8] sm:$0xff]
  %v313 = vld [vmem:[%s0 + $0x900] sm:$0xff]
  %v314 = vld [vmem:[%s0 + $0x908] sm:$0xff]
  %v315 = vld [vmem:[%s0 + $0x910] sm:$0xff]
  %v316 = vld [vmem:[%s0 + $0x918] sm:$0xff]
  %v317 = vld [vmem:[%s0 + $0x920] sm:$0xff]
  %v318 = vld [vmem:[%s0 + $0x928] sm:$0xff]
  %v319 = vld [vmem:[%s0 + $0x930] sm:$0xff]
  %v320 = vld [vmem:[%s0 + $0x938] sm:$0xff]
  %v321 = vld [vmem:[%s0 + $0x940] sm:$0xff]
  %v322 = vld [vmem:[%s0 + $0x948] sm:$0xff]
  %v323 = vld [vmem:[%s0 + $0x950] sm:$0xff]
  %v324 = vld [vmem:[%s0 + $0x958] sm:$0xff]
  %v325 = vld [vmem:[%s0 + $0x960] sm:$0xff]
  %v326 = vld [vmem:[%s0 + $0x968] sm:$0xff]
  %v327 = vld [vmem:[%s0 + $0x970] sm:$0xff]
  %v328 = vld [vmem:[%s0 + $0x978] sm:$0xff]
  %v329 = vld [vmem:[%s0 + $0x980] sm:$0xff]
  %v330 = vld [vmem:[%s0 + $0x988] sm:$0xff]
  %v331 = vld [vmem:[%s0 + $0x990] sm:$0xff]
  %v332 = vld [vmem:[%s0 + $0x998] sm:$0xff]
  %v333 = vld [vmem:[%s0 + $0x9a0] sm:$0xff]
  %v334 = vld [vmem:[%s0 + $0x9a8] sm:$0xff]
  %v335 = vld [vmem:[%s0 + $0x9b0] sm:$0xff]
  %v336 = vld [vmem:[%s0 + $0x9b8] sm:$0xff]
  %v337 = vld [vmem:[%s0 + $0x9c0] sm:$0xff]
  %v338 = vld [vmem:[%s0 + $0x9c8] sm:$0xff]
  %v339 = vld [vmem:[%s0 + $0x9d0] sm:$0xff]
  %v340 = vld [vmem:[%s0 + $0x9d8] sm:$0xff]
  %v341 = vld [vmem:[%s0 + $0x9e0] sm:$0xff]
  %v342 = vld [vmem:[%s0 + $0x9e8] sm:$0xff]
  %v343 = vld [vmem:[%s0 + $0x9f0] sm:$0xff]
  %v344 = vld [vmem:[%s0 + $0x9f8] sm:$0xff]
  %v345 = vld [vmem:[%s0 + $0xa00] sm:$0xff]
  %v346 = vld [vmem:[%s0 + $0xa08] sm:$0xff]
  %v347 = vld [vmem:[%s0 + $0xa10] sm:$0xff]
  %v348 = vld [vmem:[%s0 + $0xa18] sm:$0xff]
  %v349 = vld [vmem:[%s0 + $0xa20] sm:$0xff]
  %v350 = vld [vmem:[%s0 + $0xa28] sm:$0xff]
  %v351 = vld [vmem:[%s0 + $0xa30] sm:$0xff]
  %v352 = vld [vmem:[%s0 + $0xa38] sm:$0xff]
  %v353 = vld [vmem:[%s0 + $0xa40] sm:$0xff]
  %v354 = vld [vmem:[%s0 + $0xa48] sm:$0xff]
  %v355 = vld [vmem:[%s0 + $0xa50] sm:$0xff]
  %v356 = vld [vmem:[%s0 + $0xa58] sm:$0xff]
  %v357 = vld [vmem:[%s0 + $0xa60] sm:$0xff]
  %v358 = vld [vmem:[%s0 + $0xa68] sm:$0xff]
  %v359 = vld [vmem:[%s0 + $0xa70] sm:$0xff]
  %v360 = vld [vmem:[%s0 + $0xa78] sm:$0xff]
  %v361 = vld [vmem:[%s0 + $0xa80] sm:$0xff]
  %v362 = vld [vmem:[%s0 + $0xa88] sm:$0xff]
  %v363 = vld [vmem:[%s0 + $0xa90] sm:$0xff]
  %v364 = vld [vmem:[%s0 + $0xa98] sm:$0xff]
  %v365 = vld [vmem:[%s0 + $0xaa0] sm:$0xff]
  %v366 = vld [vmem:[%s0 + $0xaa8] sm:$0xff]
  %v367 = vld [vmem:[%s0 + $0xab0] sm:$0xff]
  %v368 = vld [vmem:[%s0 + $0xab8] sm:$0xff]
  %v369 = vld [vmem:[%s0 + $0xac0] sm:$0xff]
  %v370 = vld [vmem:[%s0 + $0xac8] sm:$0xff]
  %v371 = vld [vmem:[%s0 + $0xad0] sm:$0xff]
  %v372 = vld [vmem:[%s0 + $0xad8] sm:$0xff]
  %v373 = vld [vmem:[%s0 + $0xae0] sm:$0xff]
  %v374 = vld [vmem:[%s0 + $0xae8] sm:$0xff]
  %v375 = vld [vmem:[%s0 + $0xaf0] sm:$0xff]
  %v376 = vld [vmem:[%s0 + $0xaf8] sm:$0xff]
  %v377 = vld [vmem:[%s0 + $0xb00] sm:$0xff]
  %v378 = vld [vmem:[%s0 + $0xb08] sm:$0xff]
  %v379 = vld [vmem:[%s0 + $0xb10] sm:$0xff]
  %v380 = vld [vmem:[%s0 + $0xb18] sm:$0xff]
  %v381 = vld [vmem:[%s0 + $0xb20] sm:$0xff]
  %v382 = vld [vmem:[%s0 + $0xb28] sm:$0xff]
  %v383 = vld [vmem:[%s0 + $0xb30] sm:$0xff]
  %v384 = vld [vmem:[%s0 + $0xb38] sm:$0xff]
  %v385 = vld [vmem:[%s0 + $0xb40] sm:$0xff]
  %v386 = vld [vmem:[%s0 + $0xb48] sm:$0xff]
  %v387 = vld [vmem:[%s0 + $0xb50] sm:$0xff]
  %v388 = vld [vmem:[%s0 + $0xb58] sm:$0xff]
  %v389 = vld [vmem:[%s0 + $0xb60] sm:$0xff]
  %v390 = vld [vmem:[%s0 + $0xb68] sm:$0xff]
  %v391 = vld [vmem:[%s0 + $0xb70] sm:$0xff]
  %v392 = vld [vmem:[%s0 + $0xb78] sm:$0xff]
  %v393 = vld [vmem:[%s0 + $0xb80] sm:$0xff]
  %v394 = vld [vmem:[%s0 + $0xb88] sm:$0xff]
  %v395 = vld [vmem:[%s0 + $0xb90] sm:$0xff]
  %v396 = vld [vmem:[%s0 + $0xb98] sm:$0xff]
  %v397 = vld [vmem:[%s0 + $0xba0] sm:$0xff]
  %v398 = vld [vmem:[%s0 + $0xba8] sm:$0xff]
  %v399 = vld [vmem:[%s0 + $0xbb0] sm:$0xff]
  %v400 = vld [vmem:[%s0 + $0xbb8] sm:$0xff]
  %v401 = vld [vmem:[%s0 + $0xbc0] sm:$0xff]
  %v402 = vld [vmem:[%s0 + $0xbc8] sm:$0xff]
  %v403 = vld [vmem:[%s0 + $0xbd0] sm:$0xff]
  %v404 = vld [vmem:[%s0 + $0xbd8] sm:$0xff]
  %v405 = vld [vmem:[%s0 + $0xbe0] sm:$0xff]
  %v406 = vld [vmem:[%s0 + $0xbe8] sm:$0xff]
  %v407 = vld [vmem:[%s0 + $0xbf0] sm:$0xff]
  %v408 = vld [vmem:[%s0 + $0xbf8] sm:$0xff]
  %v409 = vld [vmem:[%s0 + $0xc00] sm:$0xff]
  %v410 = vld [vmem:[%s0 + $0xc08] sm:$0xff]
  %v411 = vld [vmem:[%s0 + $0xc10] sm:$0xff]
  %v412 = vld [vmem:[%s0 + $0xc18] sm:$0xff]
  %v413 = vld [vmem:[%s0 + $0xc20] sm:$0xff]
  %v414 = vld [vmem:[%s0 + $0xc28] sm:$0xff]
  %v415 = vld [vmem:[%s0 + $0xc30] sm:$0xff]
  %v416 = vld [vmem:[%s0 + $0xc38] sm:$0xff]
  %v417 = vld [vmem:[%s0 + $0xc40] sm:$0xff]
  %v418 = vld [vmem:[%s0 + $0xc48] sm:$0xff]
  %v419 = vld [vmem:[%s0 + $0xc50] sm:$0xff]
  %v420 = vld [vmem:[%s0 + $0xc58] sm:$0xff]
  %v421 = vld [vmem:[%s0 + $0xc60] sm:$0xff]
  %v422 = vld [vmem:[%s0 + $0xc68] sm:$0xff]
  %v423 = vld [vmem:[%s0 + $0xc70] sm:$0xff]
  %v424 = vld [vmem:[%s0 + $0xc78] sm:$0xff]
  %v425 = vld [vmem:[%s0 + $0xc80] sm:$0xff]
  %v426 = vld [vmem:[%s0 + $0xc88] sm:$0xff]
  %v427 = vld [vmem:[%s0 + $0xc90] sm:$0xff]
  %v428 = vld [vmem:[%s0 + $0xc98] sm:$0xff]
  %v429 = vld [vmem:[%s0 + $0xca0] sm:$0xff]
  %v430 = vld [vmem:[%s0 + $0xca8] sm:$0xff]
  %v431 = vld [vmem:[%s0 + $0xcb0] sm:$0xff]
  %v432 = vld [vmem:[%s0 + $0xcb8] sm:$0xff]
  %v433 = vld [vmem:[%s0 + $0xcc0] sm:$0xff]
  %v434 = vld [vmem:[%s0 + $0xcc8] sm:$0xff]
  %v435 = vld [vmem:[%s0 + $0xcd0] sm:$0xff]
  %v436 = vld [vmem:[%s0 + $0xcd8] sm:$0xff]
  %v437 = vld [vmem:[%s0 + $0xce0] sm:$0xff]
  %v438 = vld [vmem:[%s0 + $0xce8] sm:$0xff]
  %v439 = vld [vmem:[%s0 + $0xcf0] sm:$0xff]
  %v440 = vld [vmem:[%s0 + $0xcf8] sm:$0xff]
  %v441 = vld [vmem:[%s0 + $0xd00] sm:$0xff]
  %v442 = vld [vmem:[%s0 + $0xd08] sm:$0xff]
  %v443 = vld [vmem:[%s0 + $0xd10] sm:$0xff]
  %v444 = vld [vmem:[%s0 + $0xd18] sm:$0xff]
  %v445 = vld [vmem:[%s0 + $0xd20] sm:$0xff]
  %v446 = vld [vmem:[%s0 + $0xd28] sm:$0xff]
  %v447 = vld [vmem:[%s0 + $0xd30] sm:$0xff]
  %v448 = vld [vmem:[%s0 + $0xd38] sm:$0xff]
  %v449 = vld [vmem:[%s0 + $0xd40] sm:$0xff]
  %v450 = vld [vmem:[%s0 + $0xd48] sm:$0xff]
  %v451 = vld [vmem:[%s0 + $0xd50] sm:$0xff]
  %v452 = vld [vmem:[%s0 + $0xd58] sm:$0xff]
  %v453 = vld [vmem:[%s0 + $0xd60] sm:$0xff]
  %v454 = vld [vmem:[%s0 + $0xd68] sm:$0xff]
  %v455 = vld [vmem:[%s0 + $0xd70] sm:$0xff]
  %v456 = vld [vmem:[%s0 + $0xd78] sm:$0xff]
  %v457 = vld [vmem:[%s0 + $0xd80] sm:$0xff]
  %v458 = vld [vmem:[%s0 + $0xd88] sm:$0xff]
  %v459 = vld [vmem:[%s0 + $0xd90] sm:$0xff]
  %v460 = vld [vmem:[%s0 + $0xd98] sm:$0xff]
  %v461 = vld [vmem:[%s0 + $0xda0] sm:$0xff]
  %v462 = vld [vmem:[%s0 + $0xda8] sm:$0xff]
  %v463 = vld [vmem:[%s0 + $0xdb0] sm:$0xff]
  %v464 = vld [vmem:[%s0 + $0xdb8] sm:$0xff]
  %v465 = vld [vmem:[%s0 + $0xdc0] sm:$0xff]
  %v466 = vld [vmem:[%s0 + $0xdc8] sm:$0xff]
  %v467 = vld [vmem:[%s0 + $0xdd0] sm:$0xff]
  %v468 = vld [vmem:[%s0 + $0xdd8] sm:$0xff]
  %v469 = vld [vmem:[%s0 + $0xde0] sm:$0xff]
  %v470 = vld [vmem:[%s0 + $0xde8] sm:$0xff]
  %v471 = vld [vmem:[%s0 + $0xdf0] sm:$0xff]
  %v472 = vld [vmem:[%s0 + $0xdf8] sm:$0xff]
  %v473 = vld [vmem:[%s0 + $0xe00] sm:$0xff]
  %v474 = vld [vmem:[%s0 + $0xe08] sm:$0xff]
  %v475 = vld [vmem:[%s0 + $0xe10] sm:$0xff]
  %v476 = vld [vmem:[%s0 + $0xe18] sm:$0xff]
  %v477 = vld [vmem:[%s0 + $0xe20] sm:$0xff]
  %v478 = vld [vmem:[%s0 + $0xe28] sm:$0xff]
  %v479 = vld [vmem:[%s0 + $0xe30] sm:$0xff]
  %v480 = vld [vmem:[%s0 + $0xe38] sm:$0xff]
  %v481 = vld [vmem:[%s0 + $0xe40] sm:$0xff]
  %v482 = vld [vmem:[%s0 + $0xe48] sm:$0xff]
  %v483 = vld [vmem:[%s0 + $0xe50] sm:$0xff]
  %v484 = vld [vmem:[%s0 + $0xe58] sm:$0xff]
  %v485 = vld [vmem:[%s0 + $0xe60] sm:$0xff]
  %v486 = vld [vmem:[%s0 + $0xe68] sm:$0xff]
  %v487 = vld [vmem:[%s0 + $0xe70] sm:$0xff]
  %v488 = vld [vmem:[%s0 + $0xe78] sm:$0xff]
  %v489 = vld [vmem:[%s0 + $0xe80] sm:$0xff]
  %v490 = vld [vmem:[%s0 + $0xe88] sm:$0xff]
  %v491 = vld [vmem:[%s0 + $0xe90] sm:$0xff]
  %v492 = vld [vmem:[%s0 + $0xe98] sm:$0xff]
  %v493 = vld [vmem:[%s0 + $0xea0] sm:$0xff]
  %v494 = vld [vmem:[%s0 + $0xea8] sm:$0xff]
  %v495 = vld [vmem:[%s0 + $0xeb0] sm:$0xff]
  %v496 = vld [vmem:[%s0 + $0xeb8] sm:$0xff]
  %v497 = vld [vmem:[%s0 + $0xec0] sm:$0xff]
  %v498 = vld [vmem:[%s0 + $0xec8] sm:$0xff]
  %v499 = vld [vmem:[%s0 + $0xed0] sm:$0xff]
  %v500 = vld [vmem:[%s0 + $0xed8] sm:$0xff]
  %v501 = vld [vmem:[%s0 + $0xee0] sm:$0xff]
  %v502 = vld [vmem:[%s0 + $0xee8] sm:$0xff]
  %v503 = vld [vmem:[%s0 + $0xef0] sm:$0xff]
  %v504 = vld [vmem:[%s0 + $0xef8] sm:$0xff]
  %v505 = vld [vmem:[%s0 + $0xf00] sm:$0xff]
  %v506 = vld [vmem:[%s0 + $0xf08] sm:$0xff]
  %v507 = vld [vmem:[%s0 + $0xf10] sm:$0xff]
  %v508 = vld [vmem:[%s0 + $0xf18] sm:$0xff]
  %v509 = vld [vmem:[%s0 + $0xf20] sm:$0xff]
  %v510 = vld [vmem:[%s0 + $0xf28] sm:$0xff]
  %v511 = vld [vmem:[%s0 + $0xf30] sm:$0xff]
  %v512 = vld [vmem:[%s0 + $0xf38] sm:$0xff]
  %v513 = vld [vmem:[%s0 + $0xf40] sm:$0xff]
  %v514 = vld [vmem:[%s0 + $0xf48] sm:$0xff]
  %v515 = vld [vmem:[%s0 + $0xf50] sm:$0xff]
  %v516 = vld [vmem:[%s0 + $0xf58] sm:$0xff]
  %v517 = vld [vmem:[%s0 + $0xf60] sm:$0xff]
  %v518 = vld [vmem:[%s0 + $0xf68] sm:$0xff]
  %v519 = vld [vmem:[%s0 + $0xf70] sm:$0xff]
  %v520 = vld [vmem:[%s0 + $0xf78] sm:$0xff]
  %v521 = vld [vmem:[%s0 + $0xf80] sm:$0xff]
  %v522 = vld [vmem:[%s0 + $0xf88] sm:$0xff]
  %v523 = vld [vmem:[%s0 + $0xf90] sm:$0xff]
  %v524 = vld [vmem:[%s0 + $0xf98] sm:$0xff]
  %v525 = vld [vmem:[%s0 + $0xfa0] sm:$0xff]
  %v526 = vld [vmem:[%s0 + $0xfa8] sm:$0xff]
  %v527 = vld [vmem:[%s0 + $0xfb0] sm:$0xff]
  %v528 = vld [vmem:[%s0 + $0xfb8] sm:$0xff]
  %v529 = vld [vmem:[%s0 + $0xfc0] sm:$0xff]
  %v530 = vld [vmem:[%s0 + $0xfc8] sm:$0xff]
  %v531 = vld [vmem:[%s0 + $0xfd0] sm:$0xff]
  %v532 = vld [vmem:[%s0 + $0xfd8] sm:$0xff]
  %v533 = vld [vmem:[%s0 + $0xfe0] sm:$0xff]
  %v534 = vld [vmem:[%s0 + $0xfe8] sm:$0xff]
  %v535 = vld [vmem:[%s0 + $0xff0] sm:$0xff]
  %v536 = vld [vmem:[%s0 + $0xff8] sm:$0xff]
  %v537 = vld [vmem:[%s0 + $0x1000] sm:$0xff]
  %v538 = vld [vmem:[%s0 + $0x1008] sm:$0xff]
  %v539 = vld [vmem:[%s0 + $0x1010] sm:$0xff]
  %v540 = vld [vmem:[%s0 + $0x1018] sm:$0xff]
  %v541 = vld [vmem:[%s0 + $0x1020] sm:$0xff]
  %v542 = vld [vmem:[%s0 + $0x1028] sm:$0xff]
  %v543 = vld [vmem:[%s0 + $0x1030] sm:$0xff]
  %v544 = vld [vmem:[%s0 + $0x1038] sm:$0xff]
  %v545 = vld [vmem:[%s0 + $0x1040] sm:$0xff]
  %v546 = vld [vmem:[%s0 + $0x1048] sm:$0xff]
  %v547 = vld [vmem:[%s0 + $0x1050] sm:$0xff]
  %v548 = vld [vmem:[%s0 + $0x1058] sm:$0xff]
  %v549 = vld [vmem:[%s0 + $0x1060] sm:$0xff]
  %v550 = vld [vmem:[%s0 + $0x1068] sm:$0xff]
  %v551 = vld [vmem:[%s0 + $0x1070] sm:$0xff]
  %v552 = vld [vmem:[%s0 + $0x1078] sm:$0xff]
  %v553 = vld [vmem:[%s0 + $0x1080] sm:$0xff]
  %v554 = vld [vmem:[%s0 + $0x1088] sm:$0xff]
  %v555 = vld [vmem:[%s0 + $0x1090] sm:$0xff]
  %v556 = vld [vmem:[%s0 + $0x1098] sm:$0xff]
  %v557 = vld [vmem:[%s0 + $0x10a0] sm:$0xff]
  %v558 = vld [vmem:[%s0 + $0x10a8] sm:$0xff]
  %v559 = vld [vmem:[%s0 + $0x10b0] sm:$0xff]
  %v560 = vld [vmem:[%s0 + $0x10b8] sm:$0xff]
  %v561 = vld [vmem:[%s0 + $0x10c0] sm:$0xff]
  %v562 = vld [vmem:[%s0 + $0x10c8] sm:$0xff]
  %v563 = vld [vmem:[%s0 + $0x10d0] sm:$0xff]
  %v564 = vld [vmem:[%s0 + $0x10d8] sm:$0xff]
  %v565 = vld [vmem:[%s0 + $0x10e0] sm:$0xff]
  %v566 = vld [vmem:[%s0 + $0x10e8] sm:$0xff]
  %v567 = vld [vmem:[%s0 + $0x10f0] sm:$0xff]
  %v568 = vld [vmem:[%s0 + $0x10f8] sm:$0xff]
  %v569 = vld [vmem:[%s0 + $0x1100] sm:$0xff]
  %v570 = vld [vmem:[%s0 + $0x1108] sm:$0xff]
  %v571 = vld [vmem:[%s0 + $0x1110] sm:$0xff]
  %v572 = vld [vmem:[%s0 + $0x1118] sm:$0xff]
  %v573 = vld [vmem:[%s0 + $0x1120] sm:$0xff]
  %v574 = vld [vmem:[%s0 + $0x1128] sm:$0xff]
  %v575 = vld [vmem:[%s0 + $0x1130] sm:$0xff]
  %v576 = vld [vmem:[%s0 + $0x1138] sm:$0xff]
  %v577 = vld [vmem:[%s0 + $0x1140] sm:$0xff]
  %v578 = vld [vmem:[%s0 + $0x1148] sm:$0xff]
  %v579 = vld [vmem:[%s0 + $0x1150] sm:$0xff]
  %v580 = vld [vmem:[%s0 + $0x1158] sm:$0xff]
  %v581 = vld [vmem:[%s0 + $0x1160] sm:$0xff]
  %v582 = vld [vmem:[%s0 + $0x1168] sm:$0xff]
  %v583 = vld [vmem:[%s0 + $0x1170] sm:$0xff]
  %v584 = vld [vmem:[%s0 + $0x1178] sm:$0xff]
  %v585 = vld [vmem:[%s0 + $0x1180] sm:$0xff]
  %v586 = vld [vmem:[%s0 + $0x1188] sm:$0xff]
  %v587 = vld [vmem:[%s0 + $0x1190] sm:$0xff]
  %v588 = vld [vmem:[%s0 + $0x1198] sm:$0xff]
  %v589 = vld [vmem:[%s0 + $0x11a0] sm:$0xff]
  %v590 = vld [vmem:[%s0 + $0x11a8] sm:$0xff]
  %v591 = vld [vmem:[%s0 + $0x11b0] sm:$0xff]
  %v592 = vld [vmem:[%s0 + $0x11b8] sm:$0xff]
  %v593 = vld [vmem:[%s0 + $0x11c0] sm:$0xff]
  %v594 = vld [vmem:[%s0 + $0x11c8] sm:$0xff]
  %v595 = vld [vmem:[%s0 + $0x11d0] sm:$0xff]
  %v596 = vld [vmem:[%s0 + $0x11d8] sm:$0xff]
  %v597 = vld [vmem:[%s0 + $0x11e0] sm:$0xff]
  %v598 = vld [vmem:[%s0 + $0x11e8] sm:$0xff]
  %v599 = vld [vmem:[%s0 + $0x11f0] sm:$0xff]
  %v600 = vld [vmem:[%s0 + $0x11f8] sm:$0xff]
  %v601 = vld [vmem:[%s0 + $0x1200] sm:$0xff]
  %v602 = vld [vmem:[%s0 + $0x1208] sm:$0xff]
  %v603 = vld [vmem:[%s0 + $0x1210] sm:$0xff]
  %v604 = vld [vmem:[%s0 + $0x1218] sm:$0xff]
  %v605 = vld [vmem:[%s0 + $0x1220] sm:$0xff]
  %v606 = vld [vmem:[%s0 + $0x1228] sm:$0xff]
  %v607 = vld [vmem:[%s0 + $0x1230] sm:$0xff]
  %v608 = vld [vmem:[%s0 + $0x1238] sm:$0xff]
  %v609 = vld [vmem:[%s0 + $0x1240] sm:$0xff]
  %v610 = vld [vmem:[%s0 + $0x1248] sm:$0xff]
  %v611 = vld [vmem:[%s0 + $0x1250] sm:$0xff]
  %v612 = vld [vmem:[%s0 + $0x1258] sm:$0xff]
  %v613 = vld [vmem:[%s0 + $0x1260] sm:$0xff]
  %v614 = vld [vmem:[%s0 + $0x1268] sm:$0xff]
  %v615 = vld [vmem:[%s0 + $0x1270] sm:$0xff]
  %v616 = vld [vmem:[%s0 + $0x1278] sm:$0xff]
  %v617 = vld [vmem:[%s0 + $0x1280] sm:$0xff]
  %v618 = vld [vmem:[%s0 + $0x1288] sm:$0xff]
  %v619 = vld [vmem:[%s0 + $0x1290] sm:$0xff]
  %v620 = vld [vmem:[%s0 + $0x1298] sm:$0xff]
  %v621 = vld [vmem:[%s0 + $0x12a0] sm:$0xff]
  %v622 = vld [vmem:[%s0 + $0x12a8] sm:$0xff]
  %v623 = vld [vmem:[%s0 + $0x12b0] sm:$0xff]
  %v624 = vld [vmem:[%s0 + $0x12b8] sm:$0xff]
  %v625 = vld [vmem:[%s0 + $0x12c0] sm:$0xff]
  %v626 = vld [vmem:[%s0 + $0x12c8] sm:$0xff]
  %v627 = vld [vmem:[%s0 + $0x12d0] sm:$0xff]
  %v628 = vld [vmem:[%s0 + $0x12d8] sm:$0xff]
  %v629 = vld [vmem:[%s0 + $0x12e0] sm:$0xff]
  %v630 = vld [vmem:[%s0 + $0x12e8] sm:$0xff]
  %v631 = vld [vmem:[%s0 + $0x12f0] sm:$0xff]
  %v632 = vld [vmem:[%s0 + $0x12f8] sm:$0xff]
  %v633 = vld [vmem:[%s0 + $0x1300] sm:$0xff]
  %v634 = vld [vmem:[%s0 + $0x1308] sm:$0xff]
  %v635 = vld [vmem:[%s0 + $0x1310] sm:$0xff]
  %v636 = vld [vmem:[%s0 + $0x1318] sm:$0xff]
  %v637 = vld [vmem:[%s0 + $0x1320] sm:$0xff]
  %v638 = vld [vmem:[%s0 + $0x1328] sm:$0xff]
  %v639 = vld [vmem:[%s0 + $0x1330] sm:$0xff]
  %v640 = vld [vmem:[%s0 + $0x1338] sm:$0xff]
  %v641 = vld [vmem:[%s0 + $0x1340] sm:$0xff]
  %v642 = vld [vmem:[%s0 + $0x1348] sm:$0xff]
  %v643 = vld [vmem:[%s0 + $0x1350] sm:$0xff]
  %v644 = vld [vmem:[%s0 + $0x1358] sm:$0xff]
  %v645 = vld [vmem:[%s0 + $0x1360] sm:$0xff]
  %v646 = vld [vmem:[%s0 + $0x1368] sm:$0xff]
  %v647 = vld [vmem:[%s0 + $0x1370] sm:$0xff]
  %v648 = vld [vmem:[%s0 + $0x1378] sm:$0xff]
  %v649 = vld [vmem:[%s0 + $0x1380] sm:$0xff]
  %v650 = vld [vmem:[%s0 + $0x1388] sm:$0xff]
  %v651 = vld [vmem:[%s0 + $0x1390] sm:$0xff]
  %v652 = vld [vmem:[%s0 + $0x1398] sm:$0xff]
  %v653 = vld [vmem:[%s0 + $0x13a0] sm:$0xff]
  %v654 = vld [vmem:[%s0 + $0x13a8] sm:$0xff]
  %v655 = vld [vmem:[%s0 + $0x13b0] sm:$0xff]
  %v656 = vld [vmem:[%s0 + $0x13b8] sm:$0xff]
  %v657 = vld [vmem:[%s0 + $0x13c0] sm:$0xff]
  %v658 = vld [vmem:[%s0 + $0x13c8] sm:$0xff]
  %v659 = vld [vmem:[%s0 + $0x13d0] sm:$0xff]
  %v660 = vld [vmem:[%s0 + $0x13d8] sm:$0xff]
  %v661 = vld [vmem:[%s0 + $0x13e0] sm:$0xff]
  %v662 = vld [vmem:[%s0 + $0x13e8] sm:$0xff]
  %v663 = vld [vmem:[%s0 + $0x13f0] sm:$0xff]
  %v664 = vld [vmem:[%s0 + $0x13f8] sm:$0xff]
  %v665 = vld [vmem:[%s0 + $0x1400] sm:$0xff]
  %v666 = vld [vmem:[%s0 + $0x1408] sm:$0xff]
  %v667 = vld [vmem:[%s0 + $0x1410] sm:$0xff]
  %v668 = vld [vmem:[%s0 + $0x1418] sm:$0xff]
  %v669 = vld [vmem:[%s0 + $0x1420] sm:$0xff]
  %v670 = vld [vmem:[%s0 + $0x1428] sm:$0xff]
  %v671 = vld [vmem:[%s0 + $0x1430] sm:$0xff]
  %v672 = vld [vmem:[%s0 + $0x1438] sm:$0xff]
  %v673 = vld [vmem:[%s0 + $0x1440] sm:$0xff]
  %v674 = vld [vmem:[%s0 + $0x1448] sm:$0xff]
  %v675 = vld [vmem:[%s0 + $0x1450] sm:$0xff]
  %v676 = vld [vmem:[%s0 + $0x1458] sm:$0xff]
  %v677 = vld [vmem:[%s0 + $0x1460] sm:$0xff]
  %v678 = vld [vmem:[%s0 + $0x1468] sm:$0xff]
  %v679 = vld [vmem:[%s0 + $0x1470] sm:$0xff]
  %v680 = vld [vmem:[%s0 + $0x1478] sm:$0xff]
  %v681 = vld [vmem:[%s0 + $0x1480] sm:$0xff]
  %v682 = vld [vmem:[%s0 + $0x1488] sm:$0xff]
  %v683 = vld [vmem:[%s0 + $0x1490] sm:$0xff]
  %v684 = vld [vmem:[%s0 + $0x1498] sm:$0xff]
  %v685 = vld [vmem:[%s0 + $0x14a0] sm:$0xff]
  %v686 = vld [vmem:[%s0 + $0x14a8] sm:$0xff]
  %v687 = vld [vmem:[%s0 + $0x14b0] sm:$0xff]
  %v688 = vld [vmem:[%s0 + $0x14b8] sm:$0xff]
  %v689 = vld [vmem:[%s0 + $0x14c0] sm:$0xff]
  %v690 = vld [vmem:[%s0 + $0x14c8] sm:$0xff]
  %v691 = vld [vmem:[%s0 + $0x14d0] sm:$0xff]
  %v692 = vld [vmem:[%s0 + $0x14d8] sm:$0xff]
  %v693 = vld [vmem:[%s0 + $0x14e0] sm:$0xff]
  %v694 = vld [vmem:[%s0 + $0x14e8] sm:$0xff]
  %v695 = vld [vmem:[%s0 + $0x14f0] sm:$0xff]
  %v696 = vld [vmem:[%s0 + $0x14f8] sm:$0xff]
  %v697 = vld [vmem:[%s0 + $0x1500] sm:$0xff]
  %v698 = vld [vmem:[%s0 + $0x1508] sm:$0xff]
  %v699 = vld [vmem:[%s0 + $0x1510] sm:$0xff]
  %v700 = vld [vmem:[%s0 + $0x1518] sm:$0xff]
  %v701 = vld [vmem:[%s0 + $0x1520] sm:$0xff]
  %v702 = vld [vmem:[%s0 + $0x1528] sm:$0xff]
  %v703 = vld [vmem:[%s0 + $0x1530] sm:$0xff]
  %v704 = vld [vmem:[%s0 + $0x1538] sm:$0xff]
  %v705 = vld [vmem:[%s0 + $0x1540] sm:$0xff]
  %v706 = vld [vmem:[%s0 + $0x1548] sm:$0xff]
  %v707 = vld [vmem:[%s0 + $0x1550] sm:$0xff]
  %v708 = vld [vmem:[%s0 + $0x1558] sm:$0xff]
  %v709 = vld [vmem:[%s0 + $0x1560] sm:$0xff]
  %v710 = vld [vmem:[%s0 + $0x1568] sm:$0xff]
  %v711 = vld [vmem:[%s0 + $0x1570] sm:$0xff]
  %v712 = vld [vmem:[%s0 + $0x1578] sm:$0xff]
  %v713 = vld [vmem:[%s0 + $0x1580] sm:$0xff]
  %v714 = vld [vmem:[%s0 + $0x1588] sm:$0xff]
  %v715 = vld [vmem:[%s0 + $0x1590] sm:$0xff]
  %v716 = vld [vmem:[%s0 + $0x1598] sm:$0xff]
  %v717 = vld [vmem:[%s0 + $0x15a0] sm:$0xff]
  %v718 = vld [vmem:[%s0 + $0x15a8] sm:$0xff]
  %v719 = vld [vmem:[%s0 + $0x15b0] sm:$0xff]
  %v720 = vld [vmem:[%s0 + $0x15b8] sm:$0xff]
  %v721 = vld [vmem:[%s0 + $0x15c0] sm:$0xff]
  %v722 = vld [vmem:[%s0 + $0x15c8] sm:$0xff]
  %v723 = vld [vmem:[%s0 + $0x15d0] sm:$0xff]
  %v724 = vld [vmem:[%s0 + $0x15d8] sm:$0xff]
  %v725 = vld [vmem:[%s0 + $0x15e0] sm:$0xff]
  %v726 = vld [vmem:[%s0 + $0x15e8] sm:$0xff]
  %v727 = vld [vmem:[%s0 + $0x15f0] sm:$0xff]
  %v728 = vld [vmem:[%s0 + $0x15f8] sm:$0xff]
  %v729 = vld [vmem:[%s0 + $0x1600] sm:$0xff]
  %v730 = vld [vmem:[%s0 + $0x1608] sm:$0xff]
  %v731 = vld [vmem:[%s0 + $0x1610] sm:$0xff]
  %v732 = vld [vmem:[%s0 + $0x1618] sm:$0xff]
  %v733 = vld [vmem:[%s0 + $0x1620] sm:$0xff]
  %v734 = vld [vmem:[%s0 + $0x1628] sm:$0xff]
  %v735 = vld [vmem:[%s0 + $0x1630] sm:$0xff]
  %v736 = vld [vmem:[%s0 + $0x1638] sm:$0xff]
  %v737 = vld [vmem:[%s0 + $0x1640] sm:$0xff]
  %v738 = vld [vmem:[%s0 + $0x1648] sm:$0xff]
  %v739 = vld [vmem:[%s0 + $0x1650] sm:$0xff]
  %v740 = vld [vmem:[%s0 + $0x1658] sm:$0xff]
  %v741 = vld [vmem:[%s0 + $0x1660] sm:$0xff]
  %v742 = vld [vmem:[%s0 + $0x1668] sm:$0xff]
  %v743 = vld [vmem:[%s0 + $0x1670] sm:$0xff]
  %v744 = vld [vmem:[%s0 + $0x1678] sm:$0xff]
  %v745 = vld [vmem:[%s0 + $0x1680] sm:$0xff]
  %v746 = vld [vmem:[%s0 + $0x1688] sm:$0xff]
  %v747 = vld [vmem:[%s0 + $0x1690] sm:$0xff]
  %v748 = vld [vmem:[%s0 + $0x1698] sm:$0xff]
  %v749 = vld [vmem:[%s0 + $0x16a0] sm:$0xff]
  %v750 = vld [vmem:[%s0 + $0x16a8] sm:$0xff]
  %v751 = vld [vmem:[%s0 + $0x16b0] sm:$0xff]
  %v752 = vld [vmem:[%s0 + $0x16b8] sm:$0xff]
  %v753 = vld [vmem:[%s0 + $0x16c0] sm:$0xff]
  %v754 = vld [vmem:[%s0 + $0x16c8] sm:$0xff]
  %v755 = vld [vmem:[%s0 + $0x16d0] sm:$0xff]
  %v756 = vld [vmem:[%s0 + $0x16d8] sm:$0xff]
  %v757 = vld [vmem:[%s0 + $0x16e0] sm:$0xff]
  %v758 = vld [vmem:[%s0 + $0x16e8] sm:$0xff]
  %v759 = vld [vmem:[%s0 + $0x16f0] sm:$0xff]
  %v760 = vld [vmem:[%s0 + $0x16f8] sm:$0xff]
  %v761 = vld [vmem:[%s0 + $0x1700] sm:$0xff]
  %v762 = vld [vmem:[%s0 + $0x1708] sm:$0xff]
  %v763 = vld [vmem:[%s0 + $0x1710] sm:$0xff]
  %v764 = vld [vmem:[%s0 + $0x1718] sm:$0xff]
  %v765 = vld [vmem:[%s0 + $0x1720] sm:$0xff]
  %v766 = vld [vmem:[%s0 + $0x1728] sm:$0xff]
  %v767 = vld [vmem:[%s0 + $0x1730] sm:$0xff]
  %v768 = vld [vmem:[%s0 + $0x1738] sm:$0xff]
  %v769 = vld [vmem:[%s0 + $0x1740] sm:$0xff]
  %v770 = vld [vmem:[%s0 + $0x1748] sm:$0xff]
  %v771 = vld [vmem:[%s0 + $0x1750] sm:$0xff]
  %v772 = vld [vmem:[%s0 + $0x1758] sm:$0xff]
  %v773 = vld [vmem:[%s0 + $0x1760] sm:$0xff]
  %v774 = vld [vmem:[%s0 + $0x1768] sm:$0xff]
  %v775 = vld [vmem:[%s0 + $0x1770] sm:$0xff]
  %v776 = vld [vmem:[%s0 + $0x1778] sm:$0xff]
  %v777 = vld [vmem:[%s0 + $0x1780] sm:$0xff]
  %v778 = vld [vmem:[%s0 + $0x1788] sm:$0xff]
  %v779 = vld [vmem:[%s0 + $0x1790] sm:$0xff]
  %v780 = vld [vmem:[%s0 + $0x1798] sm:$0xff]
  %v781 = vld [vmem:[%s0 + $0x17a0] sm:$0xff]
  %v782 = vld [vmem:[%s0 + $0x17a8] sm:$0xff]
  %v783 = vld [vmem:[%s0 + $0x17b0] sm:$0xff]
  %v784 = vld [vmem:[%s0 + $0x17b8] sm:$0xff]
  %v785 = vld [vmem:[%s0 + $0x17c0] sm:$0xff]
  %v786 = vld [vmem:[%s0 + $0x17c8] sm:$0xff]
  %v787 = vld [vmem:[%s0 + $0x17d0] sm:$0xff]
  %v788 = vld [vmem:[%s0 + $0x17d8] sm:$0xff]
  %v789 = vld [vmem:[%s0 + $0x17e0] sm:$0xff]
  %v790 = vld [vmem:[%s0 + $0x17e8] sm:$0xff]
  %v791 = vld [vmem:[%s0 + $0x17f0] sm:$0xff]
  %v792 = vld [vmem:[%s0 + $0x17f8] sm:$0xff]
  %v793 = vld [vmem:[%s0 + $0x1800] sm:$0xff]
  %v794 = vld [vmem:[%s0 + $0x1808] sm:$0xff]
  %v795 = vld [vmem:[%s0 + $0x1810] sm:$0xff]
  %v796 = vld [vmem:[%s0 + $0x1818] sm:$0xff]
  %v797 = vld [vmem:[%s0 + $0x1820] sm:$0xff]
  %v798 = vld [vmem:[%s0 + $0x1828] sm:$0xff]
  %v799 = vld [vmem:[%s0 + $0x1830] sm:$0xff]
  %v800 = vld [vmem:[%s0 + $0x1838] sm:$0xff]
  %v801 = vld [vmem:[%s0 + $0x1840] sm:$0xff]
  %v802 = vld [vmem:[%s0 + $0x1848] sm:$0xff]
  %v803 = vld [vmem:[%s0 + $0x1850] sm:$0xff]
  %v804 = vld [vmem:[%s0 + $0x1858] sm:$0xff]
  %v805 = vld [vmem:[%s0 + $0x1860] sm:$0xff]
  %v806 = vld [vmem:[%s0 + $0x1868] sm:$0xff]
  %v807 = vld [vmem:[%s0 + $0x1870] sm:$0xff]
  %v808 = vld [vmem:[%s0 + $0x1878] sm:$0xff]
  %v809 = vld [vmem:[%s2] sm:$0xff]
  %v810 = vld [vmem:[%s2 + $0x8] sm:$0xff]
  %v811 = vld [vmem:[%s2 + $0x10] sm:$0xff]
  %v812 = vld [vmem:[%s2 + $0x18] sm:$0xff]
  %v813 = vld [vmem:[%s2 + $0x20] sm:$0xff]
  %v814 = vld [vmem:[%s2 + $0x28] sm:$0xff]
  %v815 = vld [vmem:[%s2 + $0x30] sm:$0xff]
  %v816 = vld [vmem:[%s2 + $0x38] sm:$0xff]
  %v817 = vld [vmem:[%s2 + $0x40] sm:$0xff]
  %v818 = vld [vmem:[%s2 + $0x48] sm:$0xff]
  %v819 = vld [vmem:[%s2 + $0x50] sm:$0xff]
  %v820 = vld [vmem:[%s2 + $0x58] sm:$0xff]
  %v821 = vld [vmem:[%s2 + $0x60] sm:$0xff]
  %v822 = vld [vmem:[%s2 + $0x68] sm:$0xff]
  %v823 = vld [vmem:[%s2 + $0x70] sm:$0xff]
  %v824 = vld [vmem:[%s2 + $0x78] sm:$0xff]
  %v825 = vld [vmem:[%s2 + $0x80] sm:$0xff]
  %v826 = vld [vmem:[%s2 + $0x88] sm:$0xff]
  %v827 = vld [vmem:[%s2 + $0x90] sm:$0xff]
  %v828 = vld [vmem:[%s2 + $0x98] sm:$0xff]
  %v829 = vld [vmem:[%s2 + $0xa0] sm:$0xff]
  %v830 = vld [vmem:[%s2 + $0xa8] sm:$0xff]
  %v831 = vld [vmem:[%s2 + $0xb0] sm:$0xff]
  %v832 = vld [vmem:[%s2 + $0xb8] sm:$0xff]
  %v833 = vld [vmem:[%s2 + $0xc0] sm:$0xff]
  %v834 = vld [vmem:[%s2 + $0xc8] sm:$0xff]
  %v835 = vld [vmem:[%s2 + $0xd0] sm:$0xff]
  %v836 = vld [vmem:[%s2 + $0xd8] sm:$0xff]
  %v837 = vld [vmem:[%s2 + $0xe0] sm:$0xff]
  %v838 = vld [vmem:[%s2 + $0xe8] sm:$0xff]
  %v839 = vld [vmem:[%s2 + $0xf0] sm:$0xff]
  %v840 = vld [vmem:[%s2 + $0xf8] sm:$0xff]
  %v841 = vld [vmem:[%s2 + $0x100] sm:$0xff]
  %v842 = vld [vmem:[%s2 + $0x108] sm:$0xff]
  %v843 = vld [vmem:[%s2 + $0x110] sm:$0xff]
  %v844 = vld [vmem:[%s2 + $0x118] sm:$0xff]
  %v845 = vld [vmem:[%s2 + $0x120] sm:$0xff]
  %v846 = vld [vmem:[%s2 + $0x128] sm:$0xff]
  %v847 = vld [vmem:[%s2 + $0x130] sm:$0xff]
  %v848 = vld [vmem:[%s2 + $0x138] sm:$0xff]
  %v849 = vld [vmem:[%s2 + $0x140] sm:$0xff]
  %v850 = vld [vmem:[%s2 + $0x148] sm:$0xff]
  %v851 = vld [vmem:[%s2 + $0x150] sm:$0xff]
  %v852 = vld [vmem:[%s2 + $0x158] sm:$0xff]
  %v853 = vld [vmem:[%s2 + $0x160] sm:$0xff]
  %v854 = vld [vmem:[%s2 + $0x168] sm:$0xff]
  %v855 = vld [vmem:[%s2 + $0x170] sm:$0xff]
  %v856 = vld [vmem:[%s2 + $0x178] sm:$0xff]
  %v857 = vld [vmem:[%s2 + $0x180] sm:$0xff]
  %v858 = vld [vmem:[%s2 + $0x188] sm:$0xff]
  %v859 = vld [vmem:[%s2 + $0x190] sm:$0xff]
  %v860 = vld [vmem:[%s2 + $0x198] sm:$0xff]
  %v861 = vld [vmem:[%s2 + $0x1a0] sm:$0xff]
  %v862 = vld [vmem:[%s2 + $0x1a8] sm:$0xff]
  %v863 = vld [vmem:[%s2 + $0x1b0] sm:$0xff]
  %v864 = vld [vmem:[%s2 + $0x1b8] sm:$0xff]
  %v865 = vld [vmem:[%s2 + $0x1c0] sm:$0xff]
  %v866 = vld [vmem:[%s2 + $0x1c8] sm:$0xff]
  %v867 = vld [vmem:[%s2 + $0x1d0] sm:$0xff]
  %v868 = vld [vmem:[%s2 + $0x1d8] sm:$0xff]
  %v869 = vld [vmem:[%s2 + $0x1e0] sm:$0xff]
  %v870 = vld [vmem:[%s2 + $0x1e8] sm:$0xff]
  %v871 = vld [vmem:[%s2 + $0x1f0] sm:$0xff]
  %v872 = vld [vmem:[%s2 + $0x1f8] sm:$0xff]
  %v873 = vld [vmem:[%s2 + $0x200] sm:$0xff]
  %v874 = vld [vmem:[%s2 + $0x208] sm:$0xff]
  %v875 = vld [vmem:[%s2 + $0x210] sm:$0xff]
  %v876 = vld [vmem:[%s2 + $0x218] sm:$0xff]
  %v877 = vld [vmem:[%s2 + $0x220] sm:$0xff]
  %v878 = vld [vmem:[%s2 + $0x228] sm:$0xff]
  %v879 = vld [vmem:[%s2 + $0x230] sm:$0xff]
  %v880 = vld [vmem:[%s2 + $0x238] sm:$0xff]
  %v881 = vld [vmem:[%s2 + $0x240] sm:$0xff]
  %v882 = vld [vmem:[%s2 + $0x248] sm:$0xff]
  %v883 = vld [vmem:[%s2 + $0x250] sm:$0xff]
  %v884 = vld [vmem:[%s2 + $0x258] sm:$0xff]
  %v885 = vld [vmem:[%s2 + $0x260] sm:$0xff]
  %v886 = vld [vmem:[%s2 + $0x268] sm:$0xff]
  %v887 = vld [vmem:[%s2 + $0x270] sm:$0xff]
  %v888 = vld [vmem:[%s2 + $0x278] sm:$0xff]
  %v889 = vld [vmem:[%s2 + $0x280] sm:$0xff]
  %v890 = vld [vmem:[%s2 + $0x288] sm:$0xff]
  %v891 = vld [vmem:[%s2 + $0x290] sm:$0xff]
  %v892 = vld [vmem:[%s2 + $0x298] sm:$0xff]
  %v893 = vld [vmem:[%s2 + $0x2a0] sm:$0xff]
  %v894 = vld [vmem:[%s2 + $0x2a8] sm:$0xff]
  %v895 = vld [vmem:[%s2 + $0x2b0] sm:$0xff]
  %v896 = vld [vmem:[%s2 + $0x2b8] sm:$0xff]
  %v897 = vld [vmem:[%s2 + $0x2c0] sm:$0xff]
  %v898 = vld [vmem:[%s2 + $0x2c8] sm:$0xff]
  %v899 = vld [vmem:[%s2 + $0x2d0] sm:$0xff]
  %v900 = vld [vmem:[%s2 + $0x2d8] sm:$0xff]
  %v901 = vld [vmem:[%s2 + $0x2e0] sm:$0xff]
  %v902 = vld [vmem:[%s2 + $0x2e8] sm:$0xff]
  %v903 = vld [vmem:[%s2 + $0x2f0] sm:$0xff]
  %v904 = vld [vmem:[%s2 + $0x2f8] sm:$0xff]
  %v905 = vld [vmem:[%s2 + $0x300] sm:$0xff]
  %v906 = vld [vmem:[%s2 + $0x308] sm:$0xff]
  %v907 = vld [vmem:[%s2 + $0x310] sm:$0xff]
  %v908 = vld [vmem:[%s2 + $0x318] sm:$0xff]
  %v909 = vld [vmem:[%s2 + $0x320] sm:$0xff]
  %v910 = vld [vmem:[%s2 + $0x328] sm:$0xff]
  %v911 = vld [vmem:[%s2 + $0x330] sm:$0xff]
  %v912 = vld [vmem:[%s2 + $0x338] sm:$0xff]
  %v913 = vld [vmem:[%s2 + $0x340] sm:$0xff]
  %v914 = vld [vmem:[%s2 + $0x348] sm:$0xff]
  %v915 = vld [vmem:[%s2 + $0x350] sm:$0xff]
  %v916 = vld [vmem:[%s2 + $0x358] sm:$0xff]
  %v917 = vld [vmem:[%s2 + $0x360] sm:$0xff]
  %v918 = vld [vmem:[%s2 + $0x368] sm:$0xff]
  %v919 = vld [vmem:[%s2 + $0x370] sm:$0xff]
  %v920 = vld [vmem:[%s2 + $0x378] sm:$0xff]
  %v921 = vld [vmem:[%s2 + $0x380] sm:$0xff]
  %v922 = vld [vmem:[%s2 + $0x388] sm:$0xff]
  %v923 = vld [vmem:[%s2 + $0x390] sm:$0xff]
  %v924 = vld [vmem:[%s2 + $0x398] sm:$0xff]
  %v925 = vld [vmem:[%s2 + $0x3a0] sm:$0xff]
  %v926 = vld [vmem:[%s2 + $0x3a8] sm:$0xff]
  %v927 = vld [vmem:[%s2 + $0x3b0] sm:$0xff]
  %v928 = vld [vmem:[%s2 + $0x3b8] sm:$0xff]
  %v929 = vld [vmem:[%s2 + $0x3c0] sm:$0xff]
  %v930 = vld [vmem:[%s2 + $0x3c8] sm:$0xff]
  %v931 = vld [vmem:[%s2 + $0x3d0] sm:$0xff]
  %v932 = vld [vmem:[%s2 + $0x3d8] sm:$0xff]
  %v933 = vld [vmem:[%s2 + $0x3e0] sm:$0xff]
  %v934 = vld [vmem:[%s2 + $0x3e8] sm:$0xff]
  %v935 = vld [vmem:[%s2 + $0x3f0] sm:$0xff]
  %v936 = vld [vmem:[%s2 + $0x3f8] sm:$0xff]
  %v937 = vld [vmem:[%s2 + $0x400] sm:$0xff]
  %v938 = vld [vmem:[%s2 + $0x408] sm:$0xff]
  %v939 = vld [vmem:[%s2 + $0x410] sm:$0xff]
  %v940 = vld [vmem:[%s2 + $0x418] sm:$0xff]
  %v941 = vld [vmem:[%s2 + $0x420] sm:$0xff]
  %v942 = vld [vmem:[%s2 + $0x428] sm:$0xff]
  %v943 = vld [vmem:[%s2 + $0x430] sm:$0xff]
  %v944 = vld [vmem:[%s2 + $0x438] sm:$0xff]
  %v945 = vld [vmem:[%s2 + $0x440] sm:$0xff]
  %v946 = vld [vmem:[%s2 + $0x448] sm:$0xff]
  %v947 = vld [vmem:[%s2 + $0x450] sm:$0xff]
  %v948 = vld [vmem:[%s2 + $0x458] sm:$0xff]
  %v949 = vld [vmem:[%s2 + $0x460] sm:$0xff]
  %v950 = vld [vmem:[%s2 + $0x468] sm:$0xff]
  %v951 = vld [vmem:[%s2 + $0x470] sm:$0xff]
  %v952 = vld [vmem:[%s2 + $0x478] sm:$0xff]
  %v953 = vld [vmem:[%s2 + $0x480] sm:$0xff]
  %v954 = vld [vmem:[%s2 + $0x488] sm:$0xff]
  %v955 = vld [vmem:[%s2 + $0x490] sm:$0xff]
  %v956 = vld [vmem:[%s2 + $0x498] sm:$0xff]
  %v957 = vld [vmem:[%s2 + $0x4a0] sm:$0xff]
  %v958 = vld [vmem:[%s2 + $0x4a8] sm:$0xff]
  %v959 = vld [vmem:[%s2 + $0x4b0] sm:$0xff]
  %v960 = vld [vmem:[%s2 + $0x4b8] sm:$0xff]
  %v961 = vld [vmem:[%s2 + $0x4c0] sm:$0xff]
  %v962 = vld [vmem:[%s2 + $0x4c8] sm:$0xff]
  %v963 = vld [vmem:[%s2 + $0x4d0] sm:$0xff]
  %v964 = vld [vmem:[%s2 + $0x4d8] sm:$0xff]
  %v965 = vld [vmem:[%s2 + $0x4e0] sm:$0xff]
  %v966 = vld [vmem:[%s2 + $0x4e8] sm:$0xff]
  %v967 = vld [vmem:[%s2 + $0x4f0] sm:$0xff]
  %v968 = vld [vmem:[%s2 + $0x4f8] sm:$0xff]
  %v969 = vld [vmem:[%s2 + $0x500] sm:$0xff]
  %v970 = vld [vmem:[%s2 + $0x508] sm:$0xff]
  %v971 = vld [vmem:[%s2 + $0x510] sm:$0xff]
  %v972 = vld [vmem:[%s2 + $0x518] sm:$0xff]
  %v973 = vld [vmem:[%s2 + $0x520] sm:$0xff]
  %v974 = vld [vmem:[%s2 + $0x528] sm:$0xff]
  %v975 = vld [vmem:[%s2 + $0x530] sm:$0xff]
  %v976 = vld [vmem:[%s2 + $0x538] sm:$0xff]
  %v977 = vld [vmem:[%s2 + $0x540] sm:$0xff]
  %v978 = vld [vmem:[%s2 + $0x548] sm:$0xff]
  %v979 = vld [vmem:[%s2 + $0x550] sm:$0xff]
  %v980 = vld [vmem:[%s2 + $0x558] sm:$0xff]
  %v981 = vld [vmem:[%s2 + $0x560] sm:$0xff]
  %v982 = vld [vmem:[%s2 + $0x568] sm:$0xff]
  %v983 = vld [vmem:[%s2 + $0x570] sm:$0xff]
  %v984 = vld [vmem:[%s2 + $0x578] sm:$0xff]
  %v985 = vld [vmem:[%s2 + $0x580] sm:$0xff]
  %v986 = vld [vmem:[%s2 + $0x588] sm:$0xff]
  %v987 = vld [vmem:[%s2 + $0x590] sm:$0xff]
  %v988 = vld [vmem:[%s2 + $0x598] sm:$0xff]
  %v989 = vld [vmem:[%s2 + $0x5a0] sm:$0xff]
  %v990 = vld [vmem:[%s2 + $0x5a8] sm:$0xff]
  %v991 = vld [vmem:[%s2 + $0x5b0] sm:$0xff]
  %v992 = vld [vmem:[%s2 + $0x5b8] sm:$0xff]
  %v993 = vld [vmem:[%s2 + $0x5c0] sm:$0xff]
  %v994 = vld [vmem:[%s2 + $0x5c8] sm:$0xff]
  %v995 = vld [vmem:[%s2 + $0x5d0] sm:$0xff]
  %v996 = vld [vmem:[%s2 + $0x5d8] sm:$0xff]
  %v997 = vld [vmem:[%s2 + $0x5e0] sm:$0xff]
  %v998 = vld [vmem:[%s2 + $0x5e8] sm:$0xff]
  %v999 = vld [vmem:[%s2 + $0x5f0] sm:$0xff]
  %v1000 = vld [vmem:[%s2 + $0x5f8] sm:$0xff]
  %v1001 = vld [vmem:[%s2 + $0x600] sm:$0xff]
  %v1002 = vld [vmem:[%s2 + $0x608] sm:$0xff]
  %v1003 = vld [vmem:[%s2 + $0x610] sm:$0xff]
  %v1004 = vld [vmem:[%s2 + $0x618] sm:$0xff]
  %v1005 = vld [vmem:[%s2 + $0x620] sm:$0xff]
  %v1006 = vld [vmem:[%s2 + $0x628] sm:$0xff]
  %v1007 = vld [vmem:[%s2 + $0x630] sm:$0xff]
  %v1008 = vld [vmem:[%s2 + $0x638] sm:$0xff]
  %v1009 = vld [vmem:[%s2 + $0x640] sm:$0xff]
  %v1010 = vld [vmem:[%s2 + $0x648] sm:$0xff]
  %v1011 = vld [vmem:[%s2 + $0x650] sm:$0xff]
  %v1012 = vld [vmem:[%s2 + $0x658] sm:$0xff]
  %v1013 = vld [vmem:[%s2 + $0x660] sm:$0xff]
  %v1014 = vld [vmem:[%s2 + $0x668] sm:$0xff]
  %v1015 = vld [vmem:[%s2 + $0x670] sm:$0xff]
  %v1016 = vld [vmem:[%s2 + $0x678] sm:$0xff]
  %v1017 = vld [vmem:[%s2 + $0x680] sm:$0xff]
  %v1018 = vld [vmem:[%s2 + $0x688] sm:$0xff]
  %v1019 = vld [vmem:[%s2 + $0x690] sm:$0xff]
  %v1020 = vld [vmem:[%s2 + $0x698] sm:$0xff]
  %v1021 = vld [vmem:[%s2 + $0x6a0] sm:$0xff]
  %v1022 = vld [vmem:[%s2 + $0x6a8] sm:$0xff]
  %v1023 = vld [vmem:[%s2 + $0x6b0] sm:$0xff]
  %v1024 = vld [vmem:[%s2 + $0x6b8] sm:$0xff]
  %v1025 = vld [vmem:[%s2 + $0x6c0] sm:$0xff]
  %v1026 = vld [vmem:[%s2 + $0x6c8] sm:$0xff]
  %v1027 = vld [vmem:[%s2 + $0x6d0] sm:$0xff]
  %v1028 = vld [vmem:[%s2 + $0x6d8] sm:$0xff]
  %v1029 = vld [vmem:[%s2 + $0x6e0] sm:$0xff]
  %v1030 = vld [vmem:[%s2 + $0x6e8] sm:$0xff]
  %v1031 = vld [vmem:[%s2 + $0x6f0] sm:$0xff]
  %v1032 = vld [vmem:[%s2 + $0x6f8] sm:$0xff]
  %v1033 = vld [vmem:[%s2 + $0x700] sm:$0xff]
  %v1034 = vld [vmem:[%s2 + $0x708] sm:$0xff]
  %v1035 = vld [vmem:[%s2 + $0x710] sm:$0xff]
  %v1036 = vld [vmem:[%s2 + $0x718] sm:$0xff]
  %v1037 = vld [vmem:[%s2 + $0x720] sm:$0xff]
  %v1038 = vld [vmem:[%s2 + $0x728] sm:$0xff]
  %v1039 = vld [vmem:[%s2 + $0x730] sm:$0xff]
  %v1040 = vld [vmem:[%s2 + $0x738] sm:$0xff]
  %v1041 = vld [vmem:[%s2 + $0x740] sm:$0xff]
  %v1042 = vld [vmem:[%s2 + $0x748] sm:$0xff]
  %v1043 = vld [vmem:[%s2 + $0x750] sm:$0xff]
  %v1044 = vld [vmem:[%s2 + $0x758] sm:$0xff]
  %v1045 = vld [vmem:[%s2 + $0x760] sm:$0xff]
  %v1046 = vld [vmem:[%s2 + $0x768] sm:$0xff]
  %v1047 = vld [vmem:[%s2 + $0x770] sm:$0xff]
  %v1048 = vld [vmem:[%s2 + $0x778] sm:$0xff]
  %v1049 = vld [vmem:[%s2 + $0x780] sm:$0xff]
  %v1050 = vld [vmem:[%s2 + $0x788] sm:$0xff]
  %v1051 = vld [vmem:[%s2 + $0x790] sm:$0xff]
  %v1052 = vld [vmem:[%s2 + $0x798] sm:$0xff]
  %v1053 = vld [vmem:[%s2 + $0x7a0] sm:$0xff]
  %v1054 = vld [vmem:[%s2 + $0x7a8] sm:$0xff]
  %v1055 = vld [vmem:[%s2 + $0x7b0] sm:$0xff]
  %v1056 = vld [vmem:[%s2 + $0x7b8] sm:$0xff]
  %v1057 = vld [vmem:[%s2 + $0x7c0] sm:$0xff]
  %v1058 = vld [vmem:[%s2 + $0x7c8] sm:$0xff]
  %v1059 = vld [vmem:[%s2 + $0x7d0] sm:$0xff]
  %v1060 = vld [vmem:[%s2 + $0x7d8] sm:$0xff]
  %v1061 = vld [vmem:[%s2 + $0x7e0] sm:$0xff]
  %v1062 = vld [vmem:[%s2 + $0x7e8] sm:$0xff]
  %v1063 = vld [vmem:[%s2 + $0x7f0] sm:$0xff]
  %v1064 = vld [vmem:[%s2 + $0x7f8] sm:$0xff]
  %v1065 = vld [vmem:[%s3] sm:$0x3]
  %v1067 = vlaneseq
  %v1068 = vshrl.u32 %v1067, 7
  %v1069 = vsub.s32 0, %v1068
  %v1070 = vrot.slane %v1065, %v1069
  %v1071 = vlaneseq
  %v1072 = vshrl.u32 %v1071, 7
  %v1073 = vsub.s32 1, %v1072
  %v1074 = vrot.slane %v1065, %v1073
  %v1861 = vunpack.c.l.b16 %v25
  %v1862 = vunpack.c.h.b16 %v25
  %v1863 = vunpack.c.l.b16 %v26
  %v1864 = vunpack.c.h.b16 %v26
  %v1865 = vunpack.c.l.b16 %v27
  %v1866 = vunpack.c.h.b16 %v27
  %v1867 = vunpack.c.l.b16 %v28
  %v1868 = vunpack.c.h.b16 %v28
  %v1869 = vunpack.c.l.b16 %v29
  %v1870 = vunpack.c.h.b16 %v29
  %v1871 = vunpack.c.l.b16 %v30
  %v1872 = vunpack.c.h.b16 %v30
  %v1873 = vunpack.c.l.b16 %v31
  %v1874 = vunpack.c.h.b16 %v31
  %v1875 = vunpack.c.l.b16 %v32
  %v1876 = vunpack.c.h.b16 %v32
  %v1877 = vunpack.c.l.b16 %v33
  %v1878 = vunpack.c.h.b16 %v33
  %v1879 = vunpack.c.l.b16 %v34
  %v1880 = vunpack.c.h.b16 %v34
  %v1881 = vunpack.c.l.b16 %v35
  %v1882 = vunpack.c.h.b16 %v35
  %v1883 = vunpack.c.l.b16 %v36
  %v1884 = vunpack.c.h.b16 %v36
  %v1885 = vunpack.c.l.b16 %v37
  %v1886 = vunpack.c.h.b16 %v37
  %v1887 = vunpack.c.l.b16 %v38
  %v1888 = vunpack.c.h.b16 %v38
  %v1889 = vunpack.c.l.b16 %v39
  %v1890 = vunpack.c.h.b16 %v39
  %v1891 = vunpack.c.l.b16 %v40
  %v1892 = vunpack.c.h.b16 %v40
  %v1893 = vunpack.c.l.b16 %v41
  %v1894 = vunpack.c.h.b16 %v41
  %v1895 = vunpack.c.l.b16 %v42
  %v1896 = vunpack.c.h.b16 %v42
  %v1897 = vunpack.c.l.b16 %v43
  %v1898 = vunpack.c.h.b16 %v43
  %v1899 = vunpack.c.l.b16 %v44
  %v1900 = vunpack.c.h.b16 %v44
  %v1901 = vunpack.c.l.b16 %v45
  %v1902 = vunpack.c.h.b16 %v45
  %v1903 = vunpack.c.l.b16 %v46
  %v1904 = vunpack.c.h.b16 %v46
  %v1905 = vunpack.c.l.b16 %v47
  %v1906 = vunpack.c.h.b16 %v47
  %v1907 = vunpack.c.l.b16 %v48
  %v1908 = vunpack.c.h.b16 %v48
  %v1909 = vunpack.c.l.b16 %v49
  %v1910 = vunpack.c.h.b16 %v49
  %v1911 = vunpack.c.l.b16 %v50
  %v1912 = vunpack.c.h.b16 %v50
  %v1913 = vunpack.c.l.b16 %v51
  %v1914 = vunpack.c.h.b16 %v51
  %v1915 = vunpack.c.l.b16 %v52
  %v1916 = vunpack.c.h.b16 %v52
  %v1917 = vunpack.c.l.b16 %v53
  %v1918 = vunpack.c.h.b16 %v53
  %v1919 = vunpack.c.l.b16 %v54
  %v1920 = vunpack.c.h.b16 %v54
  %v1921 = vunpack.c.l.b16 %v55
  %v1922 = vunpack.c.h.b16 %v55
  %v1923 = vunpack.c.l.b16 %v56
  %v1924 = vunpack.c.h.b16 %v56
  %v1925 = vunpack.c.l.b16 %v57
  %v1926 = vunpack.c.h.b16 %v57
  %v1927 = vunpack.c.l.b16 %v58
  %v1928 = vunpack.c.h.b16 %v58
  %v1929 = vunpack.c.l.b16 %v59
  %v1930 = vunpack.c.h.b16 %v59
  %v1931 = vunpack.c.l.b16 %v60
  %v1932 = vunpack.c.h.b16 %v60
  %v1933 = vunpack.c.l.b16 %v61
  %v1934 = vunpack.c.h.b16 %v61
  %v1935 = vunpack.c.l.b16 %v62
  %v1936 = vunpack.c.h.b16 %v62
  %v1937 = vunpack.c.l.b16 %v63
  %v1938 = vunpack.c.h.b16 %v63
  %v1939 = vunpack.c.l.b16 %v64
  %v1940 = vunpack.c.h.b16 %v64
  %v1941 = vunpack.c.l.b16 %v65
  %v1942 = vunpack.c.h.b16 %v65
  %v1943 = vunpack.c.l.b16 %v66
  %v1944 = vunpack.c.h.b16 %v66
  %v1945 = vunpack.c.l.b16 %v67
  %v1946 = vunpack.c.h.b16 %v67
  %v1947 = vunpack.c.l.b16 %v68
  %v1948 = vunpack.c.h.b16 %v68
  %v1949 = vunpack.c.l.b16 %v69
  %v1950 = vunpack.c.h.b16 %v69
  %v1951 = vunpack.c.l.b16 %v70
  %v1952 = vunpack.c.h.b16 %v70
  %v1953 = vunpack.c.l.b16 %v71
  %v1954 = vunpack.c.h.b16 %v71
  %v1955 = vunpack.c.l.b16 %v72
  %v1956 = vunpack.c.h.b16 %v72
  %v1957 = vunpack.c.l.b16 %v73
  %v1958 = vunpack.c.h.b16 %v73
  %v1959 = vunpack.c.l.b16 %v74
  %v1960 = vunpack.c.h.b16 %v74
  %v1961 = vunpack.c.l.b16 %v75
  %v1962 = vunpack.c.h.b16 %v75
  %v1963 = vunpack.c.l.b16 %v76
  %v1964 = vunpack.c.h.b16 %v76
  %v1965 = vunpack.c.l.b16 %v77
  %v1966 = vunpack.c.h.b16 %v77
  %v1967 = vunpack.c.l.b16 %v78
  %v1968 = vunpack.c.h.b16 %v78
  %v1969 = vunpack.c.l.b16 %v79
  %v1970 = vunpack.c.h.b16 %v79
  %v1971 = vunpack.c.l.b16 %v80
  %v1972 = vunpack.c.h.b16 %v80
  %v1973 = vunpack.c.l.b16 %v81
  %v1974 = vunpack.c.h.b16 %v81
  %v1975 = vunpack.c.l.b16 %v82
  %v1976 = vunpack.c.h.b16 %v82
  %v1977 = vunpack.c.l.b16 %v83
  %v1978 = vunpack.c.h.b16 %v83
  %v1979 = vunpack.c.l.b16 %v84
  %v1980 = vunpack.c.h.b16 %v84
  %v1981 = vunpack.c.l.b16 %v85
  %v1982 = vunpack.c.h.b16 %v85
  %v1983 = vunpack.c.l.b16 %v86
  %v1984 = vunpack.c.h.b16 %v86
  %v1985 = vunpack.c.l.b16 %v87
  %v1986 = vunpack.c.h.b16 %v87
  %v1987 = vunpack.c.l.b16 %v88
  %v1988 = vunpack.c.h.b16 %v88
  %v1989 = vunpack.c.l.b16 %v89
  %v1990 = vunpack.c.h.b16 %v89
  %v1991 = vunpack.c.l.b16 %v90
  %v1992 = vunpack.c.h.b16 %v90
  %v1993 = vunpack.c.l.b16 %v91
  %v1994 = vunpack.c.h.b16 %v91
  %v1995 = vunpack.c.l.b16 %v92
  %v1996 = vunpack.c.h.b16 %v92
  %v1997 = vunpack.c.l.b16 %v93
  %v1998 = vunpack.c.h.b16 %v93
  %v1999 = vunpack.c.l.b16 %v94
  %v2000 = vunpack.c.h.b16 %v94
  %v2001 = vunpack.c.l.b16 %v95
  %v2002 = vunpack.c.h.b16 %v95
  %v2003 = vunpack.c.l.b16 %v96
  %v2004 = vunpack.c.h.b16 %v96
  %v2005 = vunpack.c.l.b16 %v97
  %v2006 = vunpack.c.h.b16 %v97
  %v2007 = vunpack.c.l.b16 %v98
  %v2008 = vunpack.c.h.b16 %v98
  %v2009 = vunpack.c.l.b16 %v99
  %v2010 = vunpack.c.h.b16 %v99
  %v2011 = vunpack.c.l.b16 %v100
  %v2012 = vunpack.c.h.b16 %v100
  %v2013 = vunpack.c.l.b16 %v101
  %v2014 = vunpack.c.h.b16 %v101
  %v2015 = vunpack.c.l.b16 %v102
  %v2016 = vunpack.c.h.b16 %v102
  %v2017 = vunpack.c.l.b16 %v103
  %v2018 = vunpack.c.h.b16 %v103
  %v2019 = vunpack.c.l.b16 %v104
  %v2020 = vunpack.c.h.b16 %v104
  %v2021 = vunpack.c.l.b16 %v105
  %v2022 = vunpack.c.h.b16 %v105
  %v2023 = vunpack.c.l.b16 %v106
  %v2024 = vunpack.c.h.b16 %v106
  %v2025 = vunpack.c.l.b16 %v107
  %v2026 = vunpack.c.h.b16 %v107
  %v2027 = vunpack.c.l.b16 %v108
  %v2028 = vunpack.c.h.b16 %v108
  %v2029 = vunpack.c.l.b16 %v109
  %v2030 = vunpack.c.h.b16 %v109
  %v2031 = vunpack.c.l.b16 %v110
  %v2032 = vunpack.c.h.b16 %v110
  %v2033 = vunpack.c.l.b16 %v111
  %v2034 = vunpack.c.h.b16 %v111
  %v2035 = vunpack.c.l.b16 %v112
  %v2036 = vunpack.c.h.b16 %v112
  %v2037 = vunpack.c.l.b16 %v113
  %v2038 = vunpack.c.h.b16 %v113
  %v2039 = vunpack.c.l.b16 %v114
  %v2040 = vunpack.c.h.b16 %v114
  %v2041 = vunpack.c.l.b16 %v115
  %v2042 = vunpack.c.h.b16 %v115
  %v2043 = vunpack.c.l.b16 %v116
  %v2044 = vunpack.c.h.b16 %v116
  %v2045 = vunpack.c.l.b16 %v117
  %v2046 = vunpack.c.h.b16 %v117
  %v2047 = vunpack.c.l.b16 %v118
  %v2048 = vunpack.c.h.b16 %v118
  %v2049 = vunpack.c.l.b16 %v119
  %v2050 = vunpack.c.h.b16 %v119
  %v2051 = vunpack.c.l.b16 %v120
  %v2052 = vunpack.c.h.b16 %v120
  %v2053 = vunpack.c.l.b16 %v121
  %v2054 = vunpack.c.h.b16 %v121
  %v2055 = vunpack.c.l.b16 %v122
  %v2056 = vunpack.c.h.b16 %v122
  %v2057 = vunpack.c.l.b16 %v123
  %v2058 = vunpack.c.h.b16 %v123
  %v2059 = vunpack.c.l.b16 %v124
  %v2060 = vunpack.c.h.b16 %v124
  %v2061 = vunpack.c.l.b16 %v125
  %v2062 = vunpack.c.h.b16 %v125
  %v2063 = vunpack.c.l.b16 %v126
  %v2064 = vunpack.c.h.b16 %v126
  %v2065 = vunpack.c.l.b16 %v127
  %v2066 = vunpack.c.h.b16 %v127
  %v2067 = vunpack.c.l.b16 %v128
  %v2068 = vunpack.c.h.b16 %v128
  %v2069 = vunpack.c.l.b16 %v129
  %v2070 = vunpack.c.h.b16 %v129
  %v2071 = vunpack.c.l.b16 %v130
  %v2072 = vunpack.c.h.b16 %v130
  %v2073 = vunpack.c.l.b16 %v131
  %v2074 = vunpack.c.h.b16 %v131
  %v2075 = vunpack.c.l.b16 %v132
  %v2076 = vunpack.c.h.b16 %v132
  %v2077 = vunpack.c.l.b16 %v133
  %v2078 = vunpack.c.h.b16 %v133
  %v2079 = vunpack.c.l.b16 %v134
  %v2080 = vunpack.c.h.b16 %v134
  %v2081 = vunpack.c.l.b16 %v135
  %v2082 = vunpack.c.h.b16 %v135
  %v2083 = vunpack.c.l.b16 %v136
  %v2084 = vunpack.c.h.b16 %v136
  %v2085 = vunpack.c.l.b16 %v137
  %v2086 = vunpack.c.h.b16 %v137
  %v2087 = vunpack.c.l.b16 %v138
  %v2088 = vunpack.c.h.b16 %v138
  %v2089 = vunpack.c.l.b16 %v139
  %v2090 = vunpack.c.h.b16 %v139
  %v2091 = vunpack.c.l.b16 %v140
  %v2092 = vunpack.c.h.b16 %v140
  %v2093 = vunpack.c.l.b16 %v141
  %v2094 = vunpack.c.h.b16 %v141
  %v2095 = vunpack.c.l.b16 %v142
  %v2096 = vunpack.c.h.b16 %v142
  %v2097 = vunpack.c.l.b16 %v143
  %v2098 = vunpack.c.h.b16 %v143
  %v2099 = vunpack.c.l.b16 %v144
  %v2100 = vunpack.c.h.b16 %v144
  %v2101 = vunpack.c.l.b16 %v145
  %v2102 = vunpack.c.h.b16 %v145
  %v2103 = vunpack.c.l.b16 %v146
  %v2104 = vunpack.c.h.b16 %v146
  %v2105 = vunpack.c.l.b16 %v147
  %v2106 = vunpack.c.h.b16 %v147
  %v2107 = vunpack.c.l.b16 %v148
  %v2108 = vunpack.c.h.b16 %v148
  %v2109 = vunpack.c.l.b16 %v149
  %v2110 = vunpack.c.h.b16 %v149
  %v2111 = vunpack.c.l.b16 %v150
  %v2112 = vunpack.c.h.b16 %v150
  %v2113 = vunpack.c.l.b16 %v151
  %v2114 = vunpack.c.h.b16 %v151
  %v2115 = vunpack.c.l.b16 %v152
  %v2116 = vunpack.c.h.b16 %v152
  %v2117 = vunpack.c.l.b16 %v153
  %v2118 = vunpack.c.h.b16 %v153
  %v2119 = vunpack.c.l.b16 %v154
  %v2120 = vunpack.c.h.b16 %v154
  %v2121 = vunpack.c.l.b16 %v155
  %v2122 = vunpack.c.h.b16 %v155
  %v2123 = vunpack.c.l.b16 %v156
  %v2124 = vunpack.c.h.b16 %v156
  %v2125 = vunpack.c.l.b16 %v157
  %v2126 = vunpack.c.h.b16 %v157
  %v2127 = vunpack.c.l.b16 %v158
  %v2128 = vunpack.c.h.b16 %v158
  %v2129 = vunpack.c.l.b16 %v159
  %v2130 = vunpack.c.h.b16 %v159
  %v2131 = vunpack.c.l.b16 %v160
  %v2132 = vunpack.c.h.b16 %v160
  %v2133 = vunpack.c.l.b16 %v161
  %v2134 = vunpack.c.h.b16 %v161
  %v2135 = vunpack.c.l.b16 %v162
  %v2136 = vunpack.c.h.b16 %v162
  %v2137 = vunpack.c.l.b16 %v163
  %v2138 = vunpack.c.h.b16 %v163
  %v2139 = vunpack.c.l.b16 %v164
  %v2140 = vunpack.c.h.b16 %v164
  %v2141 = vunpack.c.l.b16 %v165
  %v2142 = vunpack.c.h.b16 %v165
  %v2143 = vunpack.c.l.b16 %v166
  %v2144 = vunpack.c.h.b16 %v166
  %v2145 = vunpack.c.l.b16 %v167
  %v2146 = vunpack.c.h.b16 %v167
  %v2147 = vunpack.c.l.b16 %v168
  %v2148 = vunpack.c.h.b16 %v168
  %v2149 = vunpack.c.l.b16 %v169
  %v2150 = vunpack.c.h.b16 %v169
  %v2151 = vunpack.c.l.b16 %v170
  %v2152 = vunpack.c.h.b16 %v170
  %v2153 = vunpack.c.l.b16 %v171
  %v2154 = vunpack.c.h.b16 %v171
  %v2155 = vunpack.c.l.b16 %v172
  %v2156 = vunpack.c.h.b16 %v172
  %v2157 = vunpack.c.l.b16 %v173
  %v2158 = vunpack.c.h.b16 %v173
  %v2159 = vunpack.c.l.b16 %v174
  %v2160 = vunpack.c.h.b16 %v174
  %v2161 = vunpack.c.l.b16 %v175
  %v2162 = vunpack.c.h.b16 %v175
  %v2163 = vunpack.c.l.b16 %v176
  %v2164 = vunpack.c.h.b16 %v176
  %v2165 = vunpack.c.l.b16 %v177
  %v2166 = vunpack.c.h.b16 %v177
  %v2167 = vunpack.c.l.b16 %v178
  %v2168 = vunpack.c.h.b16 %v178
  %v2169 = vunpack.c.l.b16 %v179
  %v2170 = vunpack.c.h.b16 %v179
  %v2171 = vunpack.c.l.b16 %v180
  %v2172 = vunpack.c.h.b16 %v180
  %v2173 = vunpack.c.l.b16 %v181
  %v2174 = vunpack.c.h.b16 %v181
  %v2175 = vunpack.c.l.b16 %v182
  %v2176 = vunpack.c.h.b16 %v182
  %v2177 = vunpack.c.l.b16 %v183
  %v2178 = vunpack.c.h.b16 %v183
  %v2179 = vunpack.c.l.b16 %v184
  %v2180 = vunpack.c.h.b16 %v184
  %v2181 = vunpack.c.l.b16 %v185
  %v2182 = vunpack.c.h.b16 %v185
  %v2183 = vunpack.c.l.b16 %v186
  %v2184 = vunpack.c.h.b16 %v186
  %v2185 = vunpack.c.l.b16 %v187
  %v2186 = vunpack.c.h.b16 %v187
  %v2187 = vunpack.c.l.b16 %v188
  %v2188 = vunpack.c.h.b16 %v188
  %v2189 = vunpack.c.l.b16 %v189
  %v2190 = vunpack.c.h.b16 %v189
  %v2191 = vunpack.c.l.b16 %v190
  %v2192 = vunpack.c.h.b16 %v190
  %v2193 = vunpack.c.l.b16 %v191
  %v2194 = vunpack.c.h.b16 %v191
  %v2195 = vunpack.c.l.b16 %v192
  %v2196 = vunpack.c.h.b16 %v192
  %v2197 = vunpack.c.l.b16 %v193
  %v2198 = vunpack.c.h.b16 %v193
  %v2199 = vunpack.c.l.b16 %v194
  %v2200 = vunpack.c.h.b16 %v194
  %v2201 = vunpack.c.l.b16 %v195
  %v2202 = vunpack.c.h.b16 %v195
  %v2203 = vunpack.c.l.b16 %v196
  %v2204 = vunpack.c.h.b16 %v196
  %v2205 = vunpack.c.l.b16 %v197
  %v2206 = vunpack.c.h.b16 %v197
  %v2207 = vunpack.c.l.b16 %v198
  %v2208 = vunpack.c.h.b16 %v198
  %v2209 = vunpack.c.l.b16 %v199
  %v2210 = vunpack.c.h.b16 %v199
  %v2211 = vunpack.c.l.b16 %v200
  %v2212 = vunpack.c.h.b16 %v200
  %v2213 = vunpack.c.l.b16 %v201
  %v2214 = vunpack.c.h.b16 %v201
  %v2215 = vunpack.c.l.b16 %v202
  %v2216 = vunpack.c.h.b16 %v202
  %v2217 = vunpack.c.l.b16 %v203
  %v2218 = vunpack.c.h.b16 %v203
  %v2219 = vunpack.c.l.b16 %v204
  %v2220 = vunpack.c.h.b16 %v204
  %v2221 = vunpack.c.l.b16 %v205
  %v2222 = vunpack.c.h.b16 %v205
  %v2223 = vunpack.c.l.b16 %v206
  %v2224 = vunpack.c.h.b16 %v206
  %v2225 = vunpack.c.l.b16 %v207
  %v2226 = vunpack.c.h.b16 %v207
  %v2227 = vunpack.c.l.b16 %v208
  %v2228 = vunpack.c.h.b16 %v208
  %v2229 = vunpack.c.l.b16 %v209
  %v2230 = vunpack.c.h.b16 %v209
  %v2231 = vunpack.c.l.b16 %v210
  %v2232 = vunpack.c.h.b16 %v210
  %v2233 = vunpack.c.l.b16 %v211
  %v2234 = vunpack.c.h.b16 %v211
  %v2235 = vunpack.c.l.b16 %v212
  %v2236 = vunpack.c.h.b16 %v212
  %v2237 = vunpack.c.l.b16 %v213
  %v2238 = vunpack.c.h.b16 %v213
  %v2239 = vunpack.c.l.b16 %v214
  %v2240 = vunpack.c.h.b16 %v214
  %v2241 = vunpack.c.l.b16 %v215
  %v2242 = vunpack.c.h.b16 %v215
  %v2243 = vunpack.c.l.b16 %v216
  %v2244 = vunpack.c.h.b16 %v216
  %v2245 = vunpack.c.l.b16 %v217
  %v2246 = vunpack.c.h.b16 %v217
  %v2247 = vunpack.c.l.b16 %v218
  %v2248 = vunpack.c.h.b16 %v218
  %v2249 = vunpack.c.l.b16 %v219
  %v2250 = vunpack.c.h.b16 %v219
  %v2251 = vunpack.c.l.b16 %v220
  %v2252 = vunpack.c.h.b16 %v220
  %v2253 = vunpack.c.l.b16 %v221
  %v2254 = vunpack.c.h.b16 %v221
  %v2255 = vunpack.c.l.b16 %v222
  %v2256 = vunpack.c.h.b16 %v222
  %v2257 = vunpack.c.l.b16 %v223
  %v2258 = vunpack.c.h.b16 %v223
  %v2259 = vunpack.c.l.b16 %v224
  %v2260 = vunpack.c.h.b16 %v224
  %v2261 = vunpack.c.l.b16 %v225
  %v2262 = vunpack.c.h.b16 %v225
  %v2263 = vunpack.c.l.b16 %v226
  %v2264 = vunpack.c.h.b16 %v226
  %v2265 = vunpack.c.l.b16 %v227
  %v2266 = vunpack.c.h.b16 %v227
  %v2267 = vunpack.c.l.b16 %v228
  %v2268 = vunpack.c.h.b16 %v228
  %v2269 = vunpack.c.l.b16 %v229
  %v2270 = vunpack.c.h.b16 %v229
  %v2271 = vunpack.c.l.b16 %v230
  %v2272 = vunpack.c.h.b16 %v230
  %v2273 = vunpack.c.l.b16 %v231
  %v2274 = vunpack.c.h.b16 %v231
  %v2275 = vunpack.c.l.b16 %v232
  %v2276 = vunpack.c.h.b16 %v232
  %v2277 = vunpack.c.l.b16 %v233
  %v2278 = vunpack.c.h.b16 %v233
  %v2279 = vunpack.c.l.b16 %v234
  %v2280 = vunpack.c.h.b16 %v234
  %v2281 = vunpack.c.l.b16 %v235
  %v2282 = vunpack.c.h.b16 %v235
  %v2283 = vunpack.c.l.b16 %v236
  %v2284 = vunpack.c.h.b16 %v236
  %v2285 = vunpack.c.l.b16 %v237
  %v2286 = vunpack.c.h.b16 %v237
  %v2287 = vunpack.c.l.b16 %v238
  %v2288 = vunpack.c.h.b16 %v238
  %v2289 = vunpack.c.l.b16 %v239
  %v2290 = vunpack.c.h.b16 %v239
  %v2291 = vunpack.c.l.b16 %v240
  %v2292 = vunpack.c.h.b16 %v240
  %v2293 = vunpack.c.l.b16 %v241
  %v2294 = vunpack.c.h.b16 %v241
  %v2295 = vunpack.c.l.b16 %v242
  %v2296 = vunpack.c.h.b16 %v242
  %v2297 = vunpack.c.l.b16 %v243
  %v2298 = vunpack.c.h.b16 %v243
  %v2299 = vunpack.c.l.b16 %v244
  %v2300 = vunpack.c.h.b16 %v244
  %v2301 = vunpack.c.l.b16 %v245
  %v2302 = vunpack.c.h.b16 %v245
  %v2303 = vunpack.c.l.b16 %v246
  %v2304 = vunpack.c.h.b16 %v246
  %v2305 = vunpack.c.l.b16 %v247
  %v2306 = vunpack.c.h.b16 %v247
  %v2307 = vunpack.c.l.b16 %v248
  %v2308 = vunpack.c.h.b16 %v248
  %v2309 = vunpack.c.l.b16 %v249
  %v2310 = vunpack.c.h.b16 %v249
  %v2311 = vunpack.c.l.b16 %v250
  %v2312 = vunpack.c.h.b16 %v250
  %v2313 = vunpack.c.l.b16 %v251
  %v2314 = vunpack.c.h.b16 %v251
  %v2315 = vunpack.c.l.b16 %v252
  %v2316 = vunpack.c.h.b16 %v252
  %v2317 = vunpack.c.l.b16 %v253
  %v2318 = vunpack.c.h.b16 %v253
  %v2319 = vunpack.c.l.b16 %v254
  %v2320 = vunpack.c.h.b16 %v254
  %v2321 = vunpack.c.l.b16 %v255
  %v2322 = vunpack.c.h.b16 %v255
  %v2323 = vunpack.c.l.b16 %v256
  %v2324 = vunpack.c.h.b16 %v256
  %v2325 = vunpack.c.l.b16 %v257
  %v2326 = vunpack.c.h.b16 %v257
  %v2327 = vunpack.c.l.b16 %v258
  %v2328 = vunpack.c.h.b16 %v258
  %v2329 = vunpack.c.l.b16 %v259
  %v2330 = vunpack.c.h.b16 %v259
  %v2331 = vunpack.c.l.b16 %v260
  %v2332 = vunpack.c.h.b16 %v260
  %v2333 = vunpack.c.l.b16 %v261
  %v2334 = vunpack.c.h.b16 %v261
  %v2335 = vunpack.c.l.b16 %v262
  %v2336 = vunpack.c.h.b16 %v262
  %v2337 = vunpack.c.l.b16 %v263
  %v2338 = vunpack.c.h.b16 %v263
  %v2339 = vunpack.c.l.b16 %v264
  %v2340 = vunpack.c.h.b16 %v264
  %v2341 = vunpack.c.l.b16 %v265
  %v2342 = vunpack.c.h.b16 %v265
  %v2343 = vunpack.c.l.b16 %v266
  %v2344 = vunpack.c.h.b16 %v266
  %v2345 = vunpack.c.l.b16 %v267
  %v2346 = vunpack.c.h.b16 %v267
  %v2347 = vunpack.c.l.b16 %v268
  %v2348 = vunpack.c.h.b16 %v268
  %v2349 = vunpack.c.l.b16 %v269
  %v2350 = vunpack.c.h.b16 %v269
  %v2351 = vunpack.c.l.b16 %v270
  %v2352 = vunpack.c.h.b16 %v270
  %v2353 = vunpack.c.l.b16 %v271
  %v2354 = vunpack.c.h.b16 %v271
  %v2355 = vunpack.c.l.b16 %v272
  %v2356 = vunpack.c.h.b16 %v272
  %v2357 = vunpack.c.l.b16 %v273
  %v2358 = vunpack.c.h.b16 %v273
  %v2359 = vunpack.c.l.b16 %v274
  %v2360 = vunpack.c.h.b16 %v274
  %v2361 = vunpack.c.l.b16 %v275
  %v2362 = vunpack.c.h.b16 %v275
  %v2363 = vunpack.c.l.b16 %v276
  %v2364 = vunpack.c.h.b16 %v276
  %v2365 = vunpack.c.l.b16 %v277
  %v2366 = vunpack.c.h.b16 %v277
  %v2367 = vunpack.c.l.b16 %v278
  %v2368 = vunpack.c.h.b16 %v278
  %v2369 = vunpack.c.l.b16 %v279
  %v2370 = vunpack.c.h.b16 %v279
  %v2371 = vunpack.c.l.b16 %v280
  %v2372 = vunpack.c.h.b16 %v280
  %v2373 = vunpack.c.l.b16 %v281
  %v2374 = vunpack.c.h.b16 %v281
  %v2375 = vunpack.c.l.b16 %v282
  %v2376 = vunpack.c.h.b16 %v282
  %v2377 = vunpack.c.l.b16 %v283
  %v2378 = vunpack.c.h.b16 %v283
  %v2379 = vunpack.c.l.b16 %v284
  %v2380 = vunpack.c.h.b16 %v284
  %v2381 = vunpack.c.l.b16 %v285
  %v2382 = vunpack.c.h.b16 %v285
  %v2383 = vunpack.c.l.b16 %v286
  %v2384 = vunpack.c.h.b16 %v286
  %v2385 = vunpack.c.l.b16 %v287
  %v2386 = vunpack.c.h.b16 %v287
  %v2387 = vunpack.c.l.b16 %v288
  %v2388 = vunpack.c.h.b16 %v288
  %v2389 = vunpack.c.l.b16 %v289
  %v2390 = vunpack.c.h.b16 %v289
  %v2391 = vunpack.c.l.b16 %v290
  %v2392 = vunpack.c.h.b16 %v290
  %v2393 = vunpack.c.l.b16 %v291
  %v2394 = vunpack.c.h.b16 %v291
  %v2395 = vunpack.c.l.b16 %v292
  %v2396 = vunpack.c.h.b16 %v292
  %v2397 = vunpack.c.l.b16 %v293
  %v2398 = vunpack.c.h.b16 %v293
  %v2399 = vunpack.c.l.b16 %v294
  %v2400 = vunpack.c.h.b16 %v294
  %v2401 = vunpack.c.l.b16 %v295
  %v2402 = vunpack.c.h.b16 %v295
  %v2403 = vunpack.c.l.b16 %v296
  %v2404 = vunpack.c.h.b16 %v296
  %v2405 = vunpack.c.l.b16 %v297
  %v2406 = vunpack.c.h.b16 %v297
  %v2407 = vunpack.c.l.b16 %v298
  %v2408 = vunpack.c.h.b16 %v298
  %v2409 = vunpack.c.l.b16 %v299
  %v2410 = vunpack.c.h.b16 %v299
  %v2411 = vunpack.c.l.b16 %v300
  %v2412 = vunpack.c.h.b16 %v300
  %v2413 = vunpack.c.l.b16 %v301
  %v2414 = vunpack.c.h.b16 %v301
  %v2415 = vunpack.c.l.b16 %v302
  %v2416 = vunpack.c.h.b16 %v302
  %v2417 = vunpack.c.l.b16 %v303
  %v2418 = vunpack.c.h.b16 %v303
  %v2419 = vunpack.c.l.b16 %v304
  %v2420 = vunpack.c.h.b16 %v304
  %v2421 = vunpack.c.l.b16 %v305
  %v2422 = vunpack.c.h.b16 %v305
  %v2423 = vunpack.c.l.b16 %v306
  %v2424 = vunpack.c.h.b16 %v306
  %v2425 = vunpack.c.l.b16 %v307
  %v2426 = vunpack.c.h.b16 %v307
  %v2427 = vunpack.c.l.b16 %v308
  %v2428 = vunpack.c.h.b16 %v308
  %v2429 = vunpack.c.l.b16 %v309
  %v2430 = vunpack.c.h.b16 %v309
  %v2431 = vunpack.c.l.b16 %v310
  %v2432 = vunpack.c.h.b16 %v310
  %v2433 = vunpack.c.l.b16 %v311
  %v2434 = vunpack.c.h.b16 %v311
  %v2435 = vunpack.c.l.b16 %v312
  %v2436 = vunpack.c.h.b16 %v312
  %v2437 = vunpack.c.l.b16 %v313
  %v2438 = vunpack.c.h.b16 %v313
  %v2439 = vunpack.c.l.b16 %v314
  %v2440 = vunpack.c.h.b16 %v314
  %v2441 = vunpack.c.l.b16 %v315
  %v2442 = vunpack.c.h.b16 %v315
  %v2443 = vunpack.c.l.b16 %v316
  %v2444 = vunpack.c.h.b16 %v316
  %v2445 = vunpack.c.l.b16 %v317
  %v2446 = vunpack.c.h.b16 %v317
  %v2447 = vunpack.c.l.b16 %v318
  %v2448 = vunpack.c.h.b16 %v318
  %v2449 = vunpack.c.l.b16 %v319
  %v2450 = vunpack.c.h.b16 %v319
  %v2451 = vunpack.c.l.b16 %v320
  %v2452 = vunpack.c.h.b16 %v320
  %v2453 = vunpack.c.l.b16 %v321
  %v2454 = vunpack.c.h.b16 %v321
  %v2455 = vunpack.c.l.b16 %v322
  %v2456 = vunpack.c.h.b16 %v322
  %v2457 = vunpack.c.l.b16 %v323
  %v2458 = vunpack.c.h.b16 %v323
  %v2459 = vunpack.c.l.b16 %v324
  %v2460 = vunpack.c.h.b16 %v324
  %v2461 = vunpack.c.l.b16 %v325
  %v2462 = vunpack.c.h.b16 %v325
  %v2463 = vunpack.c.l.b16 %v326
  %v2464 = vunpack.c.h.b16 %v326
  %v2465 = vunpack.c.l.b16 %v327
  %v2466 = vunpack.c.h.b16 %v327
  %v2467 = vunpack.c.l.b16 %v328
  %v2468 = vunpack.c.h.b16 %v328
  %v2469 = vunpack.c.l.b16 %v329
  %v2470 = vunpack.c.h.b16 %v329
  %v2471 = vunpack.c.l.b16 %v330
  %v2472 = vunpack.c.h.b16 %v330
  %v2473 = vunpack.c.l.b16 %v331
  %v2474 = vunpack.c.h.b16 %v331
  %v2475 = vunpack.c.l.b16 %v332
  %v2476 = vunpack.c.h.b16 %v332
  %v2477 = vunpack.c.l.b16 %v333
  %v2478 = vunpack.c.h.b16 %v333
  %v2479 = vunpack.c.l.b16 %v334
  %v2480 = vunpack.c.h.b16 %v334
  %v2481 = vunpack.c.l.b16 %v335
  %v2482 = vunpack.c.h.b16 %v335
  %v2483 = vunpack.c.l.b16 %v336
  %v2484 = vunpack.c.h.b16 %v336
  %v2485 = vunpack.c.l.b16 %v337
  %v2486 = vunpack.c.h.b16 %v337
  %v2487 = vunpack.c.l.b16 %v338
  %v2488 = vunpack.c.h.b16 %v338
  %v2489 = vunpack.c.l.b16 %v339
  %v2490 = vunpack.c.h.b16 %v339
  %v2491 = vunpack.c.l.b16 %v340
  %v2492 = vunpack.c.h.b16 %v340
  %v2493 = vunpack.c.l.b16 %v341
  %v2494 = vunpack.c.h.b16 %v341
  %v2495 = vunpack.c.l.b16 %v342
  %v2496 = vunpack.c.h.b16 %v342
  %v2497 = vunpack.c.l.b16 %v343
  %v2498 = vunpack.c.h.b16 %v343
  %v2499 = vunpack.c.l.b16 %v344
  %v2500 = vunpack.c.h.b16 %v344
  %v2501 = vunpack.c.l.b16 %v345
  %v2502 = vunpack.c.h.b16 %v345
  %v2503 = vunpack.c.l.b16 %v346
  %v2504 = vunpack.c.h.b16 %v346
  %v2505 = vunpack.c.l.b16 %v347
  %v2506 = vunpack.c.h.b16 %v347
  %v2507 = vunpack.c.l.b16 %v348
  %v2508 = vunpack.c.h.b16 %v348
  %v2509 = vunpack.c.l.b16 %v349
  %v2510 = vunpack.c.h.b16 %v349
  %v2511 = vunpack.c.l.b16 %v350
  %v2512 = vunpack.c.h.b16 %v350
  %v2513 = vunpack.c.l.b16 %v351
  %v2514 = vunpack.c.h.b16 %v351
  %v2515 = vunpack.c.l.b16 %v352
  %v2516 = vunpack.c.h.b16 %v352
  %v2517 = vunpack.c.l.b16 %v353
  %v2518 = vunpack.c.h.b16 %v353
  %v2519 = vunpack.c.l.b16 %v354
  %v2520 = vunpack.c.h.b16 %v354
  %v2521 = vunpack.c.l.b16 %v355
  %v2522 = vunpack.c.h.b16 %v355
  %v2523 = vunpack.c.l.b16 %v356
  %v2524 = vunpack.c.h.b16 %v356
  %v2525 = vunpack.c.l.b16 %v357
  %v2526 = vunpack.c.h.b16 %v357
  %v2527 = vunpack.c.l.b16 %v358
  %v2528 = vunpack.c.h.b16 %v358
  %v2529 = vunpack.c.l.b16 %v359
  %v2530 = vunpack.c.h.b16 %v359
  %v2531 = vunpack.c.l.b16 %v360
  %v2532 = vunpack.c.h.b16 %v360
  %v2533 = vunpack.c.l.b16 %v361
  %v2534 = vunpack.c.h.b16 %v361
  %v2535 = vunpack.c.l.b16 %v362
  %v2536 = vunpack.c.h.b16 %v362
  %v2537 = vunpack.c.l.b16 %v363
  %v2538 = vunpack.c.h.b16 %v363
  %v2539 = vunpack.c.l.b16 %v364
  %v2540 = vunpack.c.h.b16 %v364
  %v2541 = vunpack.c.l.b16 %v365
  %v2542 = vunpack.c.h.b16 %v365
  %v2543 = vunpack.c.l.b16 %v366
  %v2544 = vunpack.c.h.b16 %v366
  %v2545 = vunpack.c.l.b16 %v367
  %v2546 = vunpack.c.h.b16 %v367
  %v2547 = vunpack.c.l.b16 %v368
  %v2548 = vunpack.c.h.b16 %v368
  %v2549 = vunpack.c.l.b16 %v369
  %v2550 = vunpack.c.h.b16 %v369
  %v2551 = vunpack.c.l.b16 %v370
  %v2552 = vunpack.c.h.b16 %v370
  %v2553 = vunpack.c.l.b16 %v371
  %v2554 = vunpack.c.h.b16 %v371
  %v2555 = vunpack.c.l.b16 %v372
  %v2556 = vunpack.c.h.b16 %v372
  %v2557 = vunpack.c.l.b16 %v373
  %v2558 = vunpack.c.h.b16 %v373
  %v2559 = vunpack.c.l.b16 %v374
  %v2560 = vunpack.c.h.b16 %v374
  %v2561 = vunpack.c.l.b16 %v375
  %v2562 = vunpack.c.h.b16 %v375
  %v2563 = vunpack.c.l.b16 %v376
  %v2564 = vunpack.c.h.b16 %v376
  %v2565 = vunpack.c.l.b16 %v377
  %v2566 = vunpack.c.h.b16 %v377
  %v2567 = vunpack.c.l.b16 %v378
  %v2568 = vunpack.c.h.b16 %v378
  %v2569 = vunpack.c.l.b16 %v379
  %v2570 = vunpack.c.h.b16 %v379
  %v2571 = vunpack.c.l.b16 %v380
  %v2572 = vunpack.c.h.b16 %v380
  %v2573 = vunpack.c.l.b16 %v381
  %v2574 = vunpack.c.h.b16 %v381
  %v2575 = vunpack.c.l.b16 %v382
  %v2576 = vunpack.c.h.b16 %v382
  %v2577 = vunpack.c.l.b16 %v383
  %v2578 = vunpack.c.h.b16 %v383
  %v2579 = vunpack.c.l.b16 %v384
  %v2580 = vunpack.c.h.b16 %v384
  %v2581 = vunpack.c.l.b16 %v385
  %v2582 = vunpack.c.h.b16 %v385
  %v2583 = vunpack.c.l.b16 %v386
  %v2584 = vunpack.c.h.b16 %v386
  %v2585 = vunpack.c.l.b16 %v387
  %v2586 = vunpack.c.h.b16 %v387
  %v2587 = vunpack.c.l.b16 %v388
  %v2588 = vunpack.c.h.b16 %v388
  %v2589 = vunpack.c.l.b16 %v389
  %v2590 = vunpack.c.h.b16 %v389
  %v2591 = vunpack.c.l.b16 %v390
  %v2592 = vunpack.c.h.b16 %v390
  %v2593 = vunpack.c.l.b16 %v391
  %v2594 = vunpack.c.h.b16 %v391
  %v2595 = vunpack.c.l.b16 %v392
  %v2596 = vunpack.c.h.b16 %v392
  %v2597 = vunpack.c.l.b16 %v393
  %v2598 = vunpack.c.h.b16 %v393
  %v2599 = vunpack.c.l.b16 %v394
  %v2600 = vunpack.c.h.b16 %v394
  %v2601 = vunpack.c.l.b16 %v395
  %v2602 = vunpack.c.h.b16 %v395
  %v2603 = vunpack.c.l.b16 %v396
  %v2604 = vunpack.c.h.b16 %v396
  %v2605 = vunpack.c.l.b16 %v397
  %v2606 = vunpack.c.h.b16 %v397
  %v2607 = vunpack.c.l.b16 %v398
  %v2608 = vunpack.c.h.b16 %v398
  %v2609 = vunpack.c.l.b16 %v399
  %v2610 = vunpack.c.h.b16 %v399
  %v2611 = vunpack.c.l.b16 %v400
  %v2612 = vunpack.c.h.b16 %v400
  %v2613 = vunpack.c.l.b16 %v401
  %v2614 = vunpack.c.h.b16 %v401
  %v2615 = vunpack.c.l.b16 %v402
  %v2616 = vunpack.c.h.b16 %v402
  %v2617 = vunpack.c.l.b16 %v403
  %v2618 = vunpack.c.h.b16 %v403
  %v2619 = vunpack.c.l.b16 %v404
  %v2620 = vunpack.c.h.b16 %v404
  %v2621 = vunpack.c.l.b16 %v405
  %v2622 = vunpack.c.h.b16 %v405
  %v2623 = vunpack.c.l.b16 %v406
  %v2624 = vunpack.c.h.b16 %v406
  %v2625 = vunpack.c.l.b16 %v407
  %v2626 = vunpack.c.h.b16 %v407
  %v2627 = vunpack.c.l.b16 %v408
  %v2628 = vunpack.c.h.b16 %v408
  %v2629 = vunpack.c.l.b16 %v409
  %v2630 = vunpack.c.h.b16 %v409
  %v2631 = vunpack.c.l.b16 %v410
  %v2632 = vunpack.c.h.b16 %v410
  %v2633 = vunpack.c.l.b16 %v411
  %v2634 = vunpack.c.h.b16 %v411
  %v2635 = vunpack.c.l.b16 %v412
  %v2636 = vunpack.c.h.b16 %v412
  %v2637 = vunpack.c.l.b16 %v413
  %v2638 = vunpack.c.h.b16 %v413
  %v2639 = vunpack.c.l.b16 %v414
  %v2640 = vunpack.c.h.b16 %v414
  %v2641 = vunpack.c.l.b16 %v415
  %v2642 = vunpack.c.h.b16 %v415
  %v2643 = vunpack.c.l.b16 %v416
  %v2644 = vunpack.c.h.b16 %v416
  %v2645 = vunpack.c.l.b16 %v417
  %v2646 = vunpack.c.h.b16 %v417
  %v2647 = vunpack.c.l.b16 %v418
  %v2648 = vunpack.c.h.b16 %v418
  %v2649 = vunpack.c.l.b16 %v419
  %v2650 = vunpack.c.h.b16 %v419
  %v2651 = vunpack.c.l.b16 %v420
  %v2652 = vunpack.c.h.b16 %v420
  %v2653 = vunpack.c.l.b16 %v421
  %v2654 = vunpack.c.h.b16 %v421
  %v2655 = vunpack.c.l.b16 %v422
  %v2656 = vunpack.c.h.b16 %v422
  %v2657 = vunpack.c.l.b16 %v423
  %v2658 = vunpack.c.h.b16 %v423
  %v2659 = vunpack.c.l.b16 %v424
  %v2660 = vunpack.c.h.b16 %v424
  %v2661 = vunpack.c.l.b16 %v425
  %v2662 = vunpack.c.h.b16 %v425
  %v2663 = vunpack.c.l.b16 %v426
  %v2664 = vunpack.c.h.b16 %v426
  %v2665 = vunpack.c.l.b16 %v427
  %v2666 = vunpack.c.h.b16 %v427
  %v2667 = vunpack.c.l.b16 %v428
  %v2668 = vunpack.c.h.b16 %v428
  %v2669 = vunpack.c.l.b16 %v429
  %v2670 = vunpack.c.h.b16 %v429
  %v2671 = vunpack.c.l.b16 %v430
  %v2672 = vunpack.c.h.b16 %v430
  %v2673 = vunpack.c.l.b16 %v431
  %v2674 = vunpack.c.h.b16 %v431
  %v2675 = vunpack.c.l.b16 %v432
  %v2676 = vunpack.c.h.b16 %v432
  %v2677 = vunpack.c.l.b16 %v433
  %v2678 = vunpack.c.h.b16 %v433
  %v2679 = vunpack.c.l.b16 %v434
  %v2680 = vunpack.c.h.b16 %v434
  %v2681 = vunpack.c.l.b16 %v435
  %v2682 = vunpack.c.h.b16 %v435
  %v2683 = vunpack.c.l.b16 %v436
  %v2684 = vunpack.c.h.b16 %v436
  %v2685 = vunpack.c.l.b16 %v437
  %v2686 = vunpack.c.h.b16 %v437
  %v2687 = vunpack.c.l.b16 %v438
  %v2688 = vunpack.c.h.b16 %v438
  %v2689 = vunpack.c.l.b16 %v439
  %v2690 = vunpack.c.h.b16 %v439
  %v2691 = vunpack.c.l.b16 %v440
  %v2692 = vunpack.c.h.b16 %v440
  %v2693 = vunpack.c.l.b16 %v441
  %v2694 = vunpack.c.h.b16 %v441
  %v2695 = vunpack.c.l.b16 %v442
  %v2696 = vunpack.c.h.b16 %v442
  %v2697 = vunpack.c.l.b16 %v443
  %v2698 = vunpack.c.h.b16 %v443
  %v2699 = vunpack.c.l.b16 %v444
  %v2700 = vunpack.c.h.b16 %v444
  %v2701 = vunpack.c.l.b16 %v445
  %v2702 = vunpack.c.h.b16 %v445
  %v2703 = vunpack.c.l.b16 %v446
  %v2704 = vunpack.c.h.b16 %v446
  %v2705 = vunpack.c.l.b16 %v447
  %v2706 = vunpack.c.h.b16 %v447
  %v2707 = vunpack.c.l.b16 %v448
  %v2708 = vunpack.c.h.b16 %v448
  %v2709 = vunpack.c.l.b16 %v449
  %v2710 = vunpack.c.h.b16 %v449
  %v2711 = vunpack.c.l.b16 %v450
  %v2712 = vunpack.c.h.b16 %v450
  %v2713 = vunpack.c.l.b16 %v451
  %v2714 = vunpack.c.h.b16 %v451
  %v2715 = vunpack.c.l.b16 %v452
  %v2716 = vunpack.c.h.b16 %v452
  %v2717 = vunpack.c.l.b16 %v453
  %v2718 = vunpack.c.h.b16 %v453
  %v2719 = vunpack.c.l.b16 %v454
  %v2720 = vunpack.c.h.b16 %v454
  %v2721 = vunpack.c.l.b16 %v455
  %v2722 = vunpack.c.h.b16 %v455
  %v2723 = vunpack.c.l.b16 %v456
  %v2724 = vunpack.c.h.b16 %v456
  %v2725 = vunpack.c.l.b16 %v457
  %v2726 = vunpack.c.h.b16 %v457
  %v2727 = vunpack.c.l.b16 %v458
  %v2728 = vunpack.c.h.b16 %v458
  %v2729 = vunpack.c.l.b16 %v459
  %v2730 = vunpack.c.h.b16 %v459
  %v2731 = vunpack.c.l.b16 %v460
  %v2732 = vunpack.c.h.b16 %v460
  %v2733 = vunpack.c.l.b16 %v461
  %v2734 = vunpack.c.h.b16 %v461
  %v2735 = vunpack.c.l.b16 %v462
  %v2736 = vunpack.c.h.b16 %v462
  %v2737 = vunpack.c.l.b16 %v463
  %v2738 = vunpack.c.h.b16 %v463
  %v2739 = vunpack.c.l.b16 %v464
  %v2740 = vunpack.c.h.b16 %v464
  %v2741 = vunpack.c.l.b16 %v465
  %v2742 = vunpack.c.h.b16 %v465
  %v2743 = vunpack.c.l.b16 %v466
  %v2744 = vunpack.c.h.b16 %v466
  %v2745 = vunpack.c.l.b16 %v467
  %v2746 = vunpack.c.h.b16 %v467
  %v2747 = vunpack.c.l.b16 %v468
  %v2748 = vunpack.c.h.b16 %v468
  %v2749 = vunpack.c.l.b16 %v469
  %v2750 = vunpack.c.h.b16 %v469
  %v2751 = vunpack.c.l.b16 %v470
  %v2752 = vunpack.c.h.b16 %v470
  %v2753 = vunpack.c.l.b16 %v471
  %v2754 = vunpack.c.h.b16 %v471
  %v2755 = vunpack.c.l.b16 %v472
  %v2756 = vunpack.c.h.b16 %v472
  %v2757 = vunpack.c.l.b16 %v473
  %v2758 = vunpack.c.h.b16 %v473
  %v2759 = vunpack.c.l.b16 %v474
  %v2760 = vunpack.c.h.b16 %v474
  %v2761 = vunpack.c.l.b16 %v475
  %v2762 = vunpack.c.h.b16 %v475
  %v2763 = vunpack.c.l.b16 %v476
  %v2764 = vunpack.c.h.b16 %v476
  %v2765 = vunpack.c.l.b16 %v477
  %v2766 = vunpack.c.h.b16 %v477
  %v2767 = vunpack.c.l.b16 %v478
  %v2768 = vunpack.c.h.b16 %v478
  %v2769 = vunpack.c.l.b16 %v479
  %v2770 = vunpack.c.h.b16 %v479
  %v2771 = vunpack.c.l.b16 %v480
  %v2772 = vunpack.c.h.b16 %v480
  %v2773 = vunpack.c.l.b16 %v481
  %v2774 = vunpack.c.h.b16 %v481
  %v2775 = vunpack.c.l.b16 %v482
  %v2776 = vunpack.c.h.b16 %v482
  %v2777 = vunpack.c.l.b16 %v483
  %v2778 = vunpack.c.h.b16 %v483
  %v2779 = vunpack.c.l.b16 %v484
  %v2780 = vunpack.c.h.b16 %v484
  %v2781 = vunpack.c.l.b16 %v485
  %v2782 = vunpack.c.h.b16 %v485
  %v2783 = vunpack.c.l.b16 %v486
  %v2784 = vunpack.c.h.b16 %v486
  %v2785 = vunpack.c.l.b16 %v487
  %v2786 = vunpack.c.h.b16 %v487
  %v2787 = vunpack.c.l.b16 %v488
  %v2788 = vunpack.c.h.b16 %v488
  %v2789 = vunpack.c.l.b16 %v489
  %v2790 = vunpack.c.h.b16 %v489
  %v2791 = vunpack.c.l.b16 %v490
  %v2792 = vunpack.c.h.b16 %v490
  %v2793 = vunpack.c.l.b16 %v491
  %v2794 = vunpack.c.h.b16 %v491
  %v2795 = vunpack.c.l.b16 %v492
  %v2796 = vunpack.c.h.b16 %v492
  %v2797 = vunpack.c.l.b16 %v493
  %v2798 = vunpack.c.h.b16 %v493
  %v2799 = vunpack.c.l.b16 %v494
  %v2800 = vunpack.c.h.b16 %v494
  %v2801 = vunpack.c.l.b16 %v495
  %v2802 = vunpack.c.h.b16 %v495
  %v2803 = vunpack.c.l.b16 %v496
  %v2804 = vunpack.c.h.b16 %v496
  %v2805 = vunpack.c.l.b16 %v497
  %v2806 = vunpack.c.h.b16 %v497
  %v2807 = vunpack.c.l.b16 %v498
  %v2808 = vunpack.c.h.b16 %v498
  %v2809 = vunpack.c.l.b16 %v499
  %v2810 = vunpack.c.h.b16 %v499
  %v2811 = vunpack.c.l.b16 %v500
  %v2812 = vunpack.c.h.b16 %v500
  %v2813 = vunpack.c.l.b16 %v501
  %v2814 = vunpack.c.h.b16 %v501
  %v2815 = vunpack.c.l.b16 %v502
  %v2816 = vunpack.c.h.b16 %v502
  %v2817 = vunpack.c.l.b16 %v503
  %v2818 = vunpack.c.h.b16 %v503
  %v2819 = vunpack.c.l.b16 %v504
  %v2820 = vunpack.c.h.b16 %v504
  %v2821 = vunpack.c.l.b16 %v505
  %v2822 = vunpack.c.h.b16 %v505
  %v2823 = vunpack.c.l.b16 %v506
  %v2824 = vunpack.c.h.b16 %v506
  %v2825 = vunpack.c.l.b16 %v507
  %v2826 = vunpack.c.h.b16 %v507
  %v2827 = vunpack.c.l.b16 %v508
  %v2828 = vunpack.c.h.b16 %v508
  %v2829 = vunpack.c.l.b16 %v509
  %v2830 = vunpack.c.h.b16 %v509
  %v2831 = vunpack.c.l.b16 %v510
  %v2832 = vunpack.c.h.b16 %v510
  %v2833 = vunpack.c.l.b16 %v511
  %v2834 = vunpack.c.h.b16 %v511
  %v2835 = vunpack.c.l.b16 %v512
  %v2836 = vunpack.c.h.b16 %v512
  %v2837 = vunpack.c.l.b16 %v513
  %v2838 = vunpack.c.h.b16 %v513
  %v2839 = vunpack.c.l.b16 %v514
  %v2840 = vunpack.c.h.b16 %v514
  %v2841 = vunpack.c.l.b16 %v515
  %v2842 = vunpack.c.h.b16 %v515
  %v2843 = vunpack.c.l.b16 %v516
  %v2844 = vunpack.c.h.b16 %v516
  %v2845 = vunpack.c.l.b16 %v517
  %v2846 = vunpack.c.h.b16 %v517
  %v2847 = vunpack.c.l.b16 %v518
  %v2848 = vunpack.c.h.b16 %v518
  %v2849 = vunpack.c.l.b16 %v519
  %v2850 = vunpack.c.h.b16 %v519
  %v2851 = vunpack.c.l.b16 %v520
  %v2852 = vunpack.c.h.b16 %v520
  %v2853 = vunpack.c.l.b16 %v521
  %v2854 = vunpack.c.h.b16 %v521
  %v2855 = vunpack.c.l.b16 %v522
  %v2856 = vunpack.c.h.b16 %v522
  %v2857 = vunpack.c.l.b16 %v523
  %v2858 = vunpack.c.h.b16 %v523
  %v2859 = vunpack.c.l.b16 %v524
  %v2860 = vunpack.c.h.b16 %v524
  %v2861 = vunpack.c.l.b16 %v525
  %v2862 = vunpack.c.h.b16 %v525
  %v2863 = vunpack.c.l.b16 %v526
  %v2864 = vunpack.c.h.b16 %v526
  %v2865 = vunpack.c.l.b16 %v527
  %v2866 = vunpack.c.h.b16 %v527
  %v2867 = vunpack.c.l.b16 %v528
  %v2868 = vunpack.c.h.b16 %v528
  %v2869 = vunpack.c.l.b16 %v529
  %v2870 = vunpack.c.h.b16 %v529
  %v2871 = vunpack.c.l.b16 %v530
  %v2872 = vunpack.c.h.b16 %v530
  %v2873 = vunpack.c.l.b16 %v531
  %v2874 = vunpack.c.h.b16 %v531
  %v2875 = vunpack.c.l.b16 %v532
  %v2876 = vunpack.c.h.b16 %v532
  %v2877 = vunpack.c.l.b16 %v533
  %v2878 = vunpack.c.h.b16 %v533
  %v2879 = vunpack.c.l.b16 %v534
  %v2880 = vunpack.c.h.b16 %v534
  %v2881 = vunpack.c.l.b16 %v535
  %v2882 = vunpack.c.h.b16 %v535
  %v2883 = vunpack.c.l.b16 %v536
  %v2884 = vunpack.c.h.b16 %v536
  %v2885 = vunpack.c.l.b16 %v537
  %v2886 = vunpack.c.h.b16 %v537
  %v2887 = vunpack.c.l.b16 %v538
  %v2888 = vunpack.c.h.b16 %v538
  %v2889 = vunpack.c.l.b16 %v539
  %v2890 = vunpack.c.h.b16 %v539
  %v2891 = vunpack.c.l.b16 %v540
  %v2892 = vunpack.c.h.b16 %v540
  %v2893 = vunpack.c.l.b16 %v541
  %v2894 = vunpack.c.h.b16 %v541
  %v2895 = vunpack.c.l.b16 %v542
  %v2896 = vunpack.c.h.b16 %v542
  %v2897 = vunpack.c.l.b16 %v543
  %v2898 = vunpack.c.h.b16 %v543
  %v2899 = vunpack.c.l.b16 %v544
  %v2900 = vunpack.c.h.b16 %v544
  %v2901 = vunpack.c.l.b16 %v545
  %v2902 = vunpack.c.h.b16 %v545
  %v2903 = vunpack.c.l.b16 %v546
  %v2904 = vunpack.c.h.b16 %v546
  %v2905 = vunpack.c.l.b16 %v547
  %v2906 = vunpack.c.h.b16 %v547
  %v2907 = vunpack.c.l.b16 %v548
  %v2908 = vunpack.c.h.b16 %v548
  %v2909 = vunpack.c.l.b16 %v549
  %v2910 = vunpack.c.h.b16 %v549
  %v2911 = vunpack.c.l.b16 %v550
  %v2912 = vunpack.c.h.b16 %v550
  %v2913 = vunpack.c.l.b16 %v551
  %v2914 = vunpack.c.h.b16 %v551
  %v2915 = vunpack.c.l.b16 %v552
  %v2916 = vunpack.c.h.b16 %v552
  %v2917 = vunpack.c.l.b16 %v553
  %v2918 = vunpack.c.h.b16 %v553
  %v2919 = vunpack.c.l.b16 %v554
  %v2920 = vunpack.c.h.b16 %v554
  %v2921 = vunpack.c.l.b16 %v555
  %v2922 = vunpack.c.h.b16 %v555
  %v2923 = vunpack.c.l.b16 %v556
  %v2924 = vunpack.c.h.b16 %v556
  %v2925 = vunpack.c.l.b16 %v557
  %v2926 = vunpack.c.h.b16 %v557
  %v2927 = vunpack.c.l.b16 %v558
  %v2928 = vunpack.c.h.b16 %v558
  %v2929 = vunpack.c.l.b16 %v559
  %v2930 = vunpack.c.h.b16 %v559
  %v2931 = vunpack.c.l.b16 %v560
  %v2932 = vunpack.c.h.b16 %v560
  %v2933 = vunpack.c.l.b16 %v561
  %v2934 = vunpack.c.h.b16 %v561
  %v2935 = vunpack.c.l.b16 %v562
  %v2936 = vunpack.c.h.b16 %v562
  %v2937 = vunpack.c.l.b16 %v563
  %v2938 = vunpack.c.h.b16 %v563
  %v2939 = vunpack.c.l.b16 %v564
  %v2940 = vunpack.c.h.b16 %v564
  %v2941 = vunpack.c.l.b16 %v565
  %v2942 = vunpack.c.h.b16 %v565
  %v2943 = vunpack.c.l.b16 %v566
  %v2944 = vunpack.c.h.b16 %v566
  %v2945 = vunpack.c.l.b16 %v567
  %v2946 = vunpack.c.h.b16 %v567
  %v2947 = vunpack.c.l.b16 %v568
  %v2948 = vunpack.c.h.b16 %v568
  %v2949 = vunpack.c.l.b16 %v569
  %v2950 = vunpack.c.h.b16 %v569
  %v2951 = vunpack.c.l.b16 %v570
  %v2952 = vunpack.c.h.b16 %v570
  %v2953 = vunpack.c.l.b16 %v571
  %v2954 = vunpack.c.h.b16 %v571
  %v2955 = vunpack.c.l.b16 %v572
  %v2956 = vunpack.c.h.b16 %v572
  %v2957 = vunpack.c.l.b16 %v573
  %v2958 = vunpack.c.h.b16 %v573
  %v2959 = vunpack.c.l.b16 %v574
  %v2960 = vunpack.c.h.b16 %v574
  %v2961 = vunpack.c.l.b16 %v575
  %v2962 = vunpack.c.h.b16 %v575
  %v2963 = vunpack.c.l.b16 %v576
  %v2964 = vunpack.c.h.b16 %v576
  %v2965 = vunpack.c.l.b16 %v577
  %v2966 = vunpack.c.h.b16 %v577
  %v2967 = vunpack.c.l.b16 %v578
  %v2968 = vunpack.c.h.b16 %v578
  %v2969 = vunpack.c.l.b16 %v579
  %v2970 = vunpack.c.h.b16 %v579
  %v2971 = vunpack.c.l.b16 %v580
  %v2972 = vunpack.c.h.b16 %v580
  %v2973 = vunpack.c.l.b16 %v581
  %v2974 = vunpack.c.h.b16 %v581
  %v2975 = vunpack.c.l.b16 %v582
  %v2976 = vunpack.c.h.b16 %v582
  %v2977 = vunpack.c.l.b16 %v583
  %v2978 = vunpack.c.h.b16 %v583
  %v2979 = vunpack.c.l.b16 %v584
  %v2980 = vunpack.c.h.b16 %v584
  %v2981 = vunpack.c.l.b16 %v585
  %v2982 = vunpack.c.h.b16 %v585
  %v2983 = vunpack.c.l.b16 %v586
  %v2984 = vunpack.c.h.b16 %v586
  %v2985 = vunpack.c.l.b16 %v587
  %v2986 = vunpack.c.h.b16 %v587
  %v2987 = vunpack.c.l.b16 %v588
  %v2988 = vunpack.c.h.b16 %v588
  %v2989 = vunpack.c.l.b16 %v589
  %v2990 = vunpack.c.h.b16 %v589
  %v2991 = vunpack.c.l.b16 %v590
  %v2992 = vunpack.c.h.b16 %v590
  %v2993 = vunpack.c.l.b16 %v591
  %v2994 = vunpack.c.h.b16 %v591
  %v2995 = vunpack.c.l.b16 %v592
  %v2996 = vunpack.c.h.b16 %v592
  %v2997 = vunpack.c.l.b16 %v593
  %v2998 = vunpack.c.h.b16 %v593
  %v2999 = vunpack.c.l.b16 %v594
  %v3000 = vunpack.c.h.b16 %v594
  %v3001 = vunpack.c.l.b16 %v595
  %v3002 = vunpack.c.h.b16 %v595
  %v3003 = vunpack.c.l.b16 %v596
  %v3004 = vunpack.c.h.b16 %v596
  %v3005 = vunpack.c.l.b16 %v597
  %v3006 = vunpack.c.h.b16 %v597
  %v3007 = vunpack.c.l.b16 %v598
  %v3008 = vunpack.c.h.b16 %v598
  %v3009 = vunpack.c.l.b16 %v599
  %v3010 = vunpack.c.h.b16 %v599
  %v3011 = vunpack.c.l.b16 %v600
  %v3012 = vunpack.c.h.b16 %v600
  %v3013 = vunpack.c.l.b16 %v601
  %v3014 = vunpack.c.h.b16 %v601
  %v3015 = vunpack.c.l.b16 %v602
  %v3016 = vunpack.c.h.b16 %v602
  %v3017 = vunpack.c.l.b16 %v603
  %v3018 = vunpack.c.h.b16 %v603
  %v3019 = vunpack.c.l.b16 %v604
  %v3020 = vunpack.c.h.b16 %v604
  %v3021 = vunpack.c.l.b16 %v605
  %v3022 = vunpack.c.h.b16 %v605
  %v3023 = vunpack.c.l.b16 %v606
  %v3024 = vunpack.c.h.b16 %v606
  %v3025 = vunpack.c.l.b16 %v607
  %v3026 = vunpack.c.h.b16 %v607
  %v3027 = vunpack.c.l.b16 %v608
  %v3028 = vunpack.c.h.b16 %v608
  %v3029 = vunpack.c.l.b16 %v609
  %v3030 = vunpack.c.h.b16 %v609
  %v3031 = vunpack.c.l.b16 %v610
  %v3032 = vunpack.c.h.b16 %v610
  %v3033 = vunpack.c.l.b16 %v611
  %v3034 = vunpack.c.h.b16 %v611
  %v3035 = vunpack.c.l.b16 %v612
  %v3036 = vunpack.c.h.b16 %v612
  %v3037 = vunpack.c.l.b16 %v613
  %v3038 = vunpack.c.h.b16 %v613
  %v3039 = vunpack.c.l.b16 %v614
  %v3040 = vunpack.c.h.b16 %v614
  %v3041 = vunpack.c.l.b16 %v615
  %v3042 = vunpack.c.h.b16 %v615
  %v3043 = vunpack.c.l.b16 %v616
  %v3044 = vunpack.c.h.b16 %v616
  %v3045 = vunpack.c.l.b16 %v617
  %v3046 = vunpack.c.h.b16 %v617
  %v3047 = vunpack.c.l.b16 %v618
  %v3048 = vunpack.c.h.b16 %v618
  %v3049 = vunpack.c.l.b16 %v619
  %v3050 = vunpack.c.h.b16 %v619
  %v3051 = vunpack.c.l.b16 %v620
  %v3052 = vunpack.c.h.b16 %v620
  %v3053 = vunpack.c.l.b16 %v621
  %v3054 = vunpack.c.h.b16 %v621
  %v3055 = vunpack.c.l.b16 %v622
  %v3056 = vunpack.c.h.b16 %v622
  %v3057 = vunpack.c.l.b16 %v623
  %v3058 = vunpack.c.h.b16 %v623
  %v3059 = vunpack.c.l.b16 %v624
  %v3060 = vunpack.c.h.b16 %v624
  %v3061 = vunpack.c.l.b16 %v625
  %v3062 = vunpack.c.h.b16 %v625
  %v3063 = vunpack.c.l.b16 %v626
  %v3064 = vunpack.c.h.b16 %v626
  %v3065 = vunpack.c.l.b16 %v627
  %v3066 = vunpack.c.h.b16 %v627
  %v3067 = vunpack.c.l.b16 %v628
  %v3068 = vunpack.c.h.b16 %v628
  %v3069 = vunpack.c.l.b16 %v629
  %v3070 = vunpack.c.h.b16 %v629
  %v3071 = vunpack.c.l.b16 %v630
  %v3072 = vunpack.c.h.b16 %v630
  %v3073 = vunpack.c.l.b16 %v631
  %v3074 = vunpack.c.h.b16 %v631
  %v3075 = vunpack.c.l.b16 %v632
  %v3076 = vunpack.c.h.b16 %v632
  %v3077 = vunpack.c.l.b16 %v633
  %v3078 = vunpack.c.h.b16 %v633
  %v3079 = vunpack.c.l.b16 %v634
  %v3080 = vunpack.c.h.b16 %v634
  %v3081 = vunpack.c.l.b16 %v635
  %v3082 = vunpack.c.h.b16 %v635
  %v3083 = vunpack.c.l.b16 %v636
  %v3084 = vunpack.c.h.b16 %v636
  %v3085 = vunpack.c.l.b16 %v637
  %v3086 = vunpack.c.h.b16 %v637
  %v3087 = vunpack.c.l.b16 %v638
  %v3088 = vunpack.c.h.b16 %v638
  %v3089 = vunpack.c.l.b16 %v639
  %v3090 = vunpack.c.h.b16 %v639
  %v3091 = vunpack.c.l.b16 %v640
  %v3092 = vunpack.c.h.b16 %v640
  %v3093 = vunpack.c.l.b16 %v641
  %v3094 = vunpack.c.h.b16 %v641
  %v3095 = vunpack.c.l.b16 %v642
  %v3096 = vunpack.c.h.b16 %v642
  %v3097 = vunpack.c.l.b16 %v643
  %v3098 = vunpack.c.h.b16 %v643
  %v3099 = vunpack.c.l.b16 %v644
  %v3100 = vunpack.c.h.b16 %v644
  %v3101 = vunpack.c.l.b16 %v645
  %v3102 = vunpack.c.h.b16 %v645
  %v3103 = vunpack.c.l.b16 %v646
  %v3104 = vunpack.c.h.b16 %v646
  %v3105 = vunpack.c.l.b16 %v647
  %v3106 = vunpack.c.h.b16 %v647
  %v3107 = vunpack.c.l.b16 %v648
  %v3108 = vunpack.c.h.b16 %v648
  %v3109 = vunpack.c.l.b16 %v649
  %v3110 = vunpack.c.h.b16 %v649
  %v3111 = vunpack.c.l.b16 %v650
  %v3112 = vunpack.c.h.b16 %v650
  %v3113 = vunpack.c.l.b16 %v651
  %v3114 = vunpack.c.h.b16 %v651
  %v3115 = vunpack.c.l.b16 %v652
  %v3116 = vunpack.c.h.b16 %v652
  %v3117 = vunpack.c.l.b16 %v653
  %v3118 = vunpack.c.h.b16 %v653
  %v3119 = vunpack.c.l.b16 %v654
  %v3120 = vunpack.c.h.b16 %v654
  %v3121 = vunpack.c.l.b16 %v655
  %v3122 = vunpack.c.h.b16 %v655
  %v3123 = vunpack.c.l.b16 %v656
  %v3124 = vunpack.c.h.b16 %v656
  %v3125 = vunpack.c.l.b16 %v657
  %v3126 = vunpack.c.h.b16 %v657
  %v3127 = vunpack.c.l.b16 %v658
  %v3128 = vunpack.c.h.b16 %v658
  %v3129 = vunpack.c.l.b16 %v659
  %v3130 = vunpack.c.h.b16 %v659
  %v3131 = vunpack.c.l.b16 %v660
  %v3132 = vunpack.c.h.b16 %v660
  %v3133 = vunpack.c.l.b16 %v661
  %v3134 = vunpack.c.h.b16 %v661
  %v3135 = vunpack.c.l.b16 %v662
  %v3136 = vunpack.c.h.b16 %v662
  %v3137 = vunpack.c.l.b16 %v663
  %v3138 = vunpack.c.h.b16 %v663
  %v3139 = vunpack.c.l.b16 %v664
  %v3140 = vunpack.c.h.b16 %v664
  %v3141 = vunpack.c.l.b16 %v665
  %v3142 = vunpack.c.h.b16 %v665
  %v3143 = vunpack.c.l.b16 %v666
  %v3144 = vunpack.c.h.b16 %v666
  %v3145 = vunpack.c.l.b16 %v667
  %v3146 = vunpack.c.h.b16 %v667
  %v3147 = vunpack.c.l.b16 %v668
  %v3148 = vunpack.c.h.b16 %v668
  %v3149 = vunpack.c.l.b16 %v669
  %v3150 = vunpack.c.h.b16 %v669
  %v3151 = vunpack.c.l.b16 %v670
  %v3152 = vunpack.c.h.b16 %v670
  %v3153 = vunpack.c.l.b16 %v671
  %v3154 = vunpack.c.h.b16 %v671
  %v3155 = vunpack.c.l.b16 %v672
  %v3156 = vunpack.c.h.b16 %v672
  %v3157 = vunpack.c.l.b16 %v673
  %v3158 = vunpack.c.h.b16 %v673
  %v3159 = vunpack.c.l.b16 %v674
  %v3160 = vunpack.c.h.b16 %v674
  %v3161 = vunpack.c.l.b16 %v675
  %v3162 = vunpack.c.h.b16 %v675
  %v3163 = vunpack.c.l.b16 %v676
  %v3164 = vunpack.c.h.b16 %v676
  %v3165 = vunpack.c.l.b16 %v677
  %v3166 = vunpack.c.h.b16 %v677
  %v3167 = vunpack.c.l.b16 %v678
  %v3168 = vunpack.c.h.b16 %v678
  %v3169 = vunpack.c.l.b16 %v679
  %v3170 = vunpack.c.h.b16 %v679
  %v3171 = vunpack.c.l.b16 %v680
  %v3172 = vunpack.c.h.b16 %v680
  %v3173 = vunpack.c.l.b16 %v681
  %v3174 = vunpack.c.h.b16 %v681
  %v3175 = vunpack.c.l.b16 %v682
  %v3176 = vunpack.c.h.b16 %v682
  %v3177 = vunpack.c.l.b16 %v683
  %v3178 = vunpack.c.h.b16 %v683
  %v3179 = vunpack.c.l.b16 %v684
  %v3180 = vunpack.c.h.b16 %v684
  %v3181 = vunpack.c.l.b16 %v685
  %v3182 = vunpack.c.h.b16 %v685
  %v3183 = vunpack.c.l.b16 %v686
  %v3184 = vunpack.c.h.b16 %v686
  %v3185 = vunpack.c.l.b16 %v687
  %v3186 = vunpack.c.h.b16 %v687
  %v3187 = vunpack.c.l.b16 %v688
  %v3188 = vunpack.c.h.b16 %v688
  %v3189 = vunpack.c.l.b16 %v689
  %v3190 = vunpack.c.h.b16 %v689
  %v3191 = vunpack.c.l.b16 %v690
  %v3192 = vunpack.c.h.b16 %v690
  %v3193 = vunpack.c.l.b16 %v691
  %v3194 = vunpack.c.h.b16 %v691
  %v3195 = vunpack.c.l.b16 %v692
  %v3196 = vunpack.c.h.b16 %v692
  %v3197 = vunpack.c.l.b16 %v693
  %v3198 = vunpack.c.h.b16 %v693
  %v3199 = vunpack.c.l.b16 %v694
  %v3200 = vunpack.c.h.b16 %v694
  %v3201 = vunpack.c.l.b16 %v695
  %v3202 = vunpack.c.h.b16 %v695
  %v3203 = vunpack.c.l.b16 %v696
  %v3204 = vunpack.c.h.b16 %v696
  %v3205 = vunpack.c.l.b16 %v697
  %v3206 = vunpack.c.h.b16 %v697
  %v3207 = vunpack.c.l.b16 %v698
  %v3208 = vunpack.c.h.b16 %v698
  %v3209 = vunpack.c.l.b16 %v699
  %v3210 = vunpack.c.h.b16 %v699
  %v3211 = vunpack.c.l.b16 %v700
  %v3212 = vunpack.c.h.b16 %v700
  %v3213 = vunpack.c.l.b16 %v701
  %v3214 = vunpack.c.h.b16 %v701
  %v3215 = vunpack.c.l.b16 %v702
  %v3216 = vunpack.c.h.b16 %v702
  %v3217 = vunpack.c.l.b16 %v703
  %v3218 = vunpack.c.h.b16 %v703
  %v3219 = vunpack.c.l.b16 %v704
  %v3220 = vunpack.c.h.b16 %v704
  %v3221 = vunpack.c.l.b16 %v705
  %v3222 = vunpack.c.h.b16 %v705
  %v3223 = vunpack.c.l.b16 %v706
  %v3224 = vunpack.c.h.b16 %v706
  %v3225 = vunpack.c.l.b16 %v707
  %v3226 = vunpack.c.h.b16 %v707
  %v3227 = vunpack.c.l.b16 %v708
  %v3228 = vunpack.c.h.b16 %v708
  %v3229 = vunpack.c.l.b16 %v709
  %v3230 = vunpack.c.h.b16 %v709
  %v3231 = vunpack.c.l.b16 %v710
  %v3232 = vunpack.c.h.b16 %v710
  %v3233 = vunpack.c.l.b16 %v711
  %v3234 = vunpack.c.h.b16 %v711
  %v3235 = vunpack.c.l.b16 %v712
  %v3236 = vunpack.c.h.b16 %v712
  %v3237 = vunpack.c.l.b16 %v713
  %v3238 = vunpack.c.h.b16 %v713
  %v3239 = vunpack.c.l.b16 %v714
  %v3240 = vunpack.c.h.b16 %v714
  %v3241 = vunpack.c.l.b16 %v715
  %v3242 = vunpack.c.h.b16 %v715
  %v3243 = vunpack.c.l.b16 %v716
  %v3244 = vunpack.c.h.b16 %v716
  %v3245 = vunpack.c.l.b16 %v717
  %v3246 = vunpack.c.h.b16 %v717
  %v3247 = vunpack.c.l.b16 %v718
  %v3248 = vunpack.c.h.b16 %v718
  %v3249 = vunpack.c.l.b16 %v719
  %v3250 = vunpack.c.h.b16 %v719
  %v3251 = vunpack.c.l.b16 %v720
  %v3252 = vunpack.c.h.b16 %v720
  %v3253 = vunpack.c.l.b16 %v721
  %v3254 = vunpack.c.h.b16 %v721
  %v3255 = vunpack.c.l.b16 %v722
  %v3256 = vunpack.c.h.b16 %v722
  %v3257 = vunpack.c.l.b16 %v723
  %v3258 = vunpack.c.h.b16 %v723
  %v3259 = vunpack.c.l.b16 %v724
  %v3260 = vunpack.c.h.b16 %v724
  %v3261 = vunpack.c.l.b16 %v725
  %v3262 = vunpack.c.h.b16 %v725
  %v3263 = vunpack.c.l.b16 %v726
  %v3264 = vunpack.c.h.b16 %v726
  %v3265 = vunpack.c.l.b16 %v727
  %v3266 = vunpack.c.h.b16 %v727
  %v3267 = vunpack.c.l.b16 %v728
  %v3268 = vunpack.c.h.b16 %v728
  %v3269 = vunpack.c.l.b16 %v729
  %v3270 = vunpack.c.h.b16 %v729
  %v3271 = vunpack.c.l.b16 %v730
  %v3272 = vunpack.c.h.b16 %v730
  %v3273 = vunpack.c.l.b16 %v731
  %v3274 = vunpack.c.h.b16 %v731
  %v3275 = vunpack.c.l.b16 %v732
  %v3276 = vunpack.c.h.b16 %v732
  %v3277 = vunpack.c.l.b16 %v733
  %v3278 = vunpack.c.h.b16 %v733
  %v3279 = vunpack.c.l.b16 %v734
  %v3280 = vunpack.c.h.b16 %v734
  %v3281 = vunpack.c.l.b16 %v735
  %v3282 = vunpack.c.h.b16 %v735
  %v3283 = vunpack.c.l.b16 %v736
  %v3284 = vunpack.c.h.b16 %v736
  %v3285 = vunpack.c.l.b16 %v737
  %v3286 = vunpack.c.h.b16 %v737
  %v3287 = vunpack.c.l.b16 %v738
  %v3288 = vunpack.c.h.b16 %v738
  %v3289 = vunpack.c.l.b16 %v739
  %v3290 = vunpack.c.h.b16 %v739
  %v3291 = vunpack.c.l.b16 %v740
  %v3292 = vunpack.c.h.b16 %v740
  %v3293 = vunpack.c.l.b16 %v741
  %v3294 = vunpack.c.h.b16 %v741
  %v3295 = vunpack.c.l.b16 %v742
  %v3296 = vunpack.c.h.b16 %v742
  %v3297 = vunpack.c.l.b16 %v743
  %v3298 = vunpack.c.h.b16 %v743
  %v3299 = vunpack.c.l.b16 %v744
  %v3300 = vunpack.c.h.b16 %v744
  %v3301 = vunpack.c.l.b16 %v745
  %v3302 = vunpack.c.h.b16 %v745
  %v3303 = vunpack.c.l.b16 %v746
  %v3304 = vunpack.c.h.b16 %v746
  %v3305 = vunpack.c.l.b16 %v747
  %v3306 = vunpack.c.h.b16 %v747
  %v3307 = vunpack.c.l.b16 %v748
  %v3308 = vunpack.c.h.b16 %v748
  %v3309 = vunpack.c.l.b16 %v749
  %v3310 = vunpack.c.h.b16 %v749
  %v3311 = vunpack.c.l.b16 %v750
  %v3312 = vunpack.c.h.b16 %v750
  %v3313 = vunpack.c.l.b16 %v751
  %v3314 = vunpack.c.h.b16 %v751
  %v3315 = vunpack.c.l.b16 %v752
  %v3316 = vunpack.c.h.b16 %v752
  %v3317 = vunpack.c.l.b16 %v753
  %v3318 = vunpack.c.h.b16 %v753
  %v3319 = vunpack.c.l.b16 %v754
  %v3320 = vunpack.c.h.b16 %v754
  %v3321 = vunpack.c.l.b16 %v755
  %v3322 = vunpack.c.h.b16 %v755
  %v3323 = vunpack.c.l.b16 %v756
  %v3324 = vunpack.c.h.b16 %v756
  %v3325 = vunpack.c.l.b16 %v757
  %v3326 = vunpack.c.h.b16 %v757
  %v3327 = vunpack.c.l.b16 %v758
  %v3328 = vunpack.c.h.b16 %v758
  %v3329 = vunpack.c.l.b16 %v759
  %v3330 = vunpack.c.h.b16 %v759
  %v3331 = vunpack.c.l.b16 %v760
  %v3332 = vunpack.c.h.b16 %v760
  %v3333 = vunpack.c.l.b16 %v761
  %v3334 = vunpack.c.h.b16 %v761
  %v3335 = vunpack.c.l.b16 %v762
  %v3336 = vunpack.c.h.b16 %v762
  %v3337 = vunpack.c.l.b16 %v763
  %v3338 = vunpack.c.h.b16 %v763
  %v3339 = vunpack.c.l.b16 %v764
  %v3340 = vunpack.c.h.b16 %v764
  %v3341 = vunpack.c.l.b16 %v765
  %v3342 = vunpack.c.h.b16 %v765
  %v3343 = vunpack.c.l.b16 %v766
  %v3344 = vunpack.c.h.b16 %v766
  %v3345 = vunpack.c.l.b16 %v767
  %v3346 = vunpack.c.h.b16 %v767
  %v3347 = vunpack.c.l.b16 %v768
  %v3348 = vunpack.c.h.b16 %v768
  %v3349 = vunpack.c.l.b16 %v769
  %v3350 = vunpack.c.h.b16 %v769
  %v3351 = vunpack.c.l.b16 %v770
  %v3352 = vunpack.c.h.b16 %v770
  %v3353 = vunpack.c.l.b16 %v771
  %v3354 = vunpack.c.h.b16 %v771
  %v3355 = vunpack.c.l.b16 %v772
  %v3356 = vunpack.c.h.b16 %v772
  %v3357 = vunpack.c.l.b16 %v773
  %v3358 = vunpack.c.h.b16 %v773
  %v3359 = vunpack.c.l.b16 %v774
  %v3360 = vunpack.c.h.b16 %v774
  %v3361 = vunpack.c.l.b16 %v775
  %v3362 = vunpack.c.h.b16 %v775
  %v3363 = vunpack.c.l.b16 %v776
  %v3364 = vunpack.c.h.b16 %v776
  %v3365 = vunpack.c.l.b16 %v777
  %v3366 = vunpack.c.h.b16 %v777
  %v3367 = vunpack.c.l.b16 %v778
  %v3368 = vunpack.c.h.b16 %v778
  %v3369 = vunpack.c.l.b16 %v779
  %v3370 = vunpack.c.h.b16 %v779
  %v3371 = vunpack.c.l.b16 %v780
  %v3372 = vunpack.c.h.b16 %v780
  %v3373 = vunpack.c.l.b16 %v781
  %v3374 = vunpack.c.h.b16 %v781
  %v3375 = vunpack.c.l.b16 %v782
  %v3376 = vunpack.c.h.b16 %v782
  %v3377 = vunpack.c.l.b16 %v783
  %v3378 = vunpack.c.h.b16 %v783
  %v3379 = vunpack.c.l.b16 %v784
  %v3380 = vunpack.c.h.b16 %v784
  %v3381 = vunpack.c.l.b16 %v785
  %v3382 = vunpack.c.h.b16 %v785
  %v3383 = vunpack.c.l.b16 %v786
  %v3384 = vunpack.c.h.b16 %v786
  %v3385 = vunpack.c.l.b16 %v787
  %v3386 = vunpack.c.h.b16 %v787
  %v3387 = vunpack.c.l.b16 %v788
  %v3388 = vunpack.c.h.b16 %v788
  %v3389 = vunpack.c.l.b16 %v789
  %v3390 = vunpack.c.h.b16 %v789
  %v3391 = vunpack.c.l.b16 %v790
  %v3392 = vunpack.c.h.b16 %v790
  %v3393 = vunpack.c.l.b16 %v791
  %v3394 = vunpack.c.h.b16 %v791
  %v3395 = vunpack.c.l.b16 %v792
  %v3396 = vunpack.c.h.b16 %v792
  %v3397 = vunpack.c.l.b16 %v793
  %v3398 = vunpack.c.h.b16 %v793
  %v3399 = vunpack.c.l.b16 %v794
  %v3400 = vunpack.c.h.b16 %v794
  %v3401 = vunpack.c.l.b16 %v795
  %v3402 = vunpack.c.h.b16 %v795
  %v3403 = vunpack.c.l.b16 %v796
  %v3404 = vunpack.c.h.b16 %v796
  %v3405 = vunpack.c.l.b16 %v797
  %v3406 = vunpack.c.h.b16 %v797
  %v3407 = vunpack.c.l.b16 %v798
  %v3408 = vunpack.c.h.b16 %v798
  %v3409 = vunpack.c.l.b16 %v799
  %v3410 = vunpack.c.h.b16 %v799
  %v3411 = vunpack.c.l.b16 %v800
  %v3412 = vunpack.c.h.b16 %v800
  %v3413 = vunpack.c.l.b16 %v801
  %v3414 = vunpack.c.h.b16 %v801
  %v3415 = vunpack.c.l.b16 %v802
  %v3416 = vunpack.c.h.b16 %v802
  %v3417 = vunpack.c.l.b16 %v803
  %v3418 = vunpack.c.h.b16 %v803
  %v3419 = vunpack.c.l.b16 %v804
  %v3420 = vunpack.c.h.b16 %v804
  %v3421 = vunpack.c.l.b16 %v805
  %v3422 = vunpack.c.h.b16 %v805
  %v3423 = vunpack.c.l.b16 %v806
  %v3424 = vunpack.c.h.b16 %v806
  %v3425 = vunpack.c.l.b16 %v807
  %v3426 = vunpack.c.h.b16 %v807
  %v3427 = vunpack.c.l.b16 %v808
  %v3428 = vunpack.c.h.b16 %v808
  %v3429 = vpack.c.b16 %v1877, %v1861
  %v3430 = vpack.c.b16 %v1878, %v1862
  %v3431 = vpack.c.b16 %v1879, %v1863
  %v3432 = vpack.c.b16 %v1880, %v1864
  %v3433 = vpack.c.b16 %v1881, %v1865
  %v3434 = vpack.c.b16 %v1882, %v1866
  %v3435 = vpack.c.b16 %v1883, %v1867
  %v3436 = vpack.c.b16 %v1884, %v1868
  %v3437 = vpack.c.b16 %v1885, %v1869
  %v3438 = vpack.c.b16 %v1886, %v1870
  %v3439 = vpack.c.b16 %v1887, %v1871
  %v3440 = vpack.c.b16 %v1888, %v1872
  %v3441 = vpack.c.b16 %v1889, %v1873
  %v3442 = vpack.c.b16 %v1890, %v1874
  %v3443 = vpack.c.b16 %v1891, %v1875
  %v3444 = vpack.c.b16 %v1892, %v1876
  %v3445 = vpack.c.b16 %v1909, %v1893
  %v3446 = vpack.c.b16 %v1910, %v1894
  %v3447 = vpack.c.b16 %v1911, %v1895
  %v3448 = vpack.c.b16 %v1912, %v1896
  %v3449 = vpack.c.b16 %v1913, %v1897
  %v3450 = vpack.c.b16 %v1914, %v1898
  %v3451 = vpack.c.b16 %v1915, %v1899
  %v3452 = vpack.c.b16 %v1916, %v1900
  %v3453 = vpack.c.b16 %v1917, %v1901
  %v3454 = vpack.c.b16 %v1918, %v1902
  %v3455 = vpack.c.b16 %v1919, %v1903
  %v3456 = vpack.c.b16 %v1920, %v1904
  %v3457 = vpack.c.b16 %v1921, %v1905
  %v3458 = vpack.c.b16 %v1922, %v1906
  %v3459 = vpack.c.b16 %v1923, %v1907
  %v3460 = vpack.c.b16 %v1924, %v1908
  %v3461 = vpack.c.b16 %v1941, %v1925
  %v3462 = vpack.c.b16 %v1942, %v1926
  %v3463 = vpack.c.b16 %v1943, %v1927
  %v3464 = vpack.c.b16 %v1944, %v1928
  %v3465 = vpack.c.b16 %v1945, %v1929
  %v3466 = vpack.c.b16 %v1946, %v1930
  %v3467 = vpack.c.b16 %v1947, %v1931
  %v3468 = vpack.c.b16 %v1948, %v1932
  %v3469 = vpack.c.b16 %v1949, %v1933
  %v3470 = vpack.c.b16 %v1950, %v1934
  %v3471 = vpack.c.b16 %v1951, %v1935
  %v3472 = vpack.c.b16 %v1952, %v1936
  %v3473 = vpack.c.b16 %v1953, %v1937
  %v3474 = vpack.c.b16 %v1954, %v1938
  %v3475 = vpack.c.b16 %v1955, %v1939
  %v3476 = vpack.c.b16 %v1956, %v1940
  %v3477 = vpack.c.b16 %v1973, %v1957
  %v3478 = vpack.c.b16 %v1974, %v1958
  %v3479 = vpack.c.b16 %v1975, %v1959
  %v3480 = vpack.c.b16 %v1976, %v1960
  %v3481 = vpack.c.b16 %v1977, %v1961
  %v3482 = vpack.c.b16 %v1978, %v1962
  %v3483 = vpack.c.b16 %v1979, %v1963
  %v3484 = vpack.c.b16 %v1980, %v1964
  %v3485 = vpack.c.b16 %v1981, %v1965
  %v3486 = vpack.c.b16 %v1982, %v1966
  %v3487 = vpack.c.b16 %v1983, %v1967
  %v3488 = vpack.c.b16 %v1984, %v1968
  %v3489 = vpack.c.b16 %v1985, %v1969
  %v3490 = vpack.c.b16 %v1986, %v1970
  %v3491 = vpack.c.b16 %v1987, %v1971
  %v3492 = vpack.c.b16 %v1988, %v1972
  %v3493 = vpack.c.b16 %v2005, %v1989
  %v3494 = vpack.c.b16 %v2006, %v1990
  %v3495 = vpack.c.b16 %v2007, %v1991
  %v3496 = vpack.c.b16 %v2008, %v1992
  %v3497 = vpack.c.b16 %v2009, %v1993
  %v3498 = vpack.c.b16 %v2010, %v1994
  %v3499 = vpack.c.b16 %v2011, %v1995
  %v3500 = vpack.c.b16 %v2012, %v1996
  %v3501 = vpack.c.b16 %v2013, %v1997
  %v3502 = vpack.c.b16 %v2014, %v1998
  %v3503 = vpack.c.b16 %v2015, %v1999
  %v3504 = vpack.c.b16 %v2016, %v2000
  %v3505 = vpack.c.b16 %v2017, %v2001
  %v3506 = vpack.c.b16 %v2018, %v2002
  %v3507 = vpack.c.b16 %v2019, %v2003
  %v3508 = vpack.c.b16 %v2020, %v2004
  %v3509 = vpack.c.b16 %v2037, %v2021
  %v3510 = vpack.c.b16 %v2038, %v2022
  %v3511 = vpack.c.b16 %v2039, %v2023
  %v3512 = vpack.c.b16 %v2040, %v2024
  %v3513 = vpack.c.b16 %v2041, %v2025
  %v3514 = vpack.c.b16 %v2042, %v2026
  %v3515 = vpack.c.b16 %v2043, %v2027
  %v3516 = vpack.c.b16 %v2044, %v2028
  %v3517 = vpack.c.b16 %v2045, %v2029
  %v3518 = vpack.c.b16 %v2046, %v2030
  %v3519 = vpack.c.b16 %v2047, %v2031
  %v3520 = vpack.c.b16 %v2048, %v2032
  %v3521 = vpack.c.b16 %v2049, %v2033
  %v3522 = vpack.c.b16 %v2050, %v2034
  %v3523 = vpack.c.b16 %v2051, %v2035
  %v3524 = vpack.c.b16 %v2052, %v2036
  %v3525 = vpack.c.b16 %v2069, %v2053
  %v3526 = vpack.c.b16 %v2070, %v2054
  %v3527 = vpack.c.b16 %v2071, %v2055
  %v3528 = vpack.c.b16 %v2072, %v2056
  %v3529 = vpack.c.b16 %v2073, %v2057
  %v3530 = vpack.c.b16 %v2074, %v2058
  %v3531 = vpack.c.b16 %v2075, %v2059
  %v3532 = vpack.c.b16 %v2076, %v2060
  %v3533 = vpack.c.b16 %v2077, %v2061
  %v3534 = vpack.c.b16 %v2078, %v2062
  %v3535 = vpack.c.b16 %v2079, %v2063
  %v3536 = vpack.c.b16 %v2080, %v2064
  %v3537 = vpack.c.b16 %v2081, %v2065
  %v3538 = vpack.c.b16 %v2082, %v2066
  %v3539 = vpack.c.b16 %v2083, %v2067
  %v3540 = vpack.c.b16 %v2084, %v2068
  %v3541 = vpack.c.b16 %v2101, %v2085
  %v3542 = vpack.c.b16 %v2102, %v2086
  %v3543 = vpack.c.b16 %v2103, %v2087
  %v3544 = vpack.c.b16 %v2104, %v2088
  %v3545 = vpack.c.b16 %v2105, %v2089
  %v3546 = vpack.c.b16 %v2106, %v2090
  %v3547 = vpack.c.b16 %v2107, %v2091
  %v3548 = vpack.c.b16 %v2108, %v2092
  %v3549 = vpack.c.b16 %v2109, %v2093
  %v3550 = vpack.c.b16 %v2110, %v2094
  %v3551 = vpack.c.b16 %v2111, %v2095
  %v3552 = vpack.c.b16 %v2112, %v2096
  %v3553 = vpack.c.b16 %v2113, %v2097
  %v3554 = vpack.c.b16 %v2114, %v2098
  %v3555 = vpack.c.b16 %v2115, %v2099
  %v3556 = vpack.c.b16 %v2116, %v2100
  %v3557 = vpack.c.b16 %v2133, %v2117
  %v3558 = vpack.c.b16 %v2134, %v2118
  %v3559 = vpack.c.b16 %v2135, %v2119
  %v3560 = vpack.c.b16 %v2136, %v2120
  %v3561 = vpack.c.b16 %v2137, %v2121
  %v3562 = vpack.c.b16 %v2138, %v2122
  %v3563 = vpack.c.b16 %v2139, %v2123
  %v3564 = vpack.c.b16 %v2140, %v2124
  %v3565 = vpack.c.b16 %v2141, %v2125
  %v3566 = vpack.c.b16 %v2142, %v2126
  %v3567 = vpack.c.b16 %v2143, %v2127
  %v3568 = vpack.c.b16 %v2144, %v2128
  %v3569 = vpack.c.b16 %v2145, %v2129
  %v3570 = vpack.c.b16 %v2146, %v2130
  %v3571 = vpack.c.b16 %v2147, %v2131
  %v3572 = vpack.c.b16 %v2148, %v2132
  %v3573 = vpack.c.b16 %v2165, %v2149
  %v3574 = vpack.c.b16 %v2166, %v2150
  %v3575 = vpack.c.b16 %v2167, %v2151
  %v3576 = vpack.c.b16 %v2168, %v2152
  %v3577 = vpack.c.b16 %v2169, %v2153
  %v3578 = vpack.c.b16 %v2170, %v2154
  %v3579 = vpack.c.b16 %v2171, %v2155
  %v3580 = vpack.c.b16 %v2172, %v2156
  %v3581 = vpack.c.b16 %v2173, %v2157
  %v3582 = vpack.c.b16 %v2174, %v2158
  %v3583 = vpack.c.b16 %v2175, %v2159
  %v3584 = vpack.c.b16 %v2176, %v2160
  %v3585 = vpack.c.b16 %v2177, %v2161
  %v3586 = vpack.c.b16 %v2178, %v2162
  %v3587 = vpack.c.b16 %v2179, %v2163
  %v3588 = vpack.c.b16 %v2180, %v2164
  %v3589 = vpack.c.b16 %v2197, %v2181
  %v3590 = vpack.c.b16 %v2198, %v2182
  %v3591 = vpack.c.b16 %v2199, %v2183
  %v3592 = vpack.c.b16 %v2200, %v2184
  %v3593 = vpack.c.b16 %v2201, %v2185
  %v3594 = vpack.c.b16 %v2202, %v2186
  %v3595 = vpack.c.b16 %v2203, %v2187
  %v3596 = vpack.c.b16 %v2204, %v2188
  %v3597 = vpack.c.b16 %v2205, %v2189
  %v3598 = vpack.c.b16 %v2206, %v2190
  %v3599 = vpack.c.b16 %v2207, %v2191
  %v3600 = vpack.c.b16 %v2208, %v2192
  %v3601 = vpack.c.b16 %v2209, %v2193
  %v3602 = vpack.c.b16 %v2210, %v2194
  %v3603 = vpack.c.b16 %v2211, %v2195
  %v3604 = vpack.c.b16 %v2212, %v2196
  %v3605 = vpack.c.b16 %v2229, %v2213
  %v3606 = vpack.c.b16 %v2230, %v2214
  %v3607 = vpack.c.b16 %v2231, %v2215
  %v3608 = vpack.c.b16 %v2232, %v2216
  %v3609 = vpack.c.b16 %v2233, %v2217
  %v3610 = vpack.c.b16 %v2234, %v2218
  %v3611 = vpack.c.b16 %v2235, %v2219
  %v3612 = vpack.c.b16 %v2236, %v2220
  %v3613 = vpack.c.b16 %v2237, %v2221
  %v3614 = vpack.c.b16 %v2238, %v2222
  %v3615 = vpack.c.b16 %v2239, %v2223
  %v3616 = vpack.c.b16 %v2240, %v2224
  %v3617 = vpack.c.b16 %v2241, %v2225
  %v3618 = vpack.c.b16 %v2242, %v2226
  %v3619 = vpack.c.b16 %v2243, %v2227
  %v3620 = vpack.c.b16 %v2244, %v2228
  %v3621 = vpack.c.b16 %v2261, %v2245
  %v3622 = vpack.c.b16 %v2262, %v2246
  %v3623 = vpack.c.b16 %v2263, %v2247
  %v3624 = vpack.c.b16 %v2264, %v2248
  %v3625 = vpack.c.b16 %v2265, %v2249
  %v3626 = vpack.c.b16 %v2266, %v2250
  %v3627 = vpack.c.b16 %v2267, %v2251
  %v3628 = vpack.c.b16 %v2268, %v2252
  %v3629 = vpack.c.b16 %v2269, %v2253
  %v3630 = vpack.c.b16 %v2270, %v2254
  %v3631 = vpack.c.b16 %v2271, %v2255
  %v3632 = vpack.c.b16 %v2272, %v2256
  %v3633 = vpack.c.b16 %v2273, %v2257
  %v3634 = vpack.c.b16 %v2274, %v2258
  %v3635 = vpack.c.b16 %v2275, %v2259
  %v3636 = vpack.c.b16 %v2276, %v2260
  %v3637 = vpack.c.b16 %v2293, %v2277
  %v3638 = vpack.c.b16 %v2294, %v2278
  %v3639 = vpack.c.b16 %v2295, %v2279
  %v3640 = vpack.c.b16 %v2296, %v2280
  %v3641 = vpack.c.b16 %v2297, %v2281
  %v3642 = vpack.c.b16 %v2298, %v2282
  %v3643 = vpack.c.b16 %v2299, %v2283
  %v3644 = vpack.c.b16 %v2300, %v2284
  %v3645 = vpack.c.b16 %v2301, %v2285
  %v3646 = vpack.c.b16 %v2302, %v2286
  %v3647 = vpack.c.b16 %v2303, %v2287
  %v3648 = vpack.c.b16 %v2304, %v2288
  %v3649 = vpack.c.b16 %v2305, %v2289
  %v3650 = vpack.c.b16 %v2306, %v2290
  %v3651 = vpack.c.b16 %v2307, %v2291
  %v3652 = vpack.c.b16 %v2308, %v2292
  %v3653 = vpack.c.b16 %v2325, %v2309
  %v3654 = vpack.c.b16 %v2326, %v2310
  %v3655 = vpack.c.b16 %v2327, %v2311
  %v3656 = vpack.c.b16 %v2328, %v2312
  %v3657 = vpack.c.b16 %v2329, %v2313
  %v3658 = vpack.c.b16 %v2330, %v2314
  %v3659 = vpack.c.b16 %v2331, %v2315
  %v3660 = vpack.c.b16 %v2332, %v2316
  %v3661 = vpack.c.b16 %v2333, %v2317
  %v3662 = vpack.c.b16 %v2334, %v2318
  %v3663 = vpack.c.b16 %v2335, %v2319
  %v3664 = vpack.c.b16 %v2336, %v2320
  %v3665 = vpack.c.b16 %v2337, %v2321
  %v3666 = vpack.c.b16 %v2338, %v2322
  %v3667 = vpack.c.b16 %v2339, %v2323
  %v3668 = vpack.c.b16 %v2340, %v2324
  %v3669 = vpack.c.b16 %v2357, %v2341
  %v3670 = vpack.c.b16 %v2358, %v2342
  %v3671 = vpack.c.b16 %v2359, %v2343
  %v3672 = vpack.c.b16 %v2360, %v2344
  %v3673 = vpack.c.b16 %v2361, %v2345
  %v3674 = vpack.c.b16 %v2362, %v2346
  %v3675 = vpack.c.b16 %v2363, %v2347
  %v3676 = vpack.c.b16 %v2364, %v2348
  %v3677 = vpack.c.b16 %v2365, %v2349
  %v3678 = vpack.c.b16 %v2366, %v2350
  %v3679 = vpack.c.b16 %v2367, %v2351
  %v3680 = vpack.c.b16 %v2368, %v2352
  %v3681 = vpack.c.b16 %v2369, %v2353
  %v3682 = vpack.c.b16 %v2370, %v2354
  %v3683 = vpack.c.b16 %v2371, %v2355
  %v3684 = vpack.c.b16 %v2372, %v2356
  %v3685 = vpack.c.b16 %v2389, %v2373
  %v3686 = vpack.c.b16 %v2390, %v2374
  %v3687 = vpack.c.b16 %v2391, %v2375
  %v3688 = vpack.c.b16 %v2392, %v2376
  %v3689 = vpack.c.b16 %v2393, %v2377
  %v3690 = vpack.c.b16 %v2394, %v2378
  %v3691 = vpack.c.b16 %v2395, %v2379
  %v3692 = vpack.c.b16 %v2396, %v2380
  %v3693 = vpack.c.b16 %v2397, %v2381
  %v3694 = vpack.c.b16 %v2398, %v2382
  %v3695 = vpack.c.b16 %v2399, %v2383
  %v3696 = vpack.c.b16 %v2400, %v2384
  %v3697 = vpack.c.b16 %v2401, %v2385
  %v3698 = vpack.c.b16 %v2402, %v2386
  %v3699 = vpack.c.b16 %v2403, %v2387
  %v3700 = vpack.c.b16 %v2404, %v2388
  %v3701 = vpack.c.b16 %v2421, %v2405
  %v3702 = vpack.c.b16 %v2422, %v2406
  %v3703 = vpack.c.b16 %v2423, %v2407
  %v3704 = vpack.c.b16 %v2424, %v2408
  %v3705 = vpack.c.b16 %v2425, %v2409
  %v3706 = vpack.c.b16 %v2426, %v2410
  %v3707 = vpack.c.b16 %v2427, %v2411
  %v3708 = vpack.c.b16 %v2428, %v2412
  %v3709 = vpack.c.b16 %v2429, %v2413
  %v3710 = vpack.c.b16 %v2430, %v2414
  %v3711 = vpack.c.b16 %v2431, %v2415
  %v3712 = vpack.c.b16 %v2432, %v2416
  %v3713 = vpack.c.b16 %v2433, %v2417
  %v3714 = vpack.c.b16 %v2434, %v2418
  %v3715 = vpack.c.b16 %v2435, %v2419
  %v3716 = vpack.c.b16 %v2436, %v2420
  %v3717 = vpack.c.b16 %v2453, %v2437
  %v3718 = vpack.c.b16 %v2454, %v2438
  %v3719 = vpack.c.b16 %v2455, %v2439
  %v3720 = vpack.c.b16 %v2456, %v2440
  %v3721 = vpack.c.b16 %v2457, %v2441
  %v3722 = vpack.c.b16 %v2458, %v2442
  %v3723 = vpack.c.b16 %v2459, %v2443
  %v3724 = vpack.c.b16 %v2460, %v2444
  %v3725 = vpack.c.b16 %v2461, %v2445
  %v3726 = vpack.c.b16 %v2462, %v2446
  %v3727 = vpack.c.b16 %v2463, %v2447
  %v3728 = vpack.c.b16 %v2464, %v2448
  %v3729 = vpack.c.b16 %v2465, %v2449
  %v3730 = vpack.c.b16 %v2466, %v2450
  %v3731 = vpack.c.b16 %v2467, %v2451
  %v3732 = vpack.c.b16 %v2468, %v2452
  %v3733 = vpack.c.b16 %v2485, %v2469
  %v3734 = vpack.c.b16 %v2486, %v2470
  %v3735 = vpack.c.b16 %v2487, %v2471
  %v3736 = vpack.c.b16 %v2488, %v2472
  %v3737 = vpack.c.b16 %v2489, %v2473
  %v3738 = vpack.c.b16 %v2490, %v2474
  %v3739 = vpack.c.b16 %v2491, %v2475
  %v3740 = vpack.c.b16 %v2492, %v2476
  %v3741 = vpack.c.b16 %v2493, %v2477
  %v3742 = vpack.c.b16 %v2494, %v2478
  %v3743 = vpack.c.b16 %v2495, %v2479
  %v3744 = vpack.c.b16 %v2496, %v2480
  %v3745 = vpack.c.b16 %v2497, %v2481
  %v3746 = vpack.c.b16 %v2498, %v2482
  %v3747 = vpack.c.b16 %v2499, %v2483
  %v3748 = vpack.c.b16 %v2500, %v2484
  %v3749 = vpack.c.b16 %v2517, %v2501
  %v3750 = vpack.c.b16 %v2518, %v2502
  %v3751 = vpack.c.b16 %v2519, %v2503
  %v3752 = vpack.c.b16 %v2520, %v2504
  %v3753 = vpack.c.b16 %v2521, %v2505
  %v3754 = vpack.c.b16 %v2522, %v2506
  %v3755 = vpack.c.b16 %v2523, %v2507
  %v3756 = vpack.c.b16 %v2524, %v2508
  %v3757 = vpack.c.b16 %v2525, %v2509
  %v3758 = vpack.c.b16 %v2526, %v2510
  %v3759 = vpack.c.b16 %v2527, %v2511
  %v3760 = vpack.c.b16 %v2528, %v2512
  %v3761 = vpack.c.b16 %v2529, %v2513
  %v3762 = vpack.c.b16 %v2530, %v2514
  %v3763 = vpack.c.b16 %v2531, %v2515
  %v3764 = vpack.c.b16 %v2532, %v2516
  %v3765 = vpack.c.b16 %v2549, %v2533
  %v3766 = vpack.c.b16 %v2550, %v2534
  %v3767 = vpack.c.b16 %v2551, %v2535
  %v3768 = vpack.c.b16 %v2552, %v2536
  %v3769 = vpack.c.b16 %v2553, %v2537
  %v3770 = vpack.c.b16 %v2554, %v2538
  %v3771 = vpack.c.b16 %v2555, %v2539
  %v3772 = vpack.c.b16 %v2556, %v2540
  %v3773 = vpack.c.b16 %v2557, %v2541
  %v3774 = vpack.c.b16 %v2558, %v2542
  %v3775 = vpack.c.b16 %v2559, %v2543
  %v3776 = vpack.c.b16 %v2560, %v2544
  %v3777 = vpack.c.b16 %v2561, %v2545
  %v3778 = vpack.c.b16 %v2562, %v2546
  %v3779 = vpack.c.b16 %v2563, %v2547
  %v3780 = vpack.c.b16 %v2564, %v2548
  %v3781 = vpack.c.b16 %v2581, %v2565
  %v3782 = vpack.c.b16 %v2582, %v2566
  %v3783 = vpack.c.b16 %v2583, %v2567
  %v3784 = vpack.c.b16 %v2584, %v2568
  %v3785 = vpack.c.b16 %v2585, %v2569
  %v3786 = vpack.c.b16 %v2586, %v2570
  %v3787 = vpack.c.b16 %v2587, %v2571
  %v3788 = vpack.c.b16 %v2588, %v2572
  %v3789 = vpack.c.b16 %v2589, %v2573
  %v3790 = vpack.c.b16 %v2590, %v2574
  %v3791 = vpack.c.b16 %v2591, %v2575
  %v3792 = vpack.c.b16 %v2592, %v2576
  %v3793 = vpack.c.b16 %v2593, %v2577
  %v3794 = vpack.c.b16 %v2594, %v2578
  %v3795 = vpack.c.b16 %v2595, %v2579
  %v3796 = vpack.c.b16 %v2596, %v2580
  %v3797 = vpack.c.b16 %v2613, %v2597
  %v3798 = vpack.c.b16 %v2614, %v2598
  %v3799 = vpack.c.b16 %v2615, %v2599
  %v3800 = vpack.c.b16 %v2616, %v2600
  %v3801 = vpack.c.b16 %v2617, %v2601
  %v3802 = vpack.c.b16 %v2618, %v2602
  %v3803 = vpack.c.b16 %v2619, %v2603
  %v3804 = vpack.c.b16 %v2620, %v2604
  %v3805 = vpack.c.b16 %v2621, %v2605
  %v3806 = vpack.c.b16 %v2622, %v2606
  %v3807 = vpack.c.b16 %v2623, %v2607
  %v3808 = vpack.c.b16 %v2624, %v2608
  %v3809 = vpack.c.b16 %v2625, %v2609
  %v3810 = vpack.c.b16 %v2626, %v2610
  %v3811 = vpack.c.b16 %v2627, %v2611
  %v3812 = vpack.c.b16 %v2628, %v2612
  %v3813 = vpack.c.b16 %v2645, %v2629
  %v3814 = vpack.c.b16 %v2646, %v2630
  %v3815 = vpack.c.b16 %v2647, %v2631
  %v3816 = vpack.c.b16 %v2648, %v2632
  %v3817 = vpack.c.b16 %v2649, %v2633
  %v3818 = vpack.c.b16 %v2650, %v2634
  %v3819 = vpack.c.b16 %v2651, %v2635
  %v3820 = vpack.c.b16 %v2652, %v2636
  %v3821 = vpack.c.b16 %v2653, %v2637
  %v3822 = vpack.c.b16 %v2654, %v2638
  %v3823 = vpack.c.b16 %v2655, %v2639
  %v3824 = vpack.c.b16 %v2656, %v2640
  %v3825 = vpack.c.b16 %v2657, %v2641
  %v3826 = vpack.c.b16 %v2658, %v2642
  %v3827 = vpack.c.b16 %v2659, %v2643
  %v3828 = vpack.c.b16 %v2660, %v2644
  %v3829 = vpack.c.b16 %v2677, %v2661
  %v3830 = vpack.c.b16 %v2678, %v2662
  %v3831 = vpack.c.b16 %v2679, %v2663
  %v3832 = vpack.c.b16 %v2680, %v2664
  %v3833 = vpack.c.b16 %v2681, %v2665
  %v3834 = vpack.c.b16 %v2682, %v2666
  %v3835 = vpack.c.b16 %v2683, %v2667
  %v3836 = vpack.c.b16 %v2684, %v2668
  %v3837 = vpack.c.b16 %v2685, %v2669
  %v3838 = vpack.c.b16 %v2686, %v2670
  %v3839 = vpack.c.b16 %v2687, %v2671
  %v3840 = vpack.c.b16 %v2688, %v2672
  %v3841 = vpack.c.b16 %v2689, %v2673
  %v3842 = vpack.c.b16 %v2690, %v2674
  %v3843 = vpack.c.b16 %v2691, %v2675
  %v3844 = vpack.c.b16 %v2692, %v2676
  %v3845 = vpack.c.b16 %v2709, %v2693
  %v3846 = vpack.c.b16 %v2710, %v2694
  %v3847 = vpack.c.b16 %v2711, %v2695
  %v3848 = vpack.c.b16 %v2712, %v2696
  %v3849 = vpack.c.b16 %v2713, %v2697
  %v3850 = vpack.c.b16 %v2714, %v2698
  %v3851 = vpack.c.b16 %v2715, %v2699
  %v3852 = vpack.c.b16 %v2716, %v2700
  %v3853 = vpack.c.b16 %v2717, %v2701
  %v3854 = vpack.c.b16 %v2718, %v2702
  %v3855 = vpack.c.b16 %v2719, %v2703
  %v3856 = vpack.c.b16 %v2720, %v2704
  %v3857 = vpack.c.b16 %v2721, %v2705
  %v3858 = vpack.c.b16 %v2722, %v2706
  %v3859 = vpack.c.b16 %v2723, %v2707
  %v3860 = vpack.c.b16 %v2724, %v2708
  %v3861 = vpack.c.b16 %v2741, %v2725
  %v3862 = vpack.c.b16 %v2742, %v2726
  %v3863 = vpack.c.b16 %v2743, %v2727
  %v3864 = vpack.c.b16 %v2744, %v2728
  %v3865 = vpack.c.b16 %v2745, %v2729
  %v3866 = vpack.c.b16 %v2746, %v2730
  %v3867 = vpack.c.b16 %v2747, %v2731
  %v3868 = vpack.c.b16 %v2748, %v2732
  %v3869 = vpack.c.b16 %v2749, %v2733
  %v3870 = vpack.c.b16 %v2750, %v2734
  %v3871 = vpack.c.b16 %v2751, %v2735
  %v3872 = vpack.c.b16 %v2752, %v2736
  %v3873 = vpack.c.b16 %v2753, %v2737
  %v3874 = vpack.c.b16 %v2754, %v2738
  %v3875 = vpack.c.b16 %v2755, %v2739
  %v3876 = vpack.c.b16 %v2756, %v2740
  %v3877 = vpack.c.b16 %v2773, %v2757
  %v3878 = vpack.c.b16 %v2774, %v2758
  %v3879 = vpack.c.b16 %v2775, %v2759
  %v3880 = vpack.c.b16 %v2776, %v2760
  %v3881 = vpack.c.b16 %v2777, %v2761
  %v3882 = vpack.c.b16 %v2778, %v2762
  %v3883 = vpack.c.b16 %v2779, %v2763
  %v3884 = vpack.c.b16 %v2780, %v2764
  %v3885 = vpack.c.b16 %v2781, %v2765
  %v3886 = vpack.c.b16 %v2782, %v2766
  %v3887 = vpack.c.b16 %v2783, %v2767
  %v3888 = vpack.c.b16 %v2784, %v2768
  %v3889 = vpack.c.b16 %v2785, %v2769
  %v3890 = vpack.c.b16 %v2786, %v2770
  %v3891 = vpack.c.b16 %v2787, %v2771
  %v3892 = vpack.c.b16 %v2788, %v2772
  %v3893 = vpack.c.b16 %v2805, %v2789
  %v3894 = vpack.c.b16 %v2806, %v2790
  %v3895 = vpack.c.b16 %v2807, %v2791
  %v3896 = vpack.c.b16 %v2808, %v2792
  %v3897 = vpack.c.b16 %v2809, %v2793
  %v3898 = vpack.c.b16 %v2810, %v2794
  %v3899 = vpack.c.b16 %v2811, %v2795
  %v3900 = vpack.c.b16 %v2812, %v2796
  %v3901 = vpack.c.b16 %v2813, %v2797
  %v3902 = vpack.c.b16 %v2814, %v2798
  %v3903 = vpack.c.b16 %v2815, %v2799
  %v3904 = vpack.c.b16 %v2816, %v2800
  %v3905 = vpack.c.b16 %v2817, %v2801
  %v3906 = vpack.c.b16 %v2818, %v2802
  %v3907 = vpack.c.b16 %v2819, %v2803
  %v3908 = vpack.c.b16 %v2820, %v2804
  %v3909 = vpack.c.b16 %v2837, %v2821
  %v3910 = vpack.c.b16 %v2838, %v2822
  %v3911 = vpack.c.b16 %v2839, %v2823
  %v3912 = vpack.c.b16 %v2840, %v2824
  %v3913 = vpack.c.b16 %v2841, %v2825
  %v3914 = vpack.c.b16 %v2842, %v2826
  %v3915 = vpack.c.b16 %v2843, %v2827
  %v3916 = vpack.c.b16 %v2844, %v2828
  %v3917 = vpack.c.b16 %v2845, %v2829
  %v3918 = vpack.c.b16 %v2846, %v2830
  %v3919 = vpack.c.b16 %v2847, %v2831
  %v3920 = vpack.c.b16 %v2848, %v2832
  %v3921 = vpack.c.b16 %v2849, %v2833
  %v3922 = vpack.c.b16 %v2850, %v2834
  %v3923 = vpack.c.b16 %v2851, %v2835
  %v3924 = vpack.c.b16 %v2852, %v2836
  %v3925 = vpack.c.b16 %v2869, %v2853
  %v3926 = vpack.c.b16 %v2870, %v2854
  %v3927 = vpack.c.b16 %v2871, %v2855
  %v3928 = vpack.c.b16 %v2872, %v2856
  %v3929 = vpack.c.b16 %v2873, %v2857
  %v3930 = vpack.c.b16 %v2874, %v2858
  %v3931 = vpack.c.b16 %v2875, %v2859
  %v3932 = vpack.c.b16 %v2876, %v2860
  %v3933 = vpack.c.b16 %v2877, %v2861
  %v3934 = vpack.c.b16 %v2878, %v2862
  %v3935 = vpack.c.b16 %v2879, %v2863
  %v3936 = vpack.c.b16 %v2880, %v2864
  %v3937 = vpack.c.b16 %v2881, %v2865
  %v3938 = vpack.c.b16 %v2882, %v2866
  %v3939 = vpack.c.b16 %v2883, %v2867
  %v3940 = vpack.c.b16 %v2884, %v2868
  %v3941 = vpack.c.b16 %v2901, %v2885
  %v3942 = vpack.c.b16 %v2902, %v2886
  %v3943 = vpack.c.b16 %v2903, %v2887
  %v3944 = vpack.c.b16 %v2904, %v2888
  %v3945 = vpack.c.b16 %v2905, %v2889
  %v3946 = vpack.c.b16 %v2906, %v2890
  %v3947 = vpack.c.b16 %v2907, %v2891
  %v3948 = vpack.c.b16 %v2908, %v2892
  %v3949 = vpack.c.b16 %v2909, %v2893
  %v3950 = vpack.c.b16 %v2910, %v2894
  %v3951 = vpack.c.b16 %v2911, %v2895
  %v3952 = vpack.c.b16 %v2912, %v2896
  %v3953 = vpack.c.b16 %v2913, %v2897
  %v3954 = vpack.c.b16 %v2914, %v2898
  %v3955 = vpack.c.b16 %v2915, %v2899
  %v3956 = vpack.c.b16 %v2916, %v2900
  %v3957 = vpack.c.b16 %v2933, %v2917
  %v3958 = vpack.c.b16 %v2934, %v2918
  %v3959 = vpack.c.b16 %v2935, %v2919
  %v3960 = vpack.c.b16 %v2936, %v2920
  %v3961 = vpack.c.b16 %v2937, %v2921
  %v3962 = vpack.c.b16 %v2938, %v2922
  %v3963 = vpack.c.b16 %v2939, %v2923
  %v3964 = vpack.c.b16 %v2940, %v2924
  %v3965 = vpack.c.b16 %v2941, %v2925
  %v3966 = vpack.c.b16 %v2942, %v2926
  %v3967 = vpack.c.b16 %v2943, %v2927
  %v3968 = vpack.c.b16 %v2944, %v2928
  %v3969 = vpack.c.b16 %v2945, %v2929
  %v3970 = vpack.c.b16 %v2946, %v2930
  %v3971 = vpack.c.b16 %v2947, %v2931
  %v3972 = vpack.c.b16 %v2948, %v2932
  %v3973 = vpack.c.b16 %v2965, %v2949
  %v3974 = vpack.c.b16 %v2966, %v2950
  %v3975 = vpack.c.b16 %v2967, %v2951
  %v3976 = vpack.c.b16 %v2968, %v2952
  %v3977 = vpack.c.b16 %v2969, %v2953
  %v3978 = vpack.c.b16 %v2970, %v2954
  %v3979 = vpack.c.b16 %v2971, %v2955
  %v3980 = vpack.c.b16 %v2972, %v2956
  %v3981 = vpack.c.b16 %v2973, %v2957
  %v3982 = vpack.c.b16 %v2974, %v2958
  %v3983 = vpack.c.b16 %v2975, %v2959
  %v3984 = vpack.c.b16 %v2976, %v2960
  %v3985 = vpack.c.b16 %v2977, %v2961
  %v3986 = vpack.c.b16 %v2978, %v2962
  %v3987 = vpack.c.b16 %v2979, %v2963
  %v3988 = vpack.c.b16 %v2980, %v2964
  %v3989 = vpack.c.b16 %v2997, %v2981
  %v3990 = vpack.c.b16 %v2998, %v2982
  %v3991 = vpack.c.b16 %v2999, %v2983
  %v3992 = vpack.c.b16 %v3000, %v2984
  %v3993 = vpack.c.b16 %v3001, %v2985
  %v3994 = vpack.c.b16 %v3002, %v2986
  %v3995 = vpack.c.b16 %v3003, %v2987
  %v3996 = vpack.c.b16 %v3004, %v2988
  %v3997 = vpack.c.b16 %v3005, %v2989
  %v3998 = vpack.c.b16 %v3006, %v2990
  %v3999 = vpack.c.b16 %v3007, %v2991
  %v4000 = vpack.c.b16 %v3008, %v2992
  %v4001 = vpack.c.b16 %v3009, %v2993
  %v4002 = vpack.c.b16 %v3010, %v2994
  %v4003 = vpack.c.b16 %v3011, %v2995
  %v4004 = vpack.c.b16 %v3012, %v2996
  %v4005 = vpack.c.b16 %v3029, %v3013
  %v4006 = vpack.c.b16 %v3030, %v3014
  %v4007 = vpack.c.b16 %v3031, %v3015
  %v4008 = vpack.c.b16 %v3032, %v3016
  %v4009 = vpack.c.b16 %v3033, %v3017
  %v4010 = vpack.c.b16 %v3034, %v3018
  %v4011 = vpack.c.b16 %v3035, %v3019
  %v4012 = vpack.c.b16 %v3036, %v3020
  %v4013 = vpack.c.b16 %v3037, %v3021
  %v4014 = vpack.c.b16 %v3038, %v3022
  %v4015 = vpack.c.b16 %v3039, %v3023
  %v4016 = vpack.c.b16 %v3040, %v3024
  %v4017 = vpack.c.b16 %v3041, %v3025
  %v4018 = vpack.c.b16 %v3042, %v3026
  %v4019 = vpack.c.b16 %v3043, %v3027
  %v4020 = vpack.c.b16 %v3044, %v3028
  %v4021 = vpack.c.b16 %v3061, %v3045
  %v4022 = vpack.c.b16 %v3062, %v3046
  %v4023 = vpack.c.b16 %v3063, %v3047
  %v4024 = vpack.c.b16 %v3064, %v3048
  %v4025 = vpack.c.b16 %v3065, %v3049
  %v4026 = vpack.c.b16 %v3066, %v3050
  %v4027 = vpack.c.b16 %v3067, %v3051
  %v4028 = vpack.c.b16 %v3068, %v3052
  %v4029 = vpack.c.b16 %v3069, %v3053
  %v4030 = vpack.c.b16 %v3070, %v3054
  %v4031 = vpack.c.b16 %v3071, %v3055
  %v4032 = vpack.c.b16 %v3072, %v3056
  %v4033 = vpack.c.b16 %v3073, %v3057
  %v4034 = vpack.c.b16 %v3074, %v3058
  %v4035 = vpack.c.b16 %v3075, %v3059
  %v4036 = vpack.c.b16 %v3076, %v3060
  %v4037 = vpack.c.b16 %v3093, %v3077
  %v4038 = vpack.c.b16 %v3094, %v3078
  %v4039 = vpack.c.b16 %v3095, %v3079
  %v4040 = vpack.c.b16 %v3096, %v3080
  %v4041 = vpack.c.b16 %v3097, %v3081
  %v4042 = vpack.c.b16 %v3098, %v3082
  %v4043 = vpack.c.b16 %v3099, %v3083
  %v4044 = vpack.c.b16 %v3100, %v3084
  %v4045 = vpack.c.b16 %v3101, %v3085
  %v4046 = vpack.c.b16 %v3102, %v3086
  %v4047 = vpack.c.b16 %v3103, %v3087
  %v4048 = vpack.c.b16 %v3104, %v3088
  %v4049 = vpack.c.b16 %v3105, %v3089
  %v4050 = vpack.c.b16 %v3106, %v3090
  %v4051 = vpack.c.b16 %v3107, %v3091
  %v4052 = vpack.c.b16 %v3108, %v3092
  %v4053 = vpack.c.b16 %v3125, %v3109
  %v4054 = vpack.c.b16 %v3126, %v3110
  %v4055 = vpack.c.b16 %v3127, %v3111
  %v4056 = vpack.c.b16 %v3128, %v3112
  %v4057 = vpack.c.b16 %v3129, %v3113
  %v4058 = vpack.c.b16 %v3130, %v3114
  %v4059 = vpack.c.b16 %v3131, %v3115
  %v4060 = vpack.c.b16 %v3132, %v3116
  %v4061 = vpack.c.b16 %v3133, %v3117
  %v4062 = vpack.c.b16 %v3134, %v3118
  %v4063 = vpack.c.b16 %v3135, %v3119
  %v4064 = vpack.c.b16 %v3136, %v3120
  %v4065 = vpack.c.b16 %v3137, %v3121
  %v4066 = vpack.c.b16 %v3138, %v3122
  %v4067 = vpack.c.b16 %v3139, %v3123
  %v4068 = vpack.c.b16 %v3140, %v3124
  %v4069 = vpack.c.b16 %v3157, %v3141
  %v4070 = vpack.c.b16 %v3158, %v3142
  %v4071 = vpack.c.b16 %v3159, %v3143
  %v4072 = vpack.c.b16 %v3160, %v3144
  %v4073 = vpack.c.b16 %v3161, %v3145
  %v4074 = vpack.c.b16 %v3162, %v3146
  %v4075 = vpack.c.b16 %v3163, %v3147
  %v4076 = vpack.c.b16 %v3164, %v3148
  %v4077 = vpack.c.b16 %v3165, %v3149
  %v4078 = vpack.c.b16 %v3166, %v3150
  %v4079 = vpack.c.b16 %v3167, %v3151
  %v4080 = vpack.c.b16 %v3168, %v3152
  %v4081 = vpack.c.b16 %v3169, %v3153
  %v4082 = vpack.c.b16 %v3170, %v3154
  %v4083 = vpack.c.b16 %v3171, %v3155
  %v4084 = vpack.c.b16 %v3172, %v3156
  %v4085 = vpack.c.b16 %v3189, %v3173
  %v4086 = vpack.c.b16 %v3190, %v3174
  %v4087 = vpack.c.b16 %v3191, %v3175
  %v4088 = vpack.c.b16 %v3192, %v3176
  %v4089 = vpack.c.b16 %v3193, %v3177
  %v4090 = vpack.c.b16 %v3194, %v3178
  %v4091 = vpack.c.b16 %v3195, %v3179
  %v4092 = vpack.c.b16 %v3196, %v3180
  %v4093 = vpack.c.b16 %v3197, %v3181
  %v4094 = vpack.c.b16 %v3198, %v3182
  %v4095 = vpack.c.b16 %v3199, %v3183
  %v4096 = vpack.c.b16 %v3200, %v3184
  %v4097 = vpack.c.b16 %v3201, %v3185
  %v4098 = vpack.c.b16 %v3202, %v3186
  %v4099 = vpack.c.b16 %v3203, %v3187
  %v4100 = vpack.c.b16 %v3204, %v3188
  %v4101 = vpack.c.b16 %v3221, %v3205
  %v4102 = vpack.c.b16 %v3222, %v3206
  %v4103 = vpack.c.b16 %v3223, %v3207
  %v4104 = vpack.c.b16 %v3224, %v3208
  %v4105 = vpack.c.b16 %v3225, %v3209
  %v4106 = vpack.c.b16 %v3226, %v3210
  %v4107 = vpack.c.b16 %v3227, %v3211
  %v4108 = vpack.c.b16 %v3228, %v3212
  %v4109 = vpack.c.b16 %v3229, %v3213
  %v4110 = vpack.c.b16 %v3230, %v3214
  %v4111 = vpack.c.b16 %v3231, %v3215
  %v4112 = vpack.c.b16 %v3232, %v3216
  %v4113 = vpack.c.b16 %v3233, %v3217
  %v4114 = vpack.c.b16 %v3234, %v3218
  %v4115 = vpack.c.b16 %v3235, %v3219
  %v4116 = vpack.c.b16 %v3236, %v3220
  %v4117 = vpack.c.b16 %v3253, %v3237
  %v4118 = vpack.c.b16 %v3254, %v3238
  %v4119 = vpack.c.b16 %v3255, %v3239
  %v4120 = vpack.c.b16 %v3256, %v3240
  %v4121 = vpack.c.b16 %v3257, %v3241
  %v4122 = vpack.c.b16 %v3258, %v3242
  %v4123 = vpack.c.b16 %v3259, %v3243
  %v4124 = vpack.c.b16 %v3260, %v3244
  %v4125 = vpack.c.b16 %v3261, %v3245
  %v4126 = vpack.c.b16 %v3262, %v3246
  %v4127 = vpack.c.b16 %v3263, %v3247
  %v4128 = vpack.c.b16 %v3264, %v3248
  %v4129 = vpack.c.b16 %v3265, %v3249
  %v4130 = vpack.c.b16 %v3266, %v3250
  %v4131 = vpack.c.b16 %v3267, %v3251
  %v4132 = vpack.c.b16 %v3268, %v3252
  %v4133 = vpack.c.b16 %v3285, %v3269
  %v4134 = vpack.c.b16 %v3286, %v3270
  %v4135 = vpack.c.b16 %v3287, %v3271
  %v4136 = vpack.c.b16 %v3288, %v3272
  %v4137 = vpack.c.b16 %v3289, %v3273
  %v4138 = vpack.c.b16 %v3290, %v3274
  %v4139 = vpack.c.b16 %v3291, %v3275
  %v4140 = vpack.c.b16 %v3292, %v3276
  %v4141 = vpack.c.b16 %v3293, %v3277
  %v4142 = vpack.c.b16 %v3294, %v3278
  %v4143 = vpack.c.b16 %v3295, %v3279
  %v4144 = vpack.c.b16 %v3296, %v3280
  %v4145 = vpack.c.b16 %v3297, %v3281
  %v4146 = vpack.c.b16 %v3298, %v3282
  %v4147 = vpack.c.b16 %v3299, %v3283
  %v4148 = vpack.c.b16 %v3300, %v3284
  %v4149 = vpack.c.b16 %v3317, %v3301
  %v4150 = vpack.c.b16 %v3318, %v3302
  %v4151 = vpack.c.b16 %v3319, %v3303
  %v4152 = vpack.c.b16 %v3320, %v3304
  %v4153 = vpack.c.b16 %v3321, %v3305
  %v4154 = vpack.c.b16 %v3322, %v3306
  %v4155 = vpack.c.b16 %v3323, %v3307
  %v4156 = vpack.c.b16 %v3324, %v3308
  %v4157 = vpack.c.b16 %v3325, %v3309
  %v4158 = vpack.c.b16 %v3326, %v3310
  %v4159 = vpack.c.b16 %v3327, %v3311
  %v4160 = vpack.c.b16 %v3328, %v3312
  %v4161 = vpack.c.b16 %v3329, %v3313
  %v4162 = vpack.c.b16 %v3330, %v3314
  %v4163 = vpack.c.b16 %v3331, %v3315
  %v4164 = vpack.c.b16 %v3332, %v3316
  %v4165 = vpack.c.b16 %v3349, %v3333
  %v4166 = vpack.c.b16 %v3350, %v3334
  %v4167 = vpack.c.b16 %v3351, %v3335
  %v4168 = vpack.c.b16 %v3352, %v3336
  %v4169 = vpack.c.b16 %v3353, %v3337
  %v4170 = vpack.c.b16 %v3354, %v3338
  %v4171 = vpack.c.b16 %v3355, %v3339
  %v4172 = vpack.c.b16 %v3356, %v3340
  %v4173 = vpack.c.b16 %v3357, %v3341
  %v4174 = vpack.c.b16 %v3358, %v3342
  %v4175 = vpack.c.b16 %v3359, %v3343
  %v4176 = vpack.c.b16 %v3360, %v3344
  %v4177 = vpack.c.b16 %v3361, %v3345
  %v4178 = vpack.c.b16 %v3362, %v3346
  %v4179 = vpack.c.b16 %v3363, %v3347
  %v4180 = vpack.c.b16 %v3364, %v3348
  %v4181 = vpack.c.b16 %v3381, %v3365
  %v4182 = vpack.c.b16 %v3382, %v3366
  %v4183 = vpack.c.b16 %v3383, %v3367
  %v4184 = vpack.c.b16 %v3384, %v3368
  %v4185 = vpack.c.b16 %v3385, %v3369
  %v4186 = vpack.c.b16 %v3386, %v3370
  %v4187 = vpack.c.b16 %v3387, %v3371
  %v4188 = vpack.c.b16 %v3388, %v3372
  %v4189 = vpack.c.b16 %v3389, %v3373
  %v4190 = vpack.c.b16 %v3390, %v3374
  %v4191 = vpack.c.b16 %v3391, %v3375
  %v4192 = vpack.c.b16 %v3392, %v3376
  %v4193 = vpack.c.b16 %v3393, %v3377
  %v4194 = vpack.c.b16 %v3394, %v3378
  %v4195 = vpack.c.b16 %v3395, %v3379
  %v4196 = vpack.c.b16 %v3396, %v3380
  %v4197 = vpack.c.b16 %v3413, %v3397
  %v4198 = vpack.c.b16 %v3414, %v3398
  %v4199 = vpack.c.b16 %v3415, %v3399
  %v4200 = vpack.c.b16 %v3416, %v3400
  %v4201 = vpack.c.b16 %v3417, %v3401
  %v4202 = vpack.c.b16 %v3418, %v3402
  %v4203 = vpack.c.b16 %v3419, %v3403
  %v4204 = vpack.c.b16 %v3420, %v3404
  %v4205 = vpack.c.b16 %v3421, %v3405
  %v4206 = vpack.c.b16 %v3422, %v3406
  %v4207 = vpack.c.b16 %v3423, %v3407
  %v4208 = vpack.c.b16 %v3424, %v3408
  %v4209 = vpack.c.b16 %v3425, %v3409
  %v4210 = vpack.c.b16 %v3426, %v3410
  %v4211 = vpack.c.b16 %v3427, %v3411
  %v4212 = vpack.c.b16 %v3428, %v3412
  %v5253 = vunpack.c.l.b16 %v809
  %v5254 = vunpack.c.h.b16 %v809
  %v5255 = vunpack.c.l.b16 %v810
  %v5256 = vunpack.c.h.b16 %v810
  %v5257 = vunpack.c.l.b16 %v811
  %v5258 = vunpack.c.h.b16 %v811
  %v5259 = vunpack.c.l.b16 %v812
  %v5260 = vunpack.c.h.b16 %v812
  %v5261 = vunpack.c.l.b16 %v813
  %v5262 = vunpack.c.h.b16 %v813
  %v5263 = vunpack.c.l.b16 %v814
  %v5264 = vunpack.c.h.b16 %v814
  %v5265 = vunpack.c.l.b16 %v815
  %v5266 = vunpack.c.h.b16 %v815
  %v5267 = vunpack.c.l.b16 %v816
  %v5268 = vunpack.c.h.b16 %v816
  %v5269 = vunpack.c.l.b16 %v817
  %v5270 = vunpack.c.h.b16 %v817
  %v5271 = vunpack.c.l.b16 %v818
  %v5272 = vunpack.c.h.b16 %v818
  %v5273 = vunpack.c.l.b16 %v819
  %v5274 = vunpack.c.h.b16 %v819
  %v5275 = vunpack.c.l.b16 %v820
  %v5276 = vunpack.c.h.b16 %v820
  %v5277 = vunpack.c.l.b16 %v821
  %v5278 = vunpack.c.h.b16 %v821
  %v5279 = vunpack.c.l.b16 %v822
  %v5280 = vunpack.c.h.b16 %v822
  %v5281 = vunpack.c.l.b16 %v823
  %v5282 = vunpack.c.h.b16 %v823
  %v5283 = vunpack.c.l.b16 %v824
  %v5284 = vunpack.c.h.b16 %v824
  %v5285 = vunpack.c.l.b16 %v825
  %v5286 = vunpack.c.h.b16 %v825
  %v5287 = vunpack.c.l.b16 %v826
  %v5288 = vunpack.c.h.b16 %v826
  %v5289 = vunpack.c.l.b16 %v827
  %v5290 = vunpack.c.h.b16 %v827
  %v5291 = vunpack.c.l.b16 %v828
  %v5292 = vunpack.c.h.b16 %v828
  %v5293 = vunpack.c.l.b16 %v829
  %v5294 = vunpack.c.h.b16 %v829
  %v5295 = vunpack.c.l.b16 %v830
  %v5296 = vunpack.c.h.b16 %v830
  %v5297 = vunpack.c.l.b16 %v831
  %v5298 = vunpack.c.h.b16 %v831
  %v5299 = vunpack.c.l.b16 %v832
  %v5300 = vunpack.c.h.b16 %v832
  %v5301 = vunpack.c.l.b16 %v833
  %v5302 = vunpack.c.h.b16 %v833
  %v5303 = vunpack.c.l.b16 %v834
  %v5304 = vunpack.c.h.b16 %v834
  %v5305 = vunpack.c.l.b16 %v835
  %v5306 = vunpack.c.h.b16 %v835
  %v5307 = vunpack.c.l.b16 %v836
  %v5308 = vunpack.c.h.b16 %v836
  %v5309 = vunpack.c.l.b16 %v837
  %v5310 = vunpack.c.h.b16 %v837
  %v5311 = vunpack.c.l.b16 %v838
  %v5312 = vunpack.c.h.b16 %v838
  %v5313 = vunpack.c.l.b16 %v839
  %v5314 = vunpack.c.h.b16 %v839
  %v5315 = vunpack.c.l.b16 %v840
  %v5316 = vunpack.c.h.b16 %v840
  %v5317 = vunpack.c.l.b16 %v841
  %v5318 = vunpack.c.h.b16 %v841
  %v5319 = vunpack.c.l.b16 %v842
  %v5320 = vunpack.c.h.b16 %v842
  %v5321 = vunpack.c.l.b16 %v843
  %v5322 = vunpack.c.h.b16 %v843
  %v5323 = vunpack.c.l.b16 %v844
  %v5324 = vunpack.c.h.b16 %v844
  %v5325 = vunpack.c.l.b16 %v845
  %v5326 = vunpack.c.h.b16 %v845
  %v5327 = vunpack.c.l.b16 %v846
  %v5328 = vunpack.c.h.b16 %v846
  %v5329 = vunpack.c.l.b16 %v847
  %v5330 = vunpack.c.h.b16 %v847
  %v5331 = vunpack.c.l.b16 %v848
  %v5332 = vunpack.c.h.b16 %v848
  %v5333 = vunpack.c.l.b16 %v849
  %v5334 = vunpack.c.h.b16 %v849
  %v5335 = vunpack.c.l.b16 %v850
  %v5336 = vunpack.c.h.b16 %v850
  %v5337 = vunpack.c.l.b16 %v851
  %v5338 = vunpack.c.h.b16 %v851
  %v5339 = vunpack.c.l.b16 %v852
  %v5340 = vunpack.c.h.b16 %v852
  %v5341 = vunpack.c.l.b16 %v853
  %v5342 = vunpack.c.h.b16 %v853
  %v5343 = vunpack.c.l.b16 %v854
  %v5344 = vunpack.c.h.b16 %v854
  %v5345 = vunpack.c.l.b16 %v855
  %v5346 = vunpack.c.h.b16 %v855
  %v5347 = vunpack.c.l.b16 %v856
  %v5348 = vunpack.c.h.b16 %v856
  %v5349 = vunpack.c.l.b16 %v857
  %v5350 = vunpack.c.h.b16 %v857
  %v5351 = vunpack.c.l.b16 %v858
  %v5352 = vunpack.c.h.b16 %v858
  %v5353 = vunpack.c.l.b16 %v859
  %v5354 = vunpack.c.h.b16 %v859
  %v5355 = vunpack.c.l.b16 %v860
  %v5356 = vunpack.c.h.b16 %v860
  %v5357 = vunpack.c.l.b16 %v861
  %v5358 = vunpack.c.h.b16 %v861
  %v5359 = vunpack.c.l.b16 %v862
  %v5360 = vunpack.c.h.b16 %v862
  %v5361 = vunpack.c.l.b16 %v863
  %v5362 = vunpack.c.h.b16 %v863
  %v5363 = vunpack.c.l.b16 %v864
  %v5364 = vunpack.c.h.b16 %v864
  %v5365 = vunpack.c.l.b16 %v865
  %v5366 = vunpack.c.h.b16 %v865
  %v5367 = vunpack.c.l.b16 %v866
  %v5368 = vunpack.c.h.b16 %v866
  %v5369 = vunpack.c.l.b16 %v867
  %v5370 = vunpack.c.h.b16 %v867
  %v5371 = vunpack.c.l.b16 %v868
  %v5372 = vunpack.c.h.b16 %v868
  %v5373 = vunpack.c.l.b16 %v869
  %v5374 = vunpack.c.h.b16 %v869
  %v5375 = vunpack.c.l.b16 %v870
  %v5376 = vunpack.c.h.b16 %v870
  %v5377 = vunpack.c.l.b16 %v871
  %v5378 = vunpack.c.h.b16 %v871
  %v5379 = vunpack.c.l.b16 %v872
  %v5380 = vunpack.c.h.b16 %v872
  %v5381 = vunpack.c.l.b16 %v873
  %v5382 = vunpack.c.h.b16 %v873
  %v5383 = vunpack.c.l.b16 %v874
  %v5384 = vunpack.c.h.b16 %v874
  %v5385 = vunpack.c.l.b16 %v875
  %v5386 = vunpack.c.h.b16 %v875
  %v5387 = vunpack.c.l.b16 %v876
  %v5388 = vunpack.c.h.b16 %v876
  %v5389 = vunpack.c.l.b16 %v877
  %v5390 = vunpack.c.h.b16 %v877
  %v5391 = vunpack.c.l.b16 %v878
  %v5392 = vunpack.c.h.b16 %v878
  %v5393 = vunpack.c.l.b16 %v879
  %v5394 = vunpack.c.h.b16 %v879
  %v5395 = vunpack.c.l.b16 %v880
  %v5396 = vunpack.c.h.b16 %v880
  %v5397 = vunpack.c.l.b16 %v881
  %v5398 = vunpack.c.h.b16 %v881
  %v5399 = vunpack.c.l.b16 %v882
  %v5400 = vunpack.c.h.b16 %v882
  %v5401 = vunpack.c.l.b16 %v883
  %v5402 = vunpack.c.h.b16 %v883
  %v5403 = vunpack.c.l.b16 %v884
  %v5404 = vunpack.c.h.b16 %v884
  %v5405 = vunpack.c.l.b16 %v885
  %v5406 = vunpack.c.h.b16 %v885
  %v5407 = vunpack.c.l.b16 %v886
  %v5408 = vunpack.c.h.b16 %v886
  %v5409 = vunpack.c.l.b16 %v887
  %v5410 = vunpack.c.h.b16 %v887
  %v5411 = vunpack.c.l.b16 %v888
  %v5412 = vunpack.c.h.b16 %v888
  %v5413 = vunpack.c.l.b16 %v889
  %v5414 = vunpack.c.h.b16 %v889
  %v5415 = vunpack.c.l.b16 %v890
  %v5416 = vunpack.c.h.b16 %v890
  %v5417 = vunpack.c.l.b16 %v891
  %v5418 = vunpack.c.h.b16 %v891
  %v5419 = vunpack.c.l.b16 %v892
  %v5420 = vunpack.c.h.b16 %v892
  %v5421 = vunpack.c.l.b16 %v893
  %v5422 = vunpack.c.h.b16 %v893
  %v5423 = vunpack.c.l.b16 %v894
  %v5424 = vunpack.c.h.b16 %v894
  %v5425 = vunpack.c.l.b16 %v895
  %v5426 = vunpack.c.h.b16 %v895
  %v5427 = vunpack.c.l.b16 %v896
  %v5428 = vunpack.c.h.b16 %v896
  %v5429 = vunpack.c.l.b16 %v897
  %v5430 = vunpack.c.h.b16 %v897
  %v5431 = vunpack.c.l.b16 %v898
  %v5432 = vunpack.c.h.b16 %v898
  %v5433 = vunpack.c.l.b16 %v899
  %v5434 = vunpack.c.h.b16 %v899
  %v5435 = vunpack.c.l.b16 %v900
  %v5436 = vunpack.c.h.b16 %v900
  %v5437 = vunpack.c.l.b16 %v901
  %v5438 = vunpack.c.h.b16 %v901
  %v5439 = vunpack.c.l.b16 %v902
  %v5440 = vunpack.c.h.b16 %v902
  %v5441 = vunpack.c.l.b16 %v903
  %v5442 = vunpack.c.h.b16 %v903
  %v5443 = vunpack.c.l.b16 %v904
  %v5444 = vunpack.c.h.b16 %v904
  %v5445 = vunpack.c.l.b16 %v905
  %v5446 = vunpack.c.h.b16 %v905
  %v5447 = vunpack.c.l.b16 %v906
  %v5448 = vunpack.c.h.b16 %v906
  %v5449 = vunpack.c.l.b16 %v907
  %v5450 = vunpack.c.h.b16 %v907
  %v5451 = vunpack.c.l.b16 %v908
  %v5452 = vunpack.c.h.b16 %v908
  %v5453 = vunpack.c.l.b16 %v909
  %v5454 = vunpack.c.h.b16 %v909
  %v5455 = vunpack.c.l.b16 %v910
  %v5456 = vunpack.c.h.b16 %v910
  %v5457 = vunpack.c.l.b16 %v911
  %v5458 = vunpack.c.h.b16 %v911
  %v5459 = vunpack.c.l.b16 %v912
  %v5460 = vunpack.c.h.b16 %v912
  %v5461 = vunpack.c.l.b16 %v913
  %v5462 = vunpack.c.h.b16 %v913
  %v5463 = vunpack.c.l.b16 %v914
  %v5464 = vunpack.c.h.b16 %v914
  %v5465 = vunpack.c.l.b16 %v915
  %v5466 = vunpack.c.h.b16 %v915
  %v5467 = vunpack.c.l.b16 %v916
  %v5468 = vunpack.c.h.b16 %v916
  %v5469 = vunpack.c.l.b16 %v917
  %v5470 = vunpack.c.h.b16 %v917
  %v5471 = vunpack.c.l.b16 %v918
  %v5472 = vunpack.c.h.b16 %v918
  %v5473 = vunpack.c.l.b16 %v919
  %v5474 = vunpack.c.h.b16 %v919
  %v5475 = vunpack.c.l.b16 %v920
  %v5476 = vunpack.c.h.b16 %v920
  %v5477 = vunpack.c.l.b16 %v921
  %v5478 = vunpack.c.h.b16 %v921
  %v5479 = vunpack.c.l.b16 %v922
  %v5480 = vunpack.c.h.b16 %v922
  %v5481 = vunpack.c.l.b16 %v923
  %v5482 = vunpack.c.h.b16 %v923
  %v5483 = vunpack.c.l.b16 %v924
  %v5484 = vunpack.c.h.b16 %v924
  %v5485 = vunpack.c.l.b16 %v925
  %v5486 = vunpack.c.h.b16 %v925
  %v5487 = vunpack.c.l.b16 %v926
  %v5488 = vunpack.c.h.b16 %v926
  %v5489 = vunpack.c.l.b16 %v927
  %v5490 = vunpack.c.h.b16 %v927
  %v5491 = vunpack.c.l.b16 %v928
  %v5492 = vunpack.c.h.b16 %v928
  %v5493 = vunpack.c.l.b16 %v929
  %v5494 = vunpack.c.h.b16 %v929
  %v5495 = vunpack.c.l.b16 %v930
  %v5496 = vunpack.c.h.b16 %v930
  %v5497 = vunpack.c.l.b16 %v931
  %v5498 = vunpack.c.h.b16 %v931
  %v5499 = vunpack.c.l.b16 %v932
  %v5500 = vunpack.c.h.b16 %v932
  %v5501 = vunpack.c.l.b16 %v933
  %v5502 = vunpack.c.h.b16 %v933
  %v5503 = vunpack.c.l.b16 %v934
  %v5504 = vunpack.c.h.b16 %v934
  %v5505 = vunpack.c.l.b16 %v935
  %v5506 = vunpack.c.h.b16 %v935
  %v5507 = vunpack.c.l.b16 %v936
  %v5508 = vunpack.c.h.b16 %v936
  %v5509 = vunpack.c.l.b16 %v937
  %v5510 = vunpack.c.h.b16 %v937
  %v5511 = vunpack.c.l.b16 %v938
  %v5512 = vunpack.c.h.b16 %v938
  %v5513 = vunpack.c.l.b16 %v939
  %v5514 = vunpack.c.h.b16 %v939
  %v5515 = vunpack.c.l.b16 %v940
  %v5516 = vunpack.c.h.b16 %v940
  %v5517 = vunpack.c.l.b16 %v941
  %v5518 = vunpack.c.h.b16 %v941
  %v5519 = vunpack.c.l.b16 %v942
  %v5520 = vunpack.c.h.b16 %v942
  %v5521 = vunpack.c.l.b16 %v943
  %v5522 = vunpack.c.h.b16 %v943
  %v5523 = vunpack.c.l.b16 %v944
  %v5524 = vunpack.c.h.b16 %v944
  %v5525 = vunpack.c.l.b16 %v945
  %v5526 = vunpack.c.h.b16 %v945
  %v5527 = vunpack.c.l.b16 %v946
  %v5528 = vunpack.c.h.b16 %v946
  %v5529 = vunpack.c.l.b16 %v947
  %v5530 = vunpack.c.h.b16 %v947
  %v5531 = vunpack.c.l.b16 %v948
  %v5532 = vunpack.c.h.b16 %v948
  %v5533 = vunpack.c.l.b16 %v949
  %v5534 = vunpack.c.h.b16 %v949
  %v5535 = vunpack.c.l.b16 %v950
  %v5536 = vunpack.c.h.b16 %v950
  %v5537 = vunpack.c.l.b16 %v951
  %v5538 = vunpack.c.h.b16 %v951
  %v5539 = vunpack.c.l.b16 %v952
  %v5540 = vunpack.c.h.b16 %v952
  %v5541 = vunpack.c.l.b16 %v953
  %v5542 = vunpack.c.h.b16 %v953
  %v5543 = vunpack.c.l.b16 %v954
  %v5544 = vunpack.c.h.b16 %v954
  %v5545 = vunpack.c.l.b16 %v955
  %v5546 = vunpack.c.h.b16 %v955
  %v5547 = vunpack.c.l.b16 %v956
  %v5548 = vunpack.c.h.b16 %v956
  %v5549 = vunpack.c.l.b16 %v957
  %v5550 = vunpack.c.h.b16 %v957
  %v5551 = vunpack.c.l.b16 %v958
  %v5552 = vunpack.c.h.b16 %v958
  %v5553 = vunpack.c.l.b16 %v959
  %v5554 = vunpack.c.h.b16 %v959
  %v5555 = vunpack.c.l.b16 %v960
  %v5556 = vunpack.c.h.b16 %v960
  %v5557 = vunpack.c.l.b16 %v961
  %v5558 = vunpack.c.h.b16 %v961
  %v5559 = vunpack.c.l.b16 %v962
  %v5560 = vunpack.c.h.b16 %v962
  %v5561 = vunpack.c.l.b16 %v963
  %v5562 = vunpack.c.h.b16 %v963
  %v5563 = vunpack.c.l.b16 %v964
  %v5564 = vunpack.c.h.b16 %v964
  %v5565 = vunpack.c.l.b16 %v965
  %v5566 = vunpack.c.h.b16 %v965
  %v5567 = vunpack.c.l.b16 %v966
  %v5568 = vunpack.c.h.b16 %v966
  %v5569 = vunpack.c.l.b16 %v967
  %v5570 = vunpack.c.h.b16 %v967
  %v5571 = vunpack.c.l.b16 %v968
  %v5572 = vunpack.c.h.b16 %v968
  %v5573 = vunpack.c.l.b16 %v969
  %v5574 = vunpack.c.h.b16 %v969
  %v5575 = vunpack.c.l.b16 %v970
  %v5576 = vunpack.c.h.b16 %v970
  %v5577 = vunpack.c.l.b16 %v971
  %v5578 = vunpack.c.h.b16 %v971
  %v5579 = vunpack.c.l.b16 %v972
  %v5580 = vunpack.c.h.b16 %v972
  %v5581 = vunpack.c.l.b16 %v973
  %v5582 = vunpack.c.h.b16 %v973
  %v5583 = vunpack.c.l.b16 %v974
  %v5584 = vunpack.c.h.b16 %v974
  %v5585 = vunpack.c.l.b16 %v975
  %v5586 = vunpack.c.h.b16 %v975
  %v5587 = vunpack.c.l.b16 %v976
  %v5588 = vunpack.c.h.b16 %v976
  %v5589 = vunpack.c.l.b16 %v977
  %v5590 = vunpack.c.h.b16 %v977
  %v5591 = vunpack.c.l.b16 %v978
  %v5592 = vunpack.c.h.b16 %v978
  %v5593 = vunpack.c.l.b16 %v979
  %v5594 = vunpack.c.h.b16 %v979
  %v5595 = vunpack.c.l.b16 %v980
  %v5596 = vunpack.c.h.b16 %v980
  %v5597 = vunpack.c.l.b16 %v981
  %v5598 = vunpack.c.h.b16 %v981
  %v5599 = vunpack.c.l.b16 %v982
  %v5600 = vunpack.c.h.b16 %v982
  %v5601 = vunpack.c.l.b16 %v983
  %v5602 = vunpack.c.h.b16 %v983
  %v5603 = vunpack.c.l.b16 %v984
  %v5604 = vunpack.c.h.b16 %v984
  %v5605 = vunpack.c.l.b16 %v985
  %v5606 = vunpack.c.h.b16 %v985
  %v5607 = vunpack.c.l.b16 %v986
  %v5608 = vunpack.c.h.b16 %v986
  %v5609 = vunpack.c.l.b16 %v987
  %v5610 = vunpack.c.h.b16 %v987
  %v5611 = vunpack.c.l.b16 %v988
  %v5612 = vunpack.c.h.b16 %v988
  %v5613 = vunpack.c.l.b16 %v989
  %v5614 = vunpack.c.h.b16 %v989
  %v5615 = vunpack.c.l.b16 %v990
  %v5616 = vunpack.c.h.b16 %v990
  %v5617 = vunpack.c.l.b16 %v991
  %v5618 = vunpack.c.h.b16 %v991
  %v5619 = vunpack.c.l.b16 %v992
  %v5620 = vunpack.c.h.b16 %v992
  %v5621 = vunpack.c.l.b16 %v993
  %v5622 = vunpack.c.h.b16 %v993
  %v5623 = vunpack.c.l.b16 %v994
  %v5624 = vunpack.c.h.b16 %v994
  %v5625 = vunpack.c.l.b16 %v995
  %v5626 = vunpack.c.h.b16 %v995
  %v5627 = vunpack.c.l.b16 %v996
  %v5628 = vunpack.c.h.b16 %v996
  %v5629 = vunpack.c.l.b16 %v997
  %v5630 = vunpack.c.h.b16 %v997
  %v5631 = vunpack.c.l.b16 %v998
  %v5632 = vunpack.c.h.b16 %v998
  %v5633 = vunpack.c.l.b16 %v999
  %v5634 = vunpack.c.h.b16 %v999
  %v5635 = vunpack.c.l.b16 %v1000
  %v5636 = vunpack.c.h.b16 %v1000
  %v5637 = vunpack.c.l.b16 %v1001
  %v5638 = vunpack.c.h.b16 %v1001
  %v5639 = vunpack.c.l.b16 %v1002
  %v5640 = vunpack.c.h.b16 %v1002
  %v5641 = vunpack.c.l.b16 %v1003
  %v5642 = vunpack.c.h.b16 %v1003
  %v5643 = vunpack.c.l.b16 %v1004
  %v5644 = vunpack.c.h.b16 %v1004
  %v5645 = vunpack.c.l.b16 %v1005
  %v5646 = vunpack.c.h.b16 %v1005
  %v5647 = vunpack.c.l.b16 %v1006
  %v5648 = vunpack.c.h.b16 %v1006
  %v5649 = vunpack.c.l.b16 %v1007
  %v5650 = vunpack.c.h.b16 %v1007
  %v5651 = vunpack.c.l.b16 %v1008
  %v5652 = vunpack.c.h.b16 %v1008
  %v5653 = vunpack.c.l.b16 %v1009
  %v5654 = vunpack.c.h.b16 %v1009
  %v5655 = vunpack.c.l.b16 %v1010
  %v5656 = vunpack.c.h.b16 %v1010
  %v5657 = vunpack.c.l.b16 %v1011
  %v5658 = vunpack.c.h.b16 %v1011
  %v5659 = vunpack.c.l.b16 %v1012
  %v5660 = vunpack.c.h.b16 %v1012
  %v5661 = vunpack.c.l.b16 %v1013
  %v5662 = vunpack.c.h.b16 %v1013
  %v5663 = vunpack.c.l.b16 %v1014
  %v5664 = vunpack.c.h.b16 %v1014
  %v5665 = vunpack.c.l.b16 %v1015
  %v5666 = vunpack.c.h.b16 %v1015
  %v5667 = vunpack.c.l.b16 %v1016
  %v5668 = vunpack.c.h.b16 %v1016
  %v5669 = vunpack.c.l.b16 %v1017
  %v5670 = vunpack.c.h.b16 %v1017
  %v5671 = vunpack.c.l.b16 %v1018
  %v5672 = vunpack.c.h.b16 %v1018
  %v5673 = vunpack.c.l.b16 %v1019
  %v5674 = vunpack.c.h.b16 %v1019
  %v5675 = vunpack.c.l.b16 %v1020
  %v5676 = vunpack.c.h.b16 %v1020
  %v5677 = vunpack.c.l.b16 %v1021
  %v5678 = vunpack.c.h.b16 %v1021
  %v5679 = vunpack.c.l.b16 %v1022
  %v5680 = vunpack.c.h.b16 %v1022
  %v5681 = vunpack.c.l.b16 %v1023
  %v5682 = vunpack.c.h.b16 %v1023
  %v5683 = vunpack.c.l.b16 %v1024
  %v5684 = vunpack.c.h.b16 %v1024
  %v5685 = vunpack.c.l.b16 %v1025
  %v5686 = vunpack.c.h.b16 %v1025
  %v5687 = vunpack.c.l.b16 %v1026
  %v5688 = vunpack.c.h.b16 %v1026
  %v5689 = vunpack.c.l.b16 %v1027
  %v5690 = vunpack.c.h.b16 %v1027
  %v5691 = vunpack.c.l.b16 %v1028
  %v5692 = vunpack.c.h.b16 %v1028
  %v5693 = vunpack.c.l.b16 %v1029
  %v5694 = vunpack.c.h.b16 %v1029
  %v5695 = vunpack.c.l.b16 %v1030
  %v5696 = vunpack.c.h.b16 %v1030
  %v5697 = vunpack.c.l.b16 %v1031
  %v5698 = vunpack.c.h.b16 %v1031
  %v5699 = vunpack.c.l.b16 %v1032
  %v5700 = vunpack.c.h.b16 %v1032
  %v5701 = vunpack.c.l.b16 %v1033
  %v5702 = vunpack.c.h.b16 %v1033
  %v5703 = vunpack.c.l.b16 %v1034
  %v5704 = vunpack.c.h.b16 %v1034
  %v5705 = vunpack.c.l.b16 %v1035
  %v5706 = vunpack.c.h.b16 %v1035
  %v5707 = vunpack.c.l.b16 %v1036
  %v5708 = vunpack.c.h.b16 %v1036
  %v5709 = vunpack.c.l.b16 %v1037
  %v5710 = vunpack.c.h.b16 %v1037
  %v5711 = vunpack.c.l.b16 %v1038
  %v5712 = vunpack.c.h.b16 %v1038
  %v5713 = vunpack.c.l.b16 %v1039
  %v5714 = vunpack.c.h.b16 %v1039
  %v5715 = vunpack.c.l.b16 %v1040
  %v5716 = vunpack.c.h.b16 %v1040
  %v5717 = vunpack.c.l.b16 %v1041
  %v5718 = vunpack.c.h.b16 %v1041
  %v5719 = vunpack.c.l.b16 %v1042
  %v5720 = vunpack.c.h.b16 %v1042
  %v5721 = vunpack.c.l.b16 %v1043
  %v5722 = vunpack.c.h.b16 %v1043
  %v5723 = vunpack.c.l.b16 %v1044
  %v5724 = vunpack.c.h.b16 %v1044
  %v5725 = vunpack.c.l.b16 %v1045
  %v5726 = vunpack.c.h.b16 %v1045
  %v5727 = vunpack.c.l.b16 %v1046
  %v5728 = vunpack.c.h.b16 %v1046
  %v5729 = vunpack.c.l.b16 %v1047
  %v5730 = vunpack.c.h.b16 %v1047
  %v5731 = vunpack.c.l.b16 %v1048
  %v5732 = vunpack.c.h.b16 %v1048
  %v5733 = vunpack.c.l.b16 %v1049
  %v5734 = vunpack.c.h.b16 %v1049
  %v5735 = vunpack.c.l.b16 %v1050
  %v5736 = vunpack.c.h.b16 %v1050
  %v5737 = vunpack.c.l.b16 %v1051
  %v5738 = vunpack.c.h.b16 %v1051
  %v5739 = vunpack.c.l.b16 %v1052
  %v5740 = vunpack.c.h.b16 %v1052
  %v5741 = vunpack.c.l.b16 %v1053
  %v5742 = vunpack.c.h.b16 %v1053
  %v5743 = vunpack.c.l.b16 %v1054
  %v5744 = vunpack.c.h.b16 %v1054
  %v5745 = vunpack.c.l.b16 %v1055
  %v5746 = vunpack.c.h.b16 %v1055
  %v5747 = vunpack.c.l.b16 %v1056
  %v5748 = vunpack.c.h.b16 %v1056
  %v5749 = vunpack.c.l.b16 %v1057
  %v5750 = vunpack.c.h.b16 %v1057
  %v5751 = vunpack.c.l.b16 %v1058
  %v5752 = vunpack.c.h.b16 %v1058
  %v5753 = vunpack.c.l.b16 %v1059
  %v5754 = vunpack.c.h.b16 %v1059
  %v5755 = vunpack.c.l.b16 %v1060
  %v5756 = vunpack.c.h.b16 %v1060
  %v5757 = vunpack.c.l.b16 %v1061
  %v5758 = vunpack.c.h.b16 %v1061
  %v5759 = vunpack.c.l.b16 %v1062
  %v5760 = vunpack.c.h.b16 %v1062
  %v5761 = vunpack.c.l.b16 %v1063
  %v5762 = vunpack.c.h.b16 %v1063
  %v5763 = vunpack.c.l.b16 %v1064
  %v5764 = vunpack.c.h.b16 %v1064
  %v5765 = vpack.c.b16 %v5255, %v5253
  %v5766 = vpack.c.b16 %v5256, %v5254
  %v5767 = vpack.c.b16 %v5259, %v5257
  %v5768 = vpack.c.b16 %v5260, %v5258
  %v5769 = vpack.c.b16 %v5263, %v5261
  %v5770 = vpack.c.b16 %v5264, %v5262
  %v5771 = vpack.c.b16 %v5267, %v5265
  %v5772 = vpack.c.b16 %v5268, %v5266
  %v5773 = vpack.c.b16 %v5271, %v5269
  %v5774 = vpack.c.b16 %v5272, %v5270
  %v5775 = vpack.c.b16 %v5275, %v5273
  %v5776 = vpack.c.b16 %v5276, %v5274
  %v5777 = vpack.c.b16 %v5279, %v5277
  %v5778 = vpack.c.b16 %v5280, %v5278
  %v5779 = vpack.c.b16 %v5283, %v5281
  %v5780 = vpack.c.b16 %v5284, %v5282
  %v5781 = vpack.c.b16 %v5287, %v5285
  %v5782 = vpack.c.b16 %v5288, %v5286
  %v5783 = vpack.c.b16 %v5291, %v5289
  %v5784 = vpack.c.b16 %v5292, %v5290
  %v5785 = vpack.c.b16 %v5295, %v5293
  %v5786 = vpack.c.b16 %v5296, %v5294
  %v5787 = vpack.c.b16 %v5299, %v5297
  %v5788 = vpack.c.b16 %v5300, %v5298
  %v5789 = vpack.c.b16 %v5303, %v5301
  %v5790 = vpack.c.b16 %v5304, %v5302
  %v5791 = vpack.c.b16 %v5307, %v5305
  %v5792 = vpack.c.b16 %v5308, %v5306
  %v5793 = vpack.c.b16 %v5311, %v5309
  %v5794 = vpack.c.b16 %v5312, %v5310
  %v5795 = vpack.c.b16 %v5315, %v5313
  %v5796 = vpack.c.b16 %v5316, %v5314
  %v5797 = vpack.c.b16 %v5319, %v5317
  %v5798 = vpack.c.b16 %v5320, %v5318
  %v5799 = vpack.c.b16 %v5323, %v5321
  %v5800 = vpack.c.b16 %v5324, %v5322
  %v5801 = vpack.c.b16 %v5327, %v5325
  %v5802 = vpack.c.b16 %v5328, %v5326
  %v5803 = vpack.c.b16 %v5331, %v5329
  %v5804 = vpack.c.b16 %v5332, %v5330
  %v5805 = vpack.c.b16 %v5335, %v5333
  %v5806 = vpack.c.b16 %v5336, %v5334
  %v5807 = vpack.c.b16 %v5339, %v5337
  %v5808 = vpack.c.b16 %v5340, %v5338
  %v5809 = vpack.c.b16 %v5343, %v5341
  %v5810 = vpack.c.b16 %v5344, %v5342
  %v5811 = vpack.c.b16 %v5347, %v5345
  %v5812 = vpack.c.b16 %v5348, %v5346
  %v5813 = vpack.c.b16 %v5351, %v5349
  %v5814 = vpack.c.b16 %v5352, %v5350
  %v5815 = vpack.c.b16 %v5355, %v5353
  %v5816 = vpack.c.b16 %v5356, %v5354
  %v5817 = vpack.c.b16 %v5359, %v5357
  %v5818 = vpack.c.b16 %v5360, %v5358
  %v5819 = vpack.c.b16 %v5363, %v5361
  %v5820 = vpack.c.b16 %v5364, %v5362
  %v5821 = vpack.c.b16 %v5367, %v5365
  %v5822 = vpack.c.b16 %v5368, %v5366
  %v5823 = vpack.c.b16 %v5371, %v5369
  %v5824 = vpack.c.b16 %v5372, %v5370
  %v5825 = vpack.c.b16 %v5375, %v5373
  %v5826 = vpack.c.b16 %v5376, %v5374
  %v5827 = vpack.c.b16 %v5379, %v5377
  %v5828 = vpack.c.b16 %v5380, %v5378
  %v5829 = vpack.c.b16 %v5383, %v5381
  %v5830 = vpack.c.b16 %v5384, %v5382
  %v5831 = vpack.c.b16 %v5387, %v5385
  %v5832 = vpack.c.b16 %v5388, %v5386
  %v5833 = vpack.c.b16 %v5391, %v5389
  %v5834 = vpack.c.b16 %v5392, %v5390
  %v5835 = vpack.c.b16 %v5395, %v5393
  %v5836 = vpack.c.b16 %v5396, %v5394
  %v5837 = vpack.c.b16 %v5399, %v5397
  %v5838 = vpack.c.b16 %v5400, %v5398
  %v5839 = vpack.c.b16 %v5403, %v5401
  %v5840 = vpack.c.b16 %v5404, %v5402
  %v5841 = vpack.c.b16 %v5407, %v5405
  %v5842 = vpack.c.b16 %v5408, %v5406
  %v5843 = vpack.c.b16 %v5411, %v5409
  %v5844 = vpack.c.b16 %v5412, %v5410
  %v5845 = vpack.c.b16 %v5415, %v5413
  %v5846 = vpack.c.b16 %v5416, %v5414
  %v5847 = vpack.c.b16 %v5419, %v5417
  %v5848 = vpack.c.b16 %v5420, %v5418
  %v5849 = vpack.c.b16 %v5423, %v5421
  %v5850 = vpack.c.b16 %v5424, %v5422
  %v5851 = vpack.c.b16 %v5427, %v5425
  %v5852 = vpack.c.b16 %v5428, %v5426
  %v5853 = vpack.c.b16 %v5431, %v5429
  %v5854 = vpack.c.b16 %v5432, %v5430
  %v5855 = vpack.c.b16 %v5435, %v5433
  %v5856 = vpack.c.b16 %v5436, %v5434
  %v5857 = vpack.c.b16 %v5439, %v5437
  %v5858 = vpack.c.b16 %v5440, %v5438
  %v5859 = vpack.c.b16 %v5443, %v5441
  %v5860 = vpack.c.b16 %v5444, %v5442
  %v5861 = vpack.c.b16 %v5447, %v5445
  %v5862 = vpack.c.b16 %v5448, %v5446
  %v5863 = vpack.c.b16 %v5451, %v5449
  %v5864 = vpack.c.b16 %v5452, %v5450
  %v5865 = vpack.c.b16 %v5455, %v5453
  %v5866 = vpack.c.b16 %v5456, %v5454
  %v5867 = vpack.c.b16 %v5459, %v5457
  %v5868 = vpack.c.b16 %v5460, %v5458
  %v5869 = vpack.c.b16 %v5463, %v5461
  %v5870 = vpack.c.b16 %v5464, %v5462
  %v5871 = vpack.c.b16 %v5467, %v5465
  %v5872 = vpack.c.b16 %v5468, %v5466
  %v5873 = vpack.c.b16 %v5471, %v5469
  %v5874 = vpack.c.b16 %v5472, %v5470
  %v5875 = vpack.c.b16 %v5475, %v5473
  %v5876 = vpack.c.b16 %v5476, %v5474
  %v5877 = vpack.c.b16 %v5479, %v5477
  %v5878 = vpack.c.b16 %v5480, %v5478
  %v5879 = vpack.c.b16 %v5483, %v5481
  %v5880 = vpack.c.b16 %v5484, %v5482
  %v5881 = vpack.c.b16 %v5487, %v5485
  %v5882 = vpack.c.b16 %v5488, %v5486
  %v5883 = vpack.c.b16 %v5491, %v5489
  %v5884 = vpack.c.b16 %v5492, %v5490
  %v5885 = vpack.c.b16 %v5495, %v5493
  %v5886 = vpack.c.b16 %v5496, %v5494
  %v5887 = vpack.c.b16 %v5499, %v5497
  %v5888 = vpack.c.b16 %v5500, %v5498
  %v5889 = vpack.c.b16 %v5503, %v5501
  %v5890 = vpack.c.b16 %v5504, %v5502
  %v5891 = vpack.c.b16 %v5507, %v5505
  %v5892 = vpack.c.b16 %v5508, %v5506
  %v5893 = vpack.c.b16 %v5511, %v5509
  %v5894 = vpack.c.b16 %v5512, %v5510
  %v5895 = vpack.c.b16 %v5515, %v5513
  %v5896 = vpack.c.b16 %v5516, %v5514
  %v5897 = vpack.c.b16 %v5519, %v5517
  %v5898 = vpack.c.b16 %v5520, %v5518
  %v5899 = vpack.c.b16 %v5523, %v5521
  %v5900 = vpack.c.b16 %v5524, %v5522
  %v5901 = vpack.c.b16 %v5527, %v5525
  %v5902 = vpack.c.b16 %v5528, %v5526
  %v5903 = vpack.c.b16 %v5531, %v5529
  %v5904 = vpack.c.b16 %v5532, %v5530
  %v5905 = vpack.c.b16 %v5535, %v5533
  %v5906 = vpack.c.b16 %v5536, %v5534
  %v5907 = vpack.c.b16 %v5539, %v5537
  %v5908 = vpack.c.b16 %v5540, %v5538
  %v5909 = vpack.c.b16 %v5543, %v5541
  %v5910 = vpack.c.b16 %v5544, %v5542
  %v5911 = vpack.c.b16 %v5547, %v5545
  %v5912 = vpack.c.b16 %v5548, %v5546
  %v5913 = vpack.c.b16 %v5551, %v5549
  %v5914 = vpack.c.b16 %v5552, %v5550
  %v5915 = vpack.c.b16 %v5555, %v5553
  %v5916 = vpack.c.b16 %v5556, %v5554
  %v5917 = vpack.c.b16 %v5559, %v5557
  %v5918 = vpack.c.b16 %v5560, %v5558
  %v5919 = vpack.c.b16 %v5563, %v5561
  %v5920 = vpack.c.b16 %v5564, %v5562
  %v5921 = vpack.c.b16 %v5567, %v5565
  %v5922 = vpack.c.b16 %v5568, %v5566
  %v5923 = vpack.c.b16 %v5571, %v5569
  %v5924 = vpack.c.b16 %v5572, %v5570
  %v5925 = vpack.c.b16 %v5575, %v5573
  %v5926 = vpack.c.b16 %v5576, %v5574
  %v5927 = vpack.c.b16 %v5579, %v5577
  %v5928 = vpack.c.b16 %v5580, %v5578
  %v5929 = vpack.c.b16 %v5583, %v5581
  %v5930 = vpack.c.b16 %v5584, %v5582
  %v5931 = vpack.c.b16 %v5587, %v5585
  %v5932 = vpack.c.b16 %v5588, %v5586
  %v5933 = vpack.c.b16 %v5591, %v5589
  %v5934 = vpack.c.b16 %v5592, %v5590
  %v5935 = vpack.c.b16 %v5595, %v5593
  %v5936 = vpack.c.b16 %v5596, %v5594
  %v5937 = vpack.c.b16 %v5599, %v5597
  %v5938 = vpack.c.b16 %v5600, %v5598
  %v5939 = vpack.c.b16 %v5603, %v5601
  %v5940 = vpack.c.b16 %v5604, %v5602
  %v5941 = vpack.c.b16 %v5607, %v5605
  %v5942 = vpack.c.b16 %v5608, %v5606
  %v5943 = vpack.c.b16 %v5611, %v5609
  %v5944 = vpack.c.b16 %v5612, %v5610
  %v5945 = vpack.c.b16 %v5615, %v5613
  %v5946 = vpack.c.b16 %v5616, %v5614
  %v5947 = vpack.c.b16 %v5619, %v5617
  %v5948 = vpack.c.b16 %v5620, %v5618
  %v5949 = vpack.c.b16 %v5623, %v5621
  %v5950 = vpack.c.b16 %v5624, %v5622
  %v5951 = vpack.c.b16 %v5627, %v5625
  %v5952 = vpack.c.b16 %v5628, %v5626
  %v5953 = vpack.c.b16 %v5631, %v5629
  %v5954 = vpack.c.b16 %v5632, %v5630
  %v5955 = vpack.c.b16 %v5635, %v5633
  %v5956 = vpack.c.b16 %v5636, %v5634
  %v5957 = vpack.c.b16 %v5639, %v5637
  %v5958 = vpack.c.b16 %v5640, %v5638
  %v5959 = vpack.c.b16 %v5643, %v5641
  %v5960 = vpack.c.b16 %v5644, %v5642
  %v5961 = vpack.c.b16 %v5647, %v5645
  %v5962 = vpack.c.b16 %v5648, %v5646
  %v5963 = vpack.c.b16 %v5651, %v5649
  %v5964 = vpack.c.b16 %v5652, %v5650
  %v5965 = vpack.c.b16 %v5655, %v5653
  %v5966 = vpack.c.b16 %v5656, %v5654
  %v5967 = vpack.c.b16 %v5659, %v5657
  %v5968 = vpack.c.b16 %v5660, %v5658
  %v5969 = vpack.c.b16 %v5663, %v5661
  %v5970 = vpack.c.b16 %v5664, %v5662
  %v5971 = vpack.c.b16 %v5667, %v5665
  %v5972 = vpack.c.b16 %v5668, %v5666
  %v5973 = vpack.c.b16 %v5671, %v5669
  %v5974 = vpack.c.b16 %v5672, %v5670
  %v5975 = vpack.c.b16 %v5675, %v5673
  %v5976 = vpack.c.b16 %v5676, %v5674
  %v5977 = vpack.c.b16 %v5679, %v5677
  %v5978 = vpack.c.b16 %v5680, %v5678
  %v5979 = vpack.c.b16 %v5683, %v5681
  %v5980 = vpack.c.b16 %v5684, %v5682
  %v5981 = vpack.c.b16 %v5687, %v5685
  %v5982 = vpack.c.b16 %v5688, %v5686
  %v5983 = vpack.c.b16 %v5691, %v5689
  %v5984 = vpack.c.b16 %v5692, %v5690
  %v5985 = vpack.c.b16 %v5695, %v5693
  %v5986 = vpack.c.b16 %v5696, %v5694
  %v5987 = vpack.c.b16 %v5699, %v5697
  %v5988 = vpack.c.b16 %v5700, %v5698
  %v5989 = vpack.c.b16 %v5703, %v5701
  %v5990 = vpack.c.b16 %v5704, %v5702
  %v5991 = vpack.c.b16 %v5707, %v5705
  %v5992 = vpack.c.b16 %v5708, %v5706
  %v5993 = vpack.c.b16 %v5711, %v5709
  %v5994 = vpack.c.b16 %v5712, %v5710
  %v5995 = vpack.c.b16 %v5715, %v5713
  %v5996 = vpack.c.b16 %v5716, %v5714
  %v5997 = vpack.c.b16 %v5719, %v5717
  %v5998 = vpack.c.b16 %v5720, %v5718
  %v5999 = vpack.c.b16 %v5723, %v5721
  %v6000 = vpack.c.b16 %v5724, %v5722
  %v6001 = vpack.c.b16 %v5727, %v5725
  %v6002 = vpack.c.b16 %v5728, %v5726
  %v6003 = vpack.c.b16 %v5731, %v5729
  %v6004 = vpack.c.b16 %v5732, %v5730
  %v6005 = vpack.c.b16 %v5735, %v5733
  %v6006 = vpack.c.b16 %v5736, %v5734
  %v6007 = vpack.c.b16 %v5739, %v5737
  %v6008 = vpack.c.b16 %v5740, %v5738
  %v6009 = vpack.c.b16 %v5743, %v5741
  %v6010 = vpack.c.b16 %v5744, %v5742
  %v6011 = vpack.c.b16 %v5747, %v5745
  %v6012 = vpack.c.b16 %v5748, %v5746
  %v6013 = vpack.c.b16 %v5751, %v5749
  %v6014 = vpack.c.b16 %v5752, %v5750
  %v6015 = vpack.c.b16 %v5755, %v5753
  %v6016 = vpack.c.b16 %v5756, %v5754
  %v6017 = vpack.c.b16 %v5759, %v5757
  %v6018 = vpack.c.b16 %v5760, %v5758
  %v6019 = vpack.c.b16 %v5763, %v5761
  %v6020 = vpack.c.b16 %v5764, %v5762
  %6277 = vmatprep.subr.bf16.mxu0 %v5780
  %6278 = vmatpush1.bf16.msra.mxu0 %v5779
  %6279 = vmatprep.subr.bf16.mxu0 %v5778
  %6280 = vmatpush1.bf16.msra.mxu0 %v5777
  %6281 = vmatprep.subr.bf16.mxu0 %v5776
  %6282 = vmatpush1.bf16.msra.mxu0 %v5775
  %6283 = vmatprep.subr.bf16.mxu0 %v5774
  %6284 = vmatpush1.bf16.msra.mxu0 %v5773
  %6285 = vmatprep.subr.bf16.mxu0 %v5772
  %6286 = vmatpush1.bf16.msra.mxu0 %v5771
  %6287 = vmatprep.subr.bf16.mxu0 %v5770
  %6288 = vmatpush1.bf16.msra.mxu0 %v5769
  %6289 = vmatprep.subr.bf16.mxu0 %v5768
  %6290 = vmatpush1.bf16.msra.mxu0 %v5767
  %6291 = vmatprep.subr.bf16.mxu0 %v5766
  %6292 = vmatpush1.bf16.msra.mxu0 %v5765
  %6293 = vmatprep.subr.bf16.mxu0 %v5796
  %6294 = vmatpush2.bf16.msra.mxu0 %v5795
  %6295 = vmatprep.subr.bf16.mxu0 %v5794
  %6296 = vmatpush2.bf16.msra.mxu0 %v5793
  %6297 = vmatprep.subr.bf16.mxu0 %v5792
  %6298 = vmatpush2.bf16.msra.mxu0 %v5791
  %6299 = vmatprep.subr.bf16.mxu0 %v5790
  %6300 = vmatpush2.bf16.msra.mxu0 %v5789
  %6301 = vmatprep.subr.bf16.mxu0 %v5788
  %6302 = vmatpush2.bf16.msra.mxu0 %v5787
  %6303 = vmatprep.subr.bf16.mxu0 %v5786
  %6304 = vmatpush2.bf16.msra.mxu0 %v5785
  %6305 = vmatprep.subr.bf16.mxu0 %v5784
  %6306 = vmatpush2.bf16.msra.mxu0 %v5783
  %6307 = vmatprep.subr.bf16.mxu0 %v5782
  %6308 = vmatpush2.bf16.msra.mxu0 %v5781
  %6309 = vmatprep.mubr.bf16.mxu0 %v3430
  %6310 = vmatmul.mubr.bf16.gmra.mxu0 %v3429
  %v6311 = vpop.f32.mrf.mxu0
  %v6312 = vadd.f32 %v1070, %v6311
  %v6313 = vpop.f32.mrf.mxu0
  %v6314 = vadd.f32 %v1074, %v6313
  %v6315 = vpop.f32.mrf.mxu0
  %v6316 = vadd.f32 %v1070, %v6315
  %v6317 = vpop.f32.mrf.mxu0
  %v6318 = vadd.f32 %v1074, %v6317
  %6319 = vmatprep.mubr.bf16.mxu0 %v3446
  %6320 = vmatmul.mubr.bf16.gmra.mxu0 %v3445
  %v6321 = vpop.f32.mrf.mxu0
  %v6322 = vadd.f32 %v1070, %v6321
  %v6323 = vpop.f32.mrf.mxu0
  %v6324 = vadd.f32 %v1074, %v6323
  %v6325 = vpop.f32.mrf.mxu0
  %v6326 = vadd.f32 %v1070, %v6325
  %v6327 = vpop.f32.mrf.mxu0
  %v6328 = vadd.f32 %v1074, %v6327
  %6329 = vmatprep.mubr.bf16.mxu0 %v3462
  %6330 = vmatmul.mubr.bf16.gmra.mxu0 %v3461
  %v6331 = vpop.f32.mrf.mxu0
  %v6332 = vadd.f32 %v1070, %v6331
  %v6333 = vpop.f32.mrf.mxu0
  %v6334 = vadd.f32 %v1074, %v6333
  %v6335 = vpop.f32.mrf.mxu0
  %v6336 = vadd.f32 %v1070, %v6335
  %v6337 = vpop.f32.mrf.mxu0
  %v6338 = vadd.f32 %v1074, %v6337
  %6339 = vmatprep.mubr.bf16.mxu0 %v3478
  %6340 = vmatmul.mubr.bf16.gmra.mxu0 %v3477
  %v6341 = vpop.f32.mrf.mxu0
  %v6342 = vadd.f32 %v1070, %v6341
  %v6343 = vpop.f32.mrf.mxu0
  %v6344 = vadd.f32 %v1074, %v6343
  %v6345 = vpop.f32.mrf.mxu0
  %v6346 = vadd.f32 %v1070, %v6345
  %v6347 = vpop.f32.mrf.mxu0
  %v6348 = vadd.f32 %v1074, %v6347
  %6349 = vmatprep.mubr.bf16.mxu0 %v3494
  %6350 = vmatmul.mubr.bf16.gmra.mxu0 %v3493
  %v6351 = vpop.f32.mrf.mxu0
  %v6352 = vadd.f32 %v1070, %v6351
  %v6353 = vpop.f32.mrf.mxu0
  %v6354 = vadd.f32 %v1074, %v6353
  %v6355 = vpop.f32.mrf.mxu0
  %v6356 = vadd.f32 %v1070, %v6355
  %v6357 = vpop.f32.mrf.mxu0
  %v6358 = vadd.f32 %v1074, %v6357
  %6359 = vmatprep.mubr.bf16.mxu0 %v3510
  %6360 = vmatmul.mubr.bf16.gmra.mxu0 %v3509
  %v6361 = vpop.f32.mrf.mxu0
  %v6362 = vadd.f32 %v1070, %v6361
  %v6363 = vpop.f32.mrf.mxu0
  %v6364 = vadd.f32 %v1074, %v6363
  %v6365 = vpop.f32.mrf.mxu0
  %v6366 = vadd.f32 %v1070, %v6365
  %v6367 = vpop.f32.mrf.mxu0
  %v6368 = vadd.f32 %v1074, %v6367
  %6369 = vmatprep.mubr.bf16.mxu0 %v3526
  %6370 = vmatmul.mubr.bf16.gmra.mxu0 %v3525
  %v6371 = vpop.f32.mrf.mxu0
  %v6372 = vadd.f32 %v1070, %v6371
  %v6373 = vpop.f32.mrf.mxu0
  %v6374 = vadd.f32 %v1074, %v6373
  %v6375 = vpop.f32.mrf.mxu0
  %v6376 = vadd.f32 %v1070, %v6375
  %v6377 = vpop.f32.mrf.mxu0
  %v6378 = vadd.f32 %v1074, %v6377
  %6379 = vmatprep.mubr.bf16.mxu0 %v3542
  %6380 = vmatmul.mubr.bf16.gmra.mxu0 %v3541
  %v6381 = vpop.f32.mrf.mxu0
  %v6382 = vadd.f32 %v1070, %v6381
  %v6383 = vpop.f32.mrf.mxu0
  %v6384 = vadd.f32 %v1074, %v6383
  %v6385 = vpop.f32.mrf.mxu0
  %v6386 = vadd.f32 %v1070, %v6385
  %v6387 = vpop.f32.mrf.mxu0
  %v6388 = vadd.f32 %v1074, %v6387
  %6389 = vmatprep.mubr.bf16.mxu0 %v3558
  %6390 = vmatmul.mubr.bf16.gmra.mxu0 %v3557
  %v6391 = vpop.f32.mrf.mxu0
  %v6392 = vadd.f32 %v1070, %v6391
  %v6393 = vpop.f32.mrf.mxu0
  %v6394 = vadd.f32 %v1074, %v6393
  %v6395 = vpop.f32.mrf.mxu0
  %v6396 = vadd.f32 %v1070, %v6395
  %v6397 = vpop.f32.mrf.mxu0
  %v6398 = vadd.f32 %v1074, %v6397
  %6399 = vmatprep.mubr.bf16.mxu0 %v3574
  %6400 = vmatmul.mubr.bf16.gmra.mxu0 %v3573
  %v6401 = vpop.f32.mrf.mxu0
  %v6402 = vadd.f32 %v1070, %v6401
  %v6403 = vpop.f32.mrf.mxu0
  %v6404 = vadd.f32 %v1074, %v6403
  %v6405 = vpop.f32.mrf.mxu0
  %v6406 = vadd.f32 %v1070, %v6405
  %v6407 = vpop.f32.mrf.mxu0
  %v6408 = vadd.f32 %v1074, %v6407
  %6409 = vmatprep.mubr.bf16.mxu0 %v3590
  %6410 = vmatmul.mubr.bf16.gmra.mxu0 %v3589
  %v6411 = vpop.f32.mrf.mxu0
  %v6412 = vadd.f32 %v1070, %v6411
  %v6413 = vpop.f32.mrf.mxu0
  %v6414 = vadd.f32 %v1074, %v6413
  %v6415 = vpop.f32.mrf.mxu0
  %v6416 = vadd.f32 %v1070, %v6415
  %v6417 = vpop.f32.mrf.mxu0
  %v6418 = vadd.f32 %v1074, %v6417
  %6419 = vmatprep.mubr.bf16.mxu0 %v3606
  %6420 = vmatmul.mubr.bf16.gmra.mxu0 %v3605
  %v6421 = vpop.f32.mrf.mxu0
  %v6422 = vadd.f32 %v1070, %v6421
  %v6423 = vpop.f32.mrf.mxu0
  %v6424 = vadd.f32 %v1074, %v6423
  %v6425 = vpop.f32.mrf.mxu0
  %v6426 = vadd.f32 %v1070, %v6425
  %v6427 = vpop.f32.mrf.mxu0
  %v6428 = vadd.f32 %v1074, %v6427
  %6429 = vmatprep.mubr.bf16.mxu0 %v3622
  %6430 = vmatmul.mubr.bf16.gmra.mxu0 %v3621
  %v6431 = vpop.f32.mrf.mxu0
  %v6432 = vadd.f32 %v1070, %v6431
  %v6433 = vpop.f32.mrf.mxu0
  %v6434 = vadd.f32 %v1074, %v6433
  %v6435 = vpop.f32.mrf.mxu0
  %v6436 = vadd.f32 %v1070, %v6435
  %v6437 = vpop.f32.mrf.mxu0
  %v6438 = vadd.f32 %v1074, %v6437
  %6439 = vmatprep.mubr.bf16.mxu0 %v3638
  %6440 = vmatmul.mubr.bf16.gmra.mxu0 %v3637
  %v6441 = vpop.f32.mrf.mxu0
  %v6442 = vadd.f32 %v1070, %v6441
  %v6443 = vpop.f32.mrf.mxu0
  %v6444 = vadd.f32 %v1074, %v6443
  %v6445 = vpop.f32.mrf.mxu0
  %v6446 = vadd.f32 %v1070, %v6445
  %v6447 = vpop.f32.mrf.mxu0
  %v6448 = vadd.f32 %v1074, %v6447
  %6449 = vmatprep.mubr.bf16.mxu0 %v3654
  %6450 = vmatmul.mubr.bf16.gmra.mxu0 %v3653
  %v6451 = vpop.f32.mrf.mxu0
  %v6452 = vadd.f32 %v1070, %v6451
  %v6453 = vpop.f32.mrf.mxu0
  %v6454 = vadd.f32 %v1074, %v6453
  %v6455 = vpop.f32.mrf.mxu0
  %v6456 = vadd.f32 %v1070, %v6455
  %v6457 = vpop.f32.mrf.mxu0
  %v6458 = vadd.f32 %v1074, %v6457
  %6459 = vmatprep.mubr.bf16.mxu0 %v3670
  %6460 = vmatmul.mubr.bf16.gmra.mxu0 %v3669
  %v6461 = vpop.f32.mrf.mxu0
  %v6462 = vadd.f32 %v1070, %v6461
  %v6463 = vpop.f32.mrf.mxu0
  %v6464 = vadd.f32 %v1074, %v6463
  %v6465 = vpop.f32.mrf.mxu0
  %v6466 = vadd.f32 %v1070, %v6465
  %v6467 = vpop.f32.mrf.mxu0
  %v6468 = vadd.f32 %v1074, %v6467
  %6469 = vmatprep.mubr.bf16.mxu0 %v3686
  %6470 = vmatmul.mubr.bf16.gmra.mxu0 %v3685
  %v6471 = vpop.f32.mrf.mxu0
  %v6472 = vadd.f32 %v1070, %v6471
  %v6473 = vpop.f32.mrf.mxu0
  %v6474 = vadd.f32 %v1074, %v6473
  %v6475 = vpop.f32.mrf.mxu0
  %v6476 = vadd.f32 %v1070, %v6475
  %v6477 = vpop.f32.mrf.mxu0
  %v6478 = vadd.f32 %v1074, %v6477
  %6479 = vmatprep.mubr.bf16.mxu0 %v3702
  %6480 = vmatmul.mubr.bf16.gmra.mxu0 %v3701
  %v6481 = vpop.f32.mrf.mxu0
  %v6482 = vadd.f32 %v1070, %v6481
  %v6483 = vpop.f32.mrf.mxu0
  %v6484 = vadd.f32 %v1074, %v6483
  %v6485 = vpop.f32.mrf.mxu0
  %v6486 = vadd.f32 %v1070, %v6485
  %v6487 = vpop.f32.mrf.mxu0
  %v6488 = vadd.f32 %v1074, %v6487
  %6489 = vmatprep.mubr.bf16.mxu0 %v3718
  %6490 = vmatmul.mubr.bf16.gmra.mxu0 %v3717
  %v6491 = vpop.f32.mrf.mxu0
  %v6492 = vadd.f32 %v1070, %v6491
  %v6493 = vpop.f32.mrf.mxu0
  %v6494 = vadd.f32 %v1074, %v6493
  %v6495 = vpop.f32.mrf.mxu0
  %v6496 = vadd.f32 %v1070, %v6495
  %v6497 = vpop.f32.mrf.mxu0
  %v6498 = vadd.f32 %v1074, %v6497
  %6499 = vmatprep.mubr.bf16.mxu0 %v3734
  %6500 = vmatmul.mubr.bf16.gmra.mxu0 %v3733
  %v6501 = vpop.f32.mrf.mxu0
  %v6502 = vadd.f32 %v1070, %v6501
  %v6503 = vpop.f32.mrf.mxu0
  %v6504 = vadd.f32 %v1074, %v6503
  %v6505 = vpop.f32.mrf.mxu0
  %v6506 = vadd.f32 %v1070, %v6505
  %v6507 = vpop.f32.mrf.mxu0
  %v6508 = vadd.f32 %v1074, %v6507
  %6509 = vmatprep.mubr.bf16.mxu0 %v3750
  %6510 = vmatmul.mubr.bf16.gmra.mxu0 %v3749
  %v6511 = vpop.f32.mrf.mxu0
  %v6512 = vadd.f32 %v1070, %v6511
  %v6513 = vpop.f32.mrf.mxu0
  %v6514 = vadd.f32 %v1074, %v6513
  %v6515 = vpop.f32.mrf.mxu0
  %v6516 = vadd.f32 %v1070, %v6515
  %v6517 = vpop.f32.mrf.mxu0
  %v6518 = vadd.f32 %v1074, %v6517
  %6519 = vmatprep.mubr.bf16.mxu0 %v3766
  %6520 = vmatmul.mubr.bf16.gmra.mxu0 %v3765
  %v6521 = vpop.f32.mrf.mxu0
  %v6522 = vadd.f32 %v1070, %v6521
  %v6523 = vpop.f32.mrf.mxu0
  %v6524 = vadd.f32 %v1074, %v6523
  %v6525 = vpop.f32.mrf.mxu0
  %v6526 = vadd.f32 %v1070, %v6525
  %v6527 = vpop.f32.mrf.mxu0
  %v6528 = vadd.f32 %v1074, %v6527
  %6529 = vmatprep.mubr.bf16.mxu0 %v3782
  %6530 = vmatmul.mubr.bf16.gmra.mxu0 %v3781
  %v6531 = vpop.f32.mrf.mxu0
  %v6532 = vadd.f32 %v1070, %v6531
  %v6533 = vpop.f32.mrf.mxu0
  %v6534 = vadd.f32 %v1074, %v6533
  %v6535 = vpop.f32.mrf.mxu0
  %v6536 = vadd.f32 %v1070, %v6535
  %v6537 = vpop.f32.mrf.mxu0
  %v6538 = vadd.f32 %v1074, %v6537
  %6539 = vmatprep.mubr.bf16.mxu0 %v3798
  %6540 = vmatmul.mubr.bf16.gmra.mxu0 %v3797
  %v6541 = vpop.f32.mrf.mxu0
  %v6542 = vadd.f32 %v1070, %v6541
  %v6543 = vpop.f32.mrf.mxu0
  %v6544 = vadd.f32 %v1074, %v6543
  %v6545 = vpop.f32.mrf.mxu0
  %v6546 = vadd.f32 %v1070, %v6545
  %v6547 = vpop.f32.mrf.mxu0
  %v6548 = vadd.f32 %v1074, %v6547
  %6549 = vmatprep.mubr.bf16.mxu0 %v3814
  %6550 = vmatmul.mubr.bf16.gmra.mxu0 %v3813
  %v6551 = vpop.f32.mrf.mxu0
  %v6552 = vadd.f32 %v1070, %v6551
  %v6553 = vpop.f32.mrf.mxu0
  %v6554 = vadd.f32 %v1074, %v6553
  %v6555 = vpop.f32.mrf.mxu0
  %v6556 = vadd.f32 %v1070, %v6555
  %v6557 = vpop.f32.mrf.mxu0
  %v6558 = vadd.f32 %v1074, %v6557
  %6559 = vmatprep.mubr.bf16.mxu0 %v3830
  %6560 = vmatmul.mubr.bf16.gmra.mxu0 %v3829
  %v6561 = vpop.f32.mrf.mxu0
  %v6562 = vadd.f32 %v1070, %v6561
  %v6563 = vpop.f32.mrf.mxu0
  %v6564 = vadd.f32 %v1074, %v6563
  %v6565 = vpop.f32.mrf.mxu0
  %v6566 = vadd.f32 %v1070, %v6565
  %v6567 = vpop.f32.mrf.mxu0
  %v6568 = vadd.f32 %v1074, %v6567
  %6569 = vmatprep.mubr.bf16.mxu0 %v3846
  %6570 = vmatmul.mubr.bf16.gmra.mxu0 %v3845
  %v6571 = vpop.f32.mrf.mxu0
  %v6572 = vadd.f32 %v1070, %v6571
  %v6573 = vpop.f32.mrf.mxu0
  %v6574 = vadd.f32 %v1074, %v6573
  %v6575 = vpop.f32.mrf.mxu0
  %v6576 = vadd.f32 %v1070, %v6575
  %v6577 = vpop.f32.mrf.mxu0
  %v6578 = vadd.f32 %v1074, %v6577
  %6579 = vmatprep.mubr.bf16.mxu0 %v3862
  %6580 = vmatmul.mubr.bf16.gmra.mxu0 %v3861
  %v6581 = vpop.f32.mrf.mxu0
  %v6582 = vadd.f32 %v1070, %v6581
  %v6583 = vpop.f32.mrf.mxu0
  %v6584 = vadd.f32 %v1074, %v6583
  %v6585 = vpop.f32.mrf.mxu0
  %v6586 = vadd.f32 %v1070, %v6585
  %v6587 = vpop.f32.mrf.mxu0
  %v6588 = vadd.f32 %v1074, %v6587
  %6589 = vmatprep.mubr.bf16.mxu0 %v3878
  %6590 = vmatmul.mubr.bf16.gmra.mxu0 %v3877
  %v6591 = vpop.f32.mrf.mxu0
  %v6592 = vadd.f32 %v1070, %v6591
  %v6593 = vpop.f32.mrf.mxu0
  %v6594 = vadd.f32 %v1074, %v6593
  %v6595 = vpop.f32.mrf.mxu0
  %v6596 = vadd.f32 %v1070, %v6595
  %v6597 = vpop.f32.mrf.mxu0
  %v6598 = vadd.f32 %v1074, %v6597
  %6599 = vmatprep.mubr.bf16.mxu0 %v3894
  %6600 = vmatmul.mubr.bf16.gmra.mxu0 %v3893
  %v6601 = vpop.f32.mrf.mxu0
  %v6602 = vadd.f32 %v1070, %v6601
  %v6603 = vpop.f32.mrf.mxu0
  %v6604 = vadd.f32 %v1074, %v6603
  %v6605 = vpop.f32.mrf.mxu0
  %v6606 = vadd.f32 %v1070, %v6605
  %v6607 = vpop.f32.mrf.mxu0
  %v6608 = vadd.f32 %v1074, %v6607
  %6609 = vmatprep.mubr.bf16.mxu0 %v3910
  %6610 = vmatmul.mubr.bf16.gmra.mxu0 %v3909
  %v6611 = vpop.f32.mrf.mxu0
  %v6612 = vadd.f32 %v1070, %v6611
  %v6613 = vpop.f32.mrf.mxu0
  %v6614 = vadd.f32 %v1074, %v6613
  %v6615 = vpop.f32.mrf.mxu0
  %v6616 = vadd.f32 %v1070, %v6615
  %v6617 = vpop.f32.mrf.mxu0
  %v6618 = vadd.f32 %v1074, %v6617
  %6619 = vmatprep.mubr.bf16.mxu0 %v3926
  %6620 = vmatmul.mubr.bf16.gmra.mxu0 %v3925
  %v6621 = vpop.f32.mrf.mxu0
  %v6622 = vadd.f32 %v1070, %v6621
  %v6623 = vpop.f32.mrf.mxu0
  %v6624 = vadd.f32 %v1074, %v6623
  %v6625 = vpop.f32.mrf.mxu0
  %v6626 = vadd.f32 %v1070, %v6625
  %v6627 = vpop.f32.mrf.mxu0
  %v6628 = vadd.f32 %v1074, %v6627
  %6629 = vmatprep.mubr.bf16.mxu0 %v3942
  %6630 = vmatmul.mubr.bf16.gmra.mxu0 %v3941
  %v6631 = vpop.f32.mrf.mxu0
  %v6632 = vadd.f32 %v1070, %v6631
  %v6633 = vpop.f32.mrf.mxu0
  %v6634 = vadd.f32 %v1074, %v6633
  %v6635 = vpop.f32.mrf.mxu0
  %v6636 = vadd.f32 %v1070, %v6635
  %v6637 = vpop.f32.mrf.mxu0
  %v6638 = vadd.f32 %v1074, %v6637
  %6639 = vmatprep.mubr.bf16.mxu0 %v3958
  %6640 = vmatmul.mubr.bf16.gmra.mxu0 %v3957
  %v6641 = vpop.f32.mrf.mxu0
  %v6642 = vadd.f32 %v1070, %v6641
  %v6643 = vpop.f32.mrf.mxu0
  %v6644 = vadd.f32 %v1074, %v6643
  %v6645 = vpop.f32.mrf.mxu0
  %v6646 = vadd.f32 %v1070, %v6645
  %v6647 = vpop.f32.mrf.mxu0
  %v6648 = vadd.f32 %v1074, %v6647
  %6649 = vmatprep.mubr.bf16.mxu0 %v3974
  %6650 = vmatmul.mubr.bf16.gmra.mxu0 %v3973
  %v6651 = vpop.f32.mrf.mxu0
  %v6652 = vadd.f32 %v1070, %v6651
  %v6653 = vpop.f32.mrf.mxu0
  %v6654 = vadd.f32 %v1074, %v6653
  %v6655 = vpop.f32.mrf.mxu0
  %v6656 = vadd.f32 %v1070, %v6655
  %v6657 = vpop.f32.mrf.mxu0
  %v6658 = vadd.f32 %v1074, %v6657
  %6659 = vmatprep.mubr.bf16.mxu0 %v3990
  %6660 = vmatmul.mubr.bf16.gmra.mxu0 %v3989
  %v6661 = vpop.f32.mrf.mxu0
  %v6662 = vadd.f32 %v1070, %v6661
  %v6663 = vpop.f32.mrf.mxu0
  %v6664 = vadd.f32 %v1074, %v6663
  %v6665 = vpop.f32.mrf.mxu0
  %v6666 = vadd.f32 %v1070, %v6665
  %v6667 = vpop.f32.mrf.mxu0
  %v6668 = vadd.f32 %v1074, %v6667
  %6669 = vmatprep.mubr.bf16.mxu0 %v4006
  %6670 = vmatmul.mubr.bf16.gmra.mxu0 %v4005
  %v6671 = vpop.f32.mrf.mxu0
  %v6672 = vadd.f32 %v1070, %v6671
  %v6673 = vpop.f32.mrf.mxu0
  %v6674 = vadd.f32 %v1074, %v6673
  %v6675 = vpop.f32.mrf.mxu0
  %v6676 = vadd.f32 %v1070, %v6675
  %v6677 = vpop.f32.mrf.mxu0
  %v6678 = vadd.f32 %v1074, %v6677
  %6679 = vmatprep.mubr.bf16.mxu0 %v4022
  %6680 = vmatmul.mubr.bf16.gmra.mxu0 %v4021
  %v6681 = vpop.f32.mrf.mxu0
  %v6682 = vadd.f32 %v1070, %v6681
  %v6683 = vpop.f32.mrf.mxu0
  %v6684 = vadd.f32 %v1074, %v6683
  %v6685 = vpop.f32.mrf.mxu0
  %v6686 = vadd.f32 %v1070, %v6685
  %v6687 = vpop.f32.mrf.mxu0
  %v6688 = vadd.f32 %v1074, %v6687
  %6689 = vmatprep.mubr.bf16.mxu0 %v4038
  %6690 = vmatmul.mubr.bf16.gmra.mxu0 %v4037
  %v6691 = vpop.f32.mrf.mxu0
  %v6692 = vadd.f32 %v1070, %v6691
  %v6693 = vpop.f32.mrf.mxu0
  %v6694 = vadd.f32 %v1074, %v6693
  %v6695 = vpop.f32.mrf.mxu0
  %v6696 = vadd.f32 %v1070, %v6695
  %v6697 = vpop.f32.mrf.mxu0
  %v6698 = vadd.f32 %v1074, %v6697
  %6699 = vmatprep.mubr.bf16.mxu0 %v4054
  %6700 = vmatmul.mubr.bf16.gmra.mxu0 %v4053
  %v6701 = vpop.f32.mrf.mxu0
  %v6702 = vadd.f32 %v1070, %v6701
  %v6703 = vpop.f32.mrf.mxu0
  %v6704 = vadd.f32 %v1074, %v6703
  %v6705 = vpop.f32.mrf.mxu0
  %v6706 = vadd.f32 %v1070, %v6705
  %v6707 = vpop.f32.mrf.mxu0
  %v6708 = vadd.f32 %v1074, %v6707
  %6709 = vmatprep.mubr.bf16.mxu0 %v4070
  %6710 = vmatmul.mubr.bf16.gmra.mxu0 %v4069
  %v6711 = vpop.f32.mrf.mxu0
  %v6712 = vadd.f32 %v1070, %v6711
  %v6713 = vpop.f32.mrf.mxu0
  %v6714 = vadd.f32 %v1074, %v6713
  %v6715 = vpop.f32.mrf.mxu0
  %v6716 = vadd.f32 %v1070, %v6715
  %v6717 = vpop.f32.mrf.mxu0
  %v6718 = vadd.f32 %v1074, %v6717
  %6719 = vmatprep.mubr.bf16.mxu0 %v4086
  %6720 = vmatmul.mubr.bf16.gmra.mxu0 %v4085
  %v6721 = vpop.f32.mrf.mxu0
  %v6722 = vadd.f32 %v1070, %v6721
  %v6723 = vpop.f32.mrf.mxu0
  %v6724 = vadd.f32 %v1074, %v6723
  %v6725 = vpop.f32.mrf.mxu0
  %v6726 = vadd.f32 %v1070, %v6725
  %v6727 = vpop.f32.mrf.mxu0
  %v6728 = vadd.f32 %v1074, %v6727
  %6729 = vmatprep.mubr.bf16.mxu0 %v4102
  %6730 = vmatmul.mubr.bf16.gmra.mxu0 %v4101
  %v6731 = vpop.f32.mrf.mxu0
  %v6732 = vadd.f32 %v1070, %v6731
  %v6733 = vpop.f32.mrf.mxu0
  %v6734 = vadd.f32 %v1074, %v6733
  %v6735 = vpop.f32.mrf.mxu0
  %v6736 = vadd.f32 %v1070, %v6735
  %v6737 = vpop.f32.mrf.mxu0
  %v6738 = vadd.f32 %v1074, %v6737
  %6739 = vmatprep.mubr.bf16.mxu0 %v4118
  %6740 = vmatmul.mubr.bf16.gmra.mxu0 %v4117
  %v6741 = vpop.f32.mrf.mxu0
  %v6742 = vadd.f32 %v1070, %v6741
  %v6743 = vpop.f32.mrf.mxu0
  %v6744 = vadd.f32 %v1074, %v6743
  %v6745 = vpop.f32.mrf.mxu0
  %v6746 = vadd.f32 %v1070, %v6745
  %v6747 = vpop.f32.mrf.mxu0
  %v6748 = vadd.f32 %v1074, %v6747
  %6749 = vmatprep.mubr.bf16.mxu0 %v4134
  %6750 = vmatmul.mubr.bf16.gmra.mxu0 %v4133
  %v6751 = vpop.f32.mrf.mxu0
  %v6752 = vadd.f32 %v1070, %v6751
  %v6753 = vpop.f32.mrf.mxu0
  %v6754 = vadd.f32 %v1074, %v6753
  %v6755 = vpop.f32.mrf.mxu0
  %v6756 = vadd.f32 %v1070, %v6755
  %v6757 = vpop.f32.mrf.mxu0
  %v6758 = vadd.f32 %v1074, %v6757
  %6759 = vmatprep.mubr.bf16.mxu0 %v4150
  %6760 = vmatmul.mubr.bf16.gmra.mxu0 %v4149
  %v6761 = vpop.f32.mrf.mxu0
  %v6762 = vadd.f32 %v1070, %v6761
  %v6763 = vpop.f32.mrf.mxu0
  %v6764 = vadd.f32 %v1074, %v6763
  %v6765 = vpop.f32.mrf.mxu0
  %v6766 = vadd.f32 %v1070, %v6765
  %v6767 = vpop.f32.mrf.mxu0
  %v6768 = vadd.f32 %v1074, %v6767
  %6769 = vmatprep.mubr.bf16.mxu0 %v4166
  %6770 = vmatmul.mubr.bf16.gmra.mxu0 %v4165
  %v6771 = vpop.f32.mrf.mxu0
  %v6772 = vadd.f32 %v1070, %v6771
  %v6773 = vpop.f32.mrf.mxu0
  %v6774 = vadd.f32 %v1074, %v6773
  %v6775 = vpop.f32.mrf.mxu0
  %v6776 = vadd.f32 %v1070, %v6775
  %v6777 = vpop.f32.mrf.mxu0
  %v6778 = vadd.f32 %v1074, %v6777
  %6779 = vmatprep.mubr.bf16.mxu0 %v4182
  %6780 = vmatmul.mubr.bf16.gmra.mxu0 %v4181
  %v6781 = vpop.f32.mrf.mxu0
  %v6782 = vadd.f32 %v1070, %v6781
  %v6783 = vpop.f32.mrf.mxu0
  %v6784 = vadd.f32 %v1074, %v6783
  %v6785 = vpop.f32.mrf.mxu0
  %v6786 = vadd.f32 %v1070, %v6785
  %v6787 = vpop.f32.mrf.mxu0
  %v6788 = vadd.f32 %v1074, %v6787
  %6789 = vmatprep.mubr.bf16.mxu0 %v4198
  %6790 = vmatmul.mubr.bf16.gmra.mxu0 %v4197
  %v6791 = vpop.f32.mrf.mxu0
  %v6792 = vadd.f32 %v1070, %v6791
  %v6793 = vpop.f32.mrf.mxu0
  %v6794 = vadd.f32 %v1074, %v6793
  %v6795 = vpop.f32.mrf.mxu0
  %v6796 = vadd.f32 %v1070, %v6795
  %v6797 = vpop.f32.mrf.mxu0
  %v6798 = vadd.f32 %v1074, %v6797
  %6799 = vdwg.mxu0
  %6800 = vmatprep.subr.bf16.mxu0 %v5812
  %6801 = vmatpush1.bf16.msra.mxu0 %v5811
  %6802 = vmatprep.subr.bf16.mxu0 %v5810
  %6803 = vmatpush1.bf16.msra.mxu0 %v5809
  %6804 = vmatprep.subr.bf16.mxu0 %v5808
  %6805 = vmatpush1.bf16.msra.mxu0 %v5807
  %6806 = vmatprep.subr.bf16.mxu0 %v5806
  %6807 = vmatpush1.bf16.msra.mxu0 %v5805
  %6808 = vmatprep.subr.bf16.mxu0 %v5804
  %6809 = vmatpush1.bf16.msra.mxu0 %v5803
  %6810 = vmatprep.subr.bf16.mxu0 %v5802
  %6811 = vmatpush1.bf16.msra.mxu0 %v5801
  %6812 = vmatprep.subr.bf16.mxu0 %v5800
  %6813 = vmatpush1.bf16.msra.mxu0 %v5799
  %6814 = vmatprep.subr.bf16.mxu0 %v5798
  %6815 = vmatpush1.bf16.msra.mxu0 %v5797
  %6816 = vmatprep.subr.bf16.mxu0 %v5828
  %6817 = vmatpush2.bf16.msra.mxu0 %v5827
  %6818 = vmatprep.subr.bf16.mxu0 %v5826
  %6819 = vmatpush2.bf16.msra.mxu0 %v5825
  %6820 = vmatprep.subr.bf16.mxu0 %v5824
  %6821 = vmatpush2.bf16.msra.mxu0 %v5823
  %6822 = vmatprep.subr.bf16.mxu0 %v5822
  %6823 = vmatpush2.bf16.msra.mxu0 %v5821
  %6824 = vmatprep.subr.bf16.mxu0 %v5820
  %6825 = vmatpush2.bf16.msra.mxu0 %v5819
  %6826 = vmatprep.subr.bf16.mxu0 %v5818
  %6827 = vmatpush2.bf16.msra.mxu0 %v5817
  %6828 = vmatprep.subr.bf16.mxu0 %v5816
  %6829 = vmatpush2.bf16.msra.mxu0 %v5815
  %6830 = vmatprep.subr.bf16.mxu0 %v5814
  %6831 = vmatpush2.bf16.msra.mxu0 %v5813
  %6832 = vmatprep.mubr.bf16.mxu0 %v3432
  %6833 = vmatmul.mubr.bf16.gmra.mxu0 %v3431
  %v6834 = vpop.f32.mrf.mxu0
  %v6835 = vadd.f32 %v6312, %v6834
  %v6836 = vpop.f32.mrf.mxu0
  %v6837 = vadd.f32 %v6314, %v6836
  %v6838 = vpop.f32.mrf.mxu0
  %v6839 = vadd.f32 %v6316, %v6838
  %v6840 = vpop.f32.mrf.mxu0
  %v6841 = vadd.f32 %v6318, %v6840
  %6842 = vmatprep.mubr.bf16.mxu0 %v3448
  %6843 = vmatmul.mubr.bf16.gmra.mxu0 %v3447
  %v6844 = vpop.f32.mrf.mxu0
  %v6845 = vadd.f32 %v6322, %v6844
  %v6846 = vpop.f32.mrf.mxu0
  %v6847 = vadd.f32 %v6324, %v6846
  %v6848 = vpop.f32.mrf.mxu0
  %v6849 = vadd.f32 %v6326, %v6848
  %v6850 = vpop.f32.mrf.mxu0
  %v6851 = vadd.f32 %v6328, %v6850
  %6852 = vmatprep.mubr.bf16.mxu0 %v3464
  %6853 = vmatmul.mubr.bf16.gmra.mxu0 %v3463
  %v6854 = vpop.f32.mrf.mxu0
  %v6855 = vadd.f32 %v6332, %v6854
  %v6856 = vpop.f32.mrf.mxu0
  %v6857 = vadd.f32 %v6334, %v6856
  %v6858 = vpop.f32.mrf.mxu0
  %v6859 = vadd.f32 %v6336, %v6858
  %v6860 = vpop.f32.mrf.mxu0
  %v6861 = vadd.f32 %v6338, %v6860
  %6862 = vmatprep.mubr.bf16.mxu0 %v3480
  %6863 = vmatmul.mubr.bf16.gmra.mxu0 %v3479
  %v6864 = vpop.f32.mrf.mxu0
  %v6865 = vadd.f32 %v6342, %v6864
  %v6866 = vpop.f32.mrf.mxu0
  %v6867 = vadd.f32 %v6344, %v6866
  %v6868 = vpop.f32.mrf.mxu0
  %v6869 = vadd.f32 %v6346, %v6868
  %v6870 = vpop.f32.mrf.mxu0
  %v6871 = vadd.f32 %v6348, %v6870
  %6872 = vmatprep.mubr.bf16.mxu0 %v3496
  %6873 = vmatmul.mubr.bf16.gmra.mxu0 %v3495
  %v6874 = vpop.f32.mrf.mxu0
  %v6875 = vadd.f32 %v6352, %v6874
  %v6876 = vpop.f32.mrf.mxu0
  %v6877 = vadd.f32 %v6354, %v6876
  %v6878 = vpop.f32.mrf.mxu0
  %v6879 = vadd.f32 %v6356, %v6878
  %v6880 = vpop.f32.mrf.mxu0
  %v6881 = vadd.f32 %v6358, %v6880
  %6882 = vmatprep.mubr.bf16.mxu0 %v3512
  %6883 = vmatmul.mubr.bf16.gmra.mxu0 %v3511
  %v6884 = vpop.f32.mrf.mxu0
  %v6885 = vadd.f32 %v6362, %v6884
  %v6886 = vpop.f32.mrf.mxu0
  %v6887 = vadd.f32 %v6364, %v6886
  %v6888 = vpop.f32.mrf.mxu0
  %v6889 = vadd.f32 %v6366, %v6888
  %v6890 = vpop.f32.mrf.mxu0
  %v6891 = vadd.f32 %v6368, %v6890
  %6892 = vmatprep.mubr.bf16.mxu0 %v3528
  %6893 = vmatmul.mubr.bf16.gmra.mxu0 %v3527
  %v6894 = vpop.f32.mrf.mxu0
  %v6895 = vadd.f32 %v6372, %v6894
  %v6896 = vpop.f32.mrf.mxu0
  %v6897 = vadd.f32 %v6374, %v6896
  %v6898 = vpop.f32.mrf.mxu0
  %v6899 = vadd.f32 %v6376, %v6898
  %v6900 = vpop.f32.mrf.mxu0
  %v6901 = vadd.f32 %v6378, %v6900
  %6902 = vmatprep.mubr.bf16.mxu0 %v3544
  %6903 = vmatmul.mubr.bf16.gmra.mxu0 %v3543
  %v6904 = vpop.f32.mrf.mxu0
  %v6905 = vadd.f32 %v6382, %v6904
  %v6906 = vpop.f32.mrf.mxu0
  %v6907 = vadd.f32 %v6384, %v6906
  %v6908 = vpop.f32.mrf.mxu0
  %v6909 = vadd.f32 %v6386, %v6908
  %v6910 = vpop.f32.mrf.mxu0
  %v6911 = vadd.f32 %v6388, %v6910
  %6912 = vmatprep.mubr.bf16.mxu0 %v3560
  %6913 = vmatmul.mubr.bf16.gmra.mxu0 %v3559
  %v6914 = vpop.f32.mrf.mxu0
  %v6915 = vadd.f32 %v6392, %v6914
  %v6916 = vpop.f32.mrf.mxu0
  %v6917 = vadd.f32 %v6394, %v6916
  %v6918 = vpop.f32.mrf.mxu0
  %v6919 = vadd.f32 %v6396, %v6918
  %v6920 = vpop.f32.mrf.mxu0
  %v6921 = vadd.f32 %v6398, %v6920
  %6922 = vmatprep.mubr.bf16.mxu0 %v3576
  %6923 = vmatmul.mubr.bf16.gmra.mxu0 %v3575
  %v6924 = vpop.f32.mrf.mxu0
  %v6925 = vadd.f32 %v6402, %v6924
  %v6926 = vpop.f32.mrf.mxu0
  %v6927 = vadd.f32 %v6404, %v6926
  %v6928 = vpop.f32.mrf.mxu0
  %v6929 = vadd.f32 %v6406, %v6928
  %v6930 = vpop.f32.mrf.mxu0
  %v6931 = vadd.f32 %v6408, %v6930
  %6932 = vmatprep.mubr.bf16.mxu0 %v3592
  %6933 = vmatmul.mubr.bf16.gmra.mxu0 %v3591
  %v6934 = vpop.f32.mrf.mxu0
  %v6935 = vadd.f32 %v6412, %v6934
  %v6936 = vpop.f32.mrf.mxu0
  %v6937 = vadd.f32 %v6414, %v6936
  %v6938 = vpop.f32.mrf.mxu0
  %v6939 = vadd.f32 %v6416, %v6938
  %v6940 = vpop.f32.mrf.mxu0
  %v6941 = vadd.f32 %v6418, %v6940
  %6942 = vmatprep.mubr.bf16.mxu0 %v3608
  %6943 = vmatmul.mubr.bf16.gmra.mxu0 %v3607
  %v6944 = vpop.f32.mrf.mxu0
  %v6945 = vadd.f32 %v6422, %v6944
  %v6946 = vpop.f32.mrf.mxu0
  %v6947 = vadd.f32 %v6424, %v6946
  %v6948 = vpop.f32.mrf.mxu0
  %v6949 = vadd.f32 %v6426, %v6948
  %v6950 = vpop.f32.mrf.mxu0
  %v6951 = vadd.f32 %v6428, %v6950
  %6952 = vmatprep.mubr.bf16.mxu0 %v3624
  %6953 = vmatmul.mubr.bf16.gmra.mxu0 %v3623
  %v6954 = vpop.f32.mrf.mxu0
  %v6955 = vadd.f32 %v6432, %v6954
  %v6956 = vpop.f32.mrf.mxu0
  %v6957 = vadd.f32 %v6434, %v6956
  %v6958 = vpop.f32.mrf.mxu0
  %v6959 = vadd.f32 %v6436, %v6958
  %v6960 = vpop.f32.mrf.mxu0
  %v6961 = vadd.f32 %v6438, %v6960
  %6962 = vmatprep.mubr.bf16.mxu0 %v3640
  %6963 = vmatmul.mubr.bf16.gmra.mxu0 %v3639
  %v6964 = vpop.f32.mrf.mxu0
  %v6965 = vadd.f32 %v6442, %v6964
  %v6966 = vpop.f32.mrf.mxu0
  %v6967 = vadd.f32 %v6444, %v6966
  %v6968 = vpop.f32.mrf.mxu0
  %v6969 = vadd.f32 %v6446, %v6968
  %v6970 = vpop.f32.mrf.mxu0
  %v6971 = vadd.f32 %v6448, %v6970
  %6972 = vmatprep.mubr.bf16.mxu0 %v3656
  %6973 = vmatmul.mubr.bf16.gmra.mxu0 %v3655
  %v6974 = vpop.f32.mrf.mxu0
  %v6975 = vadd.f32 %v6452, %v6974
  %v6976 = vpop.f32.mrf.mxu0
  %v6977 = vadd.f32 %v6454, %v6976
  %v6978 = vpop.f32.mrf.mxu0
  %v6979 = vadd.f32 %v6456, %v6978
  %v6980 = vpop.f32.mrf.mxu0
  %v6981 = vadd.f32 %v6458, %v6980
  %6982 = vmatprep.mubr.bf16.mxu0 %v3672
  %6983 = vmatmul.mubr.bf16.gmra.mxu0 %v3671
  %v6984 = vpop.f32.mrf.mxu0
  %v6985 = vadd.f32 %v6462, %v6984
  %v6986 = vpop.f32.mrf.mxu0
  %v6987 = vadd.f32 %v6464, %v6986
  %v6988 = vpop.f32.mrf.mxu0
  %v6989 = vadd.f32 %v6466, %v6988
  %v6990 = vpop.f32.mrf.mxu0
  %v6991 = vadd.f32 %v6468, %v6990
  %6992 = vmatprep.mubr.bf16.mxu0 %v3688
  %6993 = vmatmul.mubr.bf16.gmra.mxu0 %v3687
  %v6994 = vpop.f32.mrf.mxu0
  %v6995 = vadd.f32 %v6472, %v6994
  %v6996 = vpop.f32.mrf.mxu0
  %v6997 = vadd.f32 %v6474, %v6996
  %v6998 = vpop.f32.mrf.mxu0
  %v6999 = vadd.f32 %v6476, %v6998
  %v7000 = vpop.f32.mrf.mxu0
  %v7001 = vadd.f32 %v6478, %v7000
  %7002 = vmatprep.mubr.bf16.mxu0 %v3704
  %7003 = vmatmul.mubr.bf16.gmra.mxu0 %v3703
  %v7004 = vpop.f32.mrf.mxu0
  %v7005 = vadd.f32 %v6482, %v7004
  %v7006 = vpop.f32.mrf.mxu0
  %v7007 = vadd.f32 %v6484, %v7006
  %v7008 = vpop.f32.mrf.mxu0
  %v7009 = vadd.f32 %v6486, %v7008
  %v7010 = vpop.f32.mrf.mxu0
  %v7011 = vadd.f32 %v6488, %v7010
  %7012 = vmatprep.mubr.bf16.mxu0 %v3720
  %7013 = vmatmul.mubr.bf16.gmra.mxu0 %v3719
  %v7014 = vpop.f32.mrf.mxu0
  %v7015 = vadd.f32 %v6492, %v7014
  %v7016 = vpop.f32.mrf.mxu0
  %v7017 = vadd.f32 %v6494, %v7016
  %v7018 = vpop.f32.mrf.mxu0
  %v7019 = vadd.f32 %v6496, %v7018
  %v7020 = vpop.f32.mrf.mxu0
  %v7021 = vadd.f32 %v6498, %v7020
  %7022 = vmatprep.mubr.bf16.mxu0 %v3736
  %7023 = vmatmul.mubr.bf16.gmra.mxu0 %v3735
  %v7024 = vpop.f32.mrf.mxu0
  %v7025 = vadd.f32 %v6502, %v7024
  %v7026 = vpop.f32.mrf.mxu0
  %v7027 = vadd.f32 %v6504, %v7026
  %v7028 = vpop.f32.mrf.mxu0
  %v7029 = vadd.f32 %v6506, %v7028
  %v7030 = vpop.f32.mrf.mxu0
  %v7031 = vadd.f32 %v6508, %v7030
  %7032 = vmatprep.mubr.bf16.mxu0 %v3752
  %7033 = vmatmul.mubr.bf16.gmra.mxu0 %v3751
  %v7034 = vpop.f32.mrf.mxu0
  %v7035 = vadd.f32 %v6512, %v7034
  %v7036 = vpop.f32.mrf.mxu0
  %v7037 = vadd.f32 %v6514, %v7036
  %v7038 = vpop.f32.mrf.mxu0
  %v7039 = vadd.f32 %v6516, %v7038
  %v7040 = vpop.f32.mrf.mxu0
  %v7041 = vadd.f32 %v6518, %v7040
  %7042 = vmatprep.mubr.bf16.mxu0 %v3768
  %7043 = vmatmul.mubr.bf16.gmra.mxu0 %v3767
  %v7044 = vpop.f32.mrf.mxu0
  %v7045 = vadd.f32 %v6522, %v7044
  %v7046 = vpop.f32.mrf.mxu0
  %v7047 = vadd.f32 %v6524, %v7046
  %v7048 = vpop.f32.mrf.mxu0
  %v7049 = vadd.f32 %v6526, %v7048
  %v7050 = vpop.f32.mrf.mxu0
  %v7051 = vadd.f32 %v6528, %v7050
  %7052 = vmatprep.mubr.bf16.mxu0 %v3784
  %7053 = vmatmul.mubr.bf16.gmra.mxu0 %v3783
  %v7054 = vpop.f32.mrf.mxu0
  %v7055 = vadd.f32 %v6532, %v7054
  %v7056 = vpop.f32.mrf.mxu0
  %v7057 = vadd.f32 %v6534, %v7056
  %v7058 = vpop.f32.mrf.mxu0
  %v7059 = vadd.f32 %v6536, %v7058
  %v7060 = vpop.f32.mrf.mxu0
  %v7061 = vadd.f32 %v6538, %v7060
  %7062 = vmatprep.mubr.bf16.mxu0 %v3800
  %7063 = vmatmul.mubr.bf16.gmra.mxu0 %v3799
  %v7064 = vpop.f32.mrf.mxu0
  %v7065 = vadd.f32 %v6542, %v7064
  %v7066 = vpop.f32.mrf.mxu0
  %v7067 = vadd.f32 %v6544, %v7066
  %v7068 = vpop.f32.mrf.mxu0
  %v7069 = vadd.f32 %v6546, %v7068
  %v7070 = vpop.f32.mrf.mxu0
  %v7071 = vadd.f32 %v6548, %v7070
  %7072 = vmatprep.mubr.bf16.mxu0 %v3816
  %7073 = vmatmul.mubr.bf16.gmra.mxu0 %v3815
  %v7074 = vpop.f32.mrf.mxu0
  %v7075 = vadd.f32 %v6552, %v7074
  %v7076 = vpop.f32.mrf.mxu0
  %v7077 = vadd.f32 %v6554, %v7076
  %v7078 = vpop.f32.mrf.mxu0
  %v7079 = vadd.f32 %v6556, %v7078
  %v7080 = vpop.f32.mrf.mxu0
  %v7081 = vadd.f32 %v6558, %v7080
  %7082 = vmatprep.mubr.bf16.mxu0 %v3832
  %7083 = vmatmul.mubr.bf16.gmra.mxu0 %v3831
  %v7084 = vpop.f32.mrf.mxu0
  %v7085 = vadd.f32 %v6562, %v7084
  %v7086 = vpop.f32.mrf.mxu0
  %v7087 = vadd.f32 %v6564, %v7086
  %v7088 = vpop.f32.mrf.mxu0
  %v7089 = vadd.f32 %v6566, %v7088
  %v7090 = vpop.f32.mrf.mxu0
  %v7091 = vadd.f32 %v6568, %v7090
  %7092 = vmatprep.mubr.bf16.mxu0 %v3848
  %7093 = vmatmul.mubr.bf16.gmra.mxu0 %v3847
  %v7094 = vpop.f32.mrf.mxu0
  %v7095 = vadd.f32 %v6572, %v7094
  %v7096 = vpop.f32.mrf.mxu0
  %v7097 = vadd.f32 %v6574, %v7096
  %v7098 = vpop.f32.mrf.mxu0
  %v7099 = vadd.f32 %v6576, %v7098
  %v7100 = vpop.f32.mrf.mxu0
  %v7101 = vadd.f32 %v6578, %v7100
  %7102 = vmatprep.mubr.bf16.mxu0 %v3864
  %7103 = vmatmul.mubr.bf16.gmra.mxu0 %v3863
  %v7104 = vpop.f32.mrf.mxu0
  %v7105 = vadd.f32 %v6582, %v7104
  %v7106 = vpop.f32.mrf.mxu0
  %v7107 = vadd.f32 %v6584, %v7106
  %v7108 = vpop.f32.mrf.mxu0
  %v7109 = vadd.f32 %v6586, %v7108
  %v7110 = vpop.f32.mrf.mxu0
  %v7111 = vadd.f32 %v6588, %v7110
  %7112 = vmatprep.mubr.bf16.mxu0 %v3880
  %7113 = vmatmul.mubr.bf16.gmra.mxu0 %v3879
  %v7114 = vpop.f32.mrf.mxu0
  %v7115 = vadd.f32 %v6592, %v7114
  %v7116 = vpop.f32.mrf.mxu0
  %v7117 = vadd.f32 %v6594, %v7116
  %v7118 = vpop.f32.mrf.mxu0
  %v7119 = vadd.f32 %v6596, %v7118
  %v7120 = vpop.f32.mrf.mxu0
  %v7121 = vadd.f32 %v6598, %v7120
  %7122 = vmatprep.mubr.bf16.mxu0 %v3896
  %7123 = vmatmul.mubr.bf16.gmra.mxu0 %v3895
  %v7124 = vpop.f32.mrf.mxu0
  %v7125 = vadd.f32 %v6602, %v7124
  %v7126 = vpop.f32.mrf.mxu0
  %v7127 = vadd.f32 %v6604, %v7126
  %v7128 = vpop.f32.mrf.mxu0
  %v7129 = vadd.f32 %v6606, %v7128
  %v7130 = vpop.f32.mrf.mxu0
  %v7131 = vadd.f32 %v6608, %v7130
  %7132 = vmatprep.mubr.bf16.mxu0 %v3912
  %7133 = vmatmul.mubr.bf16.gmra.mxu0 %v3911
  %v7134 = vpop.f32.mrf.mxu0
  %v7135 = vadd.f32 %v6612, %v7134
  %v7136 = vpop.f32.mrf.mxu0
  %v7137 = vadd.f32 %v6614, %v7136
  %v7138 = vpop.f32.mrf.mxu0
  %v7139 = vadd.f32 %v6616, %v7138
  %v7140 = vpop.f32.mrf.mxu0
  %v7141 = vadd.f32 %v6618, %v7140
  %7142 = vmatprep.mubr.bf16.mxu0 %v3928
  %7143 = vmatmul.mubr.bf16.gmra.mxu0 %v3927
  %v7144 = vpop.f32.mrf.mxu0
  %v7145 = vadd.f32 %v6622, %v7144
  %v7146 = vpop.f32.mrf.mxu0
  %v7147 = vadd.f32 %v6624, %v7146
  %v7148 = vpop.f32.mrf.mxu0
  %v7149 = vadd.f32 %v6626, %v7148
  %v7150 = vpop.f32.mrf.mxu0
  %v7151 = vadd.f32 %v6628, %v7150
  %7152 = vmatprep.mubr.bf16.mxu0 %v3944
  %7153 = vmatmul.mubr.bf16.gmra.mxu0 %v3943
  %v7154 = vpop.f32.mrf.mxu0
  %v7155 = vadd.f32 %v6632, %v7154
  %v7156 = vpop.f32.mrf.mxu0
  %v7157 = vadd.f32 %v6634, %v7156
  %v7158 = vpop.f32.mrf.mxu0
  %v7159 = vadd.f32 %v6636, %v7158
  %v7160 = vpop.f32.mrf.mxu0
  %v7161 = vadd.f32 %v6638, %v7160
  %7162 = vmatprep.mubr.bf16.mxu0 %v3960
  %7163 = vmatmul.mubr.bf16.gmra.mxu0 %v3959
  %v7164 = vpop.f32.mrf.mxu0
  %v7165 = vadd.f32 %v6642, %v7164
  %v7166 = vpop.f32.mrf.mxu0
  %v7167 = vadd.f32 %v6644, %v7166
  %v7168 = vpop.f32.mrf.mxu0
  %v7169 = vadd.f32 %v6646, %v7168
  %v7170 = vpop.f32.mrf.mxu0
  %v7171 = vadd.f32 %v6648, %v7170
  %7172 = vmatprep.mubr.bf16.mxu0 %v3976
  %7173 = vmatmul.mubr.bf16.gmra.mxu0 %v3975
  %v7174 = vpop.f32.mrf.mxu0
  %v7175 = vadd.f32 %v6652, %v7174
  %v7176 = vpop.f32.mrf.mxu0
  %v7177 = vadd.f32 %v6654, %v7176
  %v7178 = vpop.f32.mrf.mxu0
  %v7179 = vadd.f32 %v6656, %v7178
  %v7180 = vpop.f32.mrf.mxu0
  %v7181 = vadd.f32 %v6658, %v7180
  %7182 = vmatprep.mubr.bf16.mxu0 %v3992
  %7183 = vmatmul.mubr.bf16.gmra.mxu0 %v3991
  %v7184 = vpop.f32.mrf.mxu0
  %v7185 = vadd.f32 %v6662, %v7184
  %v7186 = vpop.f32.mrf.mxu0
  %v7187 = vadd.f32 %v6664, %v7186
  %v7188 = vpop.f32.mrf.mxu0
  %v7189 = vadd.f32 %v6666, %v7188
  %v7190 = vpop.f32.mrf.mxu0
  %v7191 = vadd.f32 %v6668, %v7190
  %7192 = vmatprep.mubr.bf16.mxu0 %v4008
  %7193 = vmatmul.mubr.bf16.gmra.mxu0 %v4007
  %v7194 = vpop.f32.mrf.mxu0
  %v7195 = vadd.f32 %v6672, %v7194
  %v7196 = vpop.f32.mrf.mxu0
  %v7197 = vadd.f32 %v6674, %v7196
  %v7198 = vpop.f32.mrf.mxu0
  %v7199 = vadd.f32 %v6676, %v7198
  %v7200 = vpop.f32.mrf.mxu0
  %v7201 = vadd.f32 %v6678, %v7200
  %7202 = vmatprep.mubr.bf16.mxu0 %v4024
  %7203 = vmatmul.mubr.bf16.gmra.mxu0 %v4023
  %v7204 = vpop.f32.mrf.mxu0
  %v7205 = vadd.f32 %v6682, %v7204
  %v7206 = vpop.f32.mrf.mxu0
  %v7207 = vadd.f32 %v6684, %v7206
  %v7208 = vpop.f32.mrf.mxu0
  %v7209 = vadd.f32 %v6686, %v7208
  %v7210 = vpop.f32.mrf.mxu0
  %v7211 = vadd.f32 %v6688, %v7210
  %7212 = vmatprep.mubr.bf16.mxu0 %v4040
  %7213 = vmatmul.mubr.bf16.gmra.mxu0 %v4039
  %v7214 = vpop.f32.mrf.mxu0
  %v7215 = vadd.f32 %v6692, %v7214
  %v7216 = vpop.f32.mrf.mxu0
  %v7217 = vadd.f32 %v6694, %v7216
  %v7218 = vpop.f32.mrf.mxu0
  %v7219 = vadd.f32 %v6696, %v7218
  %v7220 = vpop.f32.mrf.mxu0
  %v7221 = vadd.f32 %v6698, %v7220
  %7222 = vmatprep.mubr.bf16.mxu0 %v4056
  %7223 = vmatmul.mubr.bf16.gmra.mxu0 %v4055
  %v7224 = vpop.f32.mrf.mxu0
  %v7225 = vadd.f32 %v6702, %v7224
  %v7226 = vpop.f32.mrf.mxu0
  %v7227 = vadd.f32 %v6704, %v7226
  %v7228 = vpop.f32.mrf.mxu0
  %v7229 = vadd.f32 %v6706, %v7228
  %v7230 = vpop.f32.mrf.mxu0
  %v7231 = vadd.f32 %v6708, %v7230
  %7232 = vmatprep.mubr.bf16.mxu0 %v4072
  %7233 = vmatmul.mubr.bf16.gmra.mxu0 %v4071
  %v7234 = vpop.f32.mrf.mxu0
  %v7235 = vadd.f32 %v6712, %v7234
  %v7236 = vpop.f32.mrf.mxu0
  %v7237 = vadd.f32 %v6714, %v7236
  %v7238 = vpop.f32.mrf.mxu0
  %v7239 = vadd.f32 %v6716, %v7238
  %v7240 = vpop.f32.mrf.mxu0
  %v7241 = vadd.f32 %v6718, %v7240
  %7242 = vmatprep.mubr.bf16.mxu0 %v4088
  %7243 = vmatmul.mubr.bf16.gmra.mxu0 %v4087
  %v7244 = vpop.f32.mrf.mxu0
  %v7245 = vadd.f32 %v6722, %v7244
  %v7246 = vpop.f32.mrf.mxu0
  %v7247 = vadd.f32 %v6724, %v7246
  %v7248 = vpop.f32.mrf.mxu0
  %v7249 = vadd.f32 %v6726, %v7248
  %v7250 = vpop.f32.mrf.mxu0
  %v7251 = vadd.f32 %v6728, %v7250
  %7252 = vmatprep.mubr.bf16.mxu0 %v4104
  %7253 = vmatmul.mubr.bf16.gmra.mxu0 %v4103
  %v7254 = vpop.f32.mrf.mxu0
  %v7255 = vadd.f32 %v6732, %v7254
  %v7256 = vpop.f32.mrf.mxu0
  %v7257 = vadd.f32 %v6734, %v7256
  %v7258 = vpop.f32.mrf.mxu0
  %v7259 = vadd.f32 %v6736, %v7258
  %v7260 = vpop.f32.mrf.mxu0
  %v7261 = vadd.f32 %v6738, %v7260
  %7262 = vmatprep.mubr.bf16.mxu0 %v4120
  %7263 = vmatmul.mubr.bf16.gmra.mxu0 %v4119
  %v7264 = vpop.f32.mrf.mxu0
  %v7265 = vadd.f32 %v6742, %v7264
  %v7266 = vpop.f32.mrf.mxu0
  %v7267 = vadd.f32 %v6744, %v7266
  %v7268 = vpop.f32.mrf.mxu0
  %v7269 = vadd.f32 %v6746, %v7268
  %v7270 = vpop.f32.mrf.mxu0
  %v7271 = vadd.f32 %v6748, %v7270
  %7272 = vmatprep.mubr.bf16.mxu0 %v4136
  %7273 = vmatmul.mubr.bf16.gmra.mxu0 %v4135
  %v7274 = vpop.f32.mrf.mxu0
  %v7275 = vadd.f32 %v6752, %v7274
  %v7276 = vpop.f32.mrf.mxu0
  %v7277 = vadd.f32 %v6754, %v7276
  %v7278 = vpop.f32.mrf.mxu0
  %v7279 = vadd.f32 %v6756, %v7278
  %v7280 = vpop.f32.mrf.mxu0
  %v7281 = vadd.f32 %v6758, %v7280
  %7282 = vmatprep.mubr.bf16.mxu0 %v4152
  %7283 = vmatmul.mubr.bf16.gmra.mxu0 %v4151
  %v7284 = vpop.f32.mrf.mxu0
  %v7285 = vadd.f32 %v6762, %v7284
  %v7286 = vpop.f32.mrf.mxu0
  %v7287 = vadd.f32 %v6764, %v7286
  %v7288 = vpop.f32.mrf.mxu0
  %v7289 = vadd.f32 %v6766, %v7288
  %v7290 = vpop.f32.mrf.mxu0
  %v7291 = vadd.f32 %v6768, %v7290
  %7292 = vmatprep.mubr.bf16.mxu0 %v4168
  %7293 = vmatmul.mubr.bf16.gmra.mxu0 %v4167
  %v7294 = vpop.f32.mrf.mxu0
  %v7295 = vadd.f32 %v6772, %v7294
  %v7296 = vpop.f32.mrf.mxu0
  %v7297 = vadd.f32 %v6774, %v7296
  %v7298 = vpop.f32.mrf.mxu0
  %v7299 = vadd.f32 %v6776, %v7298
  %v7300 = vpop.f32.mrf.mxu0
  %v7301 = vadd.f32 %v6778, %v7300
  %7302 = vmatprep.mubr.bf16.mxu0 %v4184
  %7303 = vmatmul.mubr.bf16.gmra.mxu0 %v4183
  %v7304 = vpop.f32.mrf.mxu0
  %v7305 = vadd.f32 %v6782, %v7304
  %v7306 = vpop.f32.mrf.mxu0
  %v7307 = vadd.f32 %v6784, %v7306
  %v7308 = vpop.f32.mrf.mxu0
  %v7309 = vadd.f32 %v6786, %v7308
  %v7310 = vpop.f32.mrf.mxu0
  %v7311 = vadd.f32 %v6788, %v7310
  %7312 = vmatprep.mubr.bf16.mxu0 %v4200
  %7313 = vmatmul.mubr.bf16.gmra.mxu0 %v4199
  %v7314 = vpop.f32.mrf.mxu0
  %v7315 = vadd.f32 %v6792, %v7314
  %v7316 = vpop.f32.mrf.mxu0
  %v7317 = vadd.f32 %v6794, %v7316
  %v7318 = vpop.f32.mrf.mxu0
  %v7319 = vadd.f32 %v6796, %v7318
  %v7320 = vpop.f32.mrf.mxu0
  %v7321 = vadd.f32 %v6798, %v7320
  %7322 = vdwg.mxu0
  %7323 = vmatprep.subr.bf16.mxu0 %v5844
  %7324 = vmatpush1.bf16.msra.mxu0 %v5843
  %7325 = vmatprep.subr.bf16.mxu0 %v5842
  %7326 = vmatpush1.bf16.msra.mxu0 %v5841
  %7327 = vmatprep.subr.bf16.mxu0 %v5840
  %7328 = vmatpush1.bf16.msra.mxu0 %v5839
  %7329 = vmatprep.subr.bf16.mxu0 %v5838
  %7330 = vmatpush1.bf16.msra.mxu0 %v5837
  %7331 = vmatprep.subr.bf16.mxu0 %v5836
  %7332 = vmatpush1.bf16.msra.mxu0 %v5835
  %7333 = vmatprep.subr.bf16.mxu0 %v5834
  %7334 = vmatpush1.bf16.msra.mxu0 %v5833
  %7335 = vmatprep.subr.bf16.mxu0 %v5832
  %7336 = vmatpush1.bf16.msra.mxu0 %v5831
  %7337 = vmatprep.subr.bf16.mxu0 %v5830
  %7338 = vmatpush1.bf16.msra.mxu0 %v5829
  %7339 = vmatprep.subr.bf16.mxu0 %v5860
  %7340 = vmatpush2.bf16.msra.mxu0 %v5859
  %7341 = vmatprep.subr.bf16.mxu0 %v5858
  %7342 = vmatpush2.bf16.msra.mxu0 %v5857
  %7343 = vmatprep.subr.bf16.mxu0 %v5856
  %7344 = vmatpush2.bf16.msra.mxu0 %v5855
  %7345 = vmatprep.subr.bf16.mxu0 %v5854
  %7346 = vmatpush2.bf16.msra.mxu0 %v5853
  %7347 = vmatprep.subr.bf16.mxu0 %v5852
  %7348 = vmatpush2.bf16.msra.mxu0 %v5851
  %7349 = vmatprep.subr.bf16.mxu0 %v5850
  %7350 = vmatpush2.bf16.msra.mxu0 %v5849
  %7351 = vmatprep.subr.bf16.mxu0 %v5848
  %7352 = vmatpush2.bf16.msra.mxu0 %v5847
  %7353 = vmatprep.subr.bf16.mxu0 %v5846
  %7354 = vmatpush2.bf16.msra.mxu0 %v5845
  %7355 = vmatprep.mubr.bf16.mxu0 %v3434
  %7356 = vmatmul.mubr.bf16.gmra.mxu0 %v3433
  %v7357 = vpop.f32.mrf.mxu0
  %v7358 = vadd.f32 %v6835, %v7357
  %v7359 = vpop.f32.mrf.mxu0
  %v7360 = vadd.f32 %v6837, %v7359
  %v7361 = vpop.f32.mrf.mxu0
  %v7362 = vadd.f32 %v6839, %v7361
  %v7363 = vpop.f32.mrf.mxu0
  %v7364 = vadd.f32 %v6841, %v7363
  %7365 = vmatprep.mubr.bf16.mxu0 %v3450
  %7366 = vmatmul.mubr.bf16.gmra.mxu0 %v3449
  %v7367 = vpop.f32.mrf.mxu0
  %v7368 = vadd.f32 %v6845, %v7367
  %v7369 = vpop.f32.mrf.mxu0
  %v7370 = vadd.f32 %v6847, %v7369
  %v7371 = vpop.f32.mrf.mxu0
  %v7372 = vadd.f32 %v6849, %v7371
  %v7373 = vpop.f32.mrf.mxu0
  %v7374 = vadd.f32 %v6851, %v7373
  %7375 = vmatprep.mubr.bf16.mxu0 %v3466
  %7376 = vmatmul.mubr.bf16.gmra.mxu0 %v3465
  %v7377 = vpop.f32.mrf.mxu0
  %v7378 = vadd.f32 %v6855, %v7377
  %v7379 = vpop.f32.mrf.mxu0
  %v7380 = vadd.f32 %v6857, %v7379
  %v7381 = vpop.f32.mrf.mxu0
  %v7382 = vadd.f32 %v6859, %v7381
  %v7383 = vpop.f32.mrf.mxu0
  %v7384 = vadd.f32 %v6861, %v7383
  %7385 = vmatprep.mubr.bf16.mxu0 %v3482
  %7386 = vmatmul.mubr.bf16.gmra.mxu0 %v3481
  %v7387 = vpop.f32.mrf.mxu0
  %v7388 = vadd.f32 %v6865, %v7387
  %v7389 = vpop.f32.mrf.mxu0
  %v7390 = vadd.f32 %v6867, %v7389
  %v7391 = vpop.f32.mrf.mxu0
  %v7392 = vadd.f32 %v6869, %v7391
  %v7393 = vpop.f32.mrf.mxu0
  %v7394 = vadd.f32 %v6871, %v7393
  %7395 = vmatprep.mubr.bf16.mxu0 %v3498
  %7396 = vmatmul.mubr.bf16.gmra.mxu0 %v3497
  %v7397 = vpop.f32.mrf.mxu0
  %v7398 = vadd.f32 %v6875, %v7397
  %v7399 = vpop.f32.mrf.mxu0
  %v7400 = vadd.f32 %v6877, %v7399
  %v7401 = vpop.f32.mrf.mxu0
  %v7402 = vadd.f32 %v6879, %v7401
  %v7403 = vpop.f32.mrf.mxu0
  %v7404 = vadd.f32 %v6881, %v7403
  %7405 = vmatprep.mubr.bf16.mxu0 %v3514
  %7406 = vmatmul.mubr.bf16.gmra.mxu0 %v3513
  %v7407 = vpop.f32.mrf.mxu0
  %v7408 = vadd.f32 %v6885, %v7407
  %v7409 = vpop.f32.mrf.mxu0
  %v7410 = vadd.f32 %v6887, %v7409
  %v7411 = vpop.f32.mrf.mxu0
  %v7412 = vadd.f32 %v6889, %v7411
  %v7413 = vpop.f32.mrf.mxu0
  %v7414 = vadd.f32 %v6891, %v7413
  %7415 = vmatprep.mubr.bf16.mxu0 %v3530
  %7416 = vmatmul.mubr.bf16.gmra.mxu0 %v3529
  %v7417 = vpop.f32.mrf.mxu0
  %v7418 = vadd.f32 %v6895, %v7417
  %v7419 = vpop.f32.mrf.mxu0
  %v7420 = vadd.f32 %v6897, %v7419
  %v7421 = vpop.f32.mrf.mxu0
  %v7422 = vadd.f32 %v6899, %v7421
  %v7423 = vpop.f32.mrf.mxu0
  %v7424 = vadd.f32 %v6901, %v7423
  %7425 = vmatprep.mubr.bf16.mxu0 %v3546
  %7426 = vmatmul.mubr.bf16.gmra.mxu0 %v3545
  %v7427 = vpop.f32.mrf.mxu0
  %v7428 = vadd.f32 %v6905, %v7427
  %v7429 = vpop.f32.mrf.mxu0
  %v7430 = vadd.f32 %v6907, %v7429
  %v7431 = vpop.f32.mrf.mxu0
  %v7432 = vadd.f32 %v6909, %v7431
  %v7433 = vpop.f32.mrf.mxu0
  %v7434 = vadd.f32 %v6911, %v7433
  %7435 = vmatprep.mubr.bf16.mxu0 %v3562
  %7436 = vmatmul.mubr.bf16.gmra.mxu0 %v3561
  %v7437 = vpop.f32.mrf.mxu0
  %v7438 = vadd.f32 %v6915, %v7437
  %v7439 = vpop.f32.mrf.mxu0
  %v7440 = vadd.f32 %v6917, %v7439
  %v7441 = vpop.f32.mrf.mxu0
  %v7442 = vadd.f32 %v6919, %v7441
  %v7443 = vpop.f32.mrf.mxu0
  %v7444 = vadd.f32 %v6921, %v7443
  %7445 = vmatprep.mubr.bf16.mxu0 %v3578
  %7446 = vmatmul.mubr.bf16.gmra.mxu0 %v3577
  %v7447 = vpop.f32.mrf.mxu0
  %v7448 = vadd.f32 %v6925, %v7447
  %v7449 = vpop.f32.mrf.mxu0
  %v7450 = vadd.f32 %v6927, %v7449
  %v7451 = vpop.f32.mrf.mxu0
  %v7452 = vadd.f32 %v6929, %v7451
  %v7453 = vpop.f32.mrf.mxu0
  %v7454 = vadd.f32 %v6931, %v7453
  %7455 = vmatprep.mubr.bf16.mxu0 %v3594
  %7456 = vmatmul.mubr.bf16.gmra.mxu0 %v3593
  %v7457 = vpop.f32.mrf.mxu0
  %v7458 = vadd.f32 %v6935, %v7457
  %v7459 = vpop.f32.mrf.mxu0
  %v7460 = vadd.f32 %v6937, %v7459
  %v7461 = vpop.f32.mrf.mxu0
  %v7462 = vadd.f32 %v6939, %v7461
  %v7463 = vpop.f32.mrf.mxu0
  %v7464 = vadd.f32 %v6941, %v7463
  %7465 = vmatprep.mubr.bf16.mxu0 %v3610
  %7466 = vmatmul.mubr.bf16.gmra.mxu0 %v3609
  %v7467 = vpop.f32.mrf.mxu0
  %v7468 = vadd.f32 %v6945, %v7467
  %v7469 = vpop.f32.mrf.mxu0
  %v7470 = vadd.f32 %v6947, %v7469
  %v7471 = vpop.f32.mrf.mxu0
  %v7472 = vadd.f32 %v6949, %v7471
  %v7473 = vpop.f32.mrf.mxu0
  %v7474 = vadd.f32 %v6951, %v7473
  %7475 = vmatprep.mubr.bf16.mxu0 %v3626
  %7476 = vmatmul.mubr.bf16.gmra.mxu0 %v3625
  %v7477 = vpop.f32.mrf.mxu0
  %v7478 = vadd.f32 %v6955, %v7477
  %v7479 = vpop.f32.mrf.mxu0
  %v7480 = vadd.f32 %v6957, %v7479
  %v7481 = vpop.f32.mrf.mxu0
  %v7482 = vadd.f32 %v6959, %v7481
  %v7483 = vpop.f32.mrf.mxu0
  %v7484 = vadd.f32 %v6961, %v7483
  %7485 = vmatprep.mubr.bf16.mxu0 %v3642
  %7486 = vmatmul.mubr.bf16.gmra.mxu0 %v3641
  %v7487 = vpop.f32.mrf.mxu0
  %v7488 = vadd.f32 %v6965, %v7487
  %v7489 = vpop.f32.mrf.mxu0
  %v7490 = vadd.f32 %v6967, %v7489
  %v7491 = vpop.f32.mrf.mxu0
  %v7492 = vadd.f32 %v6969, %v7491
  %v7493 = vpop.f32.mrf.mxu0
  %v7494 = vadd.f32 %v6971, %v7493
  %7495 = vmatprep.mubr.bf16.mxu0 %v3658
  %7496 = vmatmul.mubr.bf16.gmra.mxu0 %v3657
  %v7497 = vpop.f32.mrf.mxu0
  %v7498 = vadd.f32 %v6975, %v7497
  %v7499 = vpop.f32.mrf.mxu0
  %v7500 = vadd.f32 %v6977, %v7499
  %v7501 = vpop.f32.mrf.mxu0
  %v7502 = vadd.f32 %v6979, %v7501
  %v7503 = vpop.f32.mrf.mxu0
  %v7504 = vadd.f32 %v6981, %v7503
  %7505 = vmatprep.mubr.bf16.mxu0 %v3674
  %7506 = vmatmul.mubr.bf16.gmra.mxu0 %v3673
  %v7507 = vpop.f32.mrf.mxu0
  %v7508 = vadd.f32 %v6985, %v7507
  %v7509 = vpop.f32.mrf.mxu0
  %v7510 = vadd.f32 %v6987, %v7509
  %v7511 = vpop.f32.mrf.mxu0
  %v7512 = vadd.f32 %v6989, %v7511
  %v7513 = vpop.f32.mrf.mxu0
  %v7514 = vadd.f32 %v6991, %v7513
  %7515 = vmatprep.mubr.bf16.mxu0 %v3690
  %7516 = vmatmul.mubr.bf16.gmra.mxu0 %v3689
  %v7517 = vpop.f32.mrf.mxu0
  %v7518 = vadd.f32 %v6995, %v7517
  %v7519 = vpop.f32.mrf.mxu0
  %v7520 = vadd.f32 %v6997, %v7519
  %v7521 = vpop.f32.mrf.mxu0
  %v7522 = vadd.f32 %v6999, %v7521
  %v7523 = vpop.f32.mrf.mxu0
  %v7524 = vadd.f32 %v7001, %v7523
  %7525 = vmatprep.mubr.bf16.mxu0 %v3706
  %7526 = vmatmul.mubr.bf16.gmra.mxu0 %v3705
  %v7527 = vpop.f32.mrf.mxu0
  %v7528 = vadd.f32 %v7005, %v7527
  %v7529 = vpop.f32.mrf.mxu0
  %v7530 = vadd.f32 %v7007, %v7529
  %v7531 = vpop.f32.mrf.mxu0
  %v7532 = vadd.f32 %v7009, %v7531
  %v7533 = vpop.f32.mrf.mxu0
  %v7534 = vadd.f32 %v7011, %v7533
  %7535 = vmatprep.mubr.bf16.mxu0 %v3722
  %7536 = vmatmul.mubr.bf16.gmra.mxu0 %v3721
  %v7537 = vpop.f32.mrf.mxu0
  %v7538 = vadd.f32 %v7015, %v7537
  %v7539 = vpop.f32.mrf.mxu0
  %v7540 = vadd.f32 %v7017, %v7539
  %v7541 = vpop.f32.mrf.mxu0
  %v7542 = vadd.f32 %v7019, %v7541
  %v7543 = vpop.f32.mrf.mxu0
  %v7544 = vadd.f32 %v7021, %v7543
  %7545 = vmatprep.mubr.bf16.mxu0 %v3738
  %7546 = vmatmul.mubr.bf16.gmra.mxu0 %v3737
  %v7547 = vpop.f32.mrf.mxu0
  %v7548 = vadd.f32 %v7025, %v7547
  %v7549 = vpop.f32.mrf.mxu0
  %v7550 = vadd.f32 %v7027, %v7549
  %v7551 = vpop.f32.mrf.mxu0
  %v7552 = vadd.f32 %v7029, %v7551
  %v7553 = vpop.f32.mrf.mxu0
  %v7554 = vadd.f32 %v7031, %v7553
  %7555 = vmatprep.mubr.bf16.mxu0 %v3754
  %7556 = vmatmul.mubr.bf16.gmra.mxu0 %v3753
  %v7557 = vpop.f32.mrf.mxu0
  %v7558 = vadd.f32 %v7035, %v7557
  %v7559 = vpop.f32.mrf.mxu0
  %v7560 = vadd.f32 %v7037, %v7559
  %v7561 = vpop.f32.mrf.mxu0
  %v7562 = vadd.f32 %v7039, %v7561
  %v7563 = vpop.f32.mrf.mxu0
  %v7564 = vadd.f32 %v7041, %v7563
  %7565 = vmatprep.mubr.bf16.mxu0 %v3770
  %7566 = vmatmul.mubr.bf16.gmra.mxu0 %v3769
  %v7567 = vpop.f32.mrf.mxu0
  %v7568 = vadd.f32 %v7045, %v7567
  %v7569 = vpop.f32.mrf.mxu0
  %v7570 = vadd.f32 %v7047, %v7569
  %v7571 = vpop.f32.mrf.mxu0
  %v7572 = vadd.f32 %v7049, %v7571
  %v7573 = vpop.f32.mrf.mxu0
  %v7574 = vadd.f32 %v7051, %v7573
  %7575 = vmatprep.mubr.bf16.mxu0 %v3786
  %7576 = vmatmul.mubr.bf16.gmra.mxu0 %v3785
  %v7577 = vpop.f32.mrf.mxu0
  %v7578 = vadd.f32 %v7055, %v7577
  %v7579 = vpop.f32.mrf.mxu0
  %v7580 = vadd.f32 %v7057, %v7579
  %v7581 = vpop.f32.mrf.mxu0
  %v7582 = vadd.f32 %v7059, %v7581
  %v7583 = vpop.f32.mrf.mxu0
  %v7584 = vadd.f32 %v7061, %v7583
  %7585 = vmatprep.mubr.bf16.mxu0 %v3802
  %7586 = vmatmul.mubr.bf16.gmra.mxu0 %v3801
  %v7587 = vpop.f32.mrf.mxu0
  %v7588 = vadd.f32 %v7065, %v7587
  %v7589 = vpop.f32.mrf.mxu0
  %v7590 = vadd.f32 %v7067, %v7589
  %v7591 = vpop.f32.mrf.mxu0
  %v7592 = vadd.f32 %v7069, %v7591
  %v7593 = vpop.f32.mrf.mxu0
  %v7594 = vadd.f32 %v7071, %v7593
  %7595 = vmatprep.mubr.bf16.mxu0 %v3818
  %7596 = vmatmul.mubr.bf16.gmra.mxu0 %v3817
  %v7597 = vpop.f32.mrf.mxu0
  %v7598 = vadd.f32 %v7075, %v7597
  %v7599 = vpop.f32.mrf.mxu0
  %v7600 = vadd.f32 %v7077, %v7599
  %v7601 = vpop.f32.mrf.mxu0
  %v7602 = vadd.f32 %v7079, %v7601
  %v7603 = vpop.f32.mrf.mxu0
  %v7604 = vadd.f32 %v7081, %v7603
  %7605 = vmatprep.mubr.bf16.mxu0 %v3834
  %7606 = vmatmul.mubr.bf16.gmra.mxu0 %v3833
  %v7607 = vpop.f32.mrf.mxu0
  %v7608 = vadd.f32 %v7085, %v7607
  %v7609 = vpop.f32.mrf.mxu0
  %v7610 = vadd.f32 %v7087, %v7609
  %v7611 = vpop.f32.mrf.mxu0
  %v7612 = vadd.f32 %v7089, %v7611
  %v7613 = vpop.f32.mrf.mxu0
  %v7614 = vadd.f32 %v7091, %v7613
  %7615 = vmatprep.mubr.bf16.mxu0 %v3850
  %7616 = vmatmul.mubr.bf16.gmra.mxu0 %v3849
  %v7617 = vpop.f32.mrf.mxu0
  %v7618 = vadd.f32 %v7095, %v7617
  %v7619 = vpop.f32.mrf.mxu0
  %v7620 = vadd.f32 %v7097, %v7619
  %v7621 = vpop.f32.mrf.mxu0
  %v7622 = vadd.f32 %v7099, %v7621
  %v7623 = vpop.f32.mrf.mxu0
  %v7624 = vadd.f32 %v7101, %v7623
  %7625 = vmatprep.mubr.bf16.mxu0 %v3866
  %7626 = vmatmul.mubr.bf16.gmra.mxu0 %v3865
  %v7627 = vpop.f32.mrf.mxu0
  %v7628 = vadd.f32 %v7105, %v7627
  %v7629 = vpop.f32.mrf.mxu0
  %v7630 = vadd.f32 %v7107, %v7629
  %v7631 = vpop.f32.mrf.mxu0
  %v7632 = vadd.f32 %v7109, %v7631
  %v7633 = vpop.f32.mrf.mxu0
  %v7634 = vadd.f32 %v7111, %v7633
  %7635 = vmatprep.mubr.bf16.mxu0 %v3882
  %7636 = vmatmul.mubr.bf16.gmra.mxu0 %v3881
  %v7637 = vpop.f32.mrf.mxu0
  %v7638 = vadd.f32 %v7115, %v7637
  %v7639 = vpop.f32.mrf.mxu0
  %v7640 = vadd.f32 %v7117, %v7639
  %v7641 = vpop.f32.mrf.mxu0
  %v7642 = vadd.f32 %v7119, %v7641
  %v7643 = vpop.f32.mrf.mxu0
  %v7644 = vadd.f32 %v7121, %v7643
  %7645 = vmatprep.mubr.bf16.mxu0 %v3898
  %7646 = vmatmul.mubr.bf16.gmra.mxu0 %v3897
  %v7647 = vpop.f32.mrf.mxu0
  %v7648 = vadd.f32 %v7125, %v7647
  %v7649 = vpop.f32.mrf.mxu0
  %v7650 = vadd.f32 %v7127, %v7649
  %v7651 = vpop.f32.mrf.mxu0
  %v7652 = vadd.f32 %v7129, %v7651
  %v7653 = vpop.f32.mrf.mxu0
  %v7654 = vadd.f32 %v7131, %v7653
  %7655 = vmatprep.mubr.bf16.mxu0 %v3914
  %7656 = vmatmul.mubr.bf16.gmra.mxu0 %v3913
  %v7657 = vpop.f32.mrf.mxu0
  %v7658 = vadd.f32 %v7135, %v7657
  %v7659 = vpop.f32.mrf.mxu0
  %v7660 = vadd.f32 %v7137, %v7659
  %v7661 = vpop.f32.mrf.mxu0
  %v7662 = vadd.f32 %v7139, %v7661
  %v7663 = vpop.f32.mrf.mxu0
  %v7664 = vadd.f32 %v7141, %v7663
  %7665 = vmatprep.mubr.bf16.mxu0 %v3930
  %7666 = vmatmul.mubr.bf16.gmra.mxu0 %v3929
  %v7667 = vpop.f32.mrf.mxu0
  %v7668 = vadd.f32 %v7145, %v7667
  %v7669 = vpop.f32.mrf.mxu0
  %v7670 = vadd.f32 %v7147, %v7669
  %v7671 = vpop.f32.mrf.mxu0
  %v7672 = vadd.f32 %v7149, %v7671
  %v7673 = vpop.f32.mrf.mxu0
  %v7674 = vadd.f32 %v7151, %v7673
  %7675 = vmatprep.mubr.bf16.mxu0 %v3946
  %7676 = vmatmul.mubr.bf16.gmra.mxu0 %v3945
  %v7677 = vpop.f32.mrf.mxu0
  %v7678 = vadd.f32 %v7155, %v7677
  %v7679 = vpop.f32.mrf.mxu0
  %v7680 = vadd.f32 %v7157, %v7679
  %v7681 = vpop.f32.mrf.mxu0
  %v7682 = vadd.f32 %v7159, %v7681
  %v7683 = vpop.f32.mrf.mxu0
  %v7684 = vadd.f32 %v7161, %v7683
  %7685 = vmatprep.mubr.bf16.mxu0 %v3962
  %7686 = vmatmul.mubr.bf16.gmra.mxu0 %v3961
  %v7687 = vpop.f32.mrf.mxu0
  %v7688 = vadd.f32 %v7165, %v7687
  %v7689 = vpop.f32.mrf.mxu0
  %v7690 = vadd.f32 %v7167, %v7689
  %v7691 = vpop.f32.mrf.mxu0
  %v7692 = vadd.f32 %v7169, %v7691
  %v7693 = vpop.f32.mrf.mxu0
  %v7694 = vadd.f32 %v7171, %v7693
  %7695 = vmatprep.mubr.bf16.mxu0 %v3978
  %7696 = vmatmul.mubr.bf16.gmra.mxu0 %v3977
  %v7697 = vpop.f32.mrf.mxu0
  %v7698 = vadd.f32 %v7175, %v7697
  %v7699 = vpop.f32.mrf.mxu0
  %v7700 = vadd.f32 %v7177, %v7699
  %v7701 = vpop.f32.mrf.mxu0
  %v7702 = vadd.f32 %v7179, %v7701
  %v7703 = vpop.f32.mrf.mxu0
  %v7704 = vadd.f32 %v7181, %v7703
  %7705 = vmatprep.mubr.bf16.mxu0 %v3994
  %7706 = vmatmul.mubr.bf16.gmra.mxu0 %v3993
  %v7707 = vpop.f32.mrf.mxu0
  %v7708 = vadd.f32 %v7185, %v7707
  %v7709 = vpop.f32.mrf.mxu0
  %v7710 = vadd.f32 %v7187, %v7709
  %v7711 = vpop.f32.mrf.mxu0
  %v7712 = vadd.f32 %v7189, %v7711
  %v7713 = vpop.f32.mrf.mxu0
  %v7714 = vadd.f32 %v7191, %v7713
  %7715 = vmatprep.mubr.bf16.mxu0 %v4010
  %7716 = vmatmul.mubr.bf16.gmra.mxu0 %v4009
  %v7717 = vpop.f32.mrf.mxu0
  %v7718 = vadd.f32 %v7195, %v7717
  %v7719 = vpop.f32.mrf.mxu0
  %v7720 = vadd.f32 %v7197, %v7719
  %v7721 = vpop.f32.mrf.mxu0
  %v7722 = vadd.f32 %v7199, %v7721
  %v7723 = vpop.f32.mrf.mxu0
  %v7724 = vadd.f32 %v7201, %v7723
  %7725 = vmatprep.mubr.bf16.mxu0 %v4026
  %7726 = vmatmul.mubr.bf16.gmra.mxu0 %v4025
  %v7727 = vpop.f32.mrf.mxu0
  %v7728 = vadd.f32 %v7205, %v7727
  %v7729 = vpop.f32.mrf.mxu0
  %v7730 = vadd.f32 %v7207, %v7729
  %v7731 = vpop.f32.mrf.mxu0
  %v7732 = vadd.f32 %v7209, %v7731
  %v7733 = vpop.f32.mrf.mxu0
  %v7734 = vadd.f32 %v7211, %v7733
  %7735 = vmatprep.mubr.bf16.mxu0 %v4042
  %7736 = vmatmul.mubr.bf16.gmra.mxu0 %v4041
  %v7737 = vpop.f32.mrf.mxu0
  %v7738 = vadd.f32 %v7215, %v7737
  %v7739 = vpop.f32.mrf.mxu0
  %v7740 = vadd.f32 %v7217, %v7739
  %v7741 = vpop.f32.mrf.mxu0
  %v7742 = vadd.f32 %v7219, %v7741
  %v7743 = vpop.f32.mrf.mxu0
  %v7744 = vadd.f32 %v7221, %v7743
  %7745 = vmatprep.mubr.bf16.mxu0 %v4058
  %7746 = vmatmul.mubr.bf16.gmra.mxu0 %v4057
  %v7747 = vpop.f32.mrf.mxu0
  %v7748 = vadd.f32 %v7225, %v7747
  %v7749 = vpop.f32.mrf.mxu0
  %v7750 = vadd.f32 %v7227, %v7749
  %v7751 = vpop.f32.mrf.mxu0
  %v7752 = vadd.f32 %v7229, %v7751
  %v7753 = vpop.f32.mrf.mxu0
  %v7754 = vadd.f32 %v7231, %v7753
  %7755 = vmatprep.mubr.bf16.mxu0 %v4074
  %7756 = vmatmul.mubr.bf16.gmra.mxu0 %v4073
  %v7757 = vpop.f32.mrf.mxu0
  %v7758 = vadd.f32 %v7235, %v7757
  %v7759 = vpop.f32.mrf.mxu0
  %v7760 = vadd.f32 %v7237, %v7759
  %v7761 = vpop.f32.mrf.mxu0
  %v7762 = vadd.f32 %v7239, %v7761
  %v7763 = vpop.f32.mrf.mxu0
  %v7764 = vadd.f32 %v7241, %v7763
  %7765 = vmatprep.mubr.bf16.mxu0 %v4090
  %7766 = vmatmul.mubr.bf16.gmra.mxu0 %v4089
  %v7767 = vpop.f32.mrf.mxu0
  %v7768 = vadd.f32 %v7245, %v7767
  %v7769 = vpop.f32.mrf.mxu0
  %v7770 = vadd.f32 %v7247, %v7769
  %v7771 = vpop.f32.mrf.mxu0
  %v7772 = vadd.f32 %v7249, %v7771
  %v7773 = vpop.f32.mrf.mxu0
  %v7774 = vadd.f32 %v7251, %v7773
  %7775 = vmatprep.mubr.bf16.mxu0 %v4106
  %7776 = vmatmul.mubr.bf16.gmra.mxu0 %v4105
  %v7777 = vpop.f32.mrf.mxu0
  %v7778 = vadd.f32 %v7255, %v7777
  %v7779 = vpop.f32.mrf.mxu0
  %v7780 = vadd.f32 %v7257, %v7779
  %v7781 = vpop.f32.mrf.mxu0
  %v7782 = vadd.f32 %v7259, %v7781
  %v7783 = vpop.f32.mrf.mxu0
  %v7784 = vadd.f32 %v7261, %v7783
  %7785 = vmatprep.mubr.bf16.mxu0 %v4122
  %7786 = vmatmul.mubr.bf16.gmra.mxu0 %v4121
  %v7787 = vpop.f32.mrf.mxu0
  %v7788 = vadd.f32 %v7265, %v7787
  %v7789 = vpop.f32.mrf.mxu0
  %v7790 = vadd.f32 %v7267, %v7789
  %v7791 = vpop.f32.mrf.mxu0
  %v7792 = vadd.f32 %v7269, %v7791
  %v7793 = vpop.f32.mrf.mxu0
  %v7794 = vadd.f32 %v7271, %v7793
  %7795 = vmatprep.mubr.bf16.mxu0 %v4138
  %7796 = vmatmul.mubr.bf16.gmra.mxu0 %v4137
  %v7797 = vpop.f32.mrf.mxu0
  %v7798 = vadd.f32 %v7275, %v7797
  %v7799 = vpop.f32.mrf.mxu0
  %v7800 = vadd.f32 %v7277, %v7799
  %v7801 = vpop.f32.mrf.mxu0
  %v7802 = vadd.f32 %v7279, %v7801
  %v7803 = vpop.f32.mrf.mxu0
  %v7804 = vadd.f32 %v7281, %v7803
  %7805 = vmatprep.mubr.bf16.mxu0 %v4154
  %7806 = vmatmul.mubr.bf16.gmra.mxu0 %v4153
  %v7807 = vpop.f32.mrf.mxu0
  %v7808 = vadd.f32 %v7285, %v7807
  %v7809 = vpop.f32.mrf.mxu0
  %v7810 = vadd.f32 %v7287, %v7809
  %v7811 = vpop.f32.mrf.mxu0
  %v7812 = vadd.f32 %v7289, %v7811
  %v7813 = vpop.f32.mrf.mxu0
  %v7814 = vadd.f32 %v7291, %v7813
  %7815 = vmatprep.mubr.bf16.mxu0 %v4170
  %7816 = vmatmul.mubr.bf16.gmra.mxu0 %v4169
  %v7817 = vpop.f32.mrf.mxu0
  %v7818 = vadd.f32 %v7295, %v7817
  %v7819 = vpop.f32.mrf.mxu0
  %v7820 = vadd.f32 %v7297, %v7819
  %v7821 = vpop.f32.mrf.mxu0
  %v7822 = vadd.f32 %v7299, %v7821
  %v7823 = vpop.f32.mrf.mxu0
  %v7824 = vadd.f32 %v7301, %v7823
  %7825 = vmatprep.mubr.bf16.mxu0 %v4186
  %7826 = vmatmul.mubr.bf16.gmra.mxu0 %v4185
  %v7827 = vpop.f32.mrf.mxu0
  %v7828 = vadd.f32 %v7305, %v7827
  %v7829 = vpop.f32.mrf.mxu0
  %v7830 = vadd.f32 %v7307, %v7829
  %v7831 = vpop.f32.mrf.mxu0
  %v7832 = vadd.f32 %v7309, %v7831
  %v7833 = vpop.f32.mrf.mxu0
  %v7834 = vadd.f32 %v7311, %v7833
  %7835 = vmatprep.mubr.bf16.mxu0 %v4202
  %7836 = vmatmul.mubr.bf16.gmra.mxu0 %v4201
  %v7837 = vpop.f32.mrf.mxu0
  %v7838 = vadd.f32 %v7315, %v7837
  %v7839 = vpop.f32.mrf.mxu0
  %v7840 = vadd.f32 %v7317, %v7839
  %v7841 = vpop.f32.mrf.mxu0
  %v7842 = vadd.f32 %v7319, %v7841
  %v7843 = vpop.f32.mrf.mxu0
  %v7844 = vadd.f32 %v7321, %v7843
  %7845 = vdwg.mxu0
  %7846 = vmatprep.subr.bf16.mxu0 %v5876
  %7847 = vmatpush1.bf16.msra.mxu0 %v5875
  %7848 = vmatprep.subr.bf16.mxu0 %v5874
  %7849 = vmatpush1.bf16.msra.mxu0 %v5873
  %7850 = vmatprep.subr.bf16.mxu0 %v5872
  %7851 = vmatpush1.bf16.msra.mxu0 %v5871
  %7852 = vmatprep.subr.bf16.mxu0 %v5870
  %7853 = vmatpush1.bf16.msra.mxu0 %v5869
  %7854 = vmatprep.subr.bf16.mxu0 %v5868
  %7855 = vmatpush1.bf16.msra.mxu0 %v5867
  %7856 = vmatprep.subr.bf16.mxu0 %v5866
  %7857 = vmatpush1.bf16.msra.mxu0 %v5865
  %7858 = vmatprep.subr.bf16.mxu0 %v5864
  %7859 = vmatpush1.bf16.msra.mxu0 %v5863
  %7860 = vmatprep.subr.bf16.mxu0 %v5862
  %7861 = vmatpush1.bf16.msra.mxu0 %v5861
  %7862 = vmatprep.subr.bf16.mxu0 %v5892
  %7863 = vmatpush2.bf16.msra.mxu0 %v5891
  %7864 = vmatprep.subr.bf16.mxu0 %v5890
  %7865 = vmatpush2.bf16.msra.mxu0 %v5889
  %7866 = vmatprep.subr.bf16.mxu0 %v5888
  %7867 = vmatpush2.bf16.msra.mxu0 %v5887
  %7868 = vmatprep.subr.bf16.mxu0 %v5886
  %7869 = vmatpush2.bf16.msra.mxu0 %v5885
  %7870 = vmatprep.subr.bf16.mxu0 %v5884
  %7871 = vmatpush2.bf16.msra.mxu0 %v5883
  %7872 = vmatprep.subr.bf16.mxu0 %v5882
  %7873 = vmatpush2.bf16.msra.mxu0 %v5881
  %7874 = vmatprep.subr.bf16.mxu0 %v5880
  %7875 = vmatpush2.bf16.msra.mxu0 %v5879
  %7876 = vmatprep.subr.bf16.mxu0 %v5878
  %7877 = vmatpush2.bf16.msra.mxu0 %v5877
  %7878 = vmatprep.mubr.bf16.mxu0 %v3436
  %7879 = vmatmul.mubr.bf16.gmra.mxu0 %v3435
  %v7880 = vpop.f32.mrf.mxu0
  %v7881 = vadd.f32 %v7358, %v7880
  %v7882 = vpop.f32.mrf.mxu0
  %v7883 = vadd.f32 %v7360, %v7882
  %v7884 = vpop.f32.mrf.mxu0
  %v7885 = vadd.f32 %v7362, %v7884
  %v7886 = vpop.f32.mrf.mxu0
  %v7887 = vadd.f32 %v7364, %v7886
  %7888 = vmatprep.mubr.bf16.mxu0 %v3452
  %7889 = vmatmul.mubr.bf16.gmra.mxu0 %v3451
  %v7890 = vpop.f32.mrf.mxu0
  %v7891 = vadd.f32 %v7368, %v7890
  %v7892 = vpop.f32.mrf.mxu0
  %v7893 = vadd.f32 %v7370, %v7892
  %v7894 = vpop.f32.mrf.mxu0
  %v7895 = vadd.f32 %v7372, %v7894
  %v7896 = vpop.f32.mrf.mxu0
  %v7897 = vadd.f32 %v7374, %v7896
  %7898 = vmatprep.mubr.bf16.mxu0 %v3468
  %7899 = vmatmul.mubr.bf16.gmra.mxu0 %v3467
  %v7900 = vpop.f32.mrf.mxu0
  %v7901 = vadd.f32 %v7378, %v7900
  %v7902 = vpop.f32.mrf.mxu0
  %v7903 = vadd.f32 %v7380, %v7902
  %v7904 = vpop.f32.mrf.mxu0
  %v7905 = vadd.f32 %v7382, %v7904
  %v7906 = vpop.f32.mrf.mxu0
  %v7907 = vadd.f32 %v7384, %v7906
  %7908 = vmatprep.mubr.bf16.mxu0 %v3484
  %7909 = vmatmul.mubr.bf16.gmra.mxu0 %v3483
  %v7910 = vpop.f32.mrf.mxu0
  %v7911 = vadd.f32 %v7388, %v7910
  %v7912 = vpop.f32.mrf.mxu0
  %v7913 = vadd.f32 %v7390, %v7912
  %v7914 = vpop.f32.mrf.mxu0
  %v7915 = vadd.f32 %v7392, %v7914
  %v7916 = vpop.f32.mrf.mxu0
  %v7917 = vadd.f32 %v7394, %v7916
  %7918 = vmatprep.mubr.bf16.mxu0 %v3500
  %7919 = vmatmul.mubr.bf16.gmra.mxu0 %v3499
  %v7920 = vpop.f32.mrf.mxu0
  %v7921 = vadd.f32 %v7398, %v7920
  %v7922 = vpop.f32.mrf.mxu0
  %v7923 = vadd.f32 %v7400, %v7922
  %v7924 = vpop.f32.mrf.mxu0
  %v7925 = vadd.f32 %v7402, %v7924
  %v7926 = vpop.f32.mrf.mxu0
  %v7927 = vadd.f32 %v7404, %v7926
  %7928 = vmatprep.mubr.bf16.mxu0 %v3516
  %7929 = vmatmul.mubr.bf16.gmra.mxu0 %v3515
  %v7930 = vpop.f32.mrf.mxu0
  %v7931 = vadd.f32 %v7408, %v7930
  %v7932 = vpop.f32.mrf.mxu0
  %v7933 = vadd.f32 %v7410, %v7932
  %v7934 = vpop.f32.mrf.mxu0
  %v7935 = vadd.f32 %v7412, %v7934
  %v7936 = vpop.f32.mrf.mxu0
  %v7937 = vadd.f32 %v7414, %v7936
  %7938 = vmatprep.mubr.bf16.mxu0 %v3532
  %7939 = vmatmul.mubr.bf16.gmra.mxu0 %v3531
  %v7940 = vpop.f32.mrf.mxu0
  %v7941 = vadd.f32 %v7418, %v7940
  %v7942 = vpop.f32.mrf.mxu0
  %v7943 = vadd.f32 %v7420, %v7942
  %v7944 = vpop.f32.mrf.mxu0
  %v7945 = vadd.f32 %v7422, %v7944
  %v7946 = vpop.f32.mrf.mxu0
  %v7947 = vadd.f32 %v7424, %v7946
  %7948 = vmatprep.mubr.bf16.mxu0 %v3548
  %7949 = vmatmul.mubr.bf16.gmra.mxu0 %v3547
  %v7950 = vpop.f32.mrf.mxu0
  %v7951 = vadd.f32 %v7428, %v7950
  %v7952 = vpop.f32.mrf.mxu0
  %v7953 = vadd.f32 %v7430, %v7952
  %v7954 = vpop.f32.mrf.mxu0
  %v7955 = vadd.f32 %v7432, %v7954
  %v7956 = vpop.f32.mrf.mxu0
  %v7957 = vadd.f32 %v7434, %v7956
  %7958 = vmatprep.mubr.bf16.mxu0 %v3564
  %7959 = vmatmul.mubr.bf16.gmra.mxu0 %v3563
  %v7960 = vpop.f32.mrf.mxu0
  %v7961 = vadd.f32 %v7438, %v7960
  %v7962 = vpop.f32.mrf.mxu0
  %v7963 = vadd.f32 %v7440, %v7962
  %v7964 = vpop.f32.mrf.mxu0
  %v7965 = vadd.f32 %v7442, %v7964
  %v7966 = vpop.f32.mrf.mxu0
  %v7967 = vadd.f32 %v7444, %v7966
  %7968 = vmatprep.mubr.bf16.mxu0 %v3580
  %7969 = vmatmul.mubr.bf16.gmra.mxu0 %v3579
  %v7970 = vpop.f32.mrf.mxu0
  %v7971 = vadd.f32 %v7448, %v7970
  %v7972 = vpop.f32.mrf.mxu0
  %v7973 = vadd.f32 %v7450, %v7972
  %v7974 = vpop.f32.mrf.mxu0
  %v7975 = vadd.f32 %v7452, %v7974
  %v7976 = vpop.f32.mrf.mxu0
  %v7977 = vadd.f32 %v7454, %v7976
  %7978 = vmatprep.mubr.bf16.mxu0 %v3596
  %7979 = vmatmul.mubr.bf16.gmra.mxu0 %v3595
  %v7980 = vpop.f32.mrf.mxu0
  %v7981 = vadd.f32 %v7458, %v7980
  %v7982 = vpop.f32.mrf.mxu0
  %v7983 = vadd.f32 %v7460, %v7982
  %v7984 = vpop.f32.mrf.mxu0
  %v7985 = vadd.f32 %v7462, %v7984
  %v7986 = vpop.f32.mrf.mxu0
  %v7987 = vadd.f32 %v7464, %v7986
  %7988 = vmatprep.mubr.bf16.mxu0 %v3612
  %7989 = vmatmul.mubr.bf16.gmra.mxu0 %v3611
  %v7990 = vpop.f32.mrf.mxu0
  %v7991 = vadd.f32 %v7468, %v7990
  %v7992 = vpop.f32.mrf.mxu0
  %v7993 = vadd.f32 %v7470, %v7992
  %v7994 = vpop.f32.mrf.mxu0
  %v7995 = vadd.f32 %v7472, %v7994
  %v7996 = vpop.f32.mrf.mxu0
  %v7997 = vadd.f32 %v7474, %v7996
  %7998 = vmatprep.mubr.bf16.mxu0 %v3628
  %7999 = vmatmul.mubr.bf16.gmra.mxu0 %v3627
  %v8000 = vpop.f32.mrf.mxu0
  %v8001 = vadd.f32 %v7478, %v8000
  %v8002 = vpop.f32.mrf.mxu0
  %v8003 = vadd.f32 %v7480, %v8002
  %v8004 = vpop.f32.mrf.mxu0
  %v8005 = vadd.f32 %v7482, %v8004
  %v8006 = vpop.f32.mrf.mxu0
  %v8007 = vadd.f32 %v7484, %v8006
  %8008 = vmatprep.mubr.bf16.mxu0 %v3644
  %8009 = vmatmul.mubr.bf16.gmra.mxu0 %v3643
  %v8010 = vpop.f32.mrf.mxu0
  %v8011 = vadd.f32 %v7488, %v8010
  %v8012 = vpop.f32.mrf.mxu0
  %v8013 = vadd.f32 %v7490, %v8012
  %v8014 = vpop.f32.mrf.mxu0
  %v8015 = vadd.f32 %v7492, %v8014
  %v8016 = vpop.f32.mrf.mxu0
  %v8017 = vadd.f32 %v7494, %v8016
  %8018 = vmatprep.mubr.bf16.mxu0 %v3660
  %8019 = vmatmul.mubr.bf16.gmra.mxu0 %v3659
  %v8020 = vpop.f32.mrf.mxu0
  %v8021 = vadd.f32 %v7498, %v8020
  %v8022 = vpop.f32.mrf.mxu0
  %v8023 = vadd.f32 %v7500, %v8022
  %v8024 = vpop.f32.mrf.mxu0
  %v8025 = vadd.f32 %v7502, %v8024
  %v8026 = vpop.f32.mrf.mxu0
  %v8027 = vadd.f32 %v7504, %v8026
  %8028 = vmatprep.mubr.bf16.mxu0 %v3676
  %8029 = vmatmul.mubr.bf16.gmra.mxu0 %v3675
  %v8030 = vpop.f32.mrf.mxu0
  %v8031 = vadd.f32 %v7508, %v8030
  %v8032 = vpop.f32.mrf.mxu0
  %v8033 = vadd.f32 %v7510, %v8032
  %v8034 = vpop.f32.mrf.mxu0
  %v8035 = vadd.f32 %v7512, %v8034
  %v8036 = vpop.f32.mrf.mxu0
  %v8037 = vadd.f32 %v7514, %v8036
  %8038 = vmatprep.mubr.bf16.mxu0 %v3692
  %8039 = vmatmul.mubr.bf16.gmra.mxu0 %v3691
  %v8040 = vpop.f32.mrf.mxu0
  %v8041 = vadd.f32 %v7518, %v8040
  %v8042 = vpop.f32.mrf.mxu0
  %v8043 = vadd.f32 %v7520, %v8042
  %v8044 = vpop.f32.mrf.mxu0
  %v8045 = vadd.f32 %v7522, %v8044
  %v8046 = vpop.f32.mrf.mxu0
  %v8047 = vadd.f32 %v7524, %v8046
  %8048 = vmatprep.mubr.bf16.mxu0 %v3708
  %8049 = vmatmul.mubr.bf16.gmra.mxu0 %v3707
  %v8050 = vpop.f32.mrf.mxu0
  %v8051 = vadd.f32 %v7528, %v8050
  %v8052 = vpop.f32.mrf.mxu0
  %v8053 = vadd.f32 %v7530, %v8052
  %v8054 = vpop.f32.mrf.mxu0
  %v8055 = vadd.f32 %v7532, %v8054
  %v8056 = vpop.f32.mrf.mxu0
  %v8057 = vadd.f32 %v7534, %v8056
  %8058 = vmatprep.mubr.bf16.mxu0 %v3724
  %8059 = vmatmul.mubr.bf16.gmra.mxu0 %v3723
  %v8060 = vpop.f32.mrf.mxu0
  %v8061 = vadd.f32 %v7538, %v8060
  %v8062 = vpop.f32.mrf.mxu0
  %v8063 = vadd.f32 %v7540, %v8062
  %v8064 = vpop.f32.mrf.mxu0
  %v8065 = vadd.f32 %v7542, %v8064
  %v8066 = vpop.f32.mrf.mxu0
  %v8067 = vadd.f32 %v7544, %v8066
  %8068 = vmatprep.mubr.bf16.mxu0 %v3740
  %8069 = vmatmul.mubr.bf16.gmra.mxu0 %v3739
  %v8070 = vpop.f32.mrf.mxu0
  %v8071 = vadd.f32 %v7548, %v8070
  %v8072 = vpop.f32.mrf.mxu0
  %v8073 = vadd.f32 %v7550, %v8072
  %v8074 = vpop.f32.mrf.mxu0
  %v8075 = vadd.f32 %v7552, %v8074
  %v8076 = vpop.f32.mrf.mxu0
  %v8077 = vadd.f32 %v7554, %v8076
  %8078 = vmatprep.mubr.bf16.mxu0 %v3756
  %8079 = vmatmul.mubr.bf16.gmra.mxu0 %v3755
  %v8080 = vpop.f32.mrf.mxu0
  %v8081 = vadd.f32 %v7558, %v8080
  %v8082 = vpop.f32.mrf.mxu0
  %v8083 = vadd.f32 %v7560, %v8082
  %v8084 = vpop.f32.mrf.mxu0
  %v8085 = vadd.f32 %v7562, %v8084
  %v8086 = vpop.f32.mrf.mxu0
  %v8087 = vadd.f32 %v7564, %v8086
  %8088 = vmatprep.mubr.bf16.mxu0 %v3772
  %8089 = vmatmul.mubr.bf16.gmra.mxu0 %v3771
  %v8090 = vpop.f32.mrf.mxu0
  %v8091 = vadd.f32 %v7568, %v8090
  %v8092 = vpop.f32.mrf.mxu0
  %v8093 = vadd.f32 %v7570, %v8092
  %v8094 = vpop.f32.mrf.mxu0
  %v8095 = vadd.f32 %v7572, %v8094
  %v8096 = vpop.f32.mrf.mxu0
  %v8097 = vadd.f32 %v7574, %v8096
  %8098 = vmatprep.mubr.bf16.mxu0 %v3788
  %8099 = vmatmul.mubr.bf16.gmra.mxu0 %v3787
  %v8100 = vpop.f32.mrf.mxu0
  %v8101 = vadd.f32 %v7578, %v8100
  %v8102 = vpop.f32.mrf.mxu0
  %v8103 = vadd.f32 %v7580, %v8102
  %v8104 = vpop.f32.mrf.mxu0
  %v8105 = vadd.f32 %v7582, %v8104
  %v8106 = vpop.f32.mrf.mxu0
  %v8107 = vadd.f32 %v7584, %v8106
  %8108 = vmatprep.mubr.bf16.mxu0 %v3804
  %8109 = vmatmul.mubr.bf16.gmra.mxu0 %v3803
  %v8110 = vpop.f32.mrf.mxu0
  %v8111 = vadd.f32 %v7588, %v8110
  %v8112 = vpop.f32.mrf.mxu0
  %v8113 = vadd.f32 %v7590, %v8112
  %v8114 = vpop.f32.mrf.mxu0
  %v8115 = vadd.f32 %v7592, %v8114
  %v8116 = vpop.f32.mrf.mxu0
  %v8117 = vadd.f32 %v7594, %v8116
  %8118 = vmatprep.mubr.bf16.mxu0 %v3820
  %8119 = vmatmul.mubr.bf16.gmra.mxu0 %v3819
  %v8120 = vpop.f32.mrf.mxu0
  %v8121 = vadd.f32 %v7598, %v8120
  %v8122 = vpop.f32.mrf.mxu0
  %v8123 = vadd.f32 %v7600, %v8122
  %v8124 = vpop.f32.mrf.mxu0
  %v8125 = vadd.f32 %v7602, %v8124
  %v8126 = vpop.f32.mrf.mxu0
  %v8127 = vadd.f32 %v7604, %v8126
  %8128 = vmatprep.mubr.bf16.mxu0 %v3836
  %8129 = vmatmul.mubr.bf16.gmra.mxu0 %v3835
  %v8130 = vpop.f32.mrf.mxu0
  %v8131 = vadd.f32 %v7608, %v8130
  %v8132 = vpop.f32.mrf.mxu0
  %v8133 = vadd.f32 %v7610, %v8132
  %v8134 = vpop.f32.mrf.mxu0
  %v8135 = vadd.f32 %v7612, %v8134
  %v8136 = vpop.f32.mrf.mxu0
  %v8137 = vadd.f32 %v7614, %v8136
  %8138 = vmatprep.mubr.bf16.mxu0 %v3852
  %8139 = vmatmul.mubr.bf16.gmra.mxu0 %v3851
  %v8140 = vpop.f32.mrf.mxu0
  %v8141 = vadd.f32 %v7618, %v8140
  %v8142 = vpop.f32.mrf.mxu0
  %v8143 = vadd.f32 %v7620, %v8142
  %v8144 = vpop.f32.mrf.mxu0
  %v8145 = vadd.f32 %v7622, %v8144
  %v8146 = vpop.f32.mrf.mxu0
  %v8147 = vadd.f32 %v7624, %v8146
  %8148 = vmatprep.mubr.bf16.mxu0 %v3868
  %8149 = vmatmul.mubr.bf16.gmra.mxu0 %v3867
  %v8150 = vpop.f32.mrf.mxu0
  %v8151 = vadd.f32 %v7628, %v8150
  %v8152 = vpop.f32.mrf.mxu0
  %v8153 = vadd.f32 %v7630, %v8152
  %v8154 = vpop.f32.mrf.mxu0
  %v8155 = vadd.f32 %v7632, %v8154
  %v8156 = vpop.f32.mrf.mxu0
  %v8157 = vadd.f32 %v7634, %v8156
  %8158 = vmatprep.mubr.bf16.mxu0 %v3884
  %8159 = vmatmul.mubr.bf16.gmra.mxu0 %v3883
  %v8160 = vpop.f32.mrf.mxu0
  %v8161 = vadd.f32 %v7638, %v8160
  %v8162 = vpop.f32.mrf.mxu0
  %v8163 = vadd.f32 %v7640, %v8162
  %v8164 = vpop.f32.mrf.mxu0
  %v8165 = vadd.f32 %v7642, %v8164
  %v8166 = vpop.f32.mrf.mxu0
  %v8167 = vadd.f32 %v7644, %v8166
  %8168 = vmatprep.mubr.bf16.mxu0 %v3900
  %8169 = vmatmul.mubr.bf16.gmra.mxu0 %v3899
  %v8170 = vpop.f32.mrf.mxu0
  %v8171 = vadd.f32 %v7648, %v8170
  %v8172 = vpop.f32.mrf.mxu0
  %v8173 = vadd.f32 %v7650, %v8172
  %v8174 = vpop.f32.mrf.mxu0
  %v8175 = vadd.f32 %v7652, %v8174
  %v8176 = vpop.f32.mrf.mxu0
  %v8177 = vadd.f32 %v7654, %v8176
  %8178 = vmatprep.mubr.bf16.mxu0 %v3916
  %8179 = vmatmul.mubr.bf16.gmra.mxu0 %v3915
  %v8180 = vpop.f32.mrf.mxu0
  %v8181 = vadd.f32 %v7658, %v8180
  %v8182 = vpop.f32.mrf.mxu0
  %v8183 = vadd.f32 %v7660, %v8182
  %v8184 = vpop.f32.mrf.mxu0
  %v8185 = vadd.f32 %v7662, %v8184
  %v8186 = vpop.f32.mrf.mxu0
  %v8187 = vadd.f32 %v7664, %v8186
  %8188 = vmatprep.mubr.bf16.mxu0 %v3932
  %8189 = vmatmul.mubr.bf16.gmra.mxu0 %v3931
  %v8190 = vpop.f32.mrf.mxu0
  %v8191 = vadd.f32 %v7668, %v8190
  %v8192 = vpop.f32.mrf.mxu0
  %v8193 = vadd.f32 %v7670, %v8192
  %v8194 = vpop.f32.mrf.mxu0
  %v8195 = vadd.f32 %v7672, %v8194
  %v8196 = vpop.f32.mrf.mxu0
  %v8197 = vadd.f32 %v7674, %v8196
  %8198 = vmatprep.mubr.bf16.mxu0 %v3948
  %8199 = vmatmul.mubr.bf16.gmra.mxu0 %v3947
  %v8200 = vpop.f32.mrf.mxu0
  %v8201 = vadd.f32 %v7678, %v8200
  %v8202 = vpop.f32.mrf.mxu0
  %v8203 = vadd.f32 %v7680, %v8202
  %v8204 = vpop.f32.mrf.mxu0
  %v8205 = vadd.f32 %v7682, %v8204
  %v8206 = vpop.f32.mrf.mxu0
  %v8207 = vadd.f32 %v7684, %v8206
  %8208 = vmatprep.mubr.bf16.mxu0 %v3964
  %8209 = vmatmul.mubr.bf16.gmra.mxu0 %v3963
  %v8210 = vpop.f32.mrf.mxu0
  %v8211 = vadd.f32 %v7688, %v8210
  %v8212 = vpop.f32.mrf.mxu0
  %v8213 = vadd.f32 %v7690, %v8212
  %v8214 = vpop.f32.mrf.mxu0
  %v8215 = vadd.f32 %v7692, %v8214
  %v8216 = vpop.f32.mrf.mxu0
  %v8217 = vadd.f32 %v7694, %v8216
  %8218 = vmatprep.mubr.bf16.mxu0 %v3980
  %8219 = vmatmul.mubr.bf16.gmra.mxu0 %v3979
  %v8220 = vpop.f32.mrf.mxu0
  %v8221 = vadd.f32 %v7698, %v8220
  %v8222 = vpop.f32.mrf.mxu0
  %v8223 = vadd.f32 %v7700, %v8222
  %v8224 = vpop.f32.mrf.mxu0
  %v8225 = vadd.f32 %v7702, %v8224
  %v8226 = vpop.f32.mrf.mxu0
  %v8227 = vadd.f32 %v7704, %v8226
  %8228 = vmatprep.mubr.bf16.mxu0 %v3996
  %8229 = vmatmul.mubr.bf16.gmra.mxu0 %v3995
  %v8230 = vpop.f32.mrf.mxu0
  %v8231 = vadd.f32 %v7708, %v8230
  %v8232 = vpop.f32.mrf.mxu0
  %v8233 = vadd.f32 %v7710, %v8232
  %v8234 = vpop.f32.mrf.mxu0
  %v8235 = vadd.f32 %v7712, %v8234
  %v8236 = vpop.f32.mrf.mxu0
  %v8237 = vadd.f32 %v7714, %v8236
  %8238 = vmatprep.mubr.bf16.mxu0 %v4012
  %8239 = vmatmul.mubr.bf16.gmra.mxu0 %v4011
  %v8240 = vpop.f32.mrf.mxu0
  %v8241 = vadd.f32 %v7718, %v8240
  %v8242 = vpop.f32.mrf.mxu0
  %v8243 = vadd.f32 %v7720, %v8242
  %v8244 = vpop.f32.mrf.mxu0
  %v8245 = vadd.f32 %v7722, %v8244
  %v8246 = vpop.f32.mrf.mxu0
  %v8247 = vadd.f32 %v7724, %v8246
  %8248 = vmatprep.mubr.bf16.mxu0 %v4028
  %8249 = vmatmul.mubr.bf16.gmra.mxu0 %v4027
  %v8250 = vpop.f32.mrf.mxu0
  %v8251 = vadd.f32 %v7728, %v8250
  %v8252 = vpop.f32.mrf.mxu0
  %v8253 = vadd.f32 %v7730, %v8252
  %v8254 = vpop.f32.mrf.mxu0
  %v8255 = vadd.f32 %v7732, %v8254
  %v8256 = vpop.f32.mrf.mxu0
  %v8257 = vadd.f32 %v7734, %v8256
  %8258 = vmatprep.mubr.bf16.mxu0 %v4044
  %8259 = vmatmul.mubr.bf16.gmra.mxu0 %v4043
  %v8260 = vpop.f32.mrf.mxu0
  %v8261 = vadd.f32 %v7738, %v8260
  %v8262 = vpop.f32.mrf.mxu0
  %v8263 = vadd.f32 %v7740, %v8262
  %v8264 = vpop.f32.mrf.mxu0
  %v8265 = vadd.f32 %v7742, %v8264
  %v8266 = vpop.f32.mrf.mxu0
  %v8267 = vadd.f32 %v7744, %v8266
  %8268 = vmatprep.mubr.bf16.mxu0 %v4060
  %8269 = vmatmul.mubr.bf16.gmra.mxu0 %v4059
  %v8270 = vpop.f32.mrf.mxu0
  %v8271 = vadd.f32 %v7748, %v8270
  %v8272 = vpop.f32.mrf.mxu0
  %v8273 = vadd.f32 %v7750, %v8272
  %v8274 = vpop.f32.mrf.mxu0
  %v8275 = vadd.f32 %v7752, %v8274
  %v8276 = vpop.f32.mrf.mxu0
  %v8277 = vadd.f32 %v7754, %v8276
  %8278 = vmatprep.mubr.bf16.mxu0 %v4076
  %8279 = vmatmul.mubr.bf16.gmra.mxu0 %v4075
  %v8280 = vpop.f32.mrf.mxu0
  %v8281 = vadd.f32 %v7758, %v8280
  %v8282 = vpop.f32.mrf.mxu0
  %v8283 = vadd.f32 %v7760, %v8282
  %v8284 = vpop.f32.mrf.mxu0
  %v8285 = vadd.f32 %v7762, %v8284
  %v8286 = vpop.f32.mrf.mxu0
  %v8287 = vadd.f32 %v7764, %v8286
  %8288 = vmatprep.mubr.bf16.mxu0 %v4092
  %8289 = vmatmul.mubr.bf16.gmra.mxu0 %v4091
  %v8290 = vpop.f32.mrf.mxu0
  %v8291 = vadd.f32 %v7768, %v8290
  %v8292 = vpop.f32.mrf.mxu0
  %v8293 = vadd.f32 %v7770, %v8292
  %v8294 = vpop.f32.mrf.mxu0
  %v8295 = vadd.f32 %v7772, %v8294
  %v8296 = vpop.f32.mrf.mxu0
  %v8297 = vadd.f32 %v7774, %v8296
  %8298 = vmatprep.mubr.bf16.mxu0 %v4108
  %8299 = vmatmul.mubr.bf16.gmra.mxu0 %v4107
  %v8300 = vpop.f32.mrf.mxu0
  %v8301 = vadd.f32 %v7778, %v8300
  %v8302 = vpop.f32.mrf.mxu0
  %v8303 = vadd.f32 %v7780, %v8302
  %v8304 = vpop.f32.mrf.mxu0
  %v8305 = vadd.f32 %v7782, %v8304
  %v8306 = vpop.f32.mrf.mxu0
  %v8307 = vadd.f32 %v7784, %v8306
  %8308 = vmatprep.mubr.bf16.mxu0 %v4124
  %8309 = vmatmul.mubr.bf16.gmra.mxu0 %v4123
  %v8310 = vpop.f32.mrf.mxu0
  %v8311 = vadd.f32 %v7788, %v8310
  %v8312 = vpop.f32.mrf.mxu0
  %v8313 = vadd.f32 %v7790, %v8312
  %v8314 = vpop.f32.mrf.mxu0
  %v8315 = vadd.f32 %v7792, %v8314
  %v8316 = vpop.f32.mrf.mxu0
  %v8317 = vadd.f32 %v7794, %v8316
  %8318 = vmatprep.mubr.bf16.mxu0 %v4140
  %8319 = vmatmul.mubr.bf16.gmra.mxu0 %v4139
  %v8320 = vpop.f32.mrf.mxu0
  %v8321 = vadd.f32 %v7798, %v8320
  %v8322 = vpop.f32.mrf.mxu0
  %v8323 = vadd.f32 %v7800, %v8322
  %v8324 = vpop.f32.mrf.mxu0
  %v8325 = vadd.f32 %v7802, %v8324
  %v8326 = vpop.f32.mrf.mxu0
  %v8327 = vadd.f32 %v7804, %v8326
  %8328 = vmatprep.mubr.bf16.mxu0 %v4156
  %8329 = vmatmul.mubr.bf16.gmra.mxu0 %v4155
  %v8330 = vpop.f32.mrf.mxu0
  %v8331 = vadd.f32 %v7808, %v8330
  %v8332 = vpop.f32.mrf.mxu0
  %v8333 = vadd.f32 %v7810, %v8332
  %v8334 = vpop.f32.mrf.mxu0
  %v8335 = vadd.f32 %v7812, %v8334
  %v8336 = vpop.f32.mrf.mxu0
  %v8337 = vadd.f32 %v7814, %v8336
  %8338 = vmatprep.mubr.bf16.mxu0 %v4172
  %8339 = vmatmul.mubr.bf16.gmra.mxu0 %v4171
  %v8340 = vpop.f32.mrf.mxu0
  %v8341 = vadd.f32 %v7818, %v8340
  %v8342 = vpop.f32.mrf.mxu0
  %v8343 = vadd.f32 %v7820, %v8342
  %v8344 = vpop.f32.mrf.mxu0
  %v8345 = vadd.f32 %v7822, %v8344
  %v8346 = vpop.f32.mrf.mxu0
  %v8347 = vadd.f32 %v7824, %v8346
  %8348 = vmatprep.mubr.bf16.mxu0 %v4188
  %8349 = vmatmul.mubr.bf16.gmra.mxu0 %v4187
  %v8350 = vpop.f32.mrf.mxu0
  %v8351 = vadd.f32 %v7828, %v8350
  %v8352 = vpop.f32.mrf.mxu0
  %v8353 = vadd.f32 %v7830, %v8352
  %v8354 = vpop.f32.mrf.mxu0
  %v8355 = vadd.f32 %v7832, %v8354
  %v8356 = vpop.f32.mrf.mxu0
  %v8357 = vadd.f32 %v7834, %v8356
  %8358 = vmatprep.mubr.bf16.mxu0 %v4204
  %8359 = vmatmul.mubr.bf16.gmra.mxu0 %v4203
  %v8360 = vpop.f32.mrf.mxu0
  %v8361 = vadd.f32 %v7838, %v8360
  %v8362 = vpop.f32.mrf.mxu0
  %v8363 = vadd.f32 %v7840, %v8362
  %v8364 = vpop.f32.mrf.mxu0
  %v8365 = vadd.f32 %v7842, %v8364
  %v8366 = vpop.f32.mrf.mxu0
  %v8367 = vadd.f32 %v7844, %v8366
  %8368 = vdwg.mxu0
  %8369 = vmatprep.subr.bf16.mxu0 %v5908
  %8370 = vmatpush1.bf16.msra.mxu0 %v5907
  %8371 = vmatprep.subr.bf16.mxu0 %v5906
  %8372 = vmatpush1.bf16.msra.mxu0 %v5905
  %8373 = vmatprep.subr.bf16.mxu0 %v5904
  %8374 = vmatpush1.bf16.msra.mxu0 %v5903
  %8375 = vmatprep.subr.bf16.mxu0 %v5902
  %8376 = vmatpush1.bf16.msra.mxu0 %v5901
  %8377 = vmatprep.subr.bf16.mxu0 %v5900
  %8378 = vmatpush1.bf16.msra.mxu0 %v5899
  %8379 = vmatprep.subr.bf16.mxu0 %v5898
  %8380 = vmatpush1.bf16.msra.mxu0 %v5897
  %8381 = vmatprep.subr.bf16.mxu0 %v5896
  %8382 = vmatpush1.bf16.msra.mxu0 %v5895
  %8383 = vmatprep.subr.bf16.mxu0 %v5894
  %8384 = vmatpush1.bf16.msra.mxu0 %v5893
  %8385 = vmatprep.subr.bf16.mxu0 %v5924
  %8386 = vmatpush2.bf16.msra.mxu0 %v5923
  %8387 = vmatprep.subr.bf16.mxu0 %v5922
  %8388 = vmatpush2.bf16.msra.mxu0 %v5921
  %8389 = vmatprep.subr.bf16.mxu0 %v5920
  %8390 = vmatpush2.bf16.msra.mxu0 %v5919
  %8391 = vmatprep.subr.bf16.mxu0 %v5918
  %8392 = vmatpush2.bf16.msra.mxu0 %v5917
  %8393 = vmatprep.subr.bf16.mxu0 %v5916
  %8394 = vmatpush2.bf16.msra.mxu0 %v5915
  %8395 = vmatprep.subr.bf16.mxu0 %v5914
  %8396 = vmatpush2.bf16.msra.mxu0 %v5913
  %8397 = vmatprep.subr.bf16.mxu0 %v5912
  %8398 = vmatpush2.bf16.msra.mxu0 %v5911
  %8399 = vmatprep.subr.bf16.mxu0 %v5910
  %8400 = vmatpush2.bf16.msra.mxu0 %v5909
  %8401 = vmatprep.mubr.bf16.mxu0 %v3438
  %8402 = vmatmul.mubr.bf16.gmra.mxu0 %v3437
  %v8403 = vpop.f32.mrf.mxu0
  %v8404 = vadd.f32 %v7881, %v8403
  %v8405 = vpop.f32.mrf.mxu0
  %v8406 = vadd.f32 %v7883, %v8405
  %v8407 = vpop.f32.mrf.mxu0
  %v8408 = vadd.f32 %v7885, %v8407
  %v8409 = vpop.f32.mrf.mxu0
  %v8410 = vadd.f32 %v7887, %v8409
  %8411 = vmatprep.mubr.bf16.mxu0 %v3454
  %8412 = vmatmul.mubr.bf16.gmra.mxu0 %v3453
  %v8413 = vpop.f32.mrf.mxu0
  %v8414 = vadd.f32 %v7891, %v8413
  %v8415 = vpop.f32.mrf.mxu0
  %v8416 = vadd.f32 %v7893, %v8415
  %v8417 = vpop.f32.mrf.mxu0
  %v8418 = vadd.f32 %v7895, %v8417
  %v8419 = vpop.f32.mrf.mxu0
  %v8420 = vadd.f32 %v7897, %v8419
  %8421 = vmatprep.mubr.bf16.mxu0 %v3470
  %8422 = vmatmul.mubr.bf16.gmra.mxu0 %v3469
  %v8423 = vpop.f32.mrf.mxu0
  %v8424 = vadd.f32 %v7901, %v8423
  %v8425 = vpop.f32.mrf.mxu0
  %v8426 = vadd.f32 %v7903, %v8425
  %v8427 = vpop.f32.mrf.mxu0
  %v8428 = vadd.f32 %v7905, %v8427
  %v8429 = vpop.f32.mrf.mxu0
  %v8430 = vadd.f32 %v7907, %v8429
  %8431 = vmatprep.mubr.bf16.mxu0 %v3486
  %8432 = vmatmul.mubr.bf16.gmra.mxu0 %v3485
  %v8433 = vpop.f32.mrf.mxu0
  %v8434 = vadd.f32 %v7911, %v8433
  %v8435 = vpop.f32.mrf.mxu0
  %v8436 = vadd.f32 %v7913, %v8435
  %v8437 = vpop.f32.mrf.mxu0
  %v8438 = vadd.f32 %v7915, %v8437
  %v8439 = vpop.f32.mrf.mxu0
  %v8440 = vadd.f32 %v7917, %v8439
  %8441 = vmatprep.mubr.bf16.mxu0 %v3502
  %8442 = vmatmul.mubr.bf16.gmra.mxu0 %v3501
  %v8443 = vpop.f32.mrf.mxu0
  %v8444 = vadd.f32 %v7921, %v8443
  %v8445 = vpop.f32.mrf.mxu0
  %v8446 = vadd.f32 %v7923, %v8445
  %v8447 = vpop.f32.mrf.mxu0
  %v8448 = vadd.f32 %v7925, %v8447
  %v8449 = vpop.f32.mrf.mxu0
  %v8450 = vadd.f32 %v7927, %v8449
  %8451 = vmatprep.mubr.bf16.mxu0 %v3518
  %8452 = vmatmul.mubr.bf16.gmra.mxu0 %v3517
  %v8453 = vpop.f32.mrf.mxu0
  %v8454 = vadd.f32 %v7931, %v8453
  %v8455 = vpop.f32.mrf.mxu0
  %v8456 = vadd.f32 %v7933, %v8455
  %v8457 = vpop.f32.mrf.mxu0
  %v8458 = vadd.f32 %v7935, %v8457
  %v8459 = vpop.f32.mrf.mxu0
  %v8460 = vadd.f32 %v7937, %v8459
  %8461 = vmatprep.mubr.bf16.mxu0 %v3534
  %8462 = vmatmul.mubr.bf16.gmra.mxu0 %v3533
  %v8463 = vpop.f32.mrf.mxu0
  %v8464 = vadd.f32 %v7941, %v8463
  %v8465 = vpop.f32.mrf.mxu0
  %v8466 = vadd.f32 %v7943, %v8465
  %v8467 = vpop.f32.mrf.mxu0
  %v8468 = vadd.f32 %v7945, %v8467
  %v8469 = vpop.f32.mrf.mxu0
  %v8470 = vadd.f32 %v7947, %v8469
  %8471 = vmatprep.mubr.bf16.mxu0 %v3550
  %8472 = vmatmul.mubr.bf16.gmra.mxu0 %v3549
  %v8473 = vpop.f32.mrf.mxu0
  %v8474 = vadd.f32 %v7951, %v8473
  %v8475 = vpop.f32.mrf.mxu0
  %v8476 = vadd.f32 %v7953, %v8475
  %v8477 = vpop.f32.mrf.mxu0
  %v8478 = vadd.f32 %v7955, %v8477
  %v8479 = vpop.f32.mrf.mxu0
  %v8480 = vadd.f32 %v7957, %v8479
  %8481 = vmatprep.mubr.bf16.mxu0 %v3566
  %8482 = vmatmul.mubr.bf16.gmra.mxu0 %v3565
  %v8483 = vpop.f32.mrf.mxu0
  %v8484 = vadd.f32 %v7961, %v8483
  %v8485 = vpop.f32.mrf.mxu0
  %v8486 = vadd.f32 %v7963, %v8485
  %v8487 = vpop.f32.mrf.mxu0
  %v8488 = vadd.f32 %v7965, %v8487
  %v8489 = vpop.f32.mrf.mxu0
  %v8490 = vadd.f32 %v7967, %v8489
  %8491 = vmatprep.mubr.bf16.mxu0 %v3582
  %8492 = vmatmul.mubr.bf16.gmra.mxu0 %v3581
  %v8493 = vpop.f32.mrf.mxu0
  %v8494 = vadd.f32 %v7971, %v8493
  %v8495 = vpop.f32.mrf.mxu0
  %v8496 = vadd.f32 %v7973, %v8495
  %v8497 = vpop.f32.mrf.mxu0
  %v8498 = vadd.f32 %v7975, %v8497
  %v8499 = vpop.f32.mrf.mxu0
  %v8500 = vadd.f32 %v7977, %v8499
  %8501 = vmatprep.mubr.bf16.mxu0 %v3598
  %8502 = vmatmul.mubr.bf16.gmra.mxu0 %v3597
  %v8503 = vpop.f32.mrf.mxu0
  %v8504 = vadd.f32 %v7981, %v8503
  %v8505 = vpop.f32.mrf.mxu0
  %v8506 = vadd.f32 %v7983, %v8505
  %v8507 = vpop.f32.mrf.mxu0
  %v8508 = vadd.f32 %v7985, %v8507
  %v8509 = vpop.f32.mrf.mxu0
  %v8510 = vadd.f32 %v7987, %v8509
  %8511 = vmatprep.mubr.bf16.mxu0 %v3614
  %8512 = vmatmul.mubr.bf16.gmra.mxu0 %v3613
  %v8513 = vpop.f32.mrf.mxu0
  %v8514 = vadd.f32 %v7991, %v8513
  %v8515 = vpop.f32.mrf.mxu0
  %v8516 = vadd.f32 %v7993, %v8515
  %v8517 = vpop.f32.mrf.mxu0
  %v8518 = vadd.f32 %v7995, %v8517
  %v8519 = vpop.f32.mrf.mxu0
  %v8520 = vadd.f32 %v7997, %v8519
  %8521 = vmatprep.mubr.bf16.mxu0 %v3630
  %8522 = vmatmul.mubr.bf16.gmra.mxu0 %v3629
  %v8523 = vpop.f32.mrf.mxu0
  %v8524 = vadd.f32 %v8001, %v8523
  %v8525 = vpop.f32.mrf.mxu0
  %v8526 = vadd.f32 %v8003, %v8525
  %v8527 = vpop.f32.mrf.mxu0
  %v8528 = vadd.f32 %v8005, %v8527
  %v8529 = vpop.f32.mrf.mxu0
  %v8530 = vadd.f32 %v8007, %v8529
  %8531 = vmatprep.mubr.bf16.mxu0 %v3646
  %8532 = vmatmul.mubr.bf16.gmra.mxu0 %v3645
  %v8533 = vpop.f32.mrf.mxu0
  %v8534 = vadd.f32 %v8011, %v8533
  %v8535 = vpop.f32.mrf.mxu0
  %v8536 = vadd.f32 %v8013, %v8535
  %v8537 = vpop.f32.mrf.mxu0
  %v8538 = vadd.f32 %v8015, %v8537
  %v8539 = vpop.f32.mrf.mxu0
  %v8540 = vadd.f32 %v8017, %v8539
  %8541 = vmatprep.mubr.bf16.mxu0 %v3662
  %8542 = vmatmul.mubr.bf16.gmra.mxu0 %v3661
  %v8543 = vpop.f32.mrf.mxu0
  %v8544 = vadd.f32 %v8021, %v8543
  %v8545 = vpop.f32.mrf.mxu0
  %v8546 = vadd.f32 %v8023, %v8545
  %v8547 = vpop.f32.mrf.mxu0
  %v8548 = vadd.f32 %v8025, %v8547
  %v8549 = vpop.f32.mrf.mxu0
  %v8550 = vadd.f32 %v8027, %v8549
  %8551 = vmatprep.mubr.bf16.mxu0 %v3678
  %8552 = vmatmul.mubr.bf16.gmra.mxu0 %v3677
  %v8553 = vpop.f32.mrf.mxu0
  %v8554 = vadd.f32 %v8031, %v8553
  %v8555 = vpop.f32.mrf.mxu0
  %v8556 = vadd.f32 %v8033, %v8555
  %v8557 = vpop.f32.mrf.mxu0
  %v8558 = vadd.f32 %v8035, %v8557
  %v8559 = vpop.f32.mrf.mxu0
  %v8560 = vadd.f32 %v8037, %v8559
  %8561 = vmatprep.mubr.bf16.mxu0 %v3694
  %8562 = vmatmul.mubr.bf16.gmra.mxu0 %v3693
  %v8563 = vpop.f32.mrf.mxu0
  %v8564 = vadd.f32 %v8041, %v8563
  %v8565 = vpop.f32.mrf.mxu0
  %v8566 = vadd.f32 %v8043, %v8565
  %v8567 = vpop.f32.mrf.mxu0
  %v8568 = vadd.f32 %v8045, %v8567
  %v8569 = vpop.f32.mrf.mxu0
  %v8570 = vadd.f32 %v8047, %v8569
  %8571 = vmatprep.mubr.bf16.mxu0 %v3710
  %8572 = vmatmul.mubr.bf16.gmra.mxu0 %v3709
  %v8573 = vpop.f32.mrf.mxu0
  %v8574 = vadd.f32 %v8051, %v8573
  %v8575 = vpop.f32.mrf.mxu0
  %v8576 = vadd.f32 %v8053, %v8575
  %v8577 = vpop.f32.mrf.mxu0
  %v8578 = vadd.f32 %v8055, %v8577
  %v8579 = vpop.f32.mrf.mxu0
  %v8580 = vadd.f32 %v8057, %v8579
  %8581 = vmatprep.mubr.bf16.mxu0 %v3726
  %8582 = vmatmul.mubr.bf16.gmra.mxu0 %v3725
  %v8583 = vpop.f32.mrf.mxu0
  %v8584 = vadd.f32 %v8061, %v8583
  %v8585 = vpop.f32.mrf.mxu0
  %v8586 = vadd.f32 %v8063, %v8585
  %v8587 = vpop.f32.mrf.mxu0
  %v8588 = vadd.f32 %v8065, %v8587
  %v8589 = vpop.f32.mrf.mxu0
  %v8590 = vadd.f32 %v8067, %v8589
  %8591 = vmatprep.mubr.bf16.mxu0 %v3742
  %8592 = vmatmul.mubr.bf16.gmra.mxu0 %v3741
  %v8593 = vpop.f32.mrf.mxu0
  %v8594 = vadd.f32 %v8071, %v8593
  %v8595 = vpop.f32.mrf.mxu0
  %v8596 = vadd.f32 %v8073, %v8595
  %v8597 = vpop.f32.mrf.mxu0
  %v8598 = vadd.f32 %v8075, %v8597
  %v8599 = vpop.f32.mrf.mxu0
  %v8600 = vadd.f32 %v8077, %v8599
  %8601 = vmatprep.mubr.bf16.mxu0 %v3758
  %8602 = vmatmul.mubr.bf16.gmra.mxu0 %v3757
  %v8603 = vpop.f32.mrf.mxu0
  %v8604 = vadd.f32 %v8081, %v8603
  %v8605 = vpop.f32.mrf.mxu0
  %v8606 = vadd.f32 %v8083, %v8605
  %v8607 = vpop.f32.mrf.mxu0
  %v8608 = vadd.f32 %v8085, %v8607
  %v8609 = vpop.f32.mrf.mxu0
  %v8610 = vadd.f32 %v8087, %v8609
  %8611 = vmatprep.mubr.bf16.mxu0 %v3774
  %8612 = vmatmul.mubr.bf16.gmra.mxu0 %v3773
  %v8613 = vpop.f32.mrf.mxu0
  %v8614 = vadd.f32 %v8091, %v8613
  %v8615 = vpop.f32.mrf.mxu0
  %v8616 = vadd.f32 %v8093, %v8615
  %v8617 = vpop.f32.mrf.mxu0
  %v8618 = vadd.f32 %v8095, %v8617
  %v8619 = vpop.f32.mrf.mxu0
  %v8620 = vadd.f32 %v8097, %v8619
  %8621 = vmatprep.mubr.bf16.mxu0 %v3790
  %8622 = vmatmul.mubr.bf16.gmra.mxu0 %v3789
  %v8623 = vpop.f32.mrf.mxu0
  %v8624 = vadd.f32 %v8101, %v8623
  %v8625 = vpop.f32.mrf.mxu0
  %v8626 = vadd.f32 %v8103, %v8625
  %v8627 = vpop.f32.mrf.mxu0
  %v8628 = vadd.f32 %v8105, %v8627
  %v8629 = vpop.f32.mrf.mxu0
  %v8630 = vadd.f32 %v8107, %v8629
  %8631 = vmatprep.mubr.bf16.mxu0 %v3806
  %8632 = vmatmul.mubr.bf16.gmra.mxu0 %v3805
  %v8633 = vpop.f32.mrf.mxu0
  %v8634 = vadd.f32 %v8111, %v8633
  %v8635 = vpop.f32.mrf.mxu0
  %v8636 = vadd.f32 %v8113, %v8635
  %v8637 = vpop.f32.mrf.mxu0
  %v8638 = vadd.f32 %v8115, %v8637
  %v8639 = vpop.f32.mrf.mxu0
  %v8640 = vadd.f32 %v8117, %v8639
  %8641 = vmatprep.mubr.bf16.mxu0 %v3822
  %8642 = vmatmul.mubr.bf16.gmra.mxu0 %v3821
  %v8643 = vpop.f32.mrf.mxu0
  %v8644 = vadd.f32 %v8121, %v8643
  %v8645 = vpop.f32.mrf.mxu0
  %v8646 = vadd.f32 %v8123, %v8645
  %v8647 = vpop.f32.mrf.mxu0
  %v8648 = vadd.f32 %v8125, %v8647
  %v8649 = vpop.f32.mrf.mxu0
  %v8650 = vadd.f32 %v8127, %v8649
  %8651 = vmatprep.mubr.bf16.mxu0 %v3838
  %8652 = vmatmul.mubr.bf16.gmra.mxu0 %v3837
  %v8653 = vpop.f32.mrf.mxu0
  %v8654 = vadd.f32 %v8131, %v8653
  %v8655 = vpop.f32.mrf.mxu0
  %v8656 = vadd.f32 %v8133, %v8655
  %v8657 = vpop.f32.mrf.mxu0
  %v8658 = vadd.f32 %v8135, %v8657
  %v8659 = vpop.f32.mrf.mxu0
  %v8660 = vadd.f32 %v8137, %v8659
  %8661 = vmatprep.mubr.bf16.mxu0 %v3854
  %8662 = vmatmul.mubr.bf16.gmra.mxu0 %v3853
  %v8663 = vpop.f32.mrf.mxu0
  %v8664 = vadd.f32 %v8141, %v8663
  %v8665 = vpop.f32.mrf.mxu0
  %v8666 = vadd.f32 %v8143, %v8665
  %v8667 = vpop.f32.mrf.mxu0
  %v8668 = vadd.f32 %v8145, %v8667
  %v8669 = vpop.f32.mrf.mxu0
  %v8670 = vadd.f32 %v8147, %v8669
  %8671 = vmatprep.mubr.bf16.mxu0 %v3870
  %8672 = vmatmul.mubr.bf16.gmra.mxu0 %v3869
  %v8673 = vpop.f32.mrf.mxu0
  %v8674 = vadd.f32 %v8151, %v8673
  %v8675 = vpop.f32.mrf.mxu0
  %v8676 = vadd.f32 %v8153, %v8675
  %v8677 = vpop.f32.mrf.mxu0
  %v8678 = vadd.f32 %v8155, %v8677
  %v8679 = vpop.f32.mrf.mxu0
  %v8680 = vadd.f32 %v8157, %v8679
  %8681 = vmatprep.mubr.bf16.mxu0 %v3886
  %8682 = vmatmul.mubr.bf16.gmra.mxu0 %v3885
  %v8683 = vpop.f32.mrf.mxu0
  %v8684 = vadd.f32 %v8161, %v8683
  %v8685 = vpop.f32.mrf.mxu0
  %v8686 = vadd.f32 %v8163, %v8685
  %v8687 = vpop.f32.mrf.mxu0
  %v8688 = vadd.f32 %v8165, %v8687
  %v8689 = vpop.f32.mrf.mxu0
  %v8690 = vadd.f32 %v8167, %v8689
  %8691 = vmatprep.mubr.bf16.mxu0 %v3902
  %8692 = vmatmul.mubr.bf16.gmra.mxu0 %v3901
  %v8693 = vpop.f32.mrf.mxu0
  %v8694 = vadd.f32 %v8171, %v8693
  %v8695 = vpop.f32.mrf.mxu0
  %v8696 = vadd.f32 %v8173, %v8695
  %v8697 = vpop.f32.mrf.mxu0
  %v8698 = vadd.f32 %v8175, %v8697
  %v8699 = vpop.f32.mrf.mxu0
  %v8700 = vadd.f32 %v8177, %v8699
  %8701 = vmatprep.mubr.bf16.mxu0 %v3918
  %8702 = vmatmul.mubr.bf16.gmra.mxu0 %v3917
  %v8703 = vpop.f32.mrf.mxu0
  %v8704 = vadd.f32 %v8181, %v8703
  %v8705 = vpop.f32.mrf.mxu0
  %v8706 = vadd.f32 %v8183, %v8705
  %v8707 = vpop.f32.mrf.mxu0
  %v8708 = vadd.f32 %v8185, %v8707
  %v8709 = vpop.f32.mrf.mxu0
  %v8710 = vadd.f32 %v8187, %v8709
  %8711 = vmatprep.mubr.bf16.mxu0 %v3934
  %8712 = vmatmul.mubr.bf16.gmra.mxu0 %v3933
  %v8713 = vpop.f32.mrf.mxu0
  %v8714 = vadd.f32 %v8191, %v8713
  %v8715 = vpop.f32.mrf.mxu0
  %v8716 = vadd.f32 %v8193, %v8715
  %v8717 = vpop.f32.mrf.mxu0
  %v8718 = vadd.f32 %v8195, %v8717
  %v8719 = vpop.f32.mrf.mxu0
  %v8720 = vadd.f32 %v8197, %v8719
  %8721 = vmatprep.mubr.bf16.mxu0 %v3950
  %8722 = vmatmul.mubr.bf16.gmra.mxu0 %v3949
  %v8723 = vpop.f32.mrf.mxu0
  %v8724 = vadd.f32 %v8201, %v8723
  %v8725 = vpop.f32.mrf.mxu0
  %v8726 = vadd.f32 %v8203, %v8725
  %v8727 = vpop.f32.mrf.mxu0
  %v8728 = vadd.f32 %v8205, %v8727
  %v8729 = vpop.f32.mrf.mxu0
  %v8730 = vadd.f32 %v8207, %v8729
  %8731 = vmatprep.mubr.bf16.mxu0 %v3966
  %8732 = vmatmul.mubr.bf16.gmra.mxu0 %v3965
  %v8733 = vpop.f32.mrf.mxu0
  %v8734 = vadd.f32 %v8211, %v8733
  %v8735 = vpop.f32.mrf.mxu0
  %v8736 = vadd.f32 %v8213, %v8735
  %v8737 = vpop.f32.mrf.mxu0
  %v8738 = vadd.f32 %v8215, %v8737
  %v8739 = vpop.f32.mrf.mxu0
  %v8740 = vadd.f32 %v8217, %v8739
  %8741 = vmatprep.mubr.bf16.mxu0 %v3982
  %8742 = vmatmul.mubr.bf16.gmra.mxu0 %v3981
  %v8743 = vpop.f32.mrf.mxu0
  %v8744 = vadd.f32 %v8221, %v8743
  %v8745 = vpop.f32.mrf.mxu0
  %v8746 = vadd.f32 %v8223, %v8745
  %v8747 = vpop.f32.mrf.mxu0
  %v8748 = vadd.f32 %v8225, %v8747
  %v8749 = vpop.f32.mrf.mxu0
  %v8750 = vadd.f32 %v8227, %v8749
  %8751 = vmatprep.mubr.bf16.mxu0 %v3998
  %8752 = vmatmul.mubr.bf16.gmra.mxu0 %v3997
  %v8753 = vpop.f32.mrf.mxu0
  %v8754 = vadd.f32 %v8231, %v8753
  %v8755 = vpop.f32.mrf.mxu0
  %v8756 = vadd.f32 %v8233, %v8755
  %v8757 = vpop.f32.mrf.mxu0
  %v8758 = vadd.f32 %v8235, %v8757
  %v8759 = vpop.f32.mrf.mxu0
  %v8760 = vadd.f32 %v8237, %v8759
  %8761 = vmatprep.mubr.bf16.mxu0 %v4014
  %8762 = vmatmul.mubr.bf16.gmra.mxu0 %v4013
  %v8763 = vpop.f32.mrf.mxu0
  %v8764 = vadd.f32 %v8241, %v8763
  %v8765 = vpop.f32.mrf.mxu0
  %v8766 = vadd.f32 %v8243, %v8765
  %v8767 = vpop.f32.mrf.mxu0
  %v8768 = vadd.f32 %v8245, %v8767
  %v8769 = vpop.f32.mrf.mxu0
  %v8770 = vadd.f32 %v8247, %v8769
  %8771 = vmatprep.mubr.bf16.mxu0 %v4030
  %8772 = vmatmul.mubr.bf16.gmra.mxu0 %v4029
  %v8773 = vpop.f32.mrf.mxu0
  %v8774 = vadd.f32 %v8251, %v8773
  %v8775 = vpop.f32.mrf.mxu0
  %v8776 = vadd.f32 %v8253, %v8775
  %v8777 = vpop.f32.mrf.mxu0
  %v8778 = vadd.f32 %v8255, %v8777
  %v8779 = vpop.f32.mrf.mxu0
  %v8780 = vadd.f32 %v8257, %v8779
  %8781 = vmatprep.mubr.bf16.mxu0 %v4046
  %8782 = vmatmul.mubr.bf16.gmra.mxu0 %v4045
  %v8783 = vpop.f32.mrf.mxu0
  %v8784 = vadd.f32 %v8261, %v8783
  %v8785 = vpop.f32.mrf.mxu0
  %v8786 = vadd.f32 %v8263, %v8785
  %v8787 = vpop.f32.mrf.mxu0
  %v8788 = vadd.f32 %v8265, %v8787
  %v8789 = vpop.f32.mrf.mxu0
  %v8790 = vadd.f32 %v8267, %v8789
  %8791 = vmatprep.mubr.bf16.mxu0 %v4062
  %8792 = vmatmul.mubr.bf16.gmra.mxu0 %v4061
  %v8793 = vpop.f32.mrf.mxu0
  %v8794 = vadd.f32 %v8271, %v8793
  %v8795 = vpop.f32.mrf.mxu0
  %v8796 = vadd.f32 %v8273, %v8795
  %v8797 = vpop.f32.mrf.mxu0
  %v8798 = vadd.f32 %v8275, %v8797
  %v8799 = vpop.f32.mrf.mxu0
  %v8800 = vadd.f32 %v8277, %v8799
  %8801 = vmatprep.mubr.bf16.mxu0 %v4078
  %8802 = vmatmul.mubr.bf16.gmra.mxu0 %v4077
  %v8803 = vpop.f32.mrf.mxu0
  %v8804 = vadd.f32 %v8281, %v8803
  %v8805 = vpop.f32.mrf.mxu0
  %v8806 = vadd.f32 %v8283, %v8805
  %v8807 = vpop.f32.mrf.mxu0
  %v8808 = vadd.f32 %v8285, %v8807
  %v8809 = vpop.f32.mrf.mxu0
  %v8810 = vadd.f32 %v8287, %v8809
  %8811 = vmatprep.mubr.bf16.mxu0 %v4094
  %8812 = vmatmul.mubr.bf16.gmra.mxu0 %v4093
  %v8813 = vpop.f32.mrf.mxu0
  %v8814 = vadd.f32 %v8291, %v8813
  %v8815 = vpop.f32.mrf.mxu0
  %v8816 = vadd.f32 %v8293, %v8815
  %v8817 = vpop.f32.mrf.mxu0
  %v8818 = vadd.f32 %v8295, %v8817
  %v8819 = vpop.f32.mrf.mxu0
  %v8820 = vadd.f32 %v8297, %v8819
  %8821 = vmatprep.mubr.bf16.mxu0 %v4110
  %8822 = vmatmul.mubr.bf16.gmra.mxu0 %v4109
  %v8823 = vpop.f32.mrf.mxu0
  %v8824 = vadd.f32 %v8301, %v8823
  %v8825 = vpop.f32.mrf.mxu0
  %v8826 = vadd.f32 %v8303, %v8825
  %v8827 = vpop.f32.mrf.mxu0
  %v8828 = vadd.f32 %v8305, %v8827
  %v8829 = vpop.f32.mrf.mxu0
  %v8830 = vadd.f32 %v8307, %v8829
  %8831 = vmatprep.mubr.bf16.mxu0 %v4126
  %8832 = vmatmul.mubr.bf16.gmra.mxu0 %v4125
  %v8833 = vpop.f32.mrf.mxu0
  %v8834 = vadd.f32 %v8311, %v8833
  %v8835 = vpop.f32.mrf.mxu0
  %v8836 = vadd.f32 %v8313, %v8835
  %v8837 = vpop.f32.mrf.mxu0
  %v8838 = vadd.f32 %v8315, %v8837
  %v8839 = vpop.f32.mrf.mxu0
  %v8840 = vadd.f32 %v8317, %v8839
  %8841 = vmatprep.mubr.bf16.mxu0 %v4142
  %8842 = vmatmul.mubr.bf16.gmra.mxu0 %v4141
  %v8843 = vpop.f32.mrf.mxu0
  %v8844 = vadd.f32 %v8321, %v8843
  %v8845 = vpop.f32.mrf.mxu0
  %v8846 = vadd.f32 %v8323, %v8845
  %v8847 = vpop.f32.mrf.mxu0
  %v8848 = vadd.f32 %v8325, %v8847
  %v8849 = vpop.f32.mrf.mxu0
  %v8850 = vadd.f32 %v8327, %v8849
  %8851 = vmatprep.mubr.bf16.mxu0 %v4158
  %8852 = vmatmul.mubr.bf16.gmra.mxu0 %v4157
  %v8853 = vpop.f32.mrf.mxu0
  %v8854 = vadd.f32 %v8331, %v8853
  %v8855 = vpop.f32.mrf.mxu0
  %v8856 = vadd.f32 %v8333, %v8855
  %v8857 = vpop.f32.mrf.mxu0
  %v8858 = vadd.f32 %v8335, %v8857
  %v8859 = vpop.f32.mrf.mxu0
  %v8860 = vadd.f32 %v8337, %v8859
  %8861 = vmatprep.mubr.bf16.mxu0 %v4174
  %8862 = vmatmul.mubr.bf16.gmra.mxu0 %v4173
  %v8863 = vpop.f32.mrf.mxu0
  %v8864 = vadd.f32 %v8341, %v8863
  %v8865 = vpop.f32.mrf.mxu0
  %v8866 = vadd.f32 %v8343, %v8865
  %v8867 = vpop.f32.mrf.mxu0
  %v8868 = vadd.f32 %v8345, %v8867
  %v8869 = vpop.f32.mrf.mxu0
  %v8870 = vadd.f32 %v8347, %v8869
  %8871 = vmatprep.mubr.bf16.mxu0 %v4190
  %8872 = vmatmul.mubr.bf16.gmra.mxu0 %v4189
  %v8873 = vpop.f32.mrf.mxu0
  %v8874 = vadd.f32 %v8351, %v8873
  %v8875 = vpop.f32.mrf.mxu0
  %v8876 = vadd.f32 %v8353, %v8875
  %v8877 = vpop.f32.mrf.mxu0
  %v8878 = vadd.f32 %v8355, %v8877
  %v8879 = vpop.f32.mrf.mxu0
  %v8880 = vadd.f32 %v8357, %v8879
  %8881 = vmatprep.mubr.bf16.mxu0 %v4206
  %8882 = vmatmul.mubr.bf16.gmra.mxu0 %v4205
  %v8883 = vpop.f32.mrf.mxu0
  %v8884 = vadd.f32 %v8361, %v8883
  %v8885 = vpop.f32.mrf.mxu0
  %v8886 = vadd.f32 %v8363, %v8885
  %v8887 = vpop.f32.mrf.mxu0
  %v8888 = vadd.f32 %v8365, %v8887
  %v8889 = vpop.f32.mrf.mxu0
  %v8890 = vadd.f32 %v8367, %v8889
  %8891 = vdwg.mxu0
  %8892 = vmatprep.subr.bf16.mxu0 %v5940
  %8893 = vmatpush1.bf16.msra.mxu0 %v5939
  %8894 = vmatprep.subr.bf16.mxu0 %v5938
  %8895 = vmatpush1.bf16.msra.mxu0 %v5937
  %8896 = vmatprep.subr.bf16.mxu0 %v5936
  %8897 = vmatpush1.bf16.msra.mxu0 %v5935
  %8898 = vmatprep.subr.bf16.mxu0 %v5934
  %8899 = vmatpush1.bf16.msra.mxu0 %v5933
  %8900 = vmatprep.subr.bf16.mxu0 %v5932
  %8901 = vmatpush1.bf16.msra.mxu0 %v5931
  %8902 = vmatprep.subr.bf16.mxu0 %v5930
  %8903 = vmatpush1.bf16.msra.mxu0 %v5929
  %8904 = vmatprep.subr.bf16.mxu0 %v5928
  %8905 = vmatpush1.bf16.msra.mxu0 %v5927
  %8906 = vmatprep.subr.bf16.mxu0 %v5926
  %8907 = vmatpush1.bf16.msra.mxu0 %v5925
  %8908 = vmatprep.subr.bf16.mxu0 %v5956
  %8909 = vmatpush2.bf16.msra.mxu0 %v5955
  %8910 = vmatprep.subr.bf16.mxu0 %v5954
  %8911 = vmatpush2.bf16.msra.mxu0 %v5953
  %8912 = vmatprep.subr.bf16.mxu0 %v5952
  %8913 = vmatpush2.bf16.msra.mxu0 %v5951
  %8914 = vmatprep.subr.bf16.mxu0 %v5950
  %8915 = vmatpush2.bf16.msra.mxu0 %v5949
  %8916 = vmatprep.subr.bf16.mxu0 %v5948
  %8917 = vmatpush2.bf16.msra.mxu0 %v5947
  %8918 = vmatprep.subr.bf16.mxu0 %v5946
  %8919 = vmatpush2.bf16.msra.mxu0 %v5945
  %8920 = vmatprep.subr.bf16.mxu0 %v5944
  %8921 = vmatpush2.bf16.msra.mxu0 %v5943
  %8922 = vmatprep.subr.bf16.mxu0 %v5942
  %8923 = vmatpush2.bf16.msra.mxu0 %v5941
  %8924 = vmatprep.mubr.bf16.mxu0 %v3440
  %8925 = vmatmul.mubr.bf16.gmra.mxu0 %v3439
  %v8926 = vpop.f32.mrf.mxu0
  %v8927 = vadd.f32 %v8404, %v8926
  %v8928 = vpop.f32.mrf.mxu0
  %v8929 = vadd.f32 %v8406, %v8928
  %v8930 = vpop.f32.mrf.mxu0
  %v8931 = vadd.f32 %v8408, %v8930
  %v8932 = vpop.f32.mrf.mxu0
  %v8933 = vadd.f32 %v8410, %v8932
  %8934 = vmatprep.mubr.bf16.mxu0 %v3456
  %8935 = vmatmul.mubr.bf16.gmra.mxu0 %v3455
  %v8936 = vpop.f32.mrf.mxu0
  %v8937 = vadd.f32 %v8414, %v8936
  %v8938 = vpop.f32.mrf.mxu0
  %v8939 = vadd.f32 %v8416, %v8938
  %v8940 = vpop.f32.mrf.mxu0
  %v8941 = vadd.f32 %v8418, %v8940
  %v8942 = vpop.f32.mrf.mxu0
  %v8943 = vadd.f32 %v8420, %v8942
  %8944 = vmatprep.mubr.bf16.mxu0 %v3472
  %8945 = vmatmul.mubr.bf16.gmra.mxu0 %v3471
  %v8946 = vpop.f32.mrf.mxu0
  %v8947 = vadd.f32 %v8424, %v8946
  %v8948 = vpop.f32.mrf.mxu0
  %v8949 = vadd.f32 %v8426, %v8948
  %v8950 = vpop.f32.mrf.mxu0
  %v8951 = vadd.f32 %v8428, %v8950
  %v8952 = vpop.f32.mrf.mxu0
  %v8953 = vadd.f32 %v8430, %v8952
  %8954 = vmatprep.mubr.bf16.mxu0 %v3488
  %8955 = vmatmul.mubr.bf16.gmra.mxu0 %v3487
  %v8956 = vpop.f32.mrf.mxu0
  %v8957 = vadd.f32 %v8434, %v8956
  %v8958 = vpop.f32.mrf.mxu0
  %v8959 = vadd.f32 %v8436, %v8958
  %v8960 = vpop.f32.mrf.mxu0
  %v8961 = vadd.f32 %v8438, %v8960
  %v8962 = vpop.f32.mrf.mxu0
  %v8963 = vadd.f32 %v8440, %v8962
  %8964 = vmatprep.mubr.bf16.mxu0 %v3504
  %8965 = vmatmul.mubr.bf16.gmra.mxu0 %v3503
  %v8966 = vpop.f32.mrf.mxu0
  %v8967 = vadd.f32 %v8444, %v8966
  %v8968 = vpop.f32.mrf.mxu0
  %v8969 = vadd.f32 %v8446, %v8968
  %v8970 = vpop.f32.mrf.mxu0
  %v8971 = vadd.f32 %v8448, %v8970
  %v8972 = vpop.f32.mrf.mxu0
  %v8973 = vadd.f32 %v8450, %v8972
  %8974 = vmatprep.mubr.bf16.mxu0 %v3520
  %8975 = vmatmul.mubr.bf16.gmra.mxu0 %v3519
  %v8976 = vpop.f32.mrf.mxu0
  %v8977 = vadd.f32 %v8454, %v8976
  %v8978 = vpop.f32.mrf.mxu0
  %v8979 = vadd.f32 %v8456, %v8978
  %v8980 = vpop.f32.mrf.mxu0
  %v8981 = vadd.f32 %v8458, %v8980
  %v8982 = vpop.f32.mrf.mxu0
  %v8983 = vadd.f32 %v8460, %v8982
  %8984 = vmatprep.mubr.bf16.mxu0 %v3536
  %8985 = vmatmul.mubr.bf16.gmra.mxu0 %v3535
  %v8986 = vpop.f32.mrf.mxu0
  %v8987 = vadd.f32 %v8464, %v8986
  %v8988 = vpop.f32.mrf.mxu0
  %v8989 = vadd.f32 %v8466, %v8988
  %v8990 = vpop.f32.mrf.mxu0
  %v8991 = vadd.f32 %v8468, %v8990
  %v8992 = vpop.f32.mrf.mxu0
  %v8993 = vadd.f32 %v8470, %v8992
  %8994 = vmatprep.mubr.bf16.mxu0 %v3552
  %8995 = vmatmul.mubr.bf16.gmra.mxu0 %v3551
  %v8996 = vpop.f32.mrf.mxu0
  %v8997 = vadd.f32 %v8474, %v8996
  %v8998 = vpop.f32.mrf.mxu0
  %v8999 = vadd.f32 %v8476, %v8998
  %v9000 = vpop.f32.mrf.mxu0
  %v9001 = vadd.f32 %v8478, %v9000
  %v9002 = vpop.f32.mrf.mxu0
  %v9003 = vadd.f32 %v8480, %v9002
  %9004 = vmatprep.mubr.bf16.mxu0 %v3568
  %9005 = vmatmul.mubr.bf16.gmra.mxu0 %v3567
  %v9006 = vpop.f32.mrf.mxu0
  %v9007 = vadd.f32 %v8484, %v9006
  %v9008 = vpop.f32.mrf.mxu0
  %v9009 = vadd.f32 %v8486, %v9008
  %v9010 = vpop.f32.mrf.mxu0
  %v9011 = vadd.f32 %v8488, %v9010
  %v9012 = vpop.f32.mrf.mxu0
  %v9013 = vadd.f32 %v8490, %v9012
  %9014 = vmatprep.mubr.bf16.mxu0 %v3584
  %9015 = vmatmul.mubr.bf16.gmra.mxu0 %v3583
  %v9016 = vpop.f32.mrf.mxu0
  %v9017 = vadd.f32 %v8494, %v9016
  %v9018 = vpop.f32.mrf.mxu0
  %v9019 = vadd.f32 %v8496, %v9018
  %v9020 = vpop.f32.mrf.mxu0
  %v9021 = vadd.f32 %v8498, %v9020
  %v9022 = vpop.f32.mrf.mxu0
  %v9023 = vadd.f32 %v8500, %v9022
  %9024 = vmatprep.mubr.bf16.mxu0 %v3600
  %9025 = vmatmul.mubr.bf16.gmra.mxu0 %v3599
  %v9026 = vpop.f32.mrf.mxu0
  %v9027 = vadd.f32 %v8504, %v9026
  %v9028 = vpop.f32.mrf.mxu0
  %v9029 = vadd.f32 %v8506, %v9028
  %v9030 = vpop.f32.mrf.mxu0
  %v9031 = vadd.f32 %v8508, %v9030
  %v9032 = vpop.f32.mrf.mxu0
  %v9033 = vadd.f32 %v8510, %v9032
  %9034 = vmatprep.mubr.bf16.mxu0 %v3616
  %9035 = vmatmul.mubr.bf16.gmra.mxu0 %v3615
  %v9036 = vpop.f32.mrf.mxu0
  %v9037 = vadd.f32 %v8514, %v9036
  %v9038 = vpop.f32.mrf.mxu0
  %v9039 = vadd.f32 %v8516, %v9038
  %v9040 = vpop.f32.mrf.mxu0
  %v9041 = vadd.f32 %v8518, %v9040
  %v9042 = vpop.f32.mrf.mxu0
  %v9043 = vadd.f32 %v8520, %v9042
  %9044 = vmatprep.mubr.bf16.mxu0 %v3632
  %9045 = vmatmul.mubr.bf16.gmra.mxu0 %v3631
  %v9046 = vpop.f32.mrf.mxu0
  %v9047 = vadd.f32 %v8524, %v9046
  %v9048 = vpop.f32.mrf.mxu0
  %v9049 = vadd.f32 %v8526, %v9048
  %v9050 = vpop.f32.mrf.mxu0
  %v9051 = vadd.f32 %v8528, %v9050
  %v9052 = vpop.f32.mrf.mxu0
  %v9053 = vadd.f32 %v8530, %v9052
  %9054 = vmatprep.mubr.bf16.mxu0 %v3648
  %9055 = vmatmul.mubr.bf16.gmra.mxu0 %v3647
  %v9056 = vpop.f32.mrf.mxu0
  %v9057 = vadd.f32 %v8534, %v9056
  %v9058 = vpop.f32.mrf.mxu0
  %v9059 = vadd.f32 %v8536, %v9058
  %v9060 = vpop.f32.mrf.mxu0
  %v9061 = vadd.f32 %v8538, %v9060
  %v9062 = vpop.f32.mrf.mxu0
  %v9063 = vadd.f32 %v8540, %v9062
  %9064 = vmatprep.mubr.bf16.mxu0 %v3664
  %9065 = vmatmul.mubr.bf16.gmra.mxu0 %v3663
  %v9066 = vpop.f32.mrf.mxu0
  %v9067 = vadd.f32 %v8544, %v9066
  %v9068 = vpop.f32.mrf.mxu0
  %v9069 = vadd.f32 %v8546, %v9068
  %v9070 = vpop.f32.mrf.mxu0
  %v9071 = vadd.f32 %v8548, %v9070
  %v9072 = vpop.f32.mrf.mxu0
  %v9073 = vadd.f32 %v8550, %v9072
  %9074 = vmatprep.mubr.bf16.mxu0 %v3680
  %9075 = vmatmul.mubr.bf16.gmra.mxu0 %v3679
  %v9076 = vpop.f32.mrf.mxu0
  %v9077 = vadd.f32 %v8554, %v9076
  %v9078 = vpop.f32.mrf.mxu0
  %v9079 = vadd.f32 %v8556, %v9078
  %v9080 = vpop.f32.mrf.mxu0
  %v9081 = vadd.f32 %v8558, %v9080
  %v9082 = vpop.f32.mrf.mxu0
  %v9083 = vadd.f32 %v8560, %v9082
  %9084 = vmatprep.mubr.bf16.mxu0 %v3696
  %9085 = vmatmul.mubr.bf16.gmra.mxu0 %v3695
  %v9086 = vpop.f32.mrf.mxu0
  %v9087 = vadd.f32 %v8564, %v9086
  %v9088 = vpop.f32.mrf.mxu0
  %v9089 = vadd.f32 %v8566, %v9088
  %v9090 = vpop.f32.mrf.mxu0
  %v9091 = vadd.f32 %v8568, %v9090
  %v9092 = vpop.f32.mrf.mxu0
  %v9093 = vadd.f32 %v8570, %v9092
  %9094 = vmatprep.mubr.bf16.mxu0 %v3712
  %9095 = vmatmul.mubr.bf16.gmra.mxu0 %v3711
  %v9096 = vpop.f32.mrf.mxu0
  %v9097 = vadd.f32 %v8574, %v9096
  %v9098 = vpop.f32.mrf.mxu0
  %v9099 = vadd.f32 %v8576, %v9098
  %v9100 = vpop.f32.mrf.mxu0
  %v9101 = vadd.f32 %v8578, %v9100
  %v9102 = vpop.f32.mrf.mxu0
  %v9103 = vadd.f32 %v8580, %v9102
  %9104 = vmatprep.mubr.bf16.mxu0 %v3728
  %9105 = vmatmul.mubr.bf16.gmra.mxu0 %v3727
  %v9106 = vpop.f32.mrf.mxu0
  %v9107 = vadd.f32 %v8584, %v9106
  %v9108 = vpop.f32.mrf.mxu0
  %v9109 = vadd.f32 %v8586, %v9108
  %v9110 = vpop.f32.mrf.mxu0
  %v9111 = vadd.f32 %v8588, %v9110
  %v9112 = vpop.f32.mrf.mxu0
  %v9113 = vadd.f32 %v8590, %v9112
  %9114 = vmatprep.mubr.bf16.mxu0 %v3744
  %9115 = vmatmul.mubr.bf16.gmra.mxu0 %v3743
  %v9116 = vpop.f32.mrf.mxu0
  %v9117 = vadd.f32 %v8594, %v9116
  %v9118 = vpop.f32.mrf.mxu0
  %v9119 = vadd.f32 %v8596, %v9118
  %v9120 = vpop.f32.mrf.mxu0
  %v9121 = vadd.f32 %v8598, %v9120
  %v9122 = vpop.f32.mrf.mxu0
  %v9123 = vadd.f32 %v8600, %v9122
  %9124 = vmatprep.mubr.bf16.mxu0 %v3760
  %9125 = vmatmul.mubr.bf16.gmra.mxu0 %v3759
  %v9126 = vpop.f32.mrf.mxu0
  %v9127 = vadd.f32 %v8604, %v9126
  %v9128 = vpop.f32.mrf.mxu0
  %v9129 = vadd.f32 %v8606, %v9128
  %v9130 = vpop.f32.mrf.mxu0
  %v9131 = vadd.f32 %v8608, %v9130
  %v9132 = vpop.f32.mrf.mxu0
  %v9133 = vadd.f32 %v8610, %v9132
  %9134 = vmatprep.mubr.bf16.mxu0 %v3776
  %9135 = vmatmul.mubr.bf16.gmra.mxu0 %v3775
  %v9136 = vpop.f32.mrf.mxu0
  %v9137 = vadd.f32 %v8614, %v9136
  %v9138 = vpop.f32.mrf.mxu0
  %v9139 = vadd.f32 %v8616, %v9138
  %v9140 = vpop.f32.mrf.mxu0
  %v9141 = vadd.f32 %v8618, %v9140
  %v9142 = vpop.f32.mrf.mxu0
  %v9143 = vadd.f32 %v8620, %v9142
  %9144 = vmatprep.mubr.bf16.mxu0 %v3792
  %9145 = vmatmul.mubr.bf16.gmra.mxu0 %v3791
  %v9146 = vpop.f32.mrf.mxu0
  %v9147 = vadd.f32 %v8624, %v9146
  %v9148 = vpop.f32.mrf.mxu0
  %v9149 = vadd.f32 %v8626, %v9148
  %v9150 = vpop.f32.mrf.mxu0
  %v9151 = vadd.f32 %v8628, %v9150
  %v9152 = vpop.f32.mrf.mxu0
  %v9153 = vadd.f32 %v8630, %v9152
  %9154 = vmatprep.mubr.bf16.mxu0 %v3808
  %9155 = vmatmul.mubr.bf16.gmra.mxu0 %v3807
  %v9156 = vpop.f32.mrf.mxu0
  %v9157 = vadd.f32 %v8634, %v9156
  %v9158 = vpop.f32.mrf.mxu0
  %v9159 = vadd.f32 %v8636, %v9158
  %v9160 = vpop.f32.mrf.mxu0
  %v9161 = vadd.f32 %v8638, %v9160
  %v9162 = vpop.f32.mrf.mxu0
  %v9163 = vadd.f32 %v8640, %v9162
  %9164 = vmatprep.mubr.bf16.mxu0 %v3824
  %9165 = vmatmul.mubr.bf16.gmra.mxu0 %v3823
  %v9166 = vpop.f32.mrf.mxu0
  %v9167 = vadd.f32 %v8644, %v9166
  %v9168 = vpop.f32.mrf.mxu0
  %v9169 = vadd.f32 %v8646, %v9168
  %v9170 = vpop.f32.mrf.mxu0
  %v9171 = vadd.f32 %v8648, %v9170
  %v9172 = vpop.f32.mrf.mxu0
  %v9173 = vadd.f32 %v8650, %v9172
  %9174 = vmatprep.mubr.bf16.mxu0 %v3840
  %9175 = vmatmul.mubr.bf16.gmra.mxu0 %v3839
  %v9176 = vpop.f32.mrf.mxu0
  %v9177 = vadd.f32 %v8654, %v9176
  %v9178 = vpop.f32.mrf.mxu0
  %v9179 = vadd.f32 %v8656, %v9178
  %v9180 = vpop.f32.mrf.mxu0
  %v9181 = vadd.f32 %v8658, %v9180
  %v9182 = vpop.f32.mrf.mxu0
  %v9183 = vadd.f32 %v8660, %v9182
  %9184 = vmatprep.mubr.bf16.mxu0 %v3856
  %9185 = vmatmul.mubr.bf16.gmra.mxu0 %v3855
  %v9186 = vpop.f32.mrf.mxu0
  %v9187 = vadd.f32 %v8664, %v9186
  %v9188 = vpop.f32.mrf.mxu0
  %v9189 = vadd.f32 %v8666, %v9188
  %v9190 = vpop.f32.mrf.mxu0
  %v9191 = vadd.f32 %v8668, %v9190
  %v9192 = vpop.f32.mrf.mxu0
  %v9193 = vadd.f32 %v8670, %v9192
  %9194 = vmatprep.mubr.bf16.mxu0 %v3872
  %9195 = vmatmul.mubr.bf16.gmra.mxu0 %v3871
  %v9196 = vpop.f32.mrf.mxu0
  %v9197 = vadd.f32 %v8674, %v9196
  %v9198 = vpop.f32.mrf.mxu0
  %v9199 = vadd.f32 %v8676, %v9198
  %v9200 = vpop.f32.mrf.mxu0
  %v9201 = vadd.f32 %v8678, %v9200
  %v9202 = vpop.f32.mrf.mxu0
  %v9203 = vadd.f32 %v8680, %v9202
  %9204 = vmatprep.mubr.bf16.mxu0 %v3888
  %9205 = vmatmul.mubr.bf16.gmra.mxu0 %v3887
  %v9206 = vpop.f32.mrf.mxu0
  %v9207 = vadd.f32 %v8684, %v9206
  %v9208 = vpop.f32.mrf.mxu0
  %v9209 = vadd.f32 %v8686, %v9208
  %v9210 = vpop.f32.mrf.mxu0
  %v9211 = vadd.f32 %v8688, %v9210
  %v9212 = vpop.f32.mrf.mxu0
  %v9213 = vadd.f32 %v8690, %v9212
  %9214 = vmatprep.mubr.bf16.mxu0 %v3904
  %9215 = vmatmul.mubr.bf16.gmra.mxu0 %v3903
  %v9216 = vpop.f32.mrf.mxu0
  %v9217 = vadd.f32 %v8694, %v9216
  %v9218 = vpop.f32.mrf.mxu0
  %v9219 = vadd.f32 %v8696, %v9218
  %v9220 = vpop.f32.mrf.mxu0
  %v9221 = vadd.f32 %v8698, %v9220
  %v9222 = vpop.f32.mrf.mxu0
  %v9223 = vadd.f32 %v8700, %v9222
  %9224 = vmatprep.mubr.bf16.mxu0 %v3920
  %9225 = vmatmul.mubr.bf16.gmra.mxu0 %v3919
  %v9226 = vpop.f32.mrf.mxu0
  %v9227 = vadd.f32 %v8704, %v9226
  %v9228 = vpop.f32.mrf.mxu0
  %v9229 = vadd.f32 %v8706, %v9228
  %v9230 = vpop.f32.mrf.mxu0
  %v9231 = vadd.f32 %v8708, %v9230
  %v9232 = vpop.f32.mrf.mxu0
  %v9233 = vadd.f32 %v8710, %v9232
  %9234 = vmatprep.mubr.bf16.mxu0 %v3936
  %9235 = vmatmul.mubr.bf16.gmra.mxu0 %v3935
  %v9236 = vpop.f32.mrf.mxu0
  %v9237 = vadd.f32 %v8714, %v9236
  %v9238 = vpop.f32.mrf.mxu0
  %v9239 = vadd.f32 %v8716, %v9238
  %v9240 = vpop.f32.mrf.mxu0
  %v9241 = vadd.f32 %v8718, %v9240
  %v9242 = vpop.f32.mrf.mxu0
  %v9243 = vadd.f32 %v8720, %v9242
  %9244 = vmatprep.mubr.bf16.mxu0 %v3952
  %9245 = vmatmul.mubr.bf16.gmra.mxu0 %v3951
  %v9246 = vpop.f32.mrf.mxu0
  %v9247 = vadd.f32 %v8724, %v9246
  %v9248 = vpop.f32.mrf.mxu0
  %v9249 = vadd.f32 %v8726, %v9248
  %v9250 = vpop.f32.mrf.mxu0
  %v9251 = vadd.f32 %v8728, %v9250
  %v9252 = vpop.f32.mrf.mxu0
  %v9253 = vadd.f32 %v8730, %v9252
  %9254 = vmatprep.mubr.bf16.mxu0 %v3968
  %9255 = vmatmul.mubr.bf16.gmra.mxu0 %v3967
  %v9256 = vpop.f32.mrf.mxu0
  %v9257 = vadd.f32 %v8734, %v9256
  %v9258 = vpop.f32.mrf.mxu0
  %v9259 = vadd.f32 %v8736, %v9258
  %v9260 = vpop.f32.mrf.mxu0
  %v9261 = vadd.f32 %v8738, %v9260
  %v9262 = vpop.f32.mrf.mxu0
  %v9263 = vadd.f32 %v8740, %v9262
  %9264 = vmatprep.mubr.bf16.mxu0 %v3984
  %9265 = vmatmul.mubr.bf16.gmra.mxu0 %v3983
  %v9266 = vpop.f32.mrf.mxu0
  %v9267 = vadd.f32 %v8744, %v9266
  %v9268 = vpop.f32.mrf.mxu0
  %v9269 = vadd.f32 %v8746, %v9268
  %v9270 = vpop.f32.mrf.mxu0
  %v9271 = vadd.f32 %v8748, %v9270
  %v9272 = vpop.f32.mrf.mxu0
  %v9273 = vadd.f32 %v8750, %v9272
  %9274 = vmatprep.mubr.bf16.mxu0 %v4000
  %9275 = vmatmul.mubr.bf16.gmra.mxu0 %v3999
  %v9276 = vpop.f32.mrf.mxu0
  %v9277 = vadd.f32 %v8754, %v9276
  %v9278 = vpop.f32.mrf.mxu0
  %v9279 = vadd.f32 %v8756, %v9278
  %v9280 = vpop.f32.mrf.mxu0
  %v9281 = vadd.f32 %v8758, %v9280
  %v9282 = vpop.f32.mrf.mxu0
  %v9283 = vadd.f32 %v8760, %v9282
  %9284 = vmatprep.mubr.bf16.mxu0 %v4016
  %9285 = vmatmul.mubr.bf16.gmra.mxu0 %v4015
  %v9286 = vpop.f32.mrf.mxu0
  %v9287 = vadd.f32 %v8764, %v9286
  %v9288 = vpop.f32.mrf.mxu0
  %v9289 = vadd.f32 %v8766, %v9288
  %v9290 = vpop.f32.mrf.mxu0
  %v9291 = vadd.f32 %v8768, %v9290
  %v9292 = vpop.f32.mrf.mxu0
  %v9293 = vadd.f32 %v8770, %v9292
  %9294 = vmatprep.mubr.bf16.mxu0 %v4032
  %9295 = vmatmul.mubr.bf16.gmra.mxu0 %v4031
  %v9296 = vpop.f32.mrf.mxu0
  %v9297 = vadd.f32 %v8774, %v9296
  %v9298 = vpop.f32.mrf.mxu0
  %v9299 = vadd.f32 %v8776, %v9298
  %v9300 = vpop.f32.mrf.mxu0
  %v9301 = vadd.f32 %v8778, %v9300
  %v9302 = vpop.f32.mrf.mxu0
  %v9303 = vadd.f32 %v8780, %v9302
  %9304 = vmatprep.mubr.bf16.mxu0 %v4048
  %9305 = vmatmul.mubr.bf16.gmra.mxu0 %v4047
  %v9306 = vpop.f32.mrf.mxu0
  %v9307 = vadd.f32 %v8784, %v9306
  %v9308 = vpop.f32.mrf.mxu0
  %v9309 = vadd.f32 %v8786, %v9308
  %v9310 = vpop.f32.mrf.mxu0
  %v9311 = vadd.f32 %v8788, %v9310
  %v9312 = vpop.f32.mrf.mxu0
  %v9313 = vadd.f32 %v8790, %v9312
  %9314 = vmatprep.mubr.bf16.mxu0 %v4064
  %9315 = vmatmul.mubr.bf16.gmra.mxu0 %v4063
  %v9316 = vpop.f32.mrf.mxu0
  %v9317 = vadd.f32 %v8794, %v9316
  %v9318 = vpop.f32.mrf.mxu0
  %v9319 = vadd.f32 %v8796, %v9318
  %v9320 = vpop.f32.mrf.mxu0
  %v9321 = vadd.f32 %v8798, %v9320
  %v9322 = vpop.f32.mrf.mxu0
  %v9323 = vadd.f32 %v8800, %v9322
  %9324 = vmatprep.mubr.bf16.mxu0 %v4080
  %9325 = vmatmul.mubr.bf16.gmra.mxu0 %v4079
  %v9326 = vpop.f32.mrf.mxu0
  %v9327 = vadd.f32 %v8804, %v9326
  %v9328 = vpop.f32.mrf.mxu0
  %v9329 = vadd.f32 %v8806, %v9328
  %v9330 = vpop.f32.mrf.mxu0
  %v9331 = vadd.f32 %v8808, %v9330
  %v9332 = vpop.f32.mrf.mxu0
  %v9333 = vadd.f32 %v8810, %v9332
  %9334 = vmatprep.mubr.bf16.mxu0 %v4096
  %9335 = vmatmul.mubr.bf16.gmra.mxu0 %v4095
  %v9336 = vpop.f32.mrf.mxu0
  %v9337 = vadd.f32 %v8814, %v9336
  %v9338 = vpop.f32.mrf.mxu0
  %v9339 = vadd.f32 %v8816, %v9338
  %v9340 = vpop.f32.mrf.mxu0
  %v9341 = vadd.f32 %v8818, %v9340
  %v9342 = vpop.f32.mrf.mxu0
  %v9343 = vadd.f32 %v8820, %v9342
  %9344 = vmatprep.mubr.bf16.mxu0 %v4112
  %9345 = vmatmul.mubr.bf16.gmra.mxu0 %v4111
  %v9346 = vpop.f32.mrf.mxu0
  %v9347 = vadd.f32 %v8824, %v9346
  %v9348 = vpop.f32.mrf.mxu0
  %v9349 = vadd.f32 %v8826, %v9348
  %v9350 = vpop.f32.mrf.mxu0
  %v9351 = vadd.f32 %v8828, %v9350
  %v9352 = vpop.f32.mrf.mxu0
  %v9353 = vadd.f32 %v8830, %v9352
  %9354 = vmatprep.mubr.bf16.mxu0 %v4128
  %9355 = vmatmul.mubr.bf16.gmra.mxu0 %v4127
  %v9356 = vpop.f32.mrf.mxu0
  %v9357 = vadd.f32 %v8834, %v9356
  %v9358 = vpop.f32.mrf.mxu0
  %v9359 = vadd.f32 %v8836, %v9358
  %v9360 = vpop.f32.mrf.mxu0
  %v9361 = vadd.f32 %v8838, %v9360
  %v9362 = vpop.f32.mrf.mxu0
  %v9363 = vadd.f32 %v8840, %v9362
  %9364 = vmatprep.mubr.bf16.mxu0 %v4144
  %9365 = vmatmul.mubr.bf16.gmra.mxu0 %v4143
  %v9366 = vpop.f32.mrf.mxu0
  %v9367 = vadd.f32 %v8844, %v9366
  %v9368 = vpop.f32.mrf.mxu0
  %v9369 = vadd.f32 %v8846, %v9368
  %v9370 = vpop.f32.mrf.mxu0
  %v9371 = vadd.f32 %v8848, %v9370
  %v9372 = vpop.f32.mrf.mxu0
  %v9373 = vadd.f32 %v8850, %v9372
  %9374 = vmatprep.mubr.bf16.mxu0 %v4160
  %9375 = vmatmul.mubr.bf16.gmra.mxu0 %v4159
  %v9376 = vpop.f32.mrf.mxu0
  %v9377 = vadd.f32 %v8854, %v9376
  %v9378 = vpop.f32.mrf.mxu0
  %v9379 = vadd.f32 %v8856, %v9378
  %v9380 = vpop.f32.mrf.mxu0
  %v9381 = vadd.f32 %v8858, %v9380
  %v9382 = vpop.f32.mrf.mxu0
  %v9383 = vadd.f32 %v8860, %v9382
  %9384 = vmatprep.mubr.bf16.mxu0 %v4176
  %9385 = vmatmul.mubr.bf16.gmra.mxu0 %v4175
  %v9386 = vpop.f32.mrf.mxu0
  %v9387 = vadd.f32 %v8864, %v9386
  %v9388 = vpop.f32.mrf.mxu0
  %v9389 = vadd.f32 %v8866, %v9388
  %v9390 = vpop.f32.mrf.mxu0
  %v9391 = vadd.f32 %v8868, %v9390
  %v9392 = vpop.f32.mrf.mxu0
  %v9393 = vadd.f32 %v8870, %v9392
  %9394 = vmatprep.mubr.bf16.mxu0 %v4192
  %9395 = vmatmul.mubr.bf16.gmra.mxu0 %v4191
  %v9396 = vpop.f32.mrf.mxu0
  %v9397 = vadd.f32 %v8874, %v9396
  %v9398 = vpop.f32.mrf.mxu0
  %v9399 = vadd.f32 %v8876, %v9398
  %v9400 = vpop.f32.mrf.mxu0
  %v9401 = vadd.f32 %v8878, %v9400
  %v9402 = vpop.f32.mrf.mxu0
  %v9403 = vadd.f32 %v8880, %v9402
  %9404 = vmatprep.mubr.bf16.mxu0 %v4208
  %9405 = vmatmul.mubr.bf16.gmra.mxu0 %v4207
  %v9406 = vpop.f32.mrf.mxu0
  %v9407 = vadd.f32 %v8884, %v9406
  %v9408 = vpop.f32.mrf.mxu0
  %v9409 = vadd.f32 %v8886, %v9408
  %v9410 = vpop.f32.mrf.mxu0
  %v9411 = vadd.f32 %v8888, %v9410
  %v9412 = vpop.f32.mrf.mxu0
  %v9413 = vadd.f32 %v8890, %v9412
  %9414 = vdwg.mxu0
  %9415 = vmatprep.subr.bf16.mxu0 %v5972
  %9416 = vmatpush1.bf16.msra.mxu0 %v5971
  %9417 = vmatprep.subr.bf16.mxu0 %v5970
  %9418 = vmatpush1.bf16.msra.mxu0 %v5969
  %9419 = vmatprep.subr.bf16.mxu0 %v5968
  %9420 = vmatpush1.bf16.msra.mxu0 %v5967
  %9421 = vmatprep.subr.bf16.mxu0 %v5966
  %9422 = vmatpush1.bf16.msra.mxu0 %v5965
  %9423 = vmatprep.subr.bf16.mxu0 %v5964
  %9424 = vmatpush1.bf16.msra.mxu0 %v5963
  %9425 = vmatprep.subr.bf16.mxu0 %v5962
  %9426 = vmatpush1.bf16.msra.mxu0 %v5961
  %9427 = vmatprep.subr.bf16.mxu0 %v5960
  %9428 = vmatpush1.bf16.msra.mxu0 %v5959
  %9429 = vmatprep.subr.bf16.mxu0 %v5958
  %9430 = vmatpush1.bf16.msra.mxu0 %v5957
  %9431 = vmatprep.subr.bf16.mxu0 %v5988
  %9432 = vmatpush2.bf16.msra.mxu0 %v5987
  %9433 = vmatprep.subr.bf16.mxu0 %v5986
  %9434 = vmatpush2.bf16.msra.mxu0 %v5985
  %9435 = vmatprep.subr.bf16.mxu0 %v5984
  %9436 = vmatpush2.bf16.msra.mxu0 %v5983
  %9437 = vmatprep.subr.bf16.mxu0 %v5982
  %9438 = vmatpush2.bf16.msra.mxu0 %v5981
  %9439 = vmatprep.subr.bf16.mxu0 %v5980
  %9440 = vmatpush2.bf16.msra.mxu0 %v5979
  %9441 = vmatprep.subr.bf16.mxu0 %v5978
  %9442 = vmatpush2.bf16.msra.mxu0 %v5977
  %9443 = vmatprep.subr.bf16.mxu0 %v5976
  %9444 = vmatpush2.bf16.msra.mxu0 %v5975
  %9445 = vmatprep.subr.bf16.mxu0 %v5974
  %9446 = vmatpush2.bf16.msra.mxu0 %v5973
  %9447 = vmatprep.mubr.bf16.mxu0 %v3442
  %9448 = vmatmul.mubr.bf16.gmra.mxu0 %v3441
  %v9449 = vpop.f32.mrf.mxu0
  %v9450 = vadd.f32 %v8927, %v9449
  %v9451 = vpop.f32.mrf.mxu0
  %v9452 = vadd.f32 %v8929, %v9451
  %v9453 = vpop.f32.mrf.mxu0
  %v9454 = vadd.f32 %v8931, %v9453
  %v9455 = vpop.f32.mrf.mxu0
  %v9456 = vadd.f32 %v8933, %v9455
  %9457 = vmatprep.mubr.bf16.mxu0 %v3458
  %9458 = vmatmul.mubr.bf16.gmra.mxu0 %v3457
  %v9459 = vpop.f32.mrf.mxu0
  %v9460 = vadd.f32 %v8937, %v9459
  %v9461 = vpop.f32.mrf.mxu0
  %v9462 = vadd.f32 %v8939, %v9461
  %v9463 = vpop.f32.mrf.mxu0
  %v9464 = vadd.f32 %v8941, %v9463
  %v9465 = vpop.f32.mrf.mxu0
  %v9466 = vadd.f32 %v8943, %v9465
  %9467 = vmatprep.mubr.bf16.mxu0 %v3474
  %9468 = vmatmul.mubr.bf16.gmra.mxu0 %v3473
  %v9469 = vpop.f32.mrf.mxu0
  %v9470 = vadd.f32 %v8947, %v9469
  %v9471 = vpop.f32.mrf.mxu0
  %v9472 = vadd.f32 %v8949, %v9471
  %v9473 = vpop.f32.mrf.mxu0
  %v9474 = vadd.f32 %v8951, %v9473
  %v9475 = vpop.f32.mrf.mxu0
  %v9476 = vadd.f32 %v8953, %v9475
  %9477 = vmatprep.mubr.bf16.mxu0 %v3490
  %9478 = vmatmul.mubr.bf16.gmra.mxu0 %v3489
  %v9479 = vpop.f32.mrf.mxu0
  %v9480 = vadd.f32 %v8957, %v9479
  %v9481 = vpop.f32.mrf.mxu0
  %v9482 = vadd.f32 %v8959, %v9481
  %v9483 = vpop.f32.mrf.mxu0
  %v9484 = vadd.f32 %v8961, %v9483
  %v9485 = vpop.f32.mrf.mxu0
  %v9486 = vadd.f32 %v8963, %v9485
  %9487 = vmatprep.mubr.bf16.mxu0 %v3506
  %9488 = vmatmul.mubr.bf16.gmra.mxu0 %v3505
  %v9489 = vpop.f32.mrf.mxu0
  %v9490 = vadd.f32 %v8967, %v9489
  %v9491 = vpop.f32.mrf.mxu0
  %v9492 = vadd.f32 %v8969, %v9491
  %v9493 = vpop.f32.mrf.mxu0
  %v9494 = vadd.f32 %v8971, %v9493
  %v9495 = vpop.f32.mrf.mxu0
  %v9496 = vadd.f32 %v8973, %v9495
  %9497 = vmatprep.mubr.bf16.mxu0 %v3522
  %9498 = vmatmul.mubr.bf16.gmra.mxu0 %v3521
  %v9499 = vpop.f32.mrf.mxu0
  %v9500 = vadd.f32 %v8977, %v9499
  %v9501 = vpop.f32.mrf.mxu0
  %v9502 = vadd.f32 %v8979, %v9501
  %v9503 = vpop.f32.mrf.mxu0
  %v9504 = vadd.f32 %v8981, %v9503
  %v9505 = vpop.f32.mrf.mxu0
  %v9506 = vadd.f32 %v8983, %v9505
  %9507 = vmatprep.mubr.bf16.mxu0 %v3538
  %9508 = vmatmul.mubr.bf16.gmra.mxu0 %v3537
  %v9509 = vpop.f32.mrf.mxu0
  %v9510 = vadd.f32 %v8987, %v9509
  %v9511 = vpop.f32.mrf.mxu0
  %v9512 = vadd.f32 %v8989, %v9511
  %v9513 = vpop.f32.mrf.mxu0
  %v9514 = vadd.f32 %v8991, %v9513
  %v9515 = vpop.f32.mrf.mxu0
  %v9516 = vadd.f32 %v8993, %v9515
  %9517 = vmatprep.mubr.bf16.mxu0 %v3554
  %9518 = vmatmul.mubr.bf16.gmra.mxu0 %v3553
  %v9519 = vpop.f32.mrf.mxu0
  %v9520 = vadd.f32 %v8997, %v9519
  %v9521 = vpop.f32.mrf.mxu0
  %v9522 = vadd.f32 %v8999, %v9521
  %v9523 = vpop.f32.mrf.mxu0
  %v9524 = vadd.f32 %v9001, %v9523
  %v9525 = vpop.f32.mrf.mxu0
  %v9526 = vadd.f32 %v9003, %v9525
  %9527 = vmatprep.mubr.bf16.mxu0 %v3570
  %9528 = vmatmul.mubr.bf16.gmra.mxu0 %v3569
  %v9529 = vpop.f32.mrf.mxu0
  %v9530 = vadd.f32 %v9007, %v9529
  %v9531 = vpop.f32.mrf.mxu0
  %v9532 = vadd.f32 %v9009, %v9531
  %v9533 = vpop.f32.mrf.mxu0
  %v9534 = vadd.f32 %v9011, %v9533
  %v9535 = vpop.f32.mrf.mxu0
  %v9536 = vadd.f32 %v9013, %v9535
  %9537 = vmatprep.mubr.bf16.mxu0 %v3586
  %9538 = vmatmul.mubr.bf16.gmra.mxu0 %v3585
  %v9539 = vpop.f32.mrf.mxu0
  %v9540 = vadd.f32 %v9017, %v9539
  %v9541 = vpop.f32.mrf.mxu0
  %v9542 = vadd.f32 %v9019, %v9541
  %v9543 = vpop.f32.mrf.mxu0
  %v9544 = vadd.f32 %v9021, %v9543
  %v9545 = vpop.f32.mrf.mxu0
  %v9546 = vadd.f32 %v9023, %v9545
  %9547 = vmatprep.mubr.bf16.mxu0 %v3602
  %9548 = vmatmul.mubr.bf16.gmra.mxu0 %v3601
  %v9549 = vpop.f32.mrf.mxu0
  %v9550 = vadd.f32 %v9027, %v9549
  %v9551 = vpop.f32.mrf.mxu0
  %v9552 = vadd.f32 %v9029, %v9551
  %v9553 = vpop.f32.mrf.mxu0
  %v9554 = vadd.f32 %v9031, %v9553
  %v9555 = vpop.f32.mrf.mxu0
  %v9556 = vadd.f32 %v9033, %v9555
  %9557 = vmatprep.mubr.bf16.mxu0 %v3618
  %9558 = vmatmul.mubr.bf16.gmra.mxu0 %v3617
  %v9559 = vpop.f32.mrf.mxu0
  %v9560 = vadd.f32 %v9037, %v9559
  %v9561 = vpop.f32.mrf.mxu0
  %v9562 = vadd.f32 %v9039, %v9561
  %v9563 = vpop.f32.mrf.mxu0
  %v9564 = vadd.f32 %v9041, %v9563
  %v9565 = vpop.f32.mrf.mxu0
  %v9566 = vadd.f32 %v9043, %v9565
  %9567 = vmatprep.mubr.bf16.mxu0 %v3634
  %9568 = vmatmul.mubr.bf16.gmra.mxu0 %v3633
  %v9569 = vpop.f32.mrf.mxu0
  %v9570 = vadd.f32 %v9047, %v9569
  %v9571 = vpop.f32.mrf.mxu0
  %v9572 = vadd.f32 %v9049, %v9571
  %v9573 = vpop.f32.mrf.mxu0
  %v9574 = vadd.f32 %v9051, %v9573
  %v9575 = vpop.f32.mrf.mxu0
  %v9576 = vadd.f32 %v9053, %v9575
  %9577 = vmatprep.mubr.bf16.mxu0 %v3650
  %9578 = vmatmul.mubr.bf16.gmra.mxu0 %v3649
  %v9579 = vpop.f32.mrf.mxu0
  %v9580 = vadd.f32 %v9057, %v9579
  %v9581 = vpop.f32.mrf.mxu0
  %v9582 = vadd.f32 %v9059, %v9581
  %v9583 = vpop.f32.mrf.mxu0
  %v9584 = vadd.f32 %v9061, %v9583
  %v9585 = vpop.f32.mrf.mxu0
  %v9586 = vadd.f32 %v9063, %v9585
  %9587 = vmatprep.mubr.bf16.mxu0 %v3666
  %9588 = vmatmul.mubr.bf16.gmra.mxu0 %v3665
  %v9589 = vpop.f32.mrf.mxu0
  %v9590 = vadd.f32 %v9067, %v9589
  %v9591 = vpop.f32.mrf.mxu0
  %v9592 = vadd.f32 %v9069, %v9591
  %v9593 = vpop.f32.mrf.mxu0
  %v9594 = vadd.f32 %v9071, %v9593
  %v9595 = vpop.f32.mrf.mxu0
  %v9596 = vadd.f32 %v9073, %v9595
  %9597 = vmatprep.mubr.bf16.mxu0 %v3682
  %9598 = vmatmul.mubr.bf16.gmra.mxu0 %v3681
  %v9599 = vpop.f32.mrf.mxu0
  %v9600 = vadd.f32 %v9077, %v9599
  %v9601 = vpop.f32.mrf.mxu0
  %v9602 = vadd.f32 %v9079, %v9601
  %v9603 = vpop.f32.mrf.mxu0
  %v9604 = vadd.f32 %v9081, %v9603
  %v9605 = vpop.f32.mrf.mxu0
  %v9606 = vadd.f32 %v9083, %v9605
  %9607 = vmatprep.mubr.bf16.mxu0 %v3698
  %9608 = vmatmul.mubr.bf16.gmra.mxu0 %v3697
  %v9609 = vpop.f32.mrf.mxu0
  %v9610 = vadd.f32 %v9087, %v9609
  %v9611 = vpop.f32.mrf.mxu0
  %v9612 = vadd.f32 %v9089, %v9611
  %v9613 = vpop.f32.mrf.mxu0
  %v9614 = vadd.f32 %v9091, %v9613
  %v9615 = vpop.f32.mrf.mxu0
  %v9616 = vadd.f32 %v9093, %v9615
  %9617 = vmatprep.mubr.bf16.mxu0 %v3714
  %9618 = vmatmul.mubr.bf16.gmra.mxu0 %v3713
  %v9619 = vpop.f32.mrf.mxu0
  %v9620 = vadd.f32 %v9097, %v9619
  %v9621 = vpop.f32.mrf.mxu0
  %v9622 = vadd.f32 %v9099, %v9621
  %v9623 = vpop.f32.mrf.mxu0
  %v9624 = vadd.f32 %v9101, %v9623
  %v9625 = vpop.f32.mrf.mxu0
  %v9626 = vadd.f32 %v9103, %v9625
  %9627 = vmatprep.mubr.bf16.mxu0 %v3730
  %9628 = vmatmul.mubr.bf16.gmra.mxu0 %v3729
  %v9629 = vpop.f32.mrf.mxu0
  %v9630 = vadd.f32 %v9107, %v9629
  %v9631 = vpop.f32.mrf.mxu0
  %v9632 = vadd.f32 %v9109, %v9631
  %v9633 = vpop.f32.mrf.mxu0
  %v9634 = vadd.f32 %v9111, %v9633
  %v9635 = vpop.f32.mrf.mxu0
  %v9636 = vadd.f32 %v9113, %v9635
  %9637 = vmatprep.mubr.bf16.mxu0 %v3746
  %9638 = vmatmul.mubr.bf16.gmra.mxu0 %v3745
  %v9639 = vpop.f32.mrf.mxu0
  %v9640 = vadd.f32 %v9117, %v9639
  %v9641 = vpop.f32.mrf.mxu0
  %v9642 = vadd.f32 %v9119, %v9641
  %v9643 = vpop.f32.mrf.mxu0
  %v9644 = vadd.f32 %v9121, %v9643
  %v9645 = vpop.f32.mrf.mxu0
  %v9646 = vadd.f32 %v9123, %v9645
  %9647 = vmatprep.mubr.bf16.mxu0 %v3762
  %9648 = vmatmul.mubr.bf16.gmra.mxu0 %v3761
  %v9649 = vpop.f32.mrf.mxu0
  %v9650 = vadd.f32 %v9127, %v9649
  %v9651 = vpop.f32.mrf.mxu0
  %v9652 = vadd.f32 %v9129, %v9651
  %v9653 = vpop.f32.mrf.mxu0
  %v9654 = vadd.f32 %v9131, %v9653
  %v9655 = vpop.f32.mrf.mxu0
  %v9656 = vadd.f32 %v9133, %v9655
  %9657 = vmatprep.mubr.bf16.mxu0 %v3778
  %9658 = vmatmul.mubr.bf16.gmra.mxu0 %v3777
  %v9659 = vpop.f32.mrf.mxu0
  %v9660 = vadd.f32 %v9137, %v9659
  %v9661 = vpop.f32.mrf.mxu0
  %v9662 = vadd.f32 %v9139, %v9661
  %v9663 = vpop.f32.mrf.mxu0
  %v9664 = vadd.f32 %v9141, %v9663
  %v9665 = vpop.f32.mrf.mxu0
  %v9666 = vadd.f32 %v9143, %v9665
  %9667 = vmatprep.mubr.bf16.mxu0 %v3794
  %9668 = vmatmul.mubr.bf16.gmra.mxu0 %v3793
  %v9669 = vpop.f32.mrf.mxu0
  %v9670 = vadd.f32 %v9147, %v9669
  %v9671 = vpop.f32.mrf.mxu0
  %v9672 = vadd.f32 %v9149, %v9671
  %v9673 = vpop.f32.mrf.mxu0
  %v9674 = vadd.f32 %v9151, %v9673
  %v9675 = vpop.f32.mrf.mxu0
  %v9676 = vadd.f32 %v9153, %v9675
  %9677 = vmatprep.mubr.bf16.mxu0 %v3810
  %9678 = vmatmul.mubr.bf16.gmra.mxu0 %v3809
  %v9679 = vpop.f32.mrf.mxu0
  %v9680 = vadd.f32 %v9157, %v9679
  %v9681 = vpop.f32.mrf.mxu0
  %v9682 = vadd.f32 %v9159, %v9681
  %v9683 = vpop.f32.mrf.mxu0
  %v9684 = vadd.f32 %v9161, %v9683
  %v9685 = vpop.f32.mrf.mxu0
  %v9686 = vadd.f32 %v9163, %v9685
  %9687 = vmatprep.mubr.bf16.mxu0 %v3826
  %9688 = vmatmul.mubr.bf16.gmra.mxu0 %v3825
  %v9689 = vpop.f32.mrf.mxu0
  %v9690 = vadd.f32 %v9167, %v9689
  %v9691 = vpop.f32.mrf.mxu0
  %v9692 = vadd.f32 %v9169, %v9691
  %v9693 = vpop.f32.mrf.mxu0
  %v9694 = vadd.f32 %v9171, %v9693
  %v9695 = vpop.f32.mrf.mxu0
  %v9696 = vadd.f32 %v9173, %v9695
  %9697 = vmatprep.mubr.bf16.mxu0 %v3842
  %9698 = vmatmul.mubr.bf16.gmra.mxu0 %v3841
  %v9699 = vpop.f32.mrf.mxu0
  %v9700 = vadd.f32 %v9177, %v9699
  %v9701 = vpop.f32.mrf.mxu0
  %v9702 = vadd.f32 %v9179, %v9701
  %v9703 = vpop.f32.mrf.mxu0
  %v9704 = vadd.f32 %v9181, %v9703
  %v9705 = vpop.f32.mrf.mxu0
  %v9706 = vadd.f32 %v9183, %v9705
  %9707 = vmatprep.mubr.bf16.mxu0 %v3858
  %9708 = vmatmul.mubr.bf16.gmra.mxu0 %v3857
  %v9709 = vpop.f32.mrf.mxu0
  %v9710 = vadd.f32 %v9187, %v9709
  %v9711 = vpop.f32.mrf.mxu0
  %v9712 = vadd.f32 %v9189, %v9711
  %v9713 = vpop.f32.mrf.mxu0
  %v9714 = vadd.f32 %v9191, %v9713
  %v9715 = vpop.f32.mrf.mxu0
  %v9716 = vadd.f32 %v9193, %v9715
  %9717 = vmatprep.mubr.bf16.mxu0 %v3874
  %9718 = vmatmul.mubr.bf16.gmra.mxu0 %v3873
  %v9719 = vpop.f32.mrf.mxu0
  %v9720 = vadd.f32 %v9197, %v9719
  %v9721 = vpop.f32.mrf.mxu0
  %v9722 = vadd.f32 %v9199, %v9721
  %v9723 = vpop.f32.mrf.mxu0
  %v9724 = vadd.f32 %v9201, %v9723
  %v9725 = vpop.f32.mrf.mxu0
  %v9726 = vadd.f32 %v9203, %v9725
  %9727 = vmatprep.mubr.bf16.mxu0 %v3890
  %9728 = vmatmul.mubr.bf16.gmra.mxu0 %v3889
  %v9729 = vpop.f32.mrf.mxu0
  %v9730 = vadd.f32 %v9207, %v9729
  %v9731 = vpop.f32.mrf.mxu0
  %v9732 = vadd.f32 %v9209, %v9731
  %v9733 = vpop.f32.mrf.mxu0
  %v9734 = vadd.f32 %v9211, %v9733
  %v9735 = vpop.f32.mrf.mxu0
  %v9736 = vadd.f32 %v9213, %v9735
  %9737 = vmatprep.mubr.bf16.mxu0 %v3906
  %9738 = vmatmul.mubr.bf16.gmra.mxu0 %v3905
  %v9739 = vpop.f32.mrf.mxu0
  %v9740 = vadd.f32 %v9217, %v9739
  %v9741 = vpop.f32.mrf.mxu0
  %v9742 = vadd.f32 %v9219, %v9741
  %v9743 = vpop.f32.mrf.mxu0
  %v9744 = vadd.f32 %v9221, %v9743
  %v9745 = vpop.f32.mrf.mxu0
  %v9746 = vadd.f32 %v9223, %v9745
  %9747 = vmatprep.mubr.bf16.mxu0 %v3922
  %9748 = vmatmul.mubr.bf16.gmra.mxu0 %v3921
  %v9749 = vpop.f32.mrf.mxu0
  %v9750 = vadd.f32 %v9227, %v9749
  %v9751 = vpop.f32.mrf.mxu0
  %v9752 = vadd.f32 %v9229, %v9751
  %v9753 = vpop.f32.mrf.mxu0
  %v9754 = vadd.f32 %v9231, %v9753
  %v9755 = vpop.f32.mrf.mxu0
  %v9756 = vadd.f32 %v9233, %v9755
  %9757 = vmatprep.mubr.bf16.mxu0 %v3938
  %9758 = vmatmul.mubr.bf16.gmra.mxu0 %v3937
  %v9759 = vpop.f32.mrf.mxu0
  %v9760 = vadd.f32 %v9237, %v9759
  %v9761 = vpop.f32.mrf.mxu0
  %v9762 = vadd.f32 %v9239, %v9761
  %v9763 = vpop.f32.mrf.mxu0
  %v9764 = vadd.f32 %v9241, %v9763
  %v9765 = vpop.f32.mrf.mxu0
  %v9766 = vadd.f32 %v9243, %v9765
  %9767 = vmatprep.mubr.bf16.mxu0 %v3954
  %9768 = vmatmul.mubr.bf16.gmra.mxu0 %v3953
  %v9769 = vpop.f32.mrf.mxu0
  %v9770 = vadd.f32 %v9247, %v9769
  %v9771 = vpop.f32.mrf.mxu0
  %v9772 = vadd.f32 %v9249, %v9771
  %v9773 = vpop.f32.mrf.mxu0
  %v9774 = vadd.f32 %v9251, %v9773
  %v9775 = vpop.f32.mrf.mxu0
  %v9776 = vadd.f32 %v9253, %v9775
  %9777 = vmatprep.mubr.bf16.mxu0 %v3970
  %9778 = vmatmul.mubr.bf16.gmra.mxu0 %v3969
  %v9779 = vpop.f32.mrf.mxu0
  %v9780 = vadd.f32 %v9257, %v9779
  %v9781 = vpop.f32.mrf.mxu0
  %v9782 = vadd.f32 %v9259, %v9781
  %v9783 = vpop.f32.mrf.mxu0
  %v9784 = vadd.f32 %v9261, %v9783
  %v9785 = vpop.f32.mrf.mxu0
  %v9786 = vadd.f32 %v9263, %v9785
  %9787 = vmatprep.mubr.bf16.mxu0 %v3986
  %9788 = vmatmul.mubr.bf16.gmra.mxu0 %v3985
  %v9789 = vpop.f32.mrf.mxu0
  %v9790 = vadd.f32 %v9267, %v9789
  %v9791 = vpop.f32.mrf.mxu0
  %v9792 = vadd.f32 %v9269, %v9791
  %v9793 = vpop.f32.mrf.mxu0
  %v9794 = vadd.f32 %v9271, %v9793
  %v9795 = vpop.f32.mrf.mxu0
  %v9796 = vadd.f32 %v9273, %v9795
  %9797 = vmatprep.mubr.bf16.mxu0 %v4002
  %9798 = vmatmul.mubr.bf16.gmra.mxu0 %v4001
  %v9799 = vpop.f32.mrf.mxu0
  %v9800 = vadd.f32 %v9277, %v9799
  %v9801 = vpop.f32.mrf.mxu0
  %v9802 = vadd.f32 %v9279, %v9801
  %v9803 = vpop.f32.mrf.mxu0
  %v9804 = vadd.f32 %v9281, %v9803
  %v9805 = vpop.f32.mrf.mxu0
  %v9806 = vadd.f32 %v9283, %v9805
  %9807 = vmatprep.mubr.bf16.mxu0 %v4018
  %9808 = vmatmul.mubr.bf16.gmra.mxu0 %v4017
  %v9809 = vpop.f32.mrf.mxu0
  %v9810 = vadd.f32 %v9287, %v9809
  %v9811 = vpop.f32.mrf.mxu0
  %v9812 = vadd.f32 %v9289, %v9811
  %v9813 = vpop.f32.mrf.mxu0
  %v9814 = vadd.f32 %v9291, %v9813
  %v9815 = vpop.f32.mrf.mxu0
  %v9816 = vadd.f32 %v9293, %v9815
  %9817 = vmatprep.mubr.bf16.mxu0 %v4034
  %9818 = vmatmul.mubr.bf16.gmra.mxu0 %v4033
  %v9819 = vpop.f32.mrf.mxu0
  %v9820 = vadd.f32 %v9297, %v9819
  %v9821 = vpop.f32.mrf.mxu0
  %v9822 = vadd.f32 %v9299, %v9821
  %v9823 = vpop.f32.mrf.mxu0
  %v9824 = vadd.f32 %v9301, %v9823
  %v9825 = vpop.f32.mrf.mxu0
  %v9826 = vadd.f32 %v9303, %v9825
  %9827 = vmatprep.mubr.bf16.mxu0 %v4050
  %9828 = vmatmul.mubr.bf16.gmra.mxu0 %v4049
  %v9829 = vpop.f32.mrf.mxu0
  %v9830 = vadd.f32 %v9307, %v9829
  %v9831 = vpop.f32.mrf.mxu0
  %v9832 = vadd.f32 %v9309, %v9831
  %v9833 = vpop.f32.mrf.mxu0
  %v9834 = vadd.f32 %v9311, %v9833
  %v9835 = vpop.f32.mrf.mxu0
  %v9836 = vadd.f32 %v9313, %v9835
  %9837 = vmatprep.mubr.bf16.mxu0 %v4066
  %9838 = vmatmul.mubr.bf16.gmra.mxu0 %v4065
  %v9839 = vpop.f32.mrf.mxu0
  %v9840 = vadd.f32 %v9317, %v9839
  %v9841 = vpop.f32.mrf.mxu0
  %v9842 = vadd.f32 %v9319, %v9841
  %v9843 = vpop.f32.mrf.mxu0
  %v9844 = vadd.f32 %v9321, %v9843
  %v9845 = vpop.f32.mrf.mxu0
  %v9846 = vadd.f32 %v9323, %v9845
  %9847 = vmatprep.mubr.bf16.mxu0 %v4082
  %9848 = vmatmul.mubr.bf16.gmra.mxu0 %v4081
  %v9849 = vpop.f32.mrf.mxu0
  %v9850 = vadd.f32 %v9327, %v9849
  %v9851 = vpop.f32.mrf.mxu0
  %v9852 = vadd.f32 %v9329, %v9851
  %v9853 = vpop.f32.mrf.mxu0
  %v9854 = vadd.f32 %v9331, %v9853
  %v9855 = vpop.f32.mrf.mxu0
  %v9856 = vadd.f32 %v9333, %v9855
  %9857 = vmatprep.mubr.bf16.mxu0 %v4098
  %9858 = vmatmul.mubr.bf16.gmra.mxu0 %v4097
  %v9859 = vpop.f32.mrf.mxu0
  %v9860 = vadd.f32 %v9337, %v9859
  %v9861 = vpop.f32.mrf.mxu0
  %v9862 = vadd.f32 %v9339, %v9861
  %v9863 = vpop.f32.mrf.mxu0
  %v9864 = vadd.f32 %v9341, %v9863
  %v9865 = vpop.f32.mrf.mxu0
  %v9866 = vadd.f32 %v9343, %v9865
  %9867 = vmatprep.mubr.bf16.mxu0 %v4114
  %9868 = vmatmul.mubr.bf16.gmra.mxu0 %v4113
  %v9869 = vpop.f32.mrf.mxu0
  %v9870 = vadd.f32 %v9347, %v9869
  %v9871 = vpop.f32.mrf.mxu0
  %v9872 = vadd.f32 %v9349, %v9871
  %v9873 = vpop.f32.mrf.mxu0
  %v9874 = vadd.f32 %v9351, %v9873
  %v9875 = vpop.f32.mrf.mxu0
  %v9876 = vadd.f32 %v9353, %v9875
  %9877 = vmatprep.mubr.bf16.mxu0 %v4130
  %9878 = vmatmul.mubr.bf16.gmra.mxu0 %v4129
  %v9879 = vpop.f32.mrf.mxu0
  %v9880 = vadd.f32 %v9357, %v9879
  %v9881 = vpop.f32.mrf.mxu0
  %v9882 = vadd.f32 %v9359, %v9881
  %v9883 = vpop.f32.mrf.mxu0
  %v9884 = vadd.f32 %v9361, %v9883
  %v9885 = vpop.f32.mrf.mxu0
  %v9886 = vadd.f32 %v9363, %v9885
  %9887 = vmatprep.mubr.bf16.mxu0 %v4146
  %9888 = vmatmul.mubr.bf16.gmra.mxu0 %v4145
  %v9889 = vpop.f32.mrf.mxu0
  %v9890 = vadd.f32 %v9367, %v9889
  %v9891 = vpop.f32.mrf.mxu0
  %v9892 = vadd.f32 %v9369, %v9891
  %v9893 = vpop.f32.mrf.mxu0
  %v9894 = vadd.f32 %v9371, %v9893
  %v9895 = vpop.f32.mrf.mxu0
  %v9896 = vadd.f32 %v9373, %v9895
  %9897 = vmatprep.mubr.bf16.mxu0 %v4162
  %9898 = vmatmul.mubr.bf16.gmra.mxu0 %v4161
  %v9899 = vpop.f32.mrf.mxu0
  %v9900 = vadd.f32 %v9377, %v9899
  %v9901 = vpop.f32.mrf.mxu0
  %v9902 = vadd.f32 %v9379, %v9901
  %v9903 = vpop.f32.mrf.mxu0
  %v9904 = vadd.f32 %v9381, %v9903
  %v9905 = vpop.f32.mrf.mxu0
  %v9906 = vadd.f32 %v9383, %v9905
  %9907 = vmatprep.mubr.bf16.mxu0 %v4178
  %9908 = vmatmul.mubr.bf16.gmra.mxu0 %v4177
  %v9909 = vpop.f32.mrf.mxu0
  %v9910 = vadd.f32 %v9387, %v9909
  %v9911 = vpop.f32.mrf.mxu0
  %v9912 = vadd.f32 %v9389, %v9911
  %v9913 = vpop.f32.mrf.mxu0
  %v9914 = vadd.f32 %v9391, %v9913
  %v9915 = vpop.f32.mrf.mxu0
  %v9916 = vadd.f32 %v9393, %v9915
  %9917 = vmatprep.mubr.bf16.mxu0 %v4194
  %9918 = vmatmul.mubr.bf16.gmra.mxu0 %v4193
  %v9919 = vpop.f32.mrf.mxu0
  %v9920 = vadd.f32 %v9397, %v9919
  %v9921 = vpop.f32.mrf.mxu0
  %v9922 = vadd.f32 %v9399, %v9921
  %v9923 = vpop.f32.mrf.mxu0
  %v9924 = vadd.f32 %v9401, %v9923
  %v9925 = vpop.f32.mrf.mxu0
  %v9926 = vadd.f32 %v9403, %v9925
  %9927 = vmatprep.mubr.bf16.mxu0 %v4210
  %9928 = vmatmul.mubr.bf16.gmra.mxu0 %v4209
  %v9929 = vpop.f32.mrf.mxu0
  %v9930 = vadd.f32 %v9407, %v9929
  %v9931 = vpop.f32.mrf.mxu0
  %v9932 = vadd.f32 %v9409, %v9931
  %v9933 = vpop.f32.mrf.mxu0
  %v9934 = vadd.f32 %v9411, %v9933
  %v9935 = vpop.f32.mrf.mxu0
  %v9936 = vadd.f32 %v9413, %v9935
  %9937 = vdwg.mxu0
  %9938 = vmatprep.subr.bf16.mxu0 %v6004
  %9939 = vmatpush1.bf16.msra.mxu0 %v6003
  %9940 = vmatprep.subr.bf16.mxu0 %v6002
  %9941 = vmatpush1.bf16.msra.mxu0 %v6001
  %9942 = vmatprep.subr.bf16.mxu0 %v6000
  %9943 = vmatpush1.bf16.msra.mxu0 %v5999
  %9944 = vmatprep.subr.bf16.mxu0 %v5998
  %9945 = vmatpush1.bf16.msra.mxu0 %v5997
  %9946 = vmatprep.subr.bf16.mxu0 %v5996
  %9947 = vmatpush1.bf16.msra.mxu0 %v5995
  %9948 = vmatprep.subr.bf16.mxu0 %v5994
  %9949 = vmatpush1.bf16.msra.mxu0 %v5993
  %9950 = vmatprep.subr.bf16.mxu0 %v5992
  %9951 = vmatpush1.bf16.msra.mxu0 %v5991
  %9952 = vmatprep.subr.bf16.mxu0 %v5990
  %9953 = vmatpush1.bf16.msra.mxu0 %v5989
  %9954 = vmatprep.subr.bf16.mxu0 %v6020
  %9955 = vmatpush2.bf16.msra.mxu0 %v6019
  %9956 = vmatprep.subr.bf16.mxu0 %v6018
  %9957 = vmatpush2.bf16.msra.mxu0 %v6017
  %9958 = vmatprep.subr.bf16.mxu0 %v6016
  %9959 = vmatpush2.bf16.msra.mxu0 %v6015
  %9960 = vmatprep.subr.bf16.mxu0 %v6014
  %9961 = vmatpush2.bf16.msra.mxu0 %v6013
  %9962 = vmatprep.subr.bf16.mxu0 %v6012
  %9963 = vmatpush2.bf16.msra.mxu0 %v6011
  %9964 = vmatprep.subr.bf16.mxu0 %v6010
  %9965 = vmatpush2.bf16.msra.mxu0 %v6009
  %9966 = vmatprep.subr.bf16.mxu0 %v6008
  %9967 = vmatpush2.bf16.msra.mxu0 %v6007
  %9968 = vmatprep.subr.bf16.mxu0 %v6006
  %9969 = vmatpush2.bf16.msra.mxu0 %v6005
  %9970 = vmatprep.mubr.bf16.mxu0 %v3444
  %9971 = vmatmul.mubr.bf16.gmra.mxu0 %v3443
  %v9972 = vpop.f32.mrf.mxu0
  %v9973 = vadd.f32 %v9450, %v9972
  %v9974 = vpop.f32.mrf.mxu0
  %v9975 = vadd.f32 %v9452, %v9974
  %v9976 = vpop.f32.mrf.mxu0
  %v9977 = vadd.f32 %v9454, %v9976
  %v9978 = vpop.f32.mrf.mxu0
  %v9979 = vadd.f32 %v9456, %v9978
  %9980 = vmatprep.mubr.bf16.mxu0 %v3460
  %9981 = vmatmul.mubr.bf16.gmra.mxu0 %v3459
  %v9982 = vpop.f32.mrf.mxu0
  %v9983 = vadd.f32 %v9460, %v9982
  %v9984 = vpop.f32.mrf.mxu0
  %v9985 = vadd.f32 %v9462, %v9984
  %v9986 = vpop.f32.mrf.mxu0
  %v9987 = vadd.f32 %v9464, %v9986
  %v9988 = vpop.f32.mrf.mxu0
  %v9989 = vadd.f32 %v9466, %v9988
  %9990 = vmatprep.mubr.bf16.mxu0 %v3476
  %9991 = vmatmul.mubr.bf16.gmra.mxu0 %v3475
  %v9992 = vpop.f32.mrf.mxu0
  %v9993 = vadd.f32 %v9470, %v9992
  %v9994 = vpop.f32.mrf.mxu0
  %v9995 = vadd.f32 %v9472, %v9994
  %v9996 = vpop.f32.mrf.mxu0
  %v9997 = vadd.f32 %v9474, %v9996
  %v9998 = vpop.f32.mrf.mxu0
  %v9999 = vadd.f32 %v9476, %v9998
  %10000 = vmatprep.mubr.bf16.mxu0 %v3492
  %10001 = vmatmul.mubr.bf16.gmra.mxu0 %v3491
  %v10002 = vpop.f32.mrf.mxu0
  %v10003 = vadd.f32 %v9480, %v10002
  %v10004 = vpop.f32.mrf.mxu0
  %v10005 = vadd.f32 %v9482, %v10004
  %v10006 = vpop.f32.mrf.mxu0
  %v10007 = vadd.f32 %v9484, %v10006
  %v10008 = vpop.f32.mrf.mxu0
  %v10009 = vadd.f32 %v9486, %v10008
  %10010 = vmatprep.mubr.bf16.mxu0 %v3508
  %10011 = vmatmul.mubr.bf16.gmra.mxu0 %v3507
  %v10012 = vpop.f32.mrf.mxu0
  %v10013 = vadd.f32 %v9490, %v10012
  %v10014 = vpop.f32.mrf.mxu0
  %v10015 = vadd.f32 %v9492, %v10014
  %v10016 = vpop.f32.mrf.mxu0
  %v10017 = vadd.f32 %v9494, %v10016
  %v10018 = vpop.f32.mrf.mxu0
  %v10019 = vadd.f32 %v9496, %v10018
  %10020 = vmatprep.mubr.bf16.mxu0 %v3524
  %10021 = vmatmul.mubr.bf16.gmra.mxu0 %v3523
  %v10022 = vpop.f32.mrf.mxu0
  %v10023 = vadd.f32 %v9500, %v10022
  %v10024 = vpop.f32.mrf.mxu0
  %v10025 = vadd.f32 %v9502, %v10024
  %v10026 = vpop.f32.mrf.mxu0
  %v10027 = vadd.f32 %v9504, %v10026
  %v10028 = vpop.f32.mrf.mxu0
  %v10029 = vadd.f32 %v9506, %v10028
  %10030 = vmatprep.mubr.bf16.mxu0 %v3540
  %10031 = vmatmul.mubr.bf16.gmra.mxu0 %v3539
  %v10032 = vpop.f32.mrf.mxu0
  %v10033 = vadd.f32 %v9510, %v10032
  %v10034 = vpop.f32.mrf.mxu0
  %v10035 = vadd.f32 %v9512, %v10034
  %v10036 = vpop.f32.mrf.mxu0
  %v10037 = vadd.f32 %v9514, %v10036
  %v10038 = vpop.f32.mrf.mxu0
  %v10039 = vadd.f32 %v9516, %v10038
  %10040 = vmatprep.mubr.bf16.mxu0 %v3556
  %10041 = vmatmul.mubr.bf16.gmra.mxu0 %v3555
  %v10042 = vpop.f32.mrf.mxu0
  %v10043 = vadd.f32 %v9520, %v10042
  %v10044 = vpop.f32.mrf.mxu0
  %v10045 = vadd.f32 %v9522, %v10044
  %v10046 = vpop.f32.mrf.mxu0
  %v10047 = vadd.f32 %v9524, %v10046
  %v10048 = vpop.f32.mrf.mxu0
  %v10049 = vadd.f32 %v9526, %v10048
  %10050 = vmatprep.mubr.bf16.mxu0 %v3572
  %10051 = vmatmul.mubr.bf16.gmra.mxu0 %v3571
  %v10052 = vpop.f32.mrf.mxu0
  %v10053 = vadd.f32 %v9530, %v10052
  %v10054 = vpop.f32.mrf.mxu0
  %v10055 = vadd.f32 %v9532, %v10054
  %v10056 = vpop.f32.mrf.mxu0
  %v10057 = vadd.f32 %v9534, %v10056
  %v10058 = vpop.f32.mrf.mxu0
  %v10059 = vadd.f32 %v9536, %v10058
  %10060 = vmatprep.mubr.bf16.mxu0 %v3588
  %10061 = vmatmul.mubr.bf16.gmra.mxu0 %v3587
  %v10062 = vpop.f32.mrf.mxu0
  %v10063 = vadd.f32 %v9540, %v10062
  %v10064 = vpop.f32.mrf.mxu0
  %v10065 = vadd.f32 %v9542, %v10064
  %v10066 = vpop.f32.mrf.mxu0
  %v10067 = vadd.f32 %v9544, %v10066
  %v10068 = vpop.f32.mrf.mxu0
  %v10069 = vadd.f32 %v9546, %v10068
  %10070 = vmatprep.mubr.bf16.mxu0 %v3604
  %10071 = vmatmul.mubr.bf16.gmra.mxu0 %v3603
  %v10072 = vpop.f32.mrf.mxu0
  %v10073 = vadd.f32 %v9550, %v10072
  %v10074 = vpop.f32.mrf.mxu0
  %v10075 = vadd.f32 %v9552, %v10074
  %v10076 = vpop.f32.mrf.mxu0
  %v10077 = vadd.f32 %v9554, %v10076
  %v10078 = vpop.f32.mrf.mxu0
  %v10079 = vadd.f32 %v9556, %v10078
  %10080 = vmatprep.mubr.bf16.mxu0 %v3620
  %10081 = vmatmul.mubr.bf16.gmra.mxu0 %v3619
  %v10082 = vpop.f32.mrf.mxu0
  %v10083 = vadd.f32 %v9560, %v10082
  %v10084 = vpop.f32.mrf.mxu0
  %v10085 = vadd.f32 %v9562, %v10084
  %v10086 = vpop.f32.mrf.mxu0
  %v10087 = vadd.f32 %v9564, %v10086
  %v10088 = vpop.f32.mrf.mxu0
  %v10089 = vadd.f32 %v9566, %v10088
  %10090 = vmatprep.mubr.bf16.mxu0 %v3636
  %10091 = vmatmul.mubr.bf16.gmra.mxu0 %v3635
  %v10092 = vpop.f32.mrf.mxu0
  %v10093 = vadd.f32 %v9570, %v10092
  %v10094 = vpop.f32.mrf.mxu0
  %v10095 = vadd.f32 %v9572, %v10094
  %v10096 = vpop.f32.mrf.mxu0
  %v10097 = vadd.f32 %v9574, %v10096
  %v10098 = vpop.f32.mrf.mxu0
  %v10099 = vadd.f32 %v9576, %v10098
  %10100 = vmatprep.mubr.bf16.mxu0 %v3652
  %10101 = vmatmul.mubr.bf16.gmra.mxu0 %v3651
  %v10102 = vpop.f32.mrf.mxu0
  %v10103 = vadd.f32 %v9580, %v10102
  %v10104 = vpop.f32.mrf.mxu0
  %v10105 = vadd.f32 %v9582, %v10104
  %v10106 = vpop.f32.mrf.mxu0
  %v10107 = vadd.f32 %v9584, %v10106
  %v10108 = vpop.f32.mrf.mxu0
  %v10109 = vadd.f32 %v9586, %v10108
  %10110 = vmatprep.mubr.bf16.mxu0 %v3668
  %10111 = vmatmul.mubr.bf16.gmra.mxu0 %v3667
  %v10112 = vpop.f32.mrf.mxu0
  %v10113 = vadd.f32 %v9590, %v10112
  %v10114 = vpop.f32.mrf.mxu0
  %v10115 = vadd.f32 %v9592, %v10114
  %v10116 = vpop.f32.mrf.mxu0
  %v10117 = vadd.f32 %v9594, %v10116
  %v10118 = vpop.f32.mrf.mxu0
  %v10119 = vadd.f32 %v9596, %v10118
  %10120 = vmatprep.mubr.bf16.mxu0 %v3684
  %10121 = vmatmul.mubr.bf16.gmra.mxu0 %v3683
  %v10122 = vpop.f32.mrf.mxu0
  %v10123 = vadd.f32 %v9600, %v10122
  %v10124 = vpop.f32.mrf.mxu0
  %v10125 = vadd.f32 %v9602, %v10124
  %v10126 = vpop.f32.mrf.mxu0
  %v10127 = vadd.f32 %v9604, %v10126
  %v10128 = vpop.f32.mrf.mxu0
  %v10129 = vadd.f32 %v9606, %v10128
  %10130 = vmatprep.mubr.bf16.mxu0 %v3700
  %10131 = vmatmul.mubr.bf16.gmra.mxu0 %v3699
  %v10132 = vpop.f32.mrf.mxu0
  %v10133 = vadd.f32 %v9610, %v10132
  %v10134 = vpop.f32.mrf.mxu0
  %v10135 = vadd.f32 %v9612, %v10134
  %v10136 = vpop.f32.mrf.mxu0
  %v10137 = vadd.f32 %v9614, %v10136
  %v10138 = vpop.f32.mrf.mxu0
  %v10139 = vadd.f32 %v9616, %v10138
  %10140 = vmatprep.mubr.bf16.mxu0 %v3716
  %10141 = vmatmul.mubr.bf16.gmra.mxu0 %v3715
  %v10142 = vpop.f32.mrf.mxu0
  %v10143 = vadd.f32 %v9620, %v10142
  %v10144 = vpop.f32.mrf.mxu0
  %v10145 = vadd.f32 %v9622, %v10144
  %v10146 = vpop.f32.mrf.mxu0
  %v10147 = vadd.f32 %v9624, %v10146
  %v10148 = vpop.f32.mrf.mxu0
  %v10149 = vadd.f32 %v9626, %v10148
  %10150 = vmatprep.mubr.bf16.mxu0 %v3732
  %10151 = vmatmul.mubr.bf16.gmra.mxu0 %v3731
  %v10152 = vpop.f32.mrf.mxu0
  %v10153 = vadd.f32 %v9630, %v10152
  %v10154 = vpop.f32.mrf.mxu0
  %v10155 = vadd.f32 %v9632, %v10154
  %v10156 = vpop.f32.mrf.mxu0
  %v10157 = vadd.f32 %v9634, %v10156
  %v10158 = vpop.f32.mrf.mxu0
  %v10159 = vadd.f32 %v9636, %v10158
  %10160 = vmatprep.mubr.bf16.mxu0 %v3748
  %10161 = vmatmul.mubr.bf16.gmra.mxu0 %v3747
  %v10162 = vpop.f32.mrf.mxu0
  %v10163 = vadd.f32 %v9640, %v10162
  %v10164 = vpop.f32.mrf.mxu0
  %v10165 = vadd.f32 %v9642, %v10164
  %v10166 = vpop.f32.mrf.mxu0
  %v10167 = vadd.f32 %v9644, %v10166
  %v10168 = vpop.f32.mrf.mxu0
  %v10169 = vadd.f32 %v9646, %v10168
  %10170 = vmatprep.mubr.bf16.mxu0 %v3764
  %10171 = vmatmul.mubr.bf16.gmra.mxu0 %v3763
  %v10172 = vpop.f32.mrf.mxu0
  %v10173 = vadd.f32 %v9650, %v10172
  %v10174 = vpop.f32.mrf.mxu0
  %v10175 = vadd.f32 %v9652, %v10174
  %v10176 = vpop.f32.mrf.mxu0
  %v10177 = vadd.f32 %v9654, %v10176
  %v10178 = vpop.f32.mrf.mxu0
  %v10179 = vadd.f32 %v9656, %v10178
  %10180 = vmatprep.mubr.bf16.mxu0 %v3780
  %10181 = vmatmul.mubr.bf16.gmra.mxu0 %v3779
  %v10182 = vpop.f32.mrf.mxu0
  %v10183 = vadd.f32 %v9660, %v10182
  %v10184 = vpop.f32.mrf.mxu0
  %v10185 = vadd.f32 %v9662, %v10184
  %v10186 = vpop.f32.mrf.mxu0
  %v10187 = vadd.f32 %v9664, %v10186
  %v10188 = vpop.f32.mrf.mxu0
  %v10189 = vadd.f32 %v9666, %v10188
  %10190 = vmatprep.mubr.bf16.mxu0 %v3796
  %10191 = vmatmul.mubr.bf16.gmra.mxu0 %v3795
  %v10192 = vpop.f32.mrf.mxu0
  %v10193 = vadd.f32 %v9670, %v10192
  %v10194 = vpop.f32.mrf.mxu0
  %v10195 = vadd.f32 %v9672, %v10194
  %v10196 = vpop.f32.mrf.mxu0
  %v10197 = vadd.f32 %v9674, %v10196
  %v10198 = vpop.f32.mrf.mxu0
  %v10199 = vadd.f32 %v9676, %v10198
  %10200 = vmatprep.mubr.bf16.mxu0 %v3812
  %10201 = vmatmul.mubr.bf16.gmra.mxu0 %v3811
  %v10202 = vpop.f32.mrf.mxu0
  %v10203 = vadd.f32 %v9680, %v10202
  %v10204 = vpop.f32.mrf.mxu0
  %v10205 = vadd.f32 %v9682, %v10204
  %v10206 = vpop.f32.mrf.mxu0
  %v10207 = vadd.f32 %v9684, %v10206
  %v10208 = vpop.f32.mrf.mxu0
  %v10209 = vadd.f32 %v9686, %v10208
  %10210 = vmatprep.mubr.bf16.mxu0 %v3828
  %10211 = vmatmul.mubr.bf16.gmra.mxu0 %v3827
  %v10212 = vpop.f32.mrf.mxu0
  %v10213 = vadd.f32 %v9690, %v10212
  %v10214 = vpop.f32.mrf.mxu0
  %v10215 = vadd.f32 %v9692, %v10214
  %v10216 = vpop.f32.mrf.mxu0
  %v10217 = vadd.f32 %v9694, %v10216
  %v10218 = vpop.f32.mrf.mxu0
  %v10219 = vadd.f32 %v9696, %v10218
  %10220 = vmatprep.mubr.bf16.mxu0 %v3844
  %10221 = vmatmul.mubr.bf16.gmra.mxu0 %v3843
  %v10222 = vpop.f32.mrf.mxu0
  %v10223 = vadd.f32 %v9700, %v10222
  %v10224 = vpop.f32.mrf.mxu0
  %v10225 = vadd.f32 %v9702, %v10224
  %v10226 = vpop.f32.mrf.mxu0
  %v10227 = vadd.f32 %v9704, %v10226
  %v10228 = vpop.f32.mrf.mxu0
  %v10229 = vadd.f32 %v9706, %v10228
  %10230 = vmatprep.mubr.bf16.mxu0 %v3860
  %10231 = vmatmul.mubr.bf16.gmra.mxu0 %v3859
  %v10232 = vpop.f32.mrf.mxu0
  %v10233 = vadd.f32 %v9710, %v10232
  %v10234 = vpop.f32.mrf.mxu0
  %v10235 = vadd.f32 %v9712, %v10234
  %v10236 = vpop.f32.mrf.mxu0
  %v10237 = vadd.f32 %v9714, %v10236
  %v10238 = vpop.f32.mrf.mxu0
  %v10239 = vadd.f32 %v9716, %v10238
  %10240 = vmatprep.mubr.bf16.mxu0 %v3876
  %10241 = vmatmul.mubr.bf16.gmra.mxu0 %v3875
  %v10242 = vpop.f32.mrf.mxu0
  %v10243 = vadd.f32 %v9720, %v10242
  %v10244 = vpop.f32.mrf.mxu0
  %v10245 = vadd.f32 %v9722, %v10244
  %v10246 = vpop.f32.mrf.mxu0
  %v10247 = vadd.f32 %v9724, %v10246
  %v10248 = vpop.f32.mrf.mxu0
  %v10249 = vadd.f32 %v9726, %v10248
  %10250 = vmatprep.mubr.bf16.mxu0 %v3892
  %10251 = vmatmul.mubr.bf16.gmra.mxu0 %v3891
  %v10252 = vpop.f32.mrf.mxu0
  %v10253 = vadd.f32 %v9730, %v10252
  %v10254 = vpop.f32.mrf.mxu0
  %v10255 = vadd.f32 %v9732, %v10254
  %v10256 = vpop.f32.mrf.mxu0
  %v10257 = vadd.f32 %v9734, %v10256
  %v10258 = vpop.f32.mrf.mxu0
  %v10259 = vadd.f32 %v9736, %v10258
  %10260 = vmatprep.mubr.bf16.mxu0 %v3908
  %10261 = vmatmul.mubr.bf16.gmra.mxu0 %v3907
  %v10262 = vpop.f32.mrf.mxu0
  %v10263 = vadd.f32 %v9740, %v10262
  %v10264 = vpop.f32.mrf.mxu0
  %v10265 = vadd.f32 %v9742, %v10264
  %v10266 = vpop.f32.mrf.mxu0
  %v10267 = vadd.f32 %v9744, %v10266
  %v10268 = vpop.f32.mrf.mxu0
  %v10269 = vadd.f32 %v9746, %v10268
  %10270 = vmatprep.mubr.bf16.mxu0 %v3924
  %10271 = vmatmul.mubr.bf16.gmra.mxu0 %v3923
  %v10272 = vpop.f32.mrf.mxu0
  %v10273 = vadd.f32 %v9750, %v10272
  %v10274 = vpop.f32.mrf.mxu0
  %v10275 = vadd.f32 %v9752, %v10274
  %v10276 = vpop.f32.mrf.mxu0
  %v10277 = vadd.f32 %v9754, %v10276
  %v10278 = vpop.f32.mrf.mxu0
  %v10279 = vadd.f32 %v9756, %v10278
  %10280 = vmatprep.mubr.bf16.mxu0 %v3940
  %10281 = vmatmul.mubr.bf16.gmra.mxu0 %v3939
  %v10282 = vpop.f32.mrf.mxu0
  %v10283 = vadd.f32 %v9760, %v10282
  %v10284 = vpop.f32.mrf.mxu0
  %v10285 = vadd.f32 %v9762, %v10284
  %v10286 = vpop.f32.mrf.mxu0
  %v10287 = vadd.f32 %v9764, %v10286
  %v10288 = vpop.f32.mrf.mxu0
  %v10289 = vadd.f32 %v9766, %v10288
  %10290 = vmatprep.mubr.bf16.mxu0 %v3956
  %10291 = vmatmul.mubr.bf16.gmra.mxu0 %v3955
  %v10292 = vpop.f32.mrf.mxu0
  %v10293 = vadd.f32 %v9770, %v10292
  %v10294 = vpop.f32.mrf.mxu0
  %v10295 = vadd.f32 %v9772, %v10294
  %v10296 = vpop.f32.mrf.mxu0
  %v10297 = vadd.f32 %v9774, %v10296
  %v10298 = vpop.f32.mrf.mxu0
  %v10299 = vadd.f32 %v9776, %v10298
  %10300 = vmatprep.mubr.bf16.mxu0 %v3972
  %10301 = vmatmul.mubr.bf16.gmra.mxu0 %v3971
  %v10302 = vpop.f32.mrf.mxu0
  %v10303 = vadd.f32 %v9780, %v10302
  %v10304 = vpop.f32.mrf.mxu0
  %v10305 = vadd.f32 %v9782, %v10304
  %v10306 = vpop.f32.mrf.mxu0
  %v10307 = vadd.f32 %v9784, %v10306
  %v10308 = vpop.f32.mrf.mxu0
  %v10309 = vadd.f32 %v9786, %v10308
  %10310 = vmatprep.mubr.bf16.mxu0 %v3988
  %10311 = vmatmul.mubr.bf16.gmra.mxu0 %v3987
  %v10312 = vpop.f32.mrf.mxu0
  %v10313 = vadd.f32 %v9790, %v10312
  %v10314 = vpop.f32.mrf.mxu0
  %v10315 = vadd.f32 %v9792, %v10314
  %v10316 = vpop.f32.mrf.mxu0
  %v10317 = vadd.f32 %v9794, %v10316
  %v10318 = vpop.f32.mrf.mxu0
  %v10319 = vadd.f32 %v9796, %v10318
  %10320 = vmatprep.mubr.bf16.mxu0 %v4004
  %10321 = vmatmul.mubr.bf16.gmra.mxu0 %v4003
  %v10322 = vpop.f32.mrf.mxu0
  %v10323 = vadd.f32 %v9800, %v10322
  %v10324 = vpop.f32.mrf.mxu0
  %v10325 = vadd.f32 %v9802, %v10324
  %v10326 = vpop.f32.mrf.mxu0
  %v10327 = vadd.f32 %v9804, %v10326
  %v10328 = vpop.f32.mrf.mxu0
  %v10329 = vadd.f32 %v9806, %v10328
  %10330 = vmatprep.mubr.bf16.mxu0 %v4020
  %10331 = vmatmul.mubr.bf16.gmra.mxu0 %v4019
  %v10332 = vpop.f32.mrf.mxu0
  %v10333 = vadd.f32 %v9810, %v10332
  %v10334 = vpop.f32.mrf.mxu0
  %v10335 = vadd.f32 %v9812, %v10334
  %v10336 = vpop.f32.mrf.mxu0
  %v10337 = vadd.f32 %v9814, %v10336
  %v10338 = vpop.f32.mrf.mxu0
  %v10339 = vadd.f32 %v9816, %v10338
  %10340 = vmatprep.mubr.bf16.mxu0 %v4036
  %10341 = vmatmul.mubr.bf16.gmra.mxu0 %v4035
  %v10342 = vpop.f32.mrf.mxu0
  %v10343 = vadd.f32 %v9820, %v10342
  %v10344 = vpop.f32.mrf.mxu0
  %v10345 = vadd.f32 %v9822, %v10344
  %v10346 = vpop.f32.mrf.mxu0
  %v10347 = vadd.f32 %v9824, %v10346
  %v10348 = vpop.f32.mrf.mxu0
  %v10349 = vadd.f32 %v9826, %v10348
  %10350 = vmatprep.mubr.bf16.mxu0 %v4052
  %10351 = vmatmul.mubr.bf16.gmra.mxu0 %v4051
  %v10352 = vpop.f32.mrf.mxu0
  %v10353 = vadd.f32 %v9830, %v10352
  %v10354 = vpop.f32.mrf.mxu0
  %v10355 = vadd.f32 %v9832, %v10354
  %v10356 = vpop.f32.mrf.mxu0
  %v10357 = vadd.f32 %v9834, %v10356
  %v10358 = vpop.f32.mrf.mxu0
  %v10359 = vadd.f32 %v9836, %v10358
  %10360 = vmatprep.mubr.bf16.mxu0 %v4068
  %10361 = vmatmul.mubr.bf16.gmra.mxu0 %v4067
  %v10362 = vpop.f32.mrf.mxu0
  %v10363 = vadd.f32 %v9840, %v10362
  %v10364 = vpop.f32.mrf.mxu0
  %v10365 = vadd.f32 %v9842, %v10364
  %v10366 = vpop.f32.mrf.mxu0
  %v10367 = vadd.f32 %v9844, %v10366
  %v10368 = vpop.f32.mrf.mxu0
  %v10369 = vadd.f32 %v9846, %v10368
  %10370 = vmatprep.mubr.bf16.mxu0 %v4084
  %10371 = vmatmul.mubr.bf16.gmra.mxu0 %v4083
  %v10372 = vpop.f32.mrf.mxu0
  %v10373 = vadd.f32 %v9850, %v10372
  %v10374 = vpop.f32.mrf.mxu0
  %v10375 = vadd.f32 %v9852, %v10374
  %v10376 = vpop.f32.mrf.mxu0
  %v10377 = vadd.f32 %v9854, %v10376
  %v10378 = vpop.f32.mrf.mxu0
  %v10379 = vadd.f32 %v9856, %v10378
  %10380 = vmatprep.mubr.bf16.mxu0 %v4100
  %10381 = vmatmul.mubr.bf16.gmra.mxu0 %v4099
  %v10382 = vpop.f32.mrf.mxu0
  %v10383 = vadd.f32 %v9860, %v10382
  %v10384 = vpop.f32.mrf.mxu0
  %v10385 = vadd.f32 %v9862, %v10384
  %v10386 = vpop.f32.mrf.mxu0
  %v10387 = vadd.f32 %v9864, %v10386
  %v10388 = vpop.f32.mrf.mxu0
  %v10389 = vadd.f32 %v9866, %v10388
  %10390 = vmatprep.mubr.bf16.mxu0 %v4116
  %10391 = vmatmul.mubr.bf16.gmra.mxu0 %v4115
  %v10392 = vpop.f32.mrf.mxu0
  %v10393 = vadd.f32 %v9870, %v10392
  %v10394 = vpop.f32.mrf.mxu0
  %v10395 = vadd.f32 %v9872, %v10394
  %v10396 = vpop.f32.mrf.mxu0
  %v10397 = vadd.f32 %v9874, %v10396
  %v10398 = vpop.f32.mrf.mxu0
  %v10399 = vadd.f32 %v9876, %v10398
  %10400 = vmatprep.mubr.bf16.mxu0 %v4132
  %10401 = vmatmul.mubr.bf16.gmra.mxu0 %v4131
  %v10402 = vpop.f32.mrf.mxu0
  %v10403 = vadd.f32 %v9880, %v10402
  %v10404 = vpop.f32.mrf.mxu0
  %v10405 = vadd.f32 %v9882, %v10404
  %v10406 = vpop.f32.mrf.mxu0
  %v10407 = vadd.f32 %v9884, %v10406
  %v10408 = vpop.f32.mrf.mxu0
  %v10409 = vadd.f32 %v9886, %v10408
  %10410 = vmatprep.mubr.bf16.mxu0 %v4148
  %10411 = vmatmul.mubr.bf16.gmra.mxu0 %v4147
  %v10412 = vpop.f32.mrf.mxu0
  %v10413 = vadd.f32 %v9890, %v10412
  %v10414 = vpop.f32.mrf.mxu0
  %v10415 = vadd.f32 %v9892, %v10414
  %v10416 = vpop.f32.mrf.mxu0
  %v10417 = vadd.f32 %v9894, %v10416
  %v10418 = vpop.f32.mrf.mxu0
  %v10419 = vadd.f32 %v9896, %v10418
  %10420 = vmatprep.mubr.bf16.mxu0 %v4164
  %10421 = vmatmul.mubr.bf16.gmra.mxu0 %v4163
  %v10422 = vpop.f32.mrf.mxu0
  %v10423 = vadd.f32 %v9900, %v10422
  %v10424 = vpop.f32.mrf.mxu0
  %v10425 = vadd.f32 %v9902, %v10424
  %v10426 = vpop.f32.mrf.mxu0
  %v10427 = vadd.f32 %v9904, %v10426
  %v10428 = vpop.f32.mrf.mxu0
  %v10429 = vadd.f32 %v9906, %v10428
  %10430 = vmatprep.mubr.bf16.mxu0 %v4180
  %10431 = vmatmul.mubr.bf16.gmra.mxu0 %v4179
  %v10432 = vpop.f32.mrf.mxu0
  %v10433 = vadd.f32 %v9910, %v10432
  %v10434 = vpop.f32.mrf.mxu0
  %v10435 = vadd.f32 %v9912, %v10434
  %v10436 = vpop.f32.mrf.mxu0
  %v10437 = vadd.f32 %v9914, %v10436
  %v10438 = vpop.f32.mrf.mxu0
  %v10439 = vadd.f32 %v9916, %v10438
  %10440 = vmatprep.mubr.bf16.mxu0 %v4196
  %10441 = vmatmul.mubr.bf16.gmra.mxu0 %v4195
  %v10442 = vpop.f32.mrf.mxu0
  %v10443 = vadd.f32 %v9920, %v10442
  %v10444 = vpop.f32.mrf.mxu0
  %v10445 = vadd.f32 %v9922, %v10444
  %v10446 = vpop.f32.mrf.mxu0
  %v10447 = vadd.f32 %v9924, %v10446
  %v10448 = vpop.f32.mrf.mxu0
  %v10449 = vadd.f32 %v9926, %v10448
  %10450 = vmatprep.mubr.bf16.mxu0 %v4212
  %10451 = vmatmul.mubr.bf16.gmra.mxu0 %v4211
  %v10452 = vpop.f32.mrf.mxu0
  %v10453 = vadd.f32 %v9930, %v10452
  %v10454 = vpop.f32.mrf.mxu0
  %v10455 = vadd.f32 %v9932, %v10454
  %v10456 = vpop.f32.mrf.mxu0
  %v10457 = vadd.f32 %v9934, %v10456
  %v10458 = vpop.f32.mrf.mxu0
  %v10459 = vadd.f32 %v9936, %v10458
  %10460 = vdwg.mxu0
  %v10461 = vmax.f32 %v9973, 0.0
  %v10462 = vmax.f32 %v9975, 0.0
  %v10463 = vmax.f32 %v9977, 0.0
  %v10464 = vmax.f32 %v9979, 0.0
  %v10465 = vmax.f32 %v9983, 0.0
  %v10466 = vmax.f32 %v9985, 0.0
  %v10467 = vmax.f32 %v9987, 0.0
  %v10468 = vmax.f32 %v9989, 0.0
  %v10469 = vmax.f32 %v9993, 0.0
  %v10470 = vmax.f32 %v9995, 0.0
  %v10471 = vmax.f32 %v9997, 0.0
  %v10472 = vmax.f32 %v9999, 0.0
  %v10473 = vmax.f32 %v10003, 0.0
  %v10474 = vmax.f32 %v10005, 0.0
  %v10475 = vmax.f32 %v10007, 0.0
  %v10476 = vmax.f32 %v10009, 0.0
  %v10477 = vmax.f32 %v10013, 0.0
  %v10478 = vmax.f32 %v10015, 0.0
  %v10479 = vmax.f32 %v10017, 0.0
  %v10480 = vmax.f32 %v10019, 0.0
  %v10481 = vmax.f32 %v10023, 0.0
  %v10482 = vmax.f32 %v10025, 0.0
  %v10483 = vmax.f32 %v10027, 0.0
  %v10484 = vmax.f32 %v10029, 0.0
  %v10485 = vmax.f32 %v10033, 0.0
  %v10486 = vmax.f32 %v10035, 0.0
  %v10487 = vmax.f32 %v10037, 0.0
  %v10488 = vmax.f32 %v10039, 0.0
  %v10489 = vmax.f32 %v10043, 0.0
  %v10490 = vmax.f32 %v10045, 0.0
  %v10491 = vmax.f32 %v10047, 0.0
  %v10492 = vmax.f32 %v10049, 0.0
  %v10493 = vmax.f32 %v10053, 0.0
  %v10494 = vmax.f32 %v10055, 0.0
  %v10495 = vmax.f32 %v10057, 0.0
  %v10496 = vmax.f32 %v10059, 0.0
  %v10497 = vmax.f32 %v10063, 0.0
  %v10498 = vmax.f32 %v10065, 0.0
  %v10499 = vmax.f32 %v10067, 0.0
  %v10500 = vmax.f32 %v10069, 0.0
  %v10501 = vmax.f32 %v10073, 0.0
  %v10502 = vmax.f32 %v10075, 0.0
  %v10503 = vmax.f32 %v10077, 0.0
  %v10504 = vmax.f32 %v10079, 0.0
  %v10505 = vmax.f32 %v10083, 0.0
  %v10506 = vmax.f32 %v10085, 0.0
  %v10507 = vmax.f32 %v10087, 0.0
  %v10508 = vmax.f32 %v10089, 0.0
  %v10509 = vmax.f32 %v10093, 0.0
  %v10510 = vmax.f32 %v10095, 0.0
  %v10511 = vmax.f32 %v10097, 0.0
  %v10512 = vmax.f32 %v10099, 0.0
  %v10513 = vmax.f32 %v10103, 0.0
  %v10514 = vmax.f32 %v10105, 0.0
  %v10515 = vmax.f32 %v10107, 0.0
  %v10516 = vmax.f32 %v10109, 0.0
  %v10517 = vmax.f32 %v10113, 0.0
  %v10518 = vmax.f32 %v10115, 0.0
  %v10519 = vmax.f32 %v10117, 0.0
  %v10520 = vmax.f32 %v10119, 0.0
  %v10521 = vmax.f32 %v10123, 0.0
  %v10522 = vmax.f32 %v10125, 0.0
  %v10523 = vmax.f32 %v10127, 0.0
  %v10524 = vmax.f32 %v10129, 0.0
  %v10525 = vmax.f32 %v10133, 0.0
  %v10526 = vmax.f32 %v10135, 0.0
  %v10527 = vmax.f32 %v10137, 0.0
  %v10528 = vmax.f32 %v10139, 0.0
  %v10529 = vmax.f32 %v10143, 0.0
  %v10530 = vmax.f32 %v10145, 0.0
  %v10531 = vmax.f32 %v10147, 0.0
  %v10532 = vmax.f32 %v10149, 0.0
  %v10533 = vmax.f32 %v10153, 0.0
  %v10534 = vmax.f32 %v10155, 0.0
  %v10535 = vmax.f32 %v10157, 0.0
  %v10536 = vmax.f32 %v10159, 0.0
  %v10537 = vmax.f32 %v10163, 0.0
  %v10538 = vmax.f32 %v10165, 0.0
  %v10539 = vmax.f32 %v10167, 0.0
  %v10540 = vmax.f32 %v10169, 0.0
  %v10541 = vmax.f32 %v10173, 0.0
  %v10542 = vmax.f32 %v10175, 0.0
  %v10543 = vmax.f32 %v10177, 0.0
  %v10544 = vmax.f32 %v10179, 0.0
  %v10545 = vmax.f32 %v10183, 0.0
  %v10546 = vmax.f32 %v10185, 0.0
  %v10547 = vmax.f32 %v10187, 0.0
  %v10548 = vmax.f32 %v10189, 0.0
  %v10549 = vmax.f32 %v10193, 0.0
  %v10550 = vmax.f32 %v10195, 0.0
  %v10551 = vmax.f32 %v10197, 0.0
  %v10552 = vmax.f32 %v10199, 0.0
  %v10553 = vmax.f32 %v10203, 0.0
  %v10554 = vmax.f32 %v10205, 0.0
  %v10555 = vmax.f32 %v10207, 0.0
  %v10556 = vmax.f32 %v10209, 0.0
  %v10557 = vmax.f32 %v10213, 0.0
  %v10558 = vmax.f32 %v10215, 0.0
  %v10559 = vmax.f32 %v10217, 0.0
  %v10560 = vmax.f32 %v10219, 0.0
  %v10561 = vmax.f32 %v10223, 0.0
  %v10562 = vmax.f32 %v10225, 0.0
  %v10563 = vmax.f32 %v10227, 0.0
  %v10564 = vmax.f32 %v10229, 0.0
  %v10565 = vmax.f32 %v10233, 0.0
  %v10566 = vmax.f32 %v10235, 0.0
  %v10567 = vmax.f32 %v10237, 0.0
  %v10568 = vmax.f32 %v10239, 0.0
  %v10569 = vmax.f32 %v10243, 0.0
  %v10570 = vmax.f32 %v10245, 0.0
  %v10571 = vmax.f32 %v10247, 0.0
  %v10572 = vmax.f32 %v10249, 0.0
  %v10573 = vmax.f32 %v10253, 0.0
  %v10574 = vmax.f32 %v10255, 0.0
  %v10575 = vmax.f32 %v10257, 0.0
  %v10576 = vmax.f32 %v10259, 0.0
  %v10577 = vmax.f32 %v10263, 0.0
  %v10578 = vmax.f32 %v10265, 0.0
  %v10579 = vmax.f32 %v10267, 0.0
  %v10580 = vmax.f32 %v10269, 0.0
  %v10581 = vmax.f32 %v10273, 0.0
  %v10582 = vmax.f32 %v10275, 0.0
  %v10583 = vmax.f32 %v10277, 0.0
  %v10584 = vmax.f32 %v10279, 0.0
  %v10585 = vmax.f32 %v10283, 0.0
  %v10586 = vmax.f32 %v10285, 0.0
  %v10587 = vmax.f32 %v10287, 0.0
  %v10588 = vmax.f32 %v10289, 0.0
  %v10589 = vmax.f32 %v10293, 0.0
  %v10590 = vmax.f32 %v10295, 0.0
  %v10591 = vmax.f32 %v10297, 0.0
  %v10592 = vmax.f32 %v10299, 0.0
  %v10593 = vmax.f32 %v10303, 0.0
  %v10594 = vmax.f32 %v10305, 0.0
  %v10595 = vmax.f32 %v10307, 0.0
  %v10596 = vmax.f32 %v10309, 0.0
  %v10597 = vmax.f32 %v10313, 0.0
  %v10598 = vmax.f32 %v10315, 0.0
  %v10599 = vmax.f32 %v10317, 0.0
  %v10600 = vmax.f32 %v10319, 0.0
  %v10601 = vmax.f32 %v10323, 0.0
  %v10602 = vmax.f32 %v10325, 0.0
  %v10603 = vmax.f32 %v10327, 0.0
  %v10604 = vmax.f32 %v10329, 0.0
  %v10605 = vmax.f32 %v10333, 0.0
  %v10606 = vmax.f32 %v10335, 0.0
  %v10607 = vmax.f32 %v10337, 0.0
  %v10608 = vmax.f32 %v10339, 0.0
  %v10609 = vmax.f32 %v10343, 0.0
  %v10610 = vmax.f32 %v10345, 0.0
  %v10611 = vmax.f32 %v10347, 0.0
  %v10612 = vmax.f32 %v10349, 0.0
  %v10613 = vmax.f32 %v10353, 0.0
  %v10614 = vmax.f32 %v10355, 0.0
  %v10615 = vmax.f32 %v10357, 0.0
  %v10616 = vmax.f32 %v10359, 0.0
  %v10617 = vmax.f32 %v10363, 0.0
  %v10618 = vmax.f32 %v10365, 0.0
  %v10619 = vmax.f32 %v10367, 0.0
  %v10620 = vmax.f32 %v10369, 0.0
  %v10621 = vmax.f32 %v10373, 0.0
  %v10622 = vmax.f32 %v10375, 0.0
  %v10623 = vmax.f32 %v10377, 0.0
  %v10624 = vmax.f32 %v10379, 0.0
  %v10625 = vmax.f32 %v10383, 0.0
  %v10626 = vmax.f32 %v10385, 0.0
  %v10627 = vmax.f32 %v10387, 0.0
  %v10628 = vmax.f32 %v10389, 0.0
  %v10629 = vmax.f32 %v10393, 0.0
  %v10630 = vmax.f32 %v10395, 0.0
  %v10631 = vmax.f32 %v10397, 0.0
  %v10632 = vmax.f32 %v10399, 0.0
  %v10633 = vmax.f32 %v10403, 0.0
  %v10634 = vmax.f32 %v10405, 0.0
  %v10635 = vmax.f32 %v10407, 0.0
  %v10636 = vmax.f32 %v10409, 0.0
  %v10637 = vmax.f32 %v10413, 0.0
  %v10638 = vmax.f32 %v10415, 0.0
  %v10639 = vmax.f32 %v10417, 0.0
  %v10640 = vmax.f32 %v10419, 0.0
  %v10641 = vmax.f32 %v10423, 0.0
  %v10642 = vmax.f32 %v10425, 0.0
  %v10643 = vmax.f32 %v10427, 0.0
  %v10644 = vmax.f32 %v10429, 0.0
  %v10645 = vmax.f32 %v10433, 0.0
  %v10646 = vmax.f32 %v10435, 0.0
  %v10647 = vmax.f32 %v10437, 0.0
  %v10648 = vmax.f32 %v10439, 0.0
  %v10649 = vmax.f32 %v10443, 0.0
  %v10650 = vmax.f32 %v10445, 0.0
  %v10651 = vmax.f32 %v10447, 0.0
  %v10652 = vmax.f32 %v10449, 0.0
  %v10653 = vmax.f32 %v10453, 0.0
  %v10654 = vmax.f32 %v10455, 0.0
  %v10655 = vmax.f32 %v10457, 0.0
  %v10656 = vmax.f32 %v10459, 0.0
  %v10657 = vlaneseq
  %v10658 = vand.u32 %v10657, 127
  %v10659 = vadd.s32 %v10658, 128
  %v10660 = vadd.s32 %v10658, 256
  %v10661 = vadd.s32 %v10658, 384
  %v10662 = vadd.s32 %v10658, 512
  %v10663 = vadd.s32 %v10658, 640
  %v10664 = vadd.s32 %v10658, 768
  %v10665 = vlaneseq
  %v10666 = vshrl.u32 %v10665, 7
  %v10667 = vadd.s32 %v10666, 8
  %v10668 = vmul.u32 %v10666, 49
  %v10669 = vmul.u32 %v10667, 49
  %vm10670 = vcmp.ge.s32.totalorder %v10658, %v10668
  %vm10671 = vcmp.ge.s32.totalorder %v10659, %v10668
  %vm10672 = vcmp.ge.s32.totalorder %v10660, %v10668
  %vm10673 = vcmp.ge.s32.totalorder %v10661, %v10668
  %vm10674 = vcmp.ge.s32.totalorder %v10662, %v10668
  %vm10675 = vcmp.ge.s32.totalorder %v10663, %v10668
  %vm10676 = vcmp.ge.s32.totalorder %v10664, %v10668
  %vm10677 = vcmp.ge.s32.totalorder %v10658, %v10669
  %vm10678 = vcmp.ge.s32.totalorder %v10659, %v10669
  %vm10679 = vcmp.ge.s32.totalorder %v10660, %v10669
  %vm10680 = vcmp.ge.s32.totalorder %v10661, %v10669
  %vm10681 = vcmp.ge.s32.totalorder %v10662, %v10669
  %vm10682 = vcmp.ge.s32.totalorder %v10663, %v10669
  %vm10683 = vcmp.ge.s32.totalorder %v10664, %v10669
  %v10684 = vadd.s32 %v10666, 1
  %v10685 = vadd.s32 %v10667, 1
  %v10686 = vmul.u32 %v10684, 49
  %v10687 = vmul.u32 %v10685, 49
  %vm10688 = vcmp.lt.s32.totalorder %v10658, %v10686
  %vm10689 = vcmp.lt.s32.totalorder %v10659, %v10686
  %vm10690 = vcmp.lt.s32.totalorder %v10660, %v10686
  %vm10691 = vcmp.lt.s32.totalorder %v10661, %v10686
  %vm10692 = vcmp.lt.s32.totalorder %v10662, %v10686
  %vm10693 = vcmp.lt.s32.totalorder %v10663, %v10686
  %vm10694 = vcmp.lt.s32.totalorder %v10664, %v10686
  %vm10695 = vcmp.lt.s32.totalorder %v10658, %v10687
  %vm10696 = vcmp.lt.s32.totalorder %v10659, %v10687
  %vm10697 = vcmp.lt.s32.totalorder %v10660, %v10687
  %vm10698 = vcmp.lt.s32.totalorder %v10661, %v10687
  %vm10699 = vcmp.lt.s32.totalorder %v10662, %v10687
  %vm10700 = vcmp.lt.s32.totalorder %v10663, %v10687
  %vm10701 = vcmp.lt.s32.totalorder %v10664, %v10687
  %vm10702 = vmand %vm10670, %vm10688
  %vm10703 = vmand %vm10671, %vm10689
  %vm10704 = vmand %vm10672, %vm10690
  %vm10705 = vmand %vm10673, %vm10691
  %vm10706 = vmand %vm10674, %vm10692
  %vm10707 = vmand %vm10675, %vm10693
  %vm10708 = vmand %vm10676, %vm10694
  %vm10709 = vmand %vm10677, %vm10695
  %vm10710 = vmand %vm10678, %vm10696
  %vm10711 = vmand %vm10679, %vm10697
  %vm10712 = vmand %vm10680, %vm10698
  %vm10713 = vmand %vm10681, %vm10699
  %vm10714 = vmand %vm10682, %vm10700
  %vm10715 = vmand %vm10683, %vm10701
  %v10716 = vsel %vm10702, 0.020408163, 0.0
  %v10717 = vsel %vm10703, 0.020408163, 0.0
  %v10718 = vsel %vm10704, 0.020408163, 0.0
  %v10719 = vsel %vm10705, 0.020408163, 0.0
  %v10720 = vsel %vm10706, 0.020408163, 0.0
  %v10721 = vsel %vm10707, 0.020408163, 0.0
  %v10722 = vsel %vm10708, 0.020408163, 0.0
  %v10723 = vsel %vm10709, 0.020408163, 0.0
  %v10724 = vsel %vm10710, 0.020408163, 0.0
  %v10725 = vsel %vm10711, 0.020408163, 0.0
  %v10726 = vsel %vm10712, 0.020408163, 0.0
  %v10727 = vsel %vm10713, 0.020408163, 0.0
  %v10728 = vsel %vm10714, 0.020408163, 0.0
  %v10729 = vsel %vm10715, 0.020408163, 0.0
  %vm10730 = vcmask 130048
  %v10732 = vsel %vm10730, %v10722, 0
  %v10735 = vsel %vm10730, %v10729, 0
  %10737 = vmatprep.subr.mxu0 %v10492
  %10738 = vmatpush1.msra.mxu0 %v10491
  %10739 = vmatprep.subr.mxu0 %v10490
  %10740 = vmatpush1.msra.mxu0 %v10489
  %10741 = vmatprep.subr.mxu0 %v10488
  %10742 = vmatpush1.msra.mxu0 %v10487
  %10743 = vmatprep.subr.mxu0 %v10486
  %10744 = vmatpush1.msra.mxu0 %v10485
  %10745 = vmatprep.subr.mxu0 %v10484
  %10746 = vmatpush1.msra.mxu0 %v10483
  %10747 = vmatprep.subr.mxu0 %v10482
  %10748 = vmatpush1.msra.mxu0 %v10481
  %10749 = vmatprep.subr.mxu0 %v10480
  %10750 = vmatpush1.msra.mxu0 %v10479
  %10751 = vmatprep.subr.mxu0 %v10478
  %10752 = vmatpush1.msra.mxu0 %v10477
  %10753 = vmatprep.subr.mxu0 %v10476
  %10754 = vmatpush1.msra.mxu0 %v10475
  %10755 = vmatprep.subr.mxu0 %v10474
  %10756 = vmatpush1.msra.mxu0 %v10473
  %10757 = vmatprep.subr.mxu0 %v10472
  %10758 = vmatpush1.msra.mxu0 %v10471
  %10759 = vmatprep.subr.mxu0 %v10470
  %10760 = vmatpush1.msra.mxu0 %v10469
  %10761 = vmatprep.subr.mxu0 %v10468
  %10762 = vmatpush1.msra.mxu0 %v10467
  %10763 = vmatprep.subr.mxu0 %v10466
  %10764 = vmatpush1.msra.mxu0 %v10465
  %10765 = vmatprep.subr.mxu0 %v10464
  %10766 = vmatpush1.msra.mxu0 %v10463
  %10767 = vmatprep.subr.mxu0 %v10462
  %10768 = vmatpush1.msra.mxu0 %v10461
  %10769 = vmatprep.subr.mxu0 %v10524
  %10770 = vmatpush2.msra.mxu0 %v10523
  %10771 = vmatprep.subr.mxu0 %v10522
  %10772 = vmatpush2.msra.mxu0 %v10521
  %10773 = vmatprep.subr.mxu0 %v10520
  %10774 = vmatpush2.msra.mxu0 %v10519
  %10775 = vmatprep.subr.mxu0 %v10518
  %10776 = vmatpush2.msra.mxu0 %v10517
  %10777 = vmatprep.subr.mxu0 %v10516
  %10778 = vmatpush2.msra.mxu0 %v10515
  %10779 = vmatprep.subr.mxu0 %v10514
  %10780 = vmatpush2.msra.mxu0 %v10513
  %10781 = vmatprep.subr.mxu0 %v10512
  %10782 = vmatpush2.msra.mxu0 %v10511
  %10783 = vmatprep.subr.mxu0 %v10510
  %10784 = vmatpush2.msra.mxu0 %v10509
  %10785 = vmatprep.subr.mxu0 %v10508
  %10786 = vmatpush2.msra.mxu0 %v10507
  %10787 = vmatprep.subr.mxu0 %v10506
  %10788 = vmatpush2.msra.mxu0 %v10505
  %10789 = vmatprep.subr.mxu0 %v10504
  %10790 = vmatpush2.msra.mxu0 %v10503
  %10791 = vmatprep.subr.mxu0 %v10502
  %10792 = vmatpush2.msra.mxu0 %v10501
  %10793 = vmatprep.subr.mxu0 %v10500
  %10794 = vmatpush2.msra.mxu0 %v10499
  %10795 = vmatprep.subr.mxu0 %v10498
  %10796 = vmatpush2.msra.mxu0 %v10497
  %10797 = vmatprep.subr.mxu0 %v10496
  %10798 = vmatpush2.msra.mxu0 %v10495
  %10799 = vmatprep.subr.mxu0 %v10494
  %10800 = vmatpush2.msra.mxu0 %v10493
  %10801 = vmatprep.mubr.f32.mxu0 %v10717
  %10802 = vmatmul.mubr.f32.gmra.mxu0 %v10716
  %v10803 = vpop.f32.mrf.mxu0
  %v10804 = vadd.f32 0.0, %v10803
  %v10805 = vpop.f32.mrf.mxu0
  %v10806 = vadd.f32 0.0, %v10805
  %10807 = vmatprep.mubr.f32.mxu0 %v10724
  %10808 = vmatmul.mubr.f32.gmra.mxu0 %v10723
  %v10809 = vpop.f32.mrf.mxu0
  %v10810 = vadd.f32 0.0, %v10809
  %v10811 = vpop.f32.mrf.mxu0
  %v10812 = vadd.f32 0.0, %v10811
  %10813 = vdwg.mxu0
  %10814 = vmatprep.subr.mxu0 %v10556
  %10815 = vmatpush1.msra.mxu0 %v10555
  %10816 = vmatprep.subr.mxu0 %v10554
  %10817 = vmatpush1.msra.mxu0 %v10553
  %10818 = vmatprep.subr.mxu0 %v10552
  %10819 = vmatpush1.msra.mxu0 %v10551
  %10820 = vmatprep.subr.mxu0 %v10550
  %10821 = vmatpush1.msra.mxu0 %v10549
  %10822 = vmatprep.subr.mxu0 %v10548
  %10823 = vmatpush1.msra.mxu0 %v10547
  %10824 = vmatprep.subr.mxu0 %v10546
  %10825 = vmatpush1.msra.mxu0 %v10545
  %10826 = vmatprep.subr.mxu0 %v10544
  %10827 = vmatpush1.msra.mxu0 %v10543
  %10828 = vmatprep.subr.mxu0 %v10542
  %10829 = vmatpush1.msra.mxu0 %v10541
  %10830 = vmatprep.subr.mxu0 %v10540
  %10831 = vmatpush1.msra.mxu0 %v10539
  %10832 = vmatprep.subr.mxu0 %v10538
  %10833 = vmatpush1.msra.mxu0 %v10537
  %10834 = vmatprep.subr.mxu0 %v10536
  %10835 = vmatpush1.msra.mxu0 %v10535
  %10836 = vmatprep.subr.mxu0 %v10534
  %10837 = vmatpush1.msra.mxu0 %v10533
  %10838 = vmatprep.subr.mxu0 %v10532
  %10839 = vmatpush1.msra.mxu0 %v10531
  %10840 = vmatprep.subr.mxu0 %v10530
  %10841 = vmatpush1.msra.mxu0 %v10529
  %10842 = vmatprep.subr.mxu0 %v10528
  %10843 = vmatpush1.msra.mxu0 %v10527
  %10844 = vmatprep.subr.mxu0 %v10526
  %10845 = vmatpush1.msra.mxu0 %v10525
  %10846 = vmatprep.subr.mxu0 %v10588
  %10847 = vmatpush2.msra.mxu0 %v10587
  %10848 = vmatprep.subr.mxu0 %v10586
  %10849 = vmatpush2.msra.mxu0 %v10585
  %10850 = vmatprep.subr.mxu0 %v10584
  %10851 = vmatpush2.msra.mxu0 %v10583
  %10852 = vmatprep.subr.mxu0 %v10582
  %10853 = vmatpush2.msra.mxu0 %v10581
  %10854 = vmatprep.subr.mxu0 %v10580
  %10855 = vmatpush2.msra.mxu0 %v10579
  %10856 = vmatprep.subr.mxu0 %v10578
  %10857 = vmatpush2.msra.mxu0 %v10577
  %10858 = vmatprep.subr.mxu0 %v10576
  %10859 = vmatpush2.msra.mxu0 %v10575
  %10860 = vmatprep.subr.mxu0 %v10574
  %10861 = vmatpush2.msra.mxu0 %v10573
  %10862 = vmatprep.subr.mxu0 %v10572
  %10863 = vmatpush2.msra.mxu0 %v10571
  %10864 = vmatprep.subr.mxu0 %v10570
  %10865 = vmatpush2.msra.mxu0 %v10569
  %10866 = vmatprep.subr.mxu0 %v10568
  %10867 = vmatpush2.msra.mxu0 %v10567
  %10868 = vmatprep.subr.mxu0 %v10566
  %10869 = vmatpush2.msra.mxu0 %v10565
  %10870 = vmatprep.subr.mxu0 %v10564
  %10871 = vmatpush2.msra.mxu0 %v10563
  %10872 = vmatprep.subr.mxu0 %v10562
  %10873 = vmatpush2.msra.mxu0 %v10561
  %10874 = vmatprep.subr.mxu0 %v10560
  %10875 = vmatpush2.msra.mxu0 %v10559
  %10876 = vmatprep.subr.mxu0 %v10558
  %10877 = vmatpush2.msra.mxu0 %v10557
  %10878 = vmatprep.mubr.f32.mxu0 %v10719
  %10879 = vmatmul.mubr.f32.gmra.mxu0 %v10718
  %v10880 = vpop.f32.mrf.mxu0
  %v10881 = vadd.f32 %v10804, %v10880
  %v10882 = vpop.f32.mrf.mxu0
  %v10883 = vadd.f32 %v10806, %v10882
  %10884 = vmatprep.mubr.f32.mxu0 %v10726
  %10885 = vmatmul.mubr.f32.gmra.mxu0 %v10725
  %v10886 = vpop.f32.mrf.mxu0
  %v10887 = vadd.f32 %v10810, %v10886
  %v10888 = vpop.f32.mrf.mxu0
  %v10889 = vadd.f32 %v10812, %v10888
  %10890 = vdwg.mxu0
  %10891 = vmatprep.subr.mxu0 %v10620
  %10892 = vmatpush1.msra.mxu0 %v10619
  %10893 = vmatprep.subr.mxu0 %v10618
  %10894 = vmatpush1.msra.mxu0 %v10617
  %10895 = vmatprep.subr.mxu0 %v10616
  %10896 = vmatpush1.msra.mxu0 %v10615
  %10897 = vmatprep.subr.mxu0 %v10614
  %10898 = vmatpush1.msra.mxu0 %v10613
  %10899 = vmatprep.subr.mxu0 %v10612
  %10900 = vmatpush1.msra.mxu0 %v10611
  %10901 = vmatprep.subr.mxu0 %v10610
  %10902 = vmatpush1.msra.mxu0 %v10609
  %10903 = vmatprep.subr.mxu0 %v10608
  %10904 = vmatpush1.msra.mxu0 %v10607
  %10905 = vmatprep.subr.mxu0 %v10606
  %10906 = vmatpush1.msra.mxu0 %v10605
  %10907 = vmatprep.subr.mxu0 %v10604
  %10908 = vmatpush1.msra.mxu0 %v10603
  %10909 = vmatprep.subr.mxu0 %v10602
  %10910 = vmatpush1.msra.mxu0 %v10601
  %10911 = vmatprep.subr.mxu0 %v10600
  %10912 = vmatpush1.msra.mxu0 %v10599
  %10913 = vmatprep.subr.mxu0 %v10598
  %10914 = vmatpush1.msra.mxu0 %v10597
  %10915 = vmatprep.subr.mxu0 %v10596
  %10916 = vmatpush1.msra.mxu0 %v10595
  %10917 = vmatprep.subr.mxu0 %v10594
  %10918 = vmatpush1.msra.mxu0 %v10593
  %10919 = vmatprep.subr.mxu0 %v10592
  %10920 = vmatpush1.msra.mxu0 %v10591
  %10921 = vmatprep.subr.mxu0 %v10590
  %10922 = vmatpush1.msra.mxu0 %v10589
  %10923 = vmatprep.subr.mxu0 %v10652
  %10924 = vmatpush2.msra.mxu0 %v10651
  %10925 = vmatprep.subr.mxu0 %v10650
  %10926 = vmatpush2.msra.mxu0 %v10649
  %10927 = vmatprep.subr.mxu0 %v10648
  %10928 = vmatpush2.msra.mxu0 %v10647
  %10929 = vmatprep.subr.mxu0 %v10646
  %10930 = vmatpush2.msra.mxu0 %v10645
  %10931 = vmatprep.subr.mxu0 %v10644
  %10932 = vmatpush2.msra.mxu0 %v10643
  %10933 = vmatprep.subr.mxu0 %v10642
  %10934 = vmatpush2.msra.mxu0 %v10641
  %10935 = vmatprep.subr.mxu0 %v10640
  %10936 = vmatpush2.msra.mxu0 %v10639
  %10937 = vmatprep.subr.mxu0 %v10638
  %10938 = vmatpush2.msra.mxu0 %v10637
  %10939 = vmatprep.subr.mxu0 %v10636
  %10940 = vmatpush2.msra.mxu0 %v10635
  %10941 = vmatprep.subr.mxu0 %v10634
  %10942 = vmatpush2.msra.mxu0 %v10633
  %10943 = vmatprep.subr.mxu0 %v10632
  %10944 = vmatpush2.msra.mxu0 %v10631
  %10945 = vmatprep.subr.mxu0 %v10630
  %10946 = vmatpush2.msra.mxu0 %v10629
  %10947 = vmatprep.subr.mxu0 %v10628
  %10948 = vmatpush2.msra.mxu0 %v10627
  %10949 = vmatprep.subr.mxu0 %v10626
  %10950 = vmatpush2.msra.mxu0 %v10625
  %10951 = vmatprep.subr.mxu0 %v10624
  %10952 = vmatpush2.msra.mxu0 %v10623
  %10953 = vmatprep.subr.mxu0 %v10622
  %10954 = vmatpush2.msra.mxu0 %v10621
  %10955 = vmatprep.mubr.f32.mxu0 %v10721
  %10956 = vmatmul.mubr.f32.gmra.mxu0 %v10720
  %v10957 = vpop.f32.mrf.mxu0
  %v10958 = vadd.f32 %v10881, %v10957
  %v10959 = vpop.f32.mrf.mxu0
  %v10960 = vadd.f32 %v10883, %v10959
  %10961 = vmatprep.mubr.f32.mxu0 %v10728
  %10962 = vmatmul.mubr.f32.gmra.mxu0 %v10727
  %v10963 = vpop.f32.mrf.mxu0
  %v10964 = vadd.f32 %v10887, %v10963
  %v10965 = vpop.f32.mrf.mxu0
  %v10966 = vadd.f32 %v10889, %v10965
  %10967 = vdwg.mxu0
  %10968 = vmatprep.subr.mxu0 0.0
  %10969 = vmatpush1.msra.mxu0 0.0
  %10970 = vmatprep.subr.mxu0 0.0
  %10971 = vmatpush1.msra.mxu0 0.0
  %10972 = vmatprep.subr.mxu0 0.0
  %10973 = vmatpush1.msra.mxu0 0.0
  %10974 = vmatprep.subr.mxu0 0.0
  %10975 = vmatpush1.msra.mxu0 0.0
  %10976 = vmatprep.subr.mxu0 0.0
  %10977 = vmatpush1.msra.mxu0 0.0
  %10978 = vmatprep.subr.mxu0 0.0
  %10979 = vmatpush1.msra.mxu0 0.0
  %10980 = vmatprep.subr.mxu0 0.0
  %10981 = vmatpush1.msra.mxu0 0.0
  %10982 = vmatprep.subr.mxu0 0.0
  %10983 = vmatpush1.msra.mxu0 0.0
  %10984 = vmatprep.subr.mxu0 0.0
  %10985 = vmatpush1.msra.mxu0 0.0
  %10986 = vmatprep.subr.mxu0 0.0
  %10987 = vmatpush1.msra.mxu0 0.0
  %10988 = vmatprep.subr.mxu0 0.0
  %10989 = vmatpush1.msra.mxu0 0.0
  %10990 = vmatprep.subr.mxu0 0.0
  %10991 = vmatpush1.msra.mxu0 0.0
  %10992 = vmatprep.subr.mxu0 0.0
  %10993 = vmatpush1.msra.mxu0 0.0
  %10994 = vmatprep.subr.mxu0 0.0
  %10995 = vmatpush1.msra.mxu0 0.0
  %10996 = vmatprep.subr.mxu0 %v10656
  %10997 = vmatpush1.msra.mxu0 %v10655
  %10998 = vmatprep.subr.mxu0 %v10654
  %10999 = vmatpush1.msra.mxu0 %v10653
  %11000 = vmatprep.subr.mxu0 0.0
  %11001 = vmatpush2.msra.mxu0 0.0
  %11002 = vmatprep.subr.mxu0 0.0
  %11003 = vmatpush2.msra.mxu0 0.0
  %11004 = vmatprep.subr.mxu0 0.0
  %11005 = vmatpush2.msra.mxu0 0.0
  %11006 = vmatprep.subr.mxu0 0.0
  %11007 = vmatpush2.msra.mxu0 0.0
  %11008 = vmatprep.subr.mxu0 0.0
  %11009 = vmatpush2.msra.mxu0 0.0
  %11010 = vmatprep.subr.mxu0 0.0
  %11011 = vmatpush2.msra.mxu0 0.0
  %11012 = vmatprep.subr.mxu0 0.0
  %11013 = vmatpush2.msra.mxu0 0.0
  %11014 = vmatprep.subr.mxu0 0.0
  %11015 = vmatpush2.msra.mxu0 0.0
  %11016 = vmatprep.subr.mxu0 0.0
  %11017 = vmatpush2.msra.mxu0 0.0
  %11018 = vmatprep.subr.mxu0 0.0
  %11019 = vmatpush2.msra.mxu0 0.0
  %11020 = vmatprep.subr.mxu0 0.0
  %11021 = vmatpush2.msra.mxu0 0.0
  %11022 = vmatprep.subr.mxu0 0.0
  %11023 = vmatpush2.msra.mxu0 0.0
  %11024 = vmatprep.subr.mxu0 0.0
  %11025 = vmatpush2.msra.mxu0 0.0
  %11026 = vmatprep.subr.mxu0 0.0
  %11027 = vmatpush2.msra.mxu0 0.0
  %11028 = vmatprep.subr.mxu0 0.0
  %11029 = vmatpush2.msra.mxu0 0.0
  %11030 = vmatprep.subr.mxu0 0.0
  %11031 = vmatpush2.msra.mxu0 0.0
  %11032 = vmatprep.mubr.f32.mxu0 0.0
  %11033 = vmatmul.mubr.f32.gmra.mxu0 %v10732
  %v11034 = vpop.f32.mrf.mxu0
  %v11035 = vadd.f32 %v10958, %v11034
  %v11036 = vpop.f32.mrf.mxu0
  %v11037 = vadd.f32 %v10960, %v11036
  %11038 = vmatprep.mubr.f32.mxu0 0.0
  %11039 = vmatmul.mubr.f32.gmra.mxu0 %v10735
  %v11040 = vpop.f32.mrf.mxu0
  %v11041 = vadd.f32 %v10964, %v11040
  %v11042 = vpop.f32.mrf.mxu0
  %v11043 = vadd.f32 %v10966, %v11042
  %11044 = vdwg.mxu0
  %11045 = vst [vmem:[%s6] sm:$0xff] %v11035
  %11046 = vst [vmem:[%s6 + $0x8] sm:$0xff] %v11037
  %11047 = vst [vmem:[%s6 + $0x10] sm:$0xff] %v11041
  %11048 = vst [vmem:[%s6 + $0x18] sm:$0xff] %v11043
  %v11049 = vld [vmem:[%s4] sm:$0xff]
  %v11050 = vld [vmem:[%s4 + $0x8] sm:$0xff]
  %v11051 = vld [vmem:[%s4 + $0x10] sm:$0xff]
  %v11052 = vld [vmem:[%s4 + $0x18] sm:$0xff]
  %v11053 = vld [vmem:[%s4 + $0x20] sm:$0xff]
  %v11054 = vld [vmem:[%s4 + $0x28] sm:$0xff]
  %v11055 = vld [vmem:[%s4 + $0x30] sm:$0xff]
  %v11056 = vld [vmem:[%s4 + $0x38] sm:$0xff]
  %v11057 = vld [vmem:[%s4 + $0x40] sm:$0xff]
  %v11058 = vld [vmem:[%s4 + $0x48] sm:$0xff]
  %v11059 = vld [vmem:[%s4 + $0x50] sm:$0xff]
  %v11060 = vld [vmem:[%s4 + $0x58] sm:$0xff]
  %v11061 = vld [vmem:[%s4 + $0x60] sm:$0xff]
  %v11062 = vld [vmem:[%s4 + $0x68] sm:$0xff]
  %v11063 = vld [vmem:[%s4 + $0x70] sm:$0xff]
  %v11064 = vld [vmem:[%s4 + $0x78] sm:$0xff]
  %v11065 = vld [vmem:[%s4 + $0x80] sm:$0xff]
  %v11066 = vld [vmem:[%s4 + $0x88] sm:$0xff]
  %v11067 = vld [vmem:[%s4 + $0x90] sm:$0xff]
  %v11068 = vld [vmem:[%s4 + $0x98] sm:$0xff]
  %v11069 = vld [vmem:[%s4 + $0xa0] sm:$0xff]
  %v11070 = vld [vmem:[%s4 + $0xa8] sm:$0xff]
  %v11071 = vld [vmem:[%s4 + $0xb0] sm:$0xff]
  %v11072 = vld [vmem:[%s4 + $0xb8] sm:$0xff]
  %v11073 = vld [vmem:[%s4 + $0xc0] sm:$0xff]
  %v11074 = vld [vmem:[%s4 + $0xc8] sm:$0xff]
  %v11075 = vld [vmem:[%s4 + $0xd0] sm:$0xff]
  %v11076 = vld [vmem:[%s4 + $0xd8] sm:$0xff]
  %v11077 = vld [vmem:[%s4 + $0xe0] sm:$0xff]
  %v11078 = vld [vmem:[%s4 + $0xe8] sm:$0xff]
  %v11079 = vld [vmem:[%s4 + $0xf0] sm:$0xff]
  %v11080 = vld [vmem:[%s4 + $0xf8] sm:$0xff]
  %v11081 = vld [vmem:[%s5] sm:$0x1]
  %v11083 = vlaneseq
  %v11084 = vshrl.u32 %v11083, 7
  %v11085 = vsub.s32 0, %v11084
  %v11086 = vrot.slane %v11081, %v11085
  %11088 = vmatprep.subr.mxu0 0.0
  %11089 = vmatpush1.msra.mxu0 %v11064
  %11090 = vmatprep.subr.mxu0 0.0
  %11091 = vmatpush1.msra.mxu0 %v11063
  %11092 = vmatprep.subr.mxu0 0.0
  %11093 = vmatpush1.msra.mxu0 %v11062
  %11094 = vmatprep.subr.mxu0 0.0
  %11095 = vmatpush1.msra.mxu0 %v11061
  %11096 = vmatprep.subr.mxu0 0.0
  %11097 = vmatpush1.msra.mxu0 %v11060
  %11098 = vmatprep.subr.mxu0 0.0
  %11099 = vmatpush1.msra.mxu0 %v11059
  %11100 = vmatprep.subr.mxu0 0.0
  %11101 = vmatpush1.msra.mxu0 %v11058
  %11102 = vmatprep.subr.mxu0 0.0
  %11103 = vmatpush1.msra.mxu0 %v11057
  %11104 = vmatprep.subr.mxu0 0.0
  %11105 = vmatpush1.msra.mxu0 %v11056
  %11106 = vmatprep.subr.mxu0 0.0
  %11107 = vmatpush1.msra.mxu0 %v11055
  %11108 = vmatprep.subr.mxu0 0.0
  %11109 = vmatpush1.msra.mxu0 %v11054
  %11110 = vmatprep.subr.mxu0 0.0
  %11111 = vmatpush1.msra.mxu0 %v11053
  %11112 = vmatprep.subr.mxu0 0.0
  %11113 = vmatpush1.msra.mxu0 %v11052
  %11114 = vmatprep.subr.mxu0 0.0
  %11115 = vmatpush1.msra.mxu0 %v11051
  %11116 = vmatprep.subr.mxu0 0.0
  %11117 = vmatpush1.msra.mxu0 %v11050
  %11118 = vmatprep.subr.mxu0 0.0
  %11119 = vmatpush1.msra.mxu0 %v11049
  %11120 = vmatprep.subr.mxu0 0.0
  %11121 = vmatpush2.msra.mxu0 %v11080
  %11122 = vmatprep.subr.mxu0 0.0
  %11123 = vmatpush2.msra.mxu0 %v11079
  %11124 = vmatprep.subr.mxu0 0.0
  %11125 = vmatpush2.msra.mxu0 %v11078
  %11126 = vmatprep.subr.mxu0 0.0
  %11127 = vmatpush2.msra.mxu0 %v11077
  %11128 = vmatprep.subr.mxu0 0.0
  %11129 = vmatpush2.msra.mxu0 %v11076
  %11130 = vmatprep.subr.mxu0 0.0
  %11131 = vmatpush2.msra.mxu0 %v11075
  %11132 = vmatprep.subr.mxu0 0.0
  %11133 = vmatpush2.msra.mxu0 %v11074
  %11134 = vmatprep.subr.mxu0 0.0
  %11135 = vmatpush2.msra.mxu0 %v11073
  %11136 = vmatprep.subr.mxu0 0.0
  %11137 = vmatpush2.msra.mxu0 %v11072
  %11138 = vmatprep.subr.mxu0 0.0
  %11139 = vmatpush2.msra.mxu0 %v11071
  %11140 = vmatprep.subr.mxu0 0.0
  %11141 = vmatpush2.msra.mxu0 %v11070
  %11142 = vmatprep.subr.mxu0 0.0
  %11143 = vmatpush2.msra.mxu0 %v11069
  %11144 = vmatprep.subr.mxu0 0.0
  %11145 = vmatpush2.msra.mxu0 %v11068
  %11146 = vmatprep.subr.mxu0 0.0
  %11147 = vmatpush2.msra.mxu0 %v11067
  %11148 = vmatprep.subr.mxu0 0.0
  %11149 = vmatpush2.msra.mxu0 %v11066
  %11150 = vmatprep.subr.mxu0 0.0
  %11151 = vmatpush2.msra.mxu0 %v11065
  %11152 = vmatprep.mubr.f32.mxu0 %v11037
  %11153 = vmatmul.mubr.f32.gmra.mxu0 %v11035
  %v11154 = vpop.f32.mrf.mxu0
  %v11155 = vadd.f32 %v11086, %v11154
  %v11156 = vpop.f32.mrf.mxu0
  %11157 = vmatprep.mubr.f32.mxu0 %v11043
  %11158 = vmatmul.mubr.f32.gmra.mxu0 %v11041
  %v11159 = vpop.f32.mrf.mxu0
  %v11160 = vadd.f32 %v11086, %v11159
  %v11161 = vpop.f32.mrf.mxu0
  %11162 = vdwg.mxu0
  %11163 = vmax.xlane.f32.xlu0 %v11155
  %v11164 = vpop.xlane.xlu0 %11163
  %11165 = vmax.xlane.f32.xlu0 %v11160
  %v11166 = vpop.xlane.xlu0 %11165
  %v11167 = vsub.f32 %v11155, %v11164
  %v11168 = vsub.f32 %v11160, %v11166
  %v11169 = vmul.f32 %v11167, 1.442695
  %v11170 = vpow.pop %v11169
  %v11171 = vmul.f32 %v11168, 1.442695
  %v11172 = vpow.pop %v11171
  %11173 = vadd.xlane.f32.xlu0 %v11170
  %v11174 = vpop.xlane.xlu0 %11173
  %11175 = vadd.xlane.f32.xlu0 %v11172
  %v11176 = vpop.xlane.xlu0 %11175
  %v11177 = vlog2.pop %v11174
  %v11178 = vmul.f32 %v11177, 0.6931472
  %v11179 = vlog2.pop %v11176
  %v11180 = vmul.f32 %v11179, 0.6931472
  %v11181 = vadd.f32 %v11164, %v11178
  %v11182 = vadd.f32 %v11166, %v11180
  %v11183 = vld [vmem:[%s1] sm:$0xff]
  %v11184 = vld [vmem:[%s1 + $0x8] sm:$0xff]
  %v11185 = vmul.f32 %v11183, %v11155
  %v11186 = vmul.f32 %v11184, %v11160
  %11187 = vadd.xlane.f32.xlu0 %v11185
  %v11188 = vpop.xlane.xlu0 %11187
  %11189 = vadd.xlane.f32.xlu0 %v11186
  %v11190 = vpop.xlane.xlu0 %11189
  %11191 = vadd.xlane.f32.xlu0 %v11183
  %v11192 = vpop.xlane.xlu0 %11191
  %11193 = vadd.xlane.f32.xlu0 %v11184
  %v11194 = vpop.xlane.xlu0 %11193
  %v11195 = vmul.f32 %v11192, %v11181
  %v11196 = vmul.f32 %v11194, %v11182
  %v11197 = vsub.f32 %v11195, %v11188
  %v11198 = vsub.f32 %v11196, %v11190
  %vm11199 = vcmask 7168
  %v11200 = vsel %vm11199, %v11197, 0.0
  %v11201 = vsel %vm11199, %v11198, 0.0
  %v11202 = vadd.f32 %v11200, %v11201
  %11203 = vadd.xlane.f32.xlu0 %v11202
  %v11204 = vpop.xlane.xlu0 %11203
  %v11205 = vrot.slane %v11204, 4
  %v11206 = vadd.f32 %v11204, %v11205
  %v11207 = vrot.slane %v11206, 2
  %v11208 = vadd.f32 %v11206, %v11207
  %v11209 = vrot.slane %v11208, 1
  %v11210 = vadd.f32 %v11208, %v11209
  %s11211 = vtos %v11210
  %v11212 = vsel %vm11199, %v11192, 0.0
  %v11213 = vsel %vm11199, %v11194, 0.0
  %v11214 = vadd.f32 %v11212, %v11213
  %11215 = vadd.xlane.f32.xlu0 %v11214
  %v11216 = vpop.xlane.xlu0 %11215
  %v11217 = vrot.slane %v11216, 4
  %v11218 = vadd.f32 %v11216, %v11217
  %v11219 = vrot.slane %v11218, 2
  %v11220 = vadd.f32 %v11218, %v11219
  %v11221 = vrot.slane %v11220, 1
  %v11222 = vadd.f32 %v11220, %v11221
  %s11223 = vtos %v11222
  %vm11224 = vcmp.eq.s32.totalorder %v10666, 0
  %vm11225 = vcmp.eq.s32.totalorder %v10666, 1
  %v11226 = vstv %s11223
  %v11227 = vsel %vm11225, %v11226, 0.0
  %v11228 = vstv %s11211
  %v11229 = vsel %vm11224, %v11228, %v11227
  %11230 = vst [vmem:[%s7] sm:$0xff] %v11229
  // Predicated region
  $region26: #{_per_image.1} parent=0 // pred_check
    _
  $region27: #{_per_image.1} parent=0 // pred_check_branch
    %11232 = sbr.rel (0) target = $region29
  $region28: #{_per_image.1} parent=0 // pred_region
    _
  $region29: #{_per_image.1} parent=0 // pred_fallthru
    _
  // Predicated region
  $region30: #{_per_image.1} parent=0 // pred_check
    _
  $region31: #{_per_image.1} parent=0 // pred_check_branch
    %11234 = sbr.rel (0) target = $region33
  $region32: #{_per_image.1} parent=0 // pred_region
    _
  $region33: #{_per_image.1} parent=0 // pred_fallthru
    _
  // Predicated region
  $region34: #{_per_image.1} parent=0 // pred_check
    _
  $region35: #{_per_image.1} parent=0 // pred_check_branch
    %11236 = sbr.rel (0) target = $region37
  $region36: #{_per_image.1} parent=0 // pred_region
    _
  $region37: #{_per_image.1} parent=0 // pred_fallthru
    _
  // Predicated region
  $region38: #{_per_image.1} parent=0 // pred_check
    _
  $region39: #{_per_image.1} parent=0 // pred_check_branch
    %11238 = sbr.rel (0) target = $region41
  $region40: #{_per_image.1} parent=0 // pred_region
    _
  $region41: #{_per_image.1} parent=0 // pred_fallthru
    _

</llo_original>
